<compile_context>
chip_gen: v6e
topology: v6e:2x2x1
jax: 0.10.0
libtpu: 0.0.40
codegen_flags: <defaults>
</compile_context>

<pallas_src>
import numpy as np
import jax
import jax.numpy as jnp
from jax.experimental import pallas as pl
from jax.experimental.pallas import tpu as pltpu

NLAYERS = 3                      # layers per DynamicBlock
NBLOCKS = 3                      # number of DynamicBlocks in the network
LIFT = 50                        # hidden ("lift") width inside DynamicBlock
DIMS = [3, 10, 10, 15]
OUTPUT = 3
N_PAD = DIMS[-1]                 # 15: padded feature width used throughout the kernel
DOF_PAD = N_PAD * (N_PAD - 1) // 2   # 105: padded skew-DOF width
LEAKY_SLOPE = 0.01               # nn.LeakyReLU default


def _leaky(x):
    return jnp.where(x >= 0, x, LEAKY_SLOPE * x)


# ---------------------------------------------------------------------------
# Kernel: whole network fused, tiled over the batch
# ---------------------------------------------------------------------------
def network_kernel(x_ref, aw_ref, ab_ref, bw_ref, bb_ref, s_ref, out_ref, xpad_ref):
    # Zero-pad input features 3 -> 15 in a VMEM scratch (replaces identity Lift matmuls).
    xpad_ref[...] = jnp.zeros(xpad_ref.shape, jnp.float32)
    xpad_ref[:, :DIMS[0]] = x_ref[...].astype(jnp.float32)
    x = xpad_ref[...]                                            # (tb, 15)

    for b in range(NBLOCKS):
        S = s_ref[b]                                             # (105, 15), 0.1 pre-folded
        for l in range(NLAYERS):
            g = b * NLAYERS + l
            h = _leaky(jnp.dot(x, aw_ref[g],
                               preferred_element_type=jnp.float32) + ab_ref[g])
            ff = _leaky(jnp.dot(h, bw_ref[g],
                                preferred_element_type=jnp.float32) + bb_ref[g])
            x = x + jnp.dot(ff, S, preferred_element_type=jnp.float32)

    # Projection(15 -> 3): projMat = [I3; 0] so y = x[:, :3] + sum(x[:, 3:]) / 3
    s = jnp.sum(x[:, OUTPUT:], axis=-1, keepdims=True) * (1.0 / OUTPUT)
    out_ref[...] = (x[:, :OUTPUT] + s).astype(out_ref.dtype)


# ---------------------------------------------------------------------------
# Parameter construction (deterministic, in-script)
# ---------------------------------------------------------------------------
def _build_skew_S(n):
    """ff @ S  ==  ones(n) @ (R - R^T) where R scatters ff into triu(offset=1)."""
    rows, cols = np.triu_indices(n, k=1)   # row-major, same order as torch.triu_indices
    dof = n * (n - 1) // 2
    S = np.zeros((dof, n), dtype=np.float32)
    S[np.arange(dof), cols] += 1.0
    S[np.arange(dof), rows] -= 1.0
    return S


def _init_block(key, n):
    dof = n * (n - 1) // 2
    layers = []
    for _ in range(NLAYERS):
        key, k1, k2, k3, k4 = jax.random.split(key, 5)
        Aw = jax.random.normal(k1, (n, LIFT), jnp.float32) / np.sqrt(n)       # A_i^T
        Ab = jax.random.normal(k2, (1, LIFT), jnp.float32)                    # Biases[i]
        Bw = jax.random.normal(k3, (LIFT, dof), jnp.float32) / np.sqrt(LIFT)  # B_i W^T
        Bb = jax.random.normal(k4, (1, dof), jnp.float32) * 0.1               # B_i bias
        layers.append((Aw, Ab, Bw, Bb))
    return key, {"n": n, "dof": dof, "layers": layers,
                 "S": jnp.asarray(_build_skew_S(n))}


def build_blocks(key):
    blocks = []
    for n in (DIMS[1], DIMS[2], DIMS[3]):
        key, blk = _init_block(key, n)
        blocks.append(blk)
    return blocks


def pack_params(blocks):
    """Pack all block parameters into 5 zero-padded arrays (fold the 0.1 into S)."""
    G = NBLOCKS * NLAYERS
    Aw_all = np.zeros((G, N_PAD, LIFT), np.float32)
    Ab_all = np.zeros((G, 1, LIFT), np.float32)
    Bw_all = np.zeros((G, LIFT, DOF_PAD), np.float32)
    Bb_all = np.zeros((G, 1, DOF_PAD), np.float32)
    S_all = np.zeros((NBLOCKS, DOF_PAD, N_PAD), np.float32)
    for b, blk in enumerate(blocks):
        n, dof = blk["n"], blk["dof"]
        S_all[b, :dof, :n] = 0.1 * np.asarray(blk["S"])
        for l, (Aw, Ab, Bw, Bb) in enumerate(blk["layers"]):
            g = b * NLAYERS + l
            Aw_all[g, :n, :] = np.asarray(Aw)
            Ab_all[g, 0, :] = np.asarray(Ab)[0]
            Bw_all[g, :, :dof] = np.asarray(Bw)
            Bb_all[g, 0, :dof] = np.asarray(Bb)[0]
    return tuple(jnp.asarray(a) for a in (Aw_all, Ab_all, Bw_all, Bb_all, S_all))


# ---------------------------------------------------------------------------
# Pallas wrapper
# ---------------------------------------------------------------------------
def network_forward(x, packed, *, tb=256):
    B, D = x.shape
    assert D == DIMS[0]

    # Keep the batch tile a multiple of 8 sublanes and, when the batch allows it,
    # at least 2 grid steps so the "parallel" axis can be split over 2 TCs (v7x).
    if B >= 16:
        tb = max(8, min(tb, 8 * pl.cdiv(B, 16)))
    else:
        tb = 8
    Bp = pl.cdiv(B, tb) * tb
    xp = x
    if Bp != B:
        xp = jnp.concatenate([x, jnp.zeros((Bp - B, D), x.dtype)], axis=0)

    in_specs = [pl.BlockSpec((tb, D), lambda i: (i, 0))]
    # Packed parameters: full-array blocks (all 3-D), same tile every grid step.
    in_specs += [pl.BlockSpec(p.shape, lambda i: (0, 0, 0)) for p in packed]
    out_spec = pl.BlockSpec((tb, OUTPUT), lambda i: (i, 0))

    flops_per_row = 2 * NBLOCKS * NLAYERS * (
        N_PAD * LIFT + LIFT * DOF_PAD + DOF_PAD * N_PAD)
    param_bytes = sum(int(np.prod(p.shape)) * 4 for p in packed)
    cost = pl.CostEstimate(
        flops=int(Bp) * flops_per_row,
        transcendentals=0,
        bytes_accessed=int(Bp) * (D + OUTPUT) * 4 + param_bytes)

    out = pl.pallas_call(
        network_kernel,
        out_shape=jax.ShapeDtypeStruct((Bp, OUTPUT), x.dtype),
        grid_spec=pltpu.PrefetchScalarGridSpec(
            num_scalar_prefetch=0,
            grid=(Bp // tb,),
            in_specs=in_specs,
            out_specs=out_spec,
            scratch_shapes=[pltpu.VMEM((tb, N_PAD), jnp.float32)],
        ),
        compiler_params=pltpu.CompilerParams(
            dimension_semantics=("parallel",)),
        cost_estimate=cost,
    )(xp, *packed)
    return out[:B]


# ---------------------------------------------------------------------------
# Pure-JAX reference (mirrors the PyTorch forward exactly) for verification
# ---------------------------------------------------------------------------
def reference_forward(x, blocks):
    def lift(x, out_dim):
        return jnp.concatenate(
            [x, jnp.zeros((x.shape[0], out_dim - x.shape[1]), x.dtype)], axis=1)

    def dyn(x, blk):
        for (Aw, Ab, Bw, Bb) in blk["layers"]:
            h = _leaky(x @ Aw + Ab)
            ff = _leaky(h @ Bw + Bb)
            x = x + 0.1 * (ff @ blk["S"])
        return x

    x = lift(x, DIMS[1])
    x = dyn(x, blocks[0])
    # Projection(10 -> 10) is the identity (empty residual sum), skip.
    x = dyn(x, blocks[1])
    x = lift(x, DIMS[3])
    x = dyn(x, blocks[2])
    s = jnp.sum(x[:, OUTPUT:], axis=1, keepdims=True) / float(OUTPUT)
    return x[:, :OUTPUT] + s


if __name__ == "__main__":
    key = jax.random.PRNGKey(0)
    key, kx, kp = jax.random.split(key, 3)

    B = 512                      # 2 grid steps at tb=256 (input is still tiny: (512, 3))
    x = jax.random.normal(kx, (B, DIMS[0]), jnp.float32)
    blocks = build_blocks(kp)
    packed = pack_params(blocks)

    out = network_forward(x, packed, tb=256)
    out = jax.block_until_ready(out)

    ref = reference_forward(x, blocks)
    np_out = np.asarray(out)
    np_ref = np.asarray(ref)
    assert np_out.shape == (B, OUTPUT)
    assert np.allclose(np_out, np_ref, rtol=1e-3, atol=1e-3), (
        f"mismatch: max abs err {np.max(np.abs(np_out - np_ref))}")

    print("KERNEL_OK")
</pallas_src>

<mosaic_0001>
module attributes {stable_mosaic.version = 11 : i64} {
  func.func @network_kernel(%arg0: i32, %arg1: memref<256x3xf32, #tpu.memory_space<vmem>>, %arg2: memref<9x15x50xf32, #tpu.memory_space<vmem>>, %arg3: memref<9x1x50xf32, #tpu.memory_space<vmem>>, %arg4: memref<9x50x105xf32, #tpu.memory_space<vmem>>, %arg5: memref<9x1x105xf32, #tpu.memory_space<vmem>>, %arg6: memref<3x105x15xf32, #tpu.memory_space<vmem>>, %arg7: memref<256x3xf32, #tpu.memory_space<vmem>>, %arg8: memref<256x15xf32, #tpu.memory_space<vmem>>) attributes {dimension_semantics = [#tpu.dimension_semantics<parallel>], iteration_bounds = array<i64: 2>, scalar_prefetch = 0 : i64, scratch_operands = 1 : i64, tpu.core_type = #tpu.core_type<tc>, window_params = [{transform_indices = @transform_0, window_bounds = array<i64: 256, 3>}, {pipeline_mode = #tpu.pipeline_mode<synchronous>, transform_indices = @transform_1, window_bounds = array<i64: 9, 15, 50>}, {pipeline_mode = #tpu.pipeline_mode<synchronous>, transform_indices = @transform_2, window_bounds = array<i64: 9, 1, 50>}, {pipeline_mode = #tpu.pipeline_mode<synchronous>, transform_indices = @transform_3, window_bounds = array<i64: 9, 50, 105>}, {pipeline_mode = #tpu.pipeline_mode<synchronous>, transform_indices = @transform_4, window_bounds = array<i64: 9, 1, 105>}, {pipeline_mode = #tpu.pipeline_mode<synchronous>, transform_indices = @transform_5, window_bounds = array<i64: 3, 105, 15>}, {transform_indices = @transform_6, window_bounds = array<i64: 256, 3>}]} {
    %cst = arith.constant 0.000000e+00 : f32
    %0 = vector.broadcast %cst : f32 to vector<256x15xf32>
    %c0 = arith.constant 0 : index
    %c0_0 = arith.constant 0 : index
    %1 = vector.load %arg8[%c0, %c0_0] : memref<256x15xf32, #tpu.memory_space<vmem>>, vector<256x15xf32>
    tpu.vector_store %arg8[%c0, %c0_0], %0 {strides = array<i32>} : memref<256x15xf32, #tpu.memory_space<vmem>>, vector<256x15xf32>,
    %c0_1 = arith.constant 0 : index
    %c0_2 = arith.constant 0 : index
    %2 = vector.load %arg1[%c0_1, %c0_2] : memref<256x3xf32, #tpu.memory_space<vmem>>, vector<256x3xf32>
    %c0_3 = arith.constant 0 : index
    %c0_4 = arith.constant 0 : index
    %3 = vector.load %arg8[%c0_3, %c0_4] : memref<256x15xf32, #tpu.memory_space<vmem>>, vector<256x3xf32>
    tpu.vector_store %arg8[%c0_3, %c0_4], %2 {strides = array<i32>} : memref<256x15xf32, #tpu.memory_space<vmem>>, vector<256x3xf32>,
    %c0_5 = arith.constant 0 : index
    %c0_6 = arith.constant 0 : index
    %4 = vector.load %arg8[%c0_5, %c0_6] : memref<256x15xf32, #tpu.memory_space<vmem>>, vector<256x15xf32>
    %c0_7 = arith.constant 0 : index
    %c0_8 = arith.constant 0 : index
    %c0_9 = arith.constant 0 : index
    %5 = vector.load %arg6[%c0_7, %c0_8, %c0_9] : memref<3x105x15xf32, #tpu.memory_space<vmem>>, vector<1x105x15xf32>
    %6 = vector.shape_cast %5 : vector<1x105x15xf32> to vector<105x15xf32>
    %c0_10 = arith.constant 0 : index
    %c0_11 = arith.constant 0 : index
    %c0_12 = arith.constant 0 : index
    %7 = vector.load %arg2[%c0_10, %c0_11, %c0_12] : memref<9x15x50xf32, #tpu.memory_space<vmem>>, vector<1x15x50xf32>
    %8 = vector.shape_cast %7 : vector<1x15x50xf32> to vector<15x50xf32>
    %cst_13 = arith.constant dense<0.000000e+00> : vector<256x50xf32>
    %9 = tpu.matmul %4, %8, %cst_13 {dimension_numbers = #tpu.dot_dimension_numbers<[1], [0], [0], [1], [0, 0, 1, 1], [], []>} : vector<256x15xf32>, vector<15x50xf32>, vector<256x50xf32> -> vector<256x50xf32>
    %c0_14 = arith.constant 0 : index
    %c0_15 = arith.constant 0 : index
    %c0_16 = arith.constant 0 : index
    %10 = vector.load %arg3[%c0_14, %c0_15, %c0_16] : memref<9x1x50xf32, #tpu.memory_space<vmem>>, vector<1x1x50xf32>
    %11 = vector.shape_cast %10 : vector<1x1x50xf32> to vector<1x50xf32>
    %12 = vector.broadcast %11 : vector<1x50xf32> to vector<256x50xf32>
    %13 = arith.addf %9, %12 : vector<256x50xf32>
    %cst_17 = arith.constant 0.000000e+00 : f32
    %14 = vector.broadcast %cst_17 : f32 to vector<256x50xf32>
    %15 = arith.cmpf oge, %13, %14 : vector<256x50xf32>
    %cst_18 = arith.constant 0.00999999977 : f32
    %16 = vector.broadcast %cst_18 : f32 to vector<256x50xf32>
    %17 = arith.mulf %16, %13 : vector<256x50xf32>
    %18 = arith.select %15, %13, %17 : vector<256x50xi1>, vector<256x50xf32>
    %c0_19 = arith.constant 0 : index
    %c0_20 = arith.constant 0 : index
    %c0_21 = arith.constant 0 : index
    %19 = vector.load %arg4[%c0_19, %c0_20, %c0_21] : memref<9x50x105xf32, #tpu.memory_space<vmem>>, vector<1x50x105xf32>
    %20 = vector.shape_cast %19 : vector<1x50x105xf32> to vector<50x105xf32>
    %cst_22 = arith.constant dense<0.000000e+00> : vector<256x105xf32>
    %21 = tpu.matmul %18, %20, %cst_22 {dimension_numbers = #tpu.dot_dimension_numbers<[1], [0], [0], [1], [0, 0, 1, 1], [], []>} : vector<256x50xf32>, vector<50x105xf32>, vector<256x105xf32> -> vector<256x105xf32>
    %c0_23 = arith.constant 0 : index
    %c0_24 = arith.constant 0 : index
    %c0_25 = arith.constant 0 : index
    %22 = vector.load %arg5[%c0_23, %c0_24, %c0_25] : memref<9x1x105xf32, #tpu.memory_space<vmem>>, vector<1x1x105xf32>
    %23 = vector.shape_cast %22 : vector<1x1x105xf32> to vector<1x105xf32>
    %24 = vector.broadcast %23 : vector<1x105xf32> to vector<256x105xf32>
    %25 = arith.addf %21, %24 : vector<256x105xf32>
    %cst_26 = arith.constant 0.000000e+00 : f32
    %26 = vector.broadcast %cst_26 : f32 to vector<256x105xf32>
    %27 = arith.cmpf oge, %25, %26 : vector<256x105xf32>
    %cst_27 = arith.constant 0.00999999977 : f32
    %28 = vector.broadcast %cst_27 : f32 to vector<256x105xf32>
    %29 = arith.mulf %28, %25 : vector<256x105xf32>
    %30 = arith.select %27, %25, %29 : vector<256x105xi1>, vector<256x105xf32>
    %cst_28 = arith.constant dense<0.000000e+00> : vector<256x15xf32>
    %31 = tpu.matmul %30, %6, %cst_28 {dimension_numbers = #tpu.dot_dimension_numbers<[1], [0], [0], [1], [0, 0, 1, 1], [], []>} : vector<256x105xf32>, vector<105x15xf32>, vector<256x15xf32> -> vector<256x15xf32>
    %32 = arith.addf %4, %31 : vector<256x15xf32>
    %c1 = arith.constant 1 : index
    %c0_29 = arith.constant 0 : index
    %c0_30 = arith.constant 0 : index
    %33 = vector.load %arg2[%c1, %c0_29, %c0_30] : memref<9x15x50xf32, #tpu.memory_space<vmem>>, vector<1x15x50xf32>
    %34 = vector.shape_cast %33 : vector<1x15x50xf32> to vector<15x50xf32>
    %cst_31 = arith.constant dense<0.000000e+00> : vector<256x50xf32>
    %35 = tpu.matmul %32, %34, %cst_31 {dimension_numbers = #tpu.dot_dimension_numbers<[1], [0], [0], [1], [0, 0, 1, 1], [], []>} : vector<256x15xf32>, vector<15x50xf32>, vector<256x50xf32> -> vector<256x50xf32>
    %c1_32 = arith.constant 1 : index
    %c0_33 = arith.constant 0 : index
    %c0_34 = arith.constant 0 : index
    %36 = vector.load %arg3[%c1_32, %c0_33, %c0_34] : memref<9x1x50xf32, #tpu.memory_space<vmem>>, vector<1x1x50xf32>
    %37 = vector.shape_cast %36 : vector<1x1x50xf32> to vector<1x50xf32>
    %38 = vector.broadcast %37 : vector<1x50xf32> to vector<256x50xf32>
    %39 = arith.addf %35, %38 : vector<256x50xf32>
    %cst_35 = arith.constant 0.000000e+00 : f32
    %40 = vector.broadcast %cst_35 : f32 to vector<256x50xf32>
    %41 = arith.cmpf oge, %39, %40 : vector<256x50xf32>
    %cst_36 = arith.constant 0.00999999977 : f32
    %42 = vector.broadcast %cst_36 : f32 to vector<256x50xf32>
    %43 = arith.mulf %42, %39 : vector<256x50xf32>
    %44 = arith.select %41, %39, %43 : vector<256x50xi1>, vector<256x50xf32>
    %c1_37 = arith.constant 1 : index
    %c0_38 = arith.constant 0 : index
    %c0_39 = arith.constant 0 : index
    %45 = vector.load %arg4[%c1_37, %c0_38, %c0_39] : memref<9x50x105xf32, #tpu.memory_space<vmem>>, vector<1x50x105xf32>
    %46 = vector.shape_cast %45 : vector<1x50x105xf32> to vector<50x105xf32>
    %cst_40 = arith.constant dense<0.000000e+00> : vector<256x105xf32>
    %47 = tpu.matmul %44, %46, %cst_40 {dimension_numbers = #tpu.dot_dimension_numbers<[1], [0], [0], [1], [0, 0, 1, 1], [], []>} : vector<256x50xf32>, vector<50x105xf32>, vector<256x105xf32> -> vector<256x105xf32>
    %c1_41 = arith.constant 1 : index
    %c0_42 = arith.constant 0 : index
    %c0_43 = arith.constant 0 : index
    %48 = vector.load %arg5[%c1_41, %c0_42, %c0_43] : memref<9x1x105xf32, #tpu.memory_space<vmem>>, vector<1x1x105xf32>
    %49 = vector.shape_cast %48 : vector<1x1x105xf32> to vector<1x105xf32>
    %50 = vector.broadcast %49 : vector<1x105xf32> to vector<256x105xf32>
    %51 = arith.addf %47, %50 : vector<256x105xf32>
    %cst_44 = arith.constant 0.000000e+00 : f32
    %52 = vector.broadcast %cst_44 : f32 to vector<256x105xf32>
    %53 = arith.cmpf oge, %51, %52 : vector<256x105xf32>
    %cst_45 = arith.constant 0.00999999977 : f32
    %54 = vector.broadcast %cst_45 : f32 to vector<256x105xf32>
    %55 = arith.mulf %54, %51 : vector<256x105xf32>
    %56 = arith.select %53, %51, %55 : vector<256x105xi1>, vector<256x105xf32>
    %cst_46 = arith.constant dense<0.000000e+00> : vector<256x15xf32>
    %57 = tpu.matmul %56, %6, %cst_46 {dimension_numbers = #tpu.dot_dimension_numbers<[1], [0], [0], [1], [0, 0, 1, 1], [], []>} : vector<256x105xf32>, vector<105x15xf32>, vector<256x15xf32> -> vector<256x15xf32>
    %58 = arith.addf %32, %57 : vector<256x15xf32>
    %c2 = arith.constant 2 : index
    %c0_47 = arith.constant 0 : index
    %c0_48 = arith.constant 0 : index
    %59 = vector.load %arg2[%c2, %c0_47, %c0_48] : memref<9x15x50xf32, #tpu.memory_space<vmem>>, vector<1x15x50xf32>
    %60 = vector.shape_cast %59 : vector<1x15x50xf32> to vector<15x50xf32>
    %cst_49 = arith.constant dense<0.000000e+00> : vector<256x50xf32>
    %61 = tpu.matmul %58, %60, %cst_49 {dimension_numbers = #tpu.dot_dimension_numbers<[1], [0], [0], [1], [0, 0, 1, 1], [], []>} : vector<256x15xf32>, vector<15x50xf32>, vector<256x50xf32> -> vector<256x50xf32>
    %c2_50 = arith.constant 2 : index
    %c0_51 = arith.constant 0 : index
    %c0_52 = arith.constant 0 : index
    %62 = vector.load %arg3[%c2_50, %c0_51, %c0_52] : memref<9x1x50xf32, #tpu.memory_space<vmem>>, vector<1x1x50xf32>
    %63 = vector.shape_cast %62 : vector<1x1x50xf32> to vector<1x50xf32>
    %64 = vector.broadcast %63 : vector<1x50xf32> to vector<256x50xf32>
    %65 = arith.addf %61, %64 : vector<256x50xf32>
    %cst_53 = arith.constant 0.000000e+00 : f32
    %66 = vector.broadcast %cst_53 : f32 to vector<256x50xf32>
    %67 = arith.cmpf oge, %65, %66 : vector<256x50xf32>
    %cst_54 = arith.constant 0.00999999977 : f32
    %68 = vector.broadcast %cst_54 : f32 to vector<256x50xf32>
    %69 = arith.mulf %68, %65 : vector<256x50xf32>
    %70 = arith.select %67, %65, %69 : vector<256x50xi1>, vector<256x50xf32>
    %c2_55 = arith.constant 2 : index
    %c0_56 = arith.constant 0 : index
    %c0_57 = arith.constant 0 : index
    %71 = vector.load %arg4[%c2_55, %c0_56, %c0_57] : memref<9x50x105xf32, #tpu.memory_space<vmem>>, vector<1x50x105xf32>
    %72 = vector.shape_cast %71 : vector<1x50x105xf32> to vector<50x105xf32>
    %cst_58 = arith.constant dense<0.000000e+00> : vector<256x105xf32>
    %73 = tpu.matmul %70, %72, %cst_58 {dimension_numbers = #tpu.dot_dimension_numbers<[1], [0], [0], [1], [0, 0, 1, 1], [], []>} : vector<256x50xf32>, vector<50x105xf32>, vector<256x105xf32> -> vector<256x105xf32>
    %c2_59 = arith.constant 2 : index
    %c0_60 = arith.constant 0 : index
    %c0_61 = arith.constant 0 : index
    %74 = vector.load %arg5[%c2_59, %c0_60, %c0_61] : memref<9x1x105xf32, #tpu.memory_space<vmem>>, vector<1x1x105xf32>
    %75 = vector.shape_cast %74 : vector<1x1x105xf32> to vector<1x105xf32>
    %76 = vector.broadcast %75 : vector<1x105xf32> to vector<256x105xf32>
    %77 = arith.addf %73, %76 : vector<256x105xf32>
    %cst_62 = arith.constant 0.000000e+00 : f32
    %78 = vector.broadcast %cst_62 : f32 to vector<256x105xf32>
    %79 = arith.cmpf oge, %77, %78 : vector<256x105xf32>
    %cst_63 = arith.constant 0.00999999977 : f32
    %80 = vector.broadcast %cst_63 : f32 to vector<256x105xf32>
    %81 = arith.mulf %80, %77 : vector<256x105xf32>
    %82 = arith.select %79, %77, %81 : vector<256x105xi1>, vector<256x105xf32>
    %cst_64 = arith.constant dense<0.000000e+00> : vector<256x15xf32>
    %83 = tpu.matmul %82, %6, %cst_64 {dimension_numbers = #tpu.dot_dimension_numbers<[1], [0], [0], [1], [0, 0, 1, 1], [], []>} : vector<256x105xf32>, vector<105x15xf32>, vector<256x15xf32> -> vector<256x15xf32>
    %84 = arith.addf %58, %83 : vector<256x15xf32>
    %c1_65 = arith.constant 1 : index
    %c0_66 = arith.constant 0 : index
    %c0_67 = arith.constant 0 : index
    %85 = vector.load %arg6[%c1_65, %c0_66, %c0_67] : memref<3x105x15xf32, #tpu.memory_space<vmem>>, vector<1x105x15xf32>
    %86 = vector.shape_cast %85 : vector<1x105x15xf32> to vector<105x15xf32>
    %c3 = arith.constant 3 : index
    %c0_68 = arith.constant 0 : index
    %c0_69 = arith.constant 0 : index
    %87 = vector.load %arg2[%c3, %c0_68, %c0_69] : memref<9x15x50xf32, #tpu.memory_space<vmem>>, vector<1x15x50xf32>
    %88 = vector.shape_cast %87 : vector<1x15x50xf32> to vector<15x50xf32>
    %cst_70 = arith.constant dense<0.000000e+00> : vector<256x50xf32>
    %89 = tpu.matmul %84, %88, %cst_70 {dimension_numbers = #tpu.dot_dimension_numbers<[1], [0], [0], [1], [0, 0, 1, 1], [], []>} : vector<256x15xf32>, vector<15x50xf32>, vector<256x50xf32> -> vector<256x50xf32>
    %c3_71 = arith.constant 3 : index
    %c0_72 = arith.constant 0 : index
    %c0_73 = arith.constant 0 : index
    %90 = vector.load %arg3[%c3_71, %c0_72, %c0_73] : memref<9x1x50xf32, #tpu.memory_space<vmem>>, vector<1x1x50xf32>
    %91 = vector.shape_cast %90 : vector<1x1x50xf32> to vector<1x50xf32>
    %92 = vector.broadcast %91 : vector<1x50xf32> to vector<256x50xf32>
    %93 = arith.addf %89, %92 : vector<256x50xf32>
    %cst_74 = arith.constant 0.000000e+00 : f32
    %94 = vector.broadcast %cst_74 : f32 to vector<256x50xf32>
    %95 = arith.cmpf oge, %93, %94 : vector<256x50xf32>
    %cst_75 = arith.constant 0.00999999977 : f32
    %96 = vector.broadcast %cst_75 : f32 to vector<256x50xf32>
    %97 = arith.mulf %96, %93 : vector<256x50xf32>
    %98 = arith.select %95, %93, %97 : vector<256x50xi1>, vector<256x50xf32>
    %c3_76 = arith.constant 3 : index
    %c0_77 = arith.constant 0 : index
    %c0_78 = arith.constant 0 : index
    %99 = vector.load %arg4[%c3_76, %c0_77, %c0_78] : memref<9x50x105xf32, #tpu.memory_space<vmem>>, vector<1x50x105xf32>
    %100 = vector.shape_cast %99 : vector<1x50x105xf32> to vector<50x105xf32>
    %cst_79 = arith.constant dense<0.000000e+00> : vector<256x105xf32>
    %101 = tpu.matmul %98, %100, %cst_79 {dimension_numbers = #tpu.dot_dimension_numbers<[1], [0], [0], [1], [0, 0, 1, 1], [], []>} : vector<256x50xf32>, vector<50x105xf32>, vector<256x105xf32> -> vector<256x105xf32>
    %c3_80 = arith.constant 3 : index
    %c0_81 = arith.constant 0 : index
    %c0_82 = arith.constant 0 : index
    %102 = vector.load %arg5[%c3_80, %c0_81, %c0_82] : memref<9x1x105xf32, #tpu.memory_space<vmem>>, vector<1x1x105xf32>
    %103 = vector.shape_cast %102 : vector<1x1x105xf32> to vector<1x105xf32>
    %104 = vector.broadcast %103 : vector<1x105xf32> to vector<256x105xf32>
    %105 = arith.addf %101, %104 : vector<256x105xf32>
    %cst_83 = arith.constant 0.000000e+00 : f32
    %106 = vector.broadcast %cst_83 : f32 to vector<256x105xf32>
    %107 = arith.cmpf oge, %105, %106 : vector<256x105xf32>
    %cst_84 = arith.constant 0.00999999977 : f32
    %108 = vector.broadcast %cst_84 : f32 to vector<256x105xf32>
    %109 = arith.mulf %108, %105 : vector<256x105xf32>
    %110 = arith.select %107, %105, %109 : vector<256x105xi1>, vector<256x105xf32>
    %cst_85 = arith.constant dense<0.000000e+00> : vector<256x15xf32>
    %111 = tpu.matmul %110, %86, %cst_85 {dimension_numbers = #tpu.dot_dimension_numbers<[1], [0], [0], [1], [0, 0, 1, 1], [], []>} : vector<256x105xf32>, vector<105x15xf32>, vector<256x15xf32> -> vector<256x15xf32>
    %112 = arith.addf %84, %111 : vector<256x15xf32>
    %c4 = arith.constant 4 : index
    %c0_86 = arith.constant 0 : index
    %c0_87 = arith.constant 0 : index
    %113 = vector.load %arg2[%c4, %c0_86, %c0_87] : memref<9x15x50xf32, #tpu.memory_space<vmem>>, vector<1x15x50xf32>
    %114 = vector.shape_cast %113 : vector<1x15x50xf32> to vector<15x50xf32>
    %cst_88 = arith.constant dense<0.000000e+00> : vector<256x50xf32>
    %115 = tpu.matmul %112, %114, %cst_88 {dimension_numbers = #tpu.dot_dimension_numbers<[1], [0], [0], [1], [0, 0, 1, 1], [], []>} : vector<256x15xf32>, vector<15x50xf32>, vector<256x50xf32> -> vector<256x50xf32>
    %c4_89 = arith.constant 4 : index
    %c0_90 = arith.constant 0 : index
    %c0_91 = arith.constant 0 : index
    %116 = vector.load %arg3[%c4_89, %c0_90, %c0_91] : memref<9x1x50xf32, #tpu.memory_space<vmem>>, vector<1x1x50xf32>
    %117 = vector.shape_cast %116 : vector<1x1x50xf32> to vector<1x50xf32>
    %118 = vector.broadcast %117 : vector<1x50xf32> to vector<256x50xf32>
    %119 = arith.addf %115, %118 : vector<256x50xf32>
    %cst_92 = arith.constant 0.000000e+00 : f32
    %120 = vector.broadcast %cst_92 : f32 to vector<256x50xf32>
    %121 = arith.cmpf oge, %119, %120 : vector<256x50xf32>
    %cst_93 = arith.constant 0.00999999977 : f32
    %122 = vector.broadcast %cst_93 : f32 to vector<256x50xf32>
    %123 = arith.mulf %122, %119 : vector<256x50xf32>
    %124 = arith.select %121, %119, %123 : vector<256x50xi1>, vector<256x50xf32>
    %c4_94 = arith.constant 4 : index
    %c0_95 = arith.constant 0 : index
    %c0_96 = arith.constant 0 : index
    %125 = vector.load %arg4[%c4_94, %c0_95, %c0_96] : memref<9x50x105xf32, #tpu.memory_space<vmem>>, vector<1x50x105xf32>
    %126 = vector.shape_cast %125 : vector<1x50x105xf32> to vector<50x105xf32>
    %cst_97 = arith.constant dense<0.000000e+00> : vector<256x105xf32>
    %127 = tpu.matmul %124, %126, %cst_97 {dimension_numbers = #tpu.dot_dimension_numbers<[1], [0], [0], [1], [0, 0, 1, 1], [], []>} : vector<256x50xf32>, vector<50x105xf32>, vector<256x105xf32> -> vector<256x105xf32>
    %c4_98 = arith.constant 4 : index
    %c0_99 = arith.constant 0 : index
    %c0_100 = arith.constant 0 : index
    %128 = vector.load %arg5[%c4_98, %c0_99, %c0_100] : memref<9x1x105xf32, #tpu.memory_space<vmem>>, vector<1x1x105xf32>
    %129 = vector.shape_cast %128 : vector<1x1x105xf32> to vector<1x105xf32>
    %130 = vector.broadcast %129 : vector<1x105xf32> to vector<256x105xf32>
    %131 = arith.addf %127, %130 : vector<256x105xf32>
    %cst_101 = arith.constant 0.000000e+00 : f32
    %132 = vector.broadcast %cst_101 : f32 to vector<256x105xf32>
    %133 = arith.cmpf oge, %131, %132 : vector<256x105xf32>
    %cst_102 = arith.constant 0.00999999977 : f32
    %134 = vector.broadcast %cst_102 : f32 to vector<256x105xf32>
    %135 = arith.mulf %134, %131 : vector<256x105xf32>
    %136 = arith.select %133, %131, %135 : vector<256x105xi1>, vector<256x105xf32>
    %cst_103 = arith.constant dense<0.000000e+00> : vector<256x15xf32>
    %137 = tpu.matmul %136, %86, %cst_103 {dimension_numbers = #tpu.dot_dimension_numbers<[1], [0], [0], [1], [0, 0, 1, 1], [], []>} : vector<256x105xf32>, vector<105x15xf32>, vector<256x15xf32> -> vector<256x15xf32>
    %138 = arith.addf %112, %137 : vector<256x15xf32>
    %c5 = arith.constant 5 : index
    %c0_104 = arith.constant 0 : index
    %c0_105 = arith.constant 0 : index
    %139 = vector.load %arg2[%c5, %c0_104, %c0_105] : memref<9x15x50xf32, #tpu.memory_space<vmem>>, vector<1x15x50xf32>
    %140 = vector.shape_cast %139 : vector<1x15x50xf32> to vector<15x50xf32>
    %cst_106 = arith.constant dense<0.000000e+00> : vector<256x50xf32>
    %141 = tpu.matmul %138, %140, %cst_106 {dimension_numbers = #tpu.dot_dimension_numbers<[1], [0], [0], [1], [0, 0, 1, 1], [], []>} : vector<256x15xf32>, vector<15x50xf32>, vector<256x50xf32> -> vector<256x50xf32>
    %c5_107 = arith.constant 5 : index
    %c0_108 = arith.constant 0 : index
    %c0_109 = arith.constant 0 : index
    %142 = vector.load %arg3[%c5_107, %c0_108, %c0_109] : memref<9x1x50xf32, #tpu.memory_space<vmem>>, vector<1x1x50xf32>
    %143 = vector.shape_cast %142 : vector<1x1x50xf32> to vector<1x50xf32>
    %144 = vector.broadcast %143 : vector<1x50xf32> to vector<256x50xf32>
    %145 = arith.addf %141, %144 : vector<256x50xf32>
    %cst_110 = arith.constant 0.000000e+00 : f32
    %146 = vector.broadcast %cst_110 : f32 to vector<256x50xf32>
    %147 = arith.cmpf oge, %145, %146 : vector<256x50xf32>
    %cst_111 = arith.constant 0.00999999977 : f32
    %148 = vector.broadcast %cst_111 : f32 to vector<256x50xf32>
    %149 = arith.mulf %148, %145 : vector<256x50xf32>
    %150 = arith.select %147, %145, %149 : vector<256x50xi1>, vector<256x50xf32>
    %c5_112 = arith.constant 5 : index
    %c0_113 = arith.constant 0 : index
    %c0_114 = arith.constant 0 : index
    %151 = vector.load %arg4[%c5_112, %c0_113, %c0_114] : memref<9x50x105xf32, #tpu.memory_space<vmem>>, vector<1x50x105xf32>
    %152 = vector.shape_cast %151 : vector<1x50x105xf32> to vector<50x105xf32>
    %cst_115 = arith.constant dense<0.000000e+00> : vector<256x105xf32>
    %153 = tpu.matmul %150, %152, %cst_115 {dimension_numbers = #tpu.dot_dimension_numbers<[1], [0], [0], [1], [0, 0, 1, 1], [], []>} : vector<256x50xf32>, vector<50x105xf32>, vector<256x105xf32> -> vector<256x105xf32>
    %c5_116 = arith.constant 5 : index
    %c0_117 = arith.constant 0 : index
    %c0_118 = arith.constant 0 : index
    %154 = vector.load %arg5[%c5_116, %c0_117, %c0_118] : memref<9x1x105xf32, #tpu.memory_space<vmem>>, vector<1x1x105xf32>
    %155 = vector.shape_cast %154 : vector<1x1x105xf32> to vector<1x105xf32>
    %156 = vector.broadcast %155 : vector<1x105xf32> to vector<256x105xf32>
    %157 = arith.addf %153, %156 : vector<256x105xf32>
    %cst_119 = arith.constant 0.000000e+00 : f32
    %158 = vector.broadcast %cst_119 : f32 to vector<256x105xf32>
    %159 = arith.cmpf oge, %157, %158 : vector<256x105xf32>
    %cst_120 = arith.constant 0.00999999977 : f32
    %160 = vector.broadcast %cst_120 : f32 to vector<256x105xf32>
    %161 = arith.mulf %160, %157 : vector<256x105xf32>
    %162 = arith.select %159, %157, %161 : vector<256x105xi1>, vector<256x105xf32>
    %cst_121 = arith.constant dense<0.000000e+00> : vector<256x15xf32>
    %163 = tpu.matmul %162, %86, %cst_121 {dimension_numbers = #tpu.dot_dimension_numbers<[1], [0], [0], [1], [0, 0, 1, 1], [], []>} : vector<256x105xf32>, vector<105x15xf32>, vector<256x15xf32> -> vector<256x15xf32>
    %164 = arith.addf %138, %163 : vector<256x15xf32>
    %c2_122 = arith.constant 2 : index
    %c0_123 = arith.constant 0 : index
    %c0_124 = arith.constant 0 : index
    %165 = vector.load %arg6[%c2_122, %c0_123, %c0_124] : memref<3x105x15xf32, #tpu.memory_space<vmem>>, vector<1x105x15xf32>
    %166 = vector.shape_cast %165 : vector<1x105x15xf32> to vector<105x15xf32>
    %c6 = arith.constant 6 : index
    %c0_125 = arith.constant 0 : index
    %c0_126 = arith.constant 0 : index
    %167 = vector.load %arg2[%c6, %c0_125, %c0_126] : memref<9x15x50xf32, #tpu.memory_space<vmem>>, vector<1x15x50xf32>
    %168 = vector.shape_cast %167 : vector<1x15x50xf32> to vector<15x50xf32>
    %cst_127 = arith.constant dense<0.000000e+00> : vector<256x50xf32>
    %169 = tpu.matmul %164, %168, %cst_127 {dimension_numbers = #tpu.dot_dimension_numbers<[1], [0], [0], [1], [0, 0, 1, 1], [], []>} : vector<256x15xf32>, vector<15x50xf32>, vector<256x50xf32> -> vector<256x50xf32>
    %c6_128 = arith.constant 6 : index
    %c0_129 = arith.constant 0 : index
    %c0_130 = arith.constant 0 : index
    %170 = vector.load %arg3[%c6_128, %c0_129, %c0_130] : memref<9x1x50xf32, #tpu.memory_space<vmem>>, vector<1x1x50xf32>
    %171 = vector.shape_cast %170 : vector<1x1x50xf32> to vector<1x50xf32>
    %172 = vector.broadcast %171 : vector<1x50xf32> to vector<256x50xf32>
    %173 = arith.addf %169, %172 : vector<256x50xf32>
    %cst_131 = arith.constant 0.000000e+00 : f32
    %174 = vector.broadcast %cst_131 : f32 to vector<256x50xf32>
    %175 = arith.cmpf oge, %173, %174 : vector<256x50xf32>
    %cst_132 = arith.constant 0.00999999977 : f32
    %176 = vector.broadcast %cst_132 : f32 to vector<256x50xf32>
    %177 = arith.mulf %176, %173 : vector<256x50xf32>
    %178 = arith.select %175, %173, %177 : vector<256x50xi1>, vector<256x50xf32>
    %c6_133 = arith.constant 6 : index
    %c0_134 = arith.constant 0 : index
    %c0_135 = arith.constant 0 : index
    %179 = vector.load %arg4[%c6_133, %c0_134, %c0_135] : memref<9x50x105xf32, #tpu.memory_space<vmem>>, vector<1x50x105xf32>
    %180 = vector.shape_cast %179 : vector<1x50x105xf32> to vector<50x105xf32>
    %cst_136 = arith.constant dense<0.000000e+00> : vector<256x105xf32>
    %181 = tpu.matmul %178, %180, %cst_136 {dimension_numbers = #tpu.dot_dimension_numbers<[1], [0], [0], [1], [0, 0, 1, 1], [], []>} : vector<256x50xf32>, vector<50x105xf32>, vector<256x105xf32> -> vector<256x105xf32>
    %c6_137 = arith.constant 6 : index
    %c0_138 = arith.constant 0 : index
    %c0_139 = arith.constant 0 : index
    %182 = vector.load %arg5[%c6_137, %c0_138, %c0_139] : memref<9x1x105xf32, #tpu.memory_space<vmem>>, vector<1x1x105xf32>
    %183 = vector.shape_cast %182 : vector<1x1x105xf32> to vector<1x105xf32>
    %184 = vector.broadcast %183 : vector<1x105xf32> to vector<256x105xf32>
    %185 = arith.addf %181, %184 : vector<256x105xf32>
    %cst_140 = arith.constant 0.000000e+00 : f32
    %186 = vector.broadcast %cst_140 : f32 to vector<256x105xf32>
    %187 = arith.cmpf oge, %185, %186 : vector<256x105xf32>
    %cst_141 = arith.constant 0.00999999977 : f32
    %188 = vector.broadcast %cst_141 : f32 to vector<256x105xf32>
    %189 = arith.mulf %188, %185 : vector<256x105xf32>
    %190 = arith.select %187, %185, %189 : vector<256x105xi1>, vector<256x105xf32>
    %cst_142 = arith.constant dense<0.000000e+00> : vector<256x15xf32>
    %191 = tpu.matmul %190, %166, %cst_142 {dimension_numbers = #tpu.dot_dimension_numbers<[1], [0], [0], [1], [0, 0, 1, 1], [], []>} : vector<256x105xf32>, vector<105x15xf32>, vector<256x15xf32> -> vector<256x15xf32>
    %192 = arith.addf %164, %191 : vector<256x15xf32>
    %c7 = arith.constant 7 : index
    %c0_143 = arith.constant 0 : index
    %c0_144 = arith.constant 0 : index
    %193 = vector.load %arg2[%c7, %c0_143, %c0_144] : memref<9x15x50xf32, #tpu.memory_space<vmem>>, vector<1x15x50xf32>
    %194 = vector.shape_cast %193 : vector<1x15x50xf32> to vector<15x50xf32>
    %cst_145 = arith.constant dense<0.000000e+00> : vector<256x50xf32>
    %195 = tpu.matmul %192, %194, %cst_145 {dimension_numbers = #tpu.dot_dimension_numbers<[1], [0], [0], [1], [0, 0, 1, 1], [], []>} : vector<256x15xf32>, vector<15x50xf32>, vector<256x50xf32> -> vector<256x50xf32>
    %c7_146 = arith.constant 7 : index
    %c0_147 = arith.constant 0 : index
    %c0_148 = arith.constant 0 : index
    %196 = vector.load %arg3[%c7_146, %c0_147, %c0_148] : memref<9x1x50xf32, #tpu.memory_space<vmem>>, vector<1x1x50xf32>
    %197 = vector.shape_cast %196 : vector<1x1x50xf32> to vector<1x50xf32>
    %198 = vector.broadcast %197 : vector<1x50xf32> to vector<256x50xf32>
    %199 = arith.addf %195, %198 : vector<256x50xf32>
    %cst_149 = arith.constant 0.000000e+00 : f32
    %200 = vector.broadcast %cst_149 : f32 to vector<256x50xf32>
    %201 = arith.cmpf oge, %199, %200 : vector<256x50xf32>
    %cst_150 = arith.constant 0.00999999977 : f32
    %202 = vector.broadcast %cst_150 : f32 to vector<256x50xf32>
    %203 = arith.mulf %202, %199 : vector<256x50xf32>
    %204 = arith.select %201, %199, %203 : vector<256x50xi1>, vector<256x50xf32>
    %c7_151 = arith.constant 7 : index
    %c0_152 = arith.constant 0 : index
    %c0_153 = arith.constant 0 : index
    %205 = vector.load %arg4[%c7_151, %c0_152, %c0_153] : memref<9x50x105xf32, #tpu.memory_space<vmem>>, vector<1x50x105xf32>
    %206 = vector.shape_cast %205 : vector<1x50x105xf32> to vector<50x105xf32>
    %cst_154 = arith.constant dense<0.000000e+00> : vector<256x105xf32>
    %207 = tpu.matmul %204, %206, %cst_154 {dimension_numbers = #tpu.dot_dimension_numbers<[1], [0], [0], [1], [0, 0, 1, 1], [], []>} : vector<256x50xf32>, vector<50x105xf32>, vector<256x105xf32> -> vector<256x105xf32>
    %c7_155 = arith.constant 7 : index
    %c0_156 = arith.constant 0 : index
    %c0_157 = arith.constant 0 : index
    %208 = vector.load %arg5[%c7_155, %c0_156, %c0_157] : memref<9x1x105xf32, #tpu.memory_space<vmem>>, vector<1x1x105xf32>
    %209 = vector.shape_cast %208 : vector<1x1x105xf32> to vector<1x105xf32>
    %210 = vector.broadcast %209 : vector<1x105xf32> to vector<256x105xf32>
    %211 = arith.addf %207, %210 : vector<256x105xf32>
    %cst_158 = arith.constant 0.000000e+00 : f32
    %212 = vector.broadcast %cst_158 : f32 to vector<256x105xf32>
    %213 = arith.cmpf oge, %211, %212 : vector<256x105xf32>
    %cst_159 = arith.constant 0.00999999977 : f32
    %214 = vector.broadcast %cst_159 : f32 to vector<256x105xf32>
    %215 = arith.mulf %214, %211 : vector<256x105xf32>
    %216 = arith.select %213, %211, %215 : vector<256x105xi1>, vector<256x105xf32>
    %cst_160 = arith.constant dense<0.000000e+00> : vector<256x15xf32>
    %217 = tpu.matmul %216, %166, %cst_160 {dimension_numbers = #tpu.dot_dimension_numbers<[1], [0], [0], [1], [0, 0, 1, 1], [], []>} : vector<256x105xf32>, vector<105x15xf32>, vector<256x15xf32> -> vector<256x15xf32>
    %218 = arith.addf %192, %217 : vector<256x15xf32>
    %c8 = arith.constant 8 : index
    %c0_161 = arith.constant 0 : index
    %c0_162 = arith.constant 0 : index
    %219 = vector.load %arg2[%c8, %c0_161, %c0_162] : memref<9x15x50xf32, #tpu.memory_space<vmem>>, vector<1x15x50xf32>
    %220 = vector.shape_cast %219 : vector<1x15x50xf32> to vector<15x50xf32>
    %cst_163 = arith.constant dense<0.000000e+00> : vector<256x50xf32>
    %221 = tpu.matmul %218, %220, %cst_163 {dimension_numbers = #tpu.dot_dimension_numbers<[1], [0], [0], [1], [0, 0, 1, 1], [], []>} : vector<256x15xf32>, vector<15x50xf32>, vector<256x50xf32> -> vector<256x50xf32>
    %c8_164 = arith.constant 8 : index
    %c0_165 = arith.constant 0 : index
    %c0_166 = arith.constant 0 : index
    %222 = vector.load %arg3[%c8_164, %c0_165, %c0_166] : memref<9x1x50xf32, #tpu.memory_space<vmem>>, vector<1x1x50xf32>
    %223 = vector.shape_cast %222 : vector<1x1x50xf32> to vector<1x50xf32>
    %224 = vector.broadcast %223 : vector<1x50xf32> to vector<256x50xf32>
    %225 = arith.addf %221, %224 : vector<256x50xf32>
    %cst_167 = arith.constant 0.000000e+00 : f32
    %226 = vector.broadcast %cst_167 : f32 to vector<256x50xf32>
    %227 = arith.cmpf oge, %225, %226 : vector<256x50xf32>
    %cst_168 = arith.constant 0.00999999977 : f32
    %228 = vector.broadcast %cst_168 : f32 to vector<256x50xf32>
    %229 = arith.mulf %228, %225 : vector<256x50xf32>
    %230 = arith.select %227, %225, %229 : vector<256x50xi1>, vector<256x50xf32>
    %c8_169 = arith.constant 8 : index
    %c0_170 = arith.constant 0 : index
    %c0_171 = arith.constant 0 : index
    %231 = vector.load %arg4[%c8_169, %c0_170, %c0_171] : memref<9x50x105xf32, #tpu.memory_space<vmem>>, vector<1x50x105xf32>
    %232 = vector.shape_cast %231 : vector<1x50x105xf32> to vector<50x105xf32>
    %cst_172 = arith.constant dense<0.000000e+00> : vector<256x105xf32>
    %233 = tpu.matmul %230, %232, %cst_172 {dimension_numbers = #tpu.dot_dimension_numbers<[1], [0], [0], [1], [0, 0, 1, 1], [], []>} : vector<256x50xf32>, vector<50x105xf32>, vector<256x105xf32> -> vector<256x105xf32>
    %c8_173 = arith.constant 8 : index
    %c0_174 = arith.constant 0 : index
    %c0_175 = arith.constant 0 : index
    %234 = vector.load %arg5[%c8_173, %c0_174, %c0_175] : memref<9x1x105xf32, #tpu.memory_space<vmem>>, vector<1x1x105xf32>
    %235 = vector.shape_cast %234 : vector<1x1x105xf32> to vector<1x105xf32>
    %236 = vector.broadcast %235 : vector<1x105xf32> to vector<256x105xf32>
    %237 = arith.addf %233, %236 : vector<256x105xf32>
    %cst_176 = arith.constant 0.000000e+00 : f32
    %238 = vector.broadcast %cst_176 : f32 to vector<256x105xf32>
    %239 = arith.cmpf oge, %237, %238 : vector<256x105xf32>
    %cst_177 = arith.constant 0.00999999977 : f32
    %240 = vector.broadcast %cst_177 : f32 to vector<256x105xf32>
    %241 = arith.mulf %240, %237 : vector<256x105xf32>
    %242 = arith.select %239, %237, %241 : vector<256x105xi1>, vector<256x105xf32>
    %cst_178 = arith.constant dense<0.000000e+00> : vector<256x15xf32>
    %243 = tpu.matmul %242, %166, %cst_178 {dimension_numbers = #tpu.dot_dimension_numbers<[1], [0], [0], [1], [0, 0, 1, 1], [], []>} : vector<256x105xf32>, vector<105x15xf32>, vector<256x15xf32> -> vector<256x15xf32>
    %244 = arith.addf %218, %243 : vector<256x15xf32>
    %245 = vector.extract_strided_slice %244 {offsets = [0, 3], sizes = [256, 12], strides = [1, 1]} : vector<256x15xf32> to vector<256x12xf32>
    %cst_179 = arith.constant dense<0.000000e+00> : vector<256xf32>
    %246 = vector.multi_reduction <add>, %245, %cst_179 [1] : vector<256x12xf32> to vector<256xf32>
    %247 = vector.shape_cast %246 : vector<256xf32> to vector<256x1xf32>
    %cst_180 = arith.constant 0.333333343 : f32
    %248 = vector.broadcast %cst_180 : f32 to vector<256x1xf32>
    %249 = arith.mulf %247, %248 : vector<256x1xf32>
    %250 = vector.extract_strided_slice %244 {offsets = [0, 0], sizes = [256, 3], strides = [1, 1]} : vector<256x15xf32> to vector<256x3xf32>
    %251 = vector.broadcast %249 : vector<256x1xf32> to vector<256x3xf32>
    %252 = arith.addf %250, %251 : vector<256x3xf32>
    %c0_181 = arith.constant 0 : index
    %c0_182 = arith.constant 0 : index
    %253 = vector.load %arg7[%c0_181, %c0_182] : memref<256x3xf32, #tpu.memory_space<vmem>>, vector<256x3xf32>
    tpu.vector_store %arg7[%c0_181, %c0_182], %252 {strides = array<i32>} : memref<256x3xf32, #tpu.memory_space<vmem>>, vector<256x3xf32>,
    return
  }
  func.func @transform_0(%arg0: i32) -> (i32, i32) {
    %c0_i32 = arith.constant 0 : i32
    %c0_i32_0 = arith.constant 0 : i32
    return %arg0, %c0_i32 : i32, i32
  }
  func.func @transform_1(%arg0: i32) -> (i32, i32, i32) {
    %c0_i32 = arith.constant 0 : i32
    %c0_i32_0 = arith.constant 0 : i32
    %c0_i32_1 = arith.constant 0 : i32
    %c0_i32_2 = arith.constant 0 : i32
    return %c0_i32, %c0_i32_0, %c0_i32_1 : i32, i32, i32
  }
  func.func @transform_2(%arg0: i32) -> (i32, i32, i32) {
    %c0_i32 = arith.constant 0 : i32
    %c0_i32_0 = arith.constant 0 : i32
    %c0_i32_1 = arith.constant 0 : i32
    %c0_i32_2 = arith.constant 0 : i32
    return %c0_i32, %c0_i32_0, %c0_i32_1 : i32, i32, i32
  }
  func.func @transform_3(%arg0: i32) -> (i32, i32, i32) {
    %c0_i32 = arith.constant 0 : i32
    %c0_i32_0 = arith.constant 0 : i32
    %c0_i32_1 = arith.constant 0 : i32
    %c0_i32_2 = arith.constant 0 : i32
    return %c0_i32, %c0_i32_0, %c0_i32_1 : i32, i32, i32
  }
  func.func @transform_4(%arg0: i32) -> (i32, i32, i32) {
    %c0_i32 = arith.constant 0 : i32
    %c0_i32_0 = arith.constant 0 : i32
    %c0_i32_1 = arith.constant 0 : i32
    %c0_i32_2 = arith.constant 0 : i32
    return %c0_i32, %c0_i32_0, %c0_i32_1 : i32, i32, i32
  }
  func.func @transform_5(%arg0: i32) -> (i32, i32, i32) {
    %c0_i32 = arith.constant 0 : i32
    %c0_i32_0 = arith.constant 0 : i32
    %c0_i32_1 = arith.constant 0 : i32
    %c0_i32_2 = arith.constant 0 : i32
    return %c0_i32, %c0_i32_0, %c0_i32_1 : i32, i32, i32
  }
  func.func @transform_6(%arg0: i32) -> (i32, i32) {
    %c0_i32 = arith.constant 0 : i32
    %c0_i32_0 = arith.constant 0 : i32
    return %arg0, %c0_i32 : i32, i32
  }
}

</mosaic_0001>

<llo_original>
// kernel: tpu_custom_call.1
$region0: #{tpu_custom_call.1}
  #allocation0 [shape = 'u32[]', space=smem, size = 0x4, offset = 0x4, fixed_abs, tag = 'smem constant byte address 0x4 - core index']
  #allocation1 [shape = 'u32[144,128]{1,0:T(1,128)}', space=vmem, size = 0x12000, scoped, tag = 'internal scratch']
  #allocation2 [shape = 'f32[256,15]{1,0:T(8,128)}', space=vmem, size = 0x20000, scoped, tag = 'scratch operand']
  %s0 = inlined_call_operand.vmem [shape: f32[512,3], index: 0, kind: input, shape index: {}]
  %s1 = inlined_call_operand.vmem [shape: f32[9,15,50], index: 1, kind: input, shape index: {}]
  %s2 = inlined_call_operand.vmem [shape: f32[9,1,50], index: 2, kind: input, shape index: {}]
  %s3 = inlined_call_operand.vmem [shape: f32[9,50,105], index: 3, kind: input, shape index: {}]
  %s4 = inlined_call_operand.vmem [shape: f32[9,1,105], index: 4, kind: input, shape index: {}]
  %s5 = inlined_call_operand.vmem [shape: f32[3,105,15], index: 5, kind: input, shape index: {}]
  %s6 = inlined_call_operand.vmem [shape: f32[512,3], index: 6, kind: output, shape index: {}]
  %s7 = sld [smem:[#allocation0]]
  $region57: #{tpu_custom_call.1} parent=0
    _
  %s9 = ssub.s32 1, %s7
  %s10 = scalar_select 0, %s9, %s7
  loop: start=0, step=1, limit=4
  $region2: #{tpu_custom_call.1} parent=0 // loop_pre_header
    _
  $region3: #{tpu_custom_call.1} parent=0 // loop_header
    %s12 = sphi 0, %s16
    %p13 = scmp.ge.s32.totalorder %s12, 4
    %s22 = sphi 0, %s24
    %s25 = sphi 0, %s22
    %s26 = sphi 0, %s25
    %s42 = sphi 0, %s26
    %s46 = sphi 0, %s46
    %s48 = sphi 0, %s46
    %s49 = sphi 0, %s48
    %s63 = sphi 0, %s49
    %s67 = sphi 0, %s67
    %s69 = sphi 0, %s67
    %s70 = sphi 0, %s69
    %s84 = sphi 0, %s70
    %s88 = sphi 0, %s88
    %s90 = sphi 0, %s88
    %s91 = sphi 0, %s90
    %s105 = sphi 0, %s91
    %s109 = sphi 0, %s109
    %s111 = sphi 0, %s109
    %s112 = sphi 0, %s111
    %s126 = sphi 0, %s112
    %s130 = sphi 0, %s130
    %s132 = sphi 0, %s130
    %s133 = sphi 0, %s132
    %s147 = sphi 0, %s133
    %s153 = sphi 0, %s155
    %s156 = sphi 0, %s153
    %s157 = sphi 0, %s156
    %s173 = sphi 0, %s157
  $region4: #{tpu_custom_call.1} parent=0 // loop_header_branch
    %15 = sbr.rel (%p13) target = $region8
  $region5: #{tpu_custom_call.1} parent=0 // loop_body
    %s17 = ssub.s32 %s12, 1
    %s18 = ssub.s32 %s12, 2
    %s19 = sadd.s32 %s12, 1
    %s20 = ssub.s32 %s12, %s19
    %p21 = scmp.eq.s32.totalorder %s20, 0
    %s23 = sadd.s32 %s22, 1
    %s24 = scalar_select %p21, %s22, %s23
    %p27 = pneg %p21
    %p28 = scmp.eq.s32.totalorder %s12, 1
    %p29 = por %p27, %p28
    %p30 = scmp.ne.s32.totalorder %s22, %s25
    %p31 = scmp.eq.s32.totalorder %s12, 0
    %p32 = por %p30, %p31
    %p33 = scmp.ne.s32.totalorder %s22, %s25
    %p34 = scmp.eq.s32.totalorder %s17, 1
    %p35 = por %p33, %p34
    %p36 = scmp.ne.s32.totalorder %s25, %s26
    %p37 = scmp.eq.s32.totalorder %s17, 0
    %p38 = por %p36, %p37
    %p39 = scmp.ne.s32.totalorder %s25, %s26
    %p40 = scmp.eq.s32.totalorder %s18, 1
    %p41 = por %p39, %p40
    %p43 = scmp.ne.s32.totalorder %s26, %s42
    %p44 = scmp.eq.s32.totalorder %s18, 0
    %p45 = por %p43, %p44
    %s47 = sadd.s32 %s46, 1
    %p50 = scmp.eq.s32.totalorder %s12, 1
    %p51 = scmp.ne.s32.totalorder %s46, %s48
    %p52 = scmp.eq.s32.totalorder %s12, 0
    %p53 = por %p51, %p52
    %p54 = scmp.ne.s32.totalorder %s46, %s48
    %p55 = scmp.eq.s32.totalorder %s17, 1
    %p56 = por %p54, %p55
    %p57 = scmp.ne.s32.totalorder %s48, %s49
    %p58 = scmp.eq.s32.totalorder %s17, 0
    %p59 = por %p57, %p58
    %p60 = scmp.ne.s32.totalorder %s48, %s49
    %p61 = scmp.eq.s32.totalorder %s18, 1
    %p62 = por %p60, %p61
    %p64 = scmp.ne.s32.totalorder %s49, %s63
    %p65 = scmp.eq.s32.totalorder %s18, 0
    %p66 = por %p64, %p65
    %s68 = sadd.s32 %s67, 1
    %p71 = scmp.eq.s32.totalorder %s12, 1
    %p72 = scmp.ne.s32.totalorder %s67, %s69
    %p73 = scmp.eq.s32.totalorder %s12, 0
    %p74 = por %p72, %p73
    %p75 = scmp.ne.s32.totalorder %s67, %s69
    %p76 = scmp.eq.s32.totalorder %s17, 1
    %p77 = por %p75, %p76
    %p78 = scmp.ne.s32.totalorder %s69, %s70
    %p79 = scmp.eq.s32.totalorder %s17, 0
    %p80 = por %p78, %p79
    %p81 = scmp.ne.s32.totalorder %s69, %s70
    %p82 = scmp.eq.s32.totalorder %s18, 1
    %p83 = por %p81, %p82
    %p85 = scmp.ne.s32.totalorder %s70, %s84
    %p86 = scmp.eq.s32.totalorder %s18, 0
    %p87 = por %p85, %p86
    %s89 = sadd.s32 %s88, 1
    %p92 = scmp.eq.s32.totalorder %s12, 1
    %p93 = scmp.ne.s32.totalorder %s88, %s90
    %p94 = scmp.eq.s32.totalorder %s12, 0
    %p95 = por %p93, %p94
    %p96 = scmp.ne.s32.totalorder %s88, %s90
    %p97 = scmp.eq.s32.totalorder %s17, 1
    %p98 = por %p96, %p97
    %p99 = scmp.ne.s32.totalorder %s90, %s91
    %p100 = scmp.eq.s32.totalorder %s17, 0
    %p101 = por %p99, %p100
    %p102 = scmp.ne.s32.totalorder %s90, %s91
    %p103 = scmp.eq.s32.totalorder %s18, 1
    %p104 = por %p102, %p103
    %p106 = scmp.ne.s32.totalorder %s91, %s105
    %p107 = scmp.eq.s32.totalorder %s18, 0
    %p108 = por %p106, %p107
    %s110 = sadd.s32 %s109, 1
    %p113 = scmp.eq.s32.totalorder %s12, 1
    %p114 = scmp.ne.s32.totalorder %s109, %s111
    %p115 = scmp.eq.s32.totalorder %s12, 0
    %p116 = por %p114, %p115
    %p117 = scmp.ne.s32.totalorder %s109, %s111
    %p118 = scmp.eq.s32.totalorder %s17, 1
    %p119 = por %p117, %p118
    %p120 = scmp.ne.s32.totalorder %s111, %s112
    %p121 = scmp.eq.s32.totalorder %s17, 0
    %p122 = por %p120, %p121
    %p123 = scmp.ne.s32.totalorder %s111, %s112
    %p124 = scmp.eq.s32.totalorder %s18, 1
    %p125 = por %p123, %p124
    %p127 = scmp.ne.s32.totalorder %s112, %s126
    %p128 = scmp.eq.s32.totalorder %s18, 0
    %p129 = por %p127, %p128
    %s131 = sadd.s32 %s130, 1
    %p134 = scmp.eq.s32.totalorder %s12, 1
    %p135 = scmp.ne.s32.totalorder %s130, %s132
    %p136 = scmp.eq.s32.totalorder %s12, 0
    %p137 = por %p135, %p136
    %p138 = scmp.ne.s32.totalorder %s130, %s132
    %p139 = scmp.eq.s32.totalorder %s17, 1
    %p140 = por %p138, %p139
    %p141 = scmp.ne.s32.totalorder %s132, %s133
    %p142 = scmp.eq.s32.totalorder %s17, 0
    %p143 = por %p141, %p142
    %p144 = scmp.ne.s32.totalorder %s132, %s133
    %p145 = scmp.eq.s32.totalorder %s18, 1
    %p146 = por %p144, %p145
    %p148 = scmp.ne.s32.totalorder %s133, %s147
    %p149 = scmp.eq.s32.totalorder %s18, 0
    %p150 = por %p148, %p149
    %s151 = ssub.s32 %s12, %s19
    %p152 = scmp.eq.s32.totalorder %s151, 0
    %s154 = sadd.s32 %s153, 1
    %s155 = scalar_select %p152, %s153, %s154
    %p158 = pneg %p152
    %p159 = scmp.eq.s32.totalorder %s12, 1
    %p160 = por %p158, %p159
    %p161 = scmp.ne.s32.totalorder %s153, %s156
    %p162 = scmp.eq.s32.totalorder %s12, 0
    %p163 = por %p161, %p162
    %p164 = scmp.ne.s32.totalorder %s153, %s156
    %p165 = scmp.eq.s32.totalorder %s17, 1
    %p166 = por %p164, %p165
    %p167 = scmp.ne.s32.totalorder %s156, %s157
    %p168 = scmp.eq.s32.totalorder %s17, 0
    %p169 = por %p167, %p168
    %p170 = scmp.ne.s32.totalorder %s156, %s157
    %p171 = scmp.eq.s32.totalorder %s18, 1
    %p172 = por %p170, %p171
    %p174 = scmp.ne.s32.totalorder %s157, %s173
    %p175 = scmp.eq.s32.totalorder %s18, 0
    %p176 = por %p174, %p175
    %p177 = scmp.le.s32.totalorder 1, %s12
    %p178 = scmp.lt.s32.totalorder %s12, 3
    %p179 = pnand %p177, %p178
    %p180 = pneg %p179
    // Predicated region
    $region9: #{tpu_custom_call.1} parent=5 // pred_check
      _
    $region10: #{tpu_custom_call.1} parent=5 // pred_check_branch
      %182 = sbr.rel (%p179) target = $region12
    $region11: #{tpu_custom_call.1} parent=5 // pred_region
      %s183 = ssub.s32 %s12, 1
      // Predicated region
      $region13: #{tpu_custom_call.1} parent=11 // pred_check
        %p184 = pneg %p59
      $region14: #{tpu_custom_call.1} parent=11 // pred_check_branch
        %186 = sbr.rel (%p184) target = $region16
      $region15: #{tpu_custom_call.1} parent=11 // pred_region
        _
      $region16: #{tpu_custom_call.1} parent=11 // pred_fallthru
        _
      // Predicated region
      $region17: #{tpu_custom_call.1} parent=11 // pred_check
        %p187 = pneg %p80
      $region18: #{tpu_custom_call.1} parent=11 // pred_check_branch
        %189 = sbr.rel (%p187) target = $region20
      $region19: #{tpu_custom_call.1} parent=11 // pred_region
        _
      $region20: #{tpu_custom_call.1} parent=11 // pred_fallthru
        _
      // Predicated region
      $region21: #{tpu_custom_call.1} parent=11 // pred_check
        %p190 = pneg %p101
      $region22: #{tpu_custom_call.1} parent=11 // pred_check_branch
        %192 = sbr.rel (%p190) target = $region24
      $region23: #{tpu_custom_call.1} parent=11 // pred_region
        _
      $region24: #{tpu_custom_call.1} parent=11 // pred_fallthru
        _
      // Predicated region
      $region25: #{tpu_custom_call.1} parent=11 // pred_check
        %p193 = pneg %p122
      $region26: #{tpu_custom_call.1} parent=11 // pred_check_branch
        %195 = sbr.rel (%p193) target = $region28
      $region27: #{tpu_custom_call.1} parent=11 // pred_region
        _
      $region28: #{tpu_custom_call.1} parent=11 // pred_fallthru
        _
      // Predicated region
      $region29: #{tpu_custom_call.1} parent=11 // pred_check
        %p196 = pneg %p143
      $region30: #{tpu_custom_call.1} parent=11 // pred_check_branch
        %198 = sbr.rel (%p196) target = $region32
      $region31: #{tpu_custom_call.1} parent=11 // pred_region
        _
      $region32: #{tpu_custom_call.1} parent=11 // pred_fallthru
        _
    $region12: #{tpu_custom_call.1} parent=5 // pred_fallthru
      _
    %p199 = scmp.lt.s32.totalorder %s12, 2
    // Predicated region
    $region33: #{tpu_custom_call.1} parent=5 // pred_check
      %p200 = pneg %p199
    $region34: #{tpu_custom_call.1} parent=5 // pred_check_branch
      %202 = sbr.rel (%p200) target = $region36
    $region35: #{tpu_custom_call.1} parent=5 // pred_region
      // Predicated region
      $region37: #{tpu_custom_call.1} parent=35 // pred_check
        %p203 = pneg %p32
      $region38: #{tpu_custom_call.1} parent=35 // pred_check_branch
        %205 = sbr.rel (%p203) target = $region40
      $region39: #{tpu_custom_call.1} parent=35 // pred_region
        %s206 = smul.u32 32, %s12
        %p207 = scmp.lt.s32.totalorder %s206, 63
        %s208 = scalar_select %p207, %s206, 63
        %s209 = smul.addr %s208, 8
        %s210 = scalar_lea.vmem %s0, %s209
        %s211 = smul.u32 32, %s12
      $region40: #{tpu_custom_call.1} parent=35 // pred_fallthru
        _
    $region36: #{tpu_custom_call.1} parent=5 // pred_fallthru
      _
    %p212 = scmp.le.s32.totalorder 1, %s12
    %p213 = scmp.lt.s32.totalorder %s12, 3
    %p214 = pnand %p212, %p213
    %p215 = pneg %p214
    // Predicated region
    $region41: #{tpu_custom_call.1} parent=5 // pred_check
      _
    $region42: #{tpu_custom_call.1} parent=5 // pred_check_branch
      %217 = sbr.rel (%p214) target = $region44
    $region43: #{tpu_custom_call.1} parent=5 // pred_region
      %s218 = ssub.s32 %s12, 1
      %s219 = smul.u32 32, %s17
      %p220 = scmp.lt.s32.totalorder %s219, 63
      %s221 = scalar_select %p220, %s219, 63
      %s222 = smul.addr %s221, 8
      %s223 = scalar_lea.vmem %s0, %s222
      %p224 = pneg %p38
      %p225 = pneg %p35
      %p226 = pneg %p59
      %p227 = pneg %p56
      %p228 = pneg %p80
      %p229 = pneg %p77
      %p230 = pneg %p101
      %p231 = pneg %p98
      %p232 = pneg %p122
      %p233 = pneg %p119
      %p234 = pneg %p143
      %p235 = pneg %p140
      %p236 = pneg %p169
      %p237 = pneg %p166
      %s238 = smul.u32 32, %s17
      %p239 = scmp.lt.s32.totalorder %s238, 63
      %s240 = scalar_select %p239, %s238, 63
      %s241 = smul.addr %s240, 8
      %s242 = scalar_lea.vmem %s6, %s241
      %s243 = smul.u32 32, %s17
      %p244 = scmp.lt.s32.totalorder %s243, 63
      %s245 = scalar_select %p244, %s243, 63
      %s246 = smul.addr %s245, 8
      %s247 = scalar_lea.vmem %s0, %s246
      %s248 = smul.u32 32, %s17
      %s249 = smul.u32 32, %s17
      %p250 = scmp.lt.s32.totalorder %s249, 63
      %s251 = scalar_select %p250, %s249, 63
      %s252 = smul.addr %s251, 8
      %s253 = scalar_lea.vmem %s6, %s252
      %s254 = smul.u32 32, %s17
      %vm255 = vcmask 121856
      %256 = vst.msk [vmem:[#allocation2] sm:$0xff] %vm255, 0.0
      %257 = vst.msk [vmem:[#allocation2 + $0x8] sm:$0xff] %vm255, 0.0
      %258 = vst.msk [vmem:[#allocation2 + $0x10] sm:$0xff] %vm255, 0.0
      %259 = vst.msk [vmem:[#allocation2 + $0x18] sm:$0xff] %vm255, 0.0
      %260 = vst.msk [vmem:[#allocation2 + $0x20] sm:$0xff] %vm255, 0.0
      %261 = vst.msk [vmem:[#allocation2 + $0x28] sm:$0xff] %vm255, 0.0
      %262 = vst.msk [vmem:[#allocation2 + $0x30] sm:$0xff] %vm255, 0.0
      %263 = vst.msk [vmem:[#allocation2 + $0x38] sm:$0xff] %vm255, 0.0
      %264 = vst.msk [vmem:[#allocation2 + $0x40] sm:$0xff] %vm255, 0.0
      %265 = vst.msk [vmem:[#allocation2 + $0x48] sm:$0xff] %vm255, 0.0
      %266 = vst.msk [vmem:[#allocation2 + $0x50] sm:$0xff] %vm255, 0.0
      %267 = vst.msk [vmem:[#allocation2 + $0x58] sm:$0xff] %vm255, 0.0
      %268 = vst.msk [vmem:[#allocation2 + $0x60] sm:$0xff] %vm255, 0.0
      %269 = vst.msk [vmem:[#allocation2 + $0x68] sm:$0xff] %vm255, 0.0
      %270 = vst.msk [vmem:[#allocation2 + $0x70] sm:$0xff] %vm255, 0.0
      %271 = vst.msk [vmem:[#allocation2 + $0x78] sm:$0xff] %vm255, 0.0
      %272 = vst.msk [vmem:[#allocation2 + $0x80] sm:$0xff] %vm255, 0.0
      %273 = vst.msk [vmem:[#allocation2 + $0x88] sm:$0xff] %vm255, 0.0
      %274 = vst.msk [vmem:[#allocation2 + $0x90] sm:$0xff] %vm255, 0.0
      %275 = vst.msk [vmem:[#allocation2 + $0x98] sm:$0xff] %vm255, 0.0
      %276 = vst.msk [vmem:[#allocation2 + $0xa0] sm:$0xff] %vm255, 0.0
      %277 = vst.msk [vmem:[#allocation2 + $0xa8] sm:$0xff] %vm255, 0.0
      %278 = vst.msk [vmem:[#allocation2 + $0xb0] sm:$0xff] %vm255, 0.0
      %279 = vst.msk [vmem:[#allocation2 + $0xb8] sm:$0xff] %vm255, 0.0
      %280 = vst.msk [vmem:[#allocation2 + $0xc0] sm:$0xff] %vm255, 0.0
      %281 = vst.msk [vmem:[#allocation2 + $0xc8] sm:$0xff] %vm255, 0.0
      %282 = vst.msk [vmem:[#allocation2 + $0xd0] sm:$0xff] %vm255, 0.0
      %283 = vst.msk [vmem:[#allocation2 + $0xd8] sm:$0xff] %vm255, 0.0
      %284 = vst.msk [vmem:[#allocation2 + $0xe0] sm:$0xff] %vm255, 0.0
      %285 = vst.msk [vmem:[#allocation2 + $0xe8] sm:$0xff] %vm255, 0.0
      %286 = vst.msk [vmem:[#allocation2 + $0xf0] sm:$0xff] %vm255, 0.0
      %287 = vst.msk [vmem:[#allocation2 + $0xf8] sm:$0xff] %vm255, 0.0
      %v288 = vld [vmem:[%s247] sm:$0xff]
      %v289 = vld [vmem:[%s247 + $0x8] sm:$0xff]
      %v290 = vld [vmem:[%s247 + $0x10] sm:$0xff]
      %v291 = vld [vmem:[%s247 + $0x18] sm:$0xff]
      %v292 = vld [vmem:[%s247 + $0x20] sm:$0xff]
      %v293 = vld [vmem:[%s247 + $0x28] sm:$0xff]
      %v294 = vld [vmem:[%s247 + $0x30] sm:$0xff]
      %v295 = vld [vmem:[%s247 + $0x38] sm:$0xff]
      %v296 = vld [vmem:[%s247 + $0x40] sm:$0xff]
      %v297 = vld [vmem:[%s247 + $0x48] sm:$0xff]
      %v298 = vld [vmem:[%s247 + $0x50] sm:$0xff]
      %v299 = vld [vmem:[%s247 + $0x58] sm:$0xff]
      %v300 = vld [vmem:[%s247 + $0x60] sm:$0xff]
      %v301 = vld [vmem:[%s247 + $0x68] sm:$0xff]
      %v302 = vld [vmem:[%s247 + $0x70] sm:$0xff]
      %v303 = vld [vmem:[%s247 + $0x78] sm:$0xff]
      %v304 = vld [vmem:[%s247 + $0x80] sm:$0xff]
      %v305 = vld [vmem:[%s247 + $0x88] sm:$0xff]
      %v306 = vld [vmem:[%s247 + $0x90] sm:$0xff]
      %v307 = vld [vmem:[%s247 + $0x98] sm:$0xff]
      %v308 = vld [vmem:[%s247 + $0xa0] sm:$0xff]
      %v309 = vld [vmem:[%s247 + $0xa8] sm:$0xff]
      %v310 = vld [vmem:[%s247 + $0xb0] sm:$0xff]
      %v311 = vld [vmem:[%s247 + $0xb8] sm:$0xff]
      %v312 = vld [vmem:[%s247 + $0xc0] sm:$0xff]
      %v313 = vld [vmem:[%s247 + $0xc8] sm:$0xff]
      %v314 = vld [vmem:[%s247 + $0xd0] sm:$0xff]
      %v315 = vld [vmem:[%s247 + $0xd8] sm:$0xff]
      %v316 = vld [vmem:[%s247 + $0xe0] sm:$0xff]
      %v317 = vld [vmem:[%s247 + $0xe8] sm:$0xff]
      %v318 = vld [vmem:[%s247 + $0xf0] sm:$0xff]
      %v319 = vld [vmem:[%s247 + $0xf8] sm:$0xff]
      %vm320 = vcmask 23552
      %321 = vst.msk [vmem:[#allocation2] sm:$0xff] %vm320, %v288
      %322 = vst.msk [vmem:[#allocation2 + $0x8] sm:$0xff] %vm320, %v289
      %323 = vst.msk [vmem:[#allocation2 + $0x10] sm:$0xff] %vm320, %v290
      %324 = vst.msk [vmem:[#allocation2 + $0x18] sm:$0xff] %vm320, %v291
      %325 = vst.msk [vmem:[#allocation2 + $0x20] sm:$0xff] %vm320, %v292
      %326 = vst.msk [vmem:[#allocation2 + $0x28] sm:$0xff] %vm320, %v293
      %327 = vst.msk [vmem:[#allocation2 + $0x30] sm:$0xff] %vm320, %v294
      %328 = vst.msk [vmem:[#allocation2 + $0x38] sm:$0xff] %vm320, %v295
      %329 = vst.msk [vmem:[#allocation2 + $0x40] sm:$0xff] %vm320, %v296
      %330 = vst.msk [vmem:[#allocation2 + $0x48] sm:$0xff] %vm320, %v297
      %331 = vst.msk [vmem:[#allocation2 + $0x50] sm:$0xff] %vm320, %v298
      %332 = vst.msk [vmem:[#allocation2 + $0x58] sm:$0xff] %vm320, %v299
      %333 = vst.msk [vmem:[#allocation2 + $0x60] sm:$0xff] %vm320, %v300
      %334 = vst.msk [vmem:[#allocation2 + $0x68] sm:$0xff] %vm320, %v301
      %335 = vst.msk [vmem:[#allocation2 + $0x70] sm:$0xff] %vm320, %v302
      %336 = vst.msk [vmem:[#allocation2 + $0x78] sm:$0xff] %vm320, %v303
      %337 = vst.msk [vmem:[#allocation2 + $0x80] sm:$0xff] %vm320, %v304
      %338 = vst.msk [vmem:[#allocation2 + $0x88] sm:$0xff] %vm320, %v305
      %339 = vst.msk [vmem:[#allocation2 + $0x90] sm:$0xff] %vm320, %v306
      %340 = vst.msk [vmem:[#allocation2 + $0x98] sm:$0xff] %vm320, %v307
      %341 = vst.msk [vmem:[#allocation2 + $0xa0] sm:$0xff] %vm320, %v308
      %342 = vst.msk [vmem:[#allocation2 + $0xa8] sm:$0xff] %vm320, %v309
      %343 = vst.msk [vmem:[#allocation2 + $0xb0] sm:$0xff] %vm320, %v310
      %344 = vst.msk [vmem:[#allocation2 + $0xb8] sm:$0xff] %vm320, %v311
      %345 = vst.msk [vmem:[#allocation2 + $0xc0] sm:$0xff] %vm320, %v312
      %346 = vst.msk [vmem:[#allocation2 + $0xc8] sm:$0xff] %vm320, %v313
      %347 = vst.msk [vmem:[#allocation2 + $0xd0] sm:$0xff] %vm320, %v314
      %348 = vst.msk [vmem:[#allocation2 + $0xd8] sm:$0xff] %vm320, %v315
      %349 = vst.msk [vmem:[#allocation2 + $0xe0] sm:$0xff] %vm320, %v316
      %350 = vst.msk [vmem:[#allocation2 + $0xe8] sm:$0xff] %vm320, %v317
      %351 = vst.msk [vmem:[#allocation2 + $0xf0] sm:$0xff] %vm320, %v318
      %352 = vst.msk [vmem:[#allocation2 + $0xf8] sm:$0xff] %vm320, %v319
      %v353 = vld [vmem:[#allocation2] sm:$0xff]
      %v354 = vld [vmem:[#allocation2 + $0x8] sm:$0xff]
      %v355 = vld [vmem:[#allocation2 + $0x10] sm:$0xff]
      %v356 = vld [vmem:[#allocation2 + $0x18] sm:$0xff]
      %v357 = vld [vmem:[#allocation2 + $0x20] sm:$0xff]
      %v358 = vld [vmem:[#allocation2 + $0x28] sm:$0xff]
      %v359 = vld [vmem:[#allocation2 + $0x30] sm:$0xff]
      %v360 = vld [vmem:[#allocation2 + $0x38] sm:$0xff]
      %v361 = vld [vmem:[#allocation2 + $0x40] sm:$0xff]
      %v362 = vld [vmem:[#allocation2 + $0x48] sm:$0xff]
      %v363 = vld [vmem:[#allocation2 + $0x50] sm:$0xff]
      %v364 = vld [vmem:[#allocation2 + $0x58] sm:$0xff]
      %v365 = vld [vmem:[#allocation2 + $0x60] sm:$0xff]
      %v366 = vld [vmem:[#allocation2 + $0x68] sm:$0xff]
      %v367 = vld [vmem:[#allocation2 + $0x70] sm:$0xff]
      %v368 = vld [vmem:[#allocation2 + $0x78] sm:$0xff]
      %v369 = vld [vmem:[#allocation2 + $0x80] sm:$0xff]
      %v370 = vld [vmem:[#allocation2 + $0x88] sm:$0xff]
      %v371 = vld [vmem:[#allocation2 + $0x90] sm:$0xff]
      %v372 = vld [vmem:[#allocation2 + $0x98] sm:$0xff]
      %v373 = vld [vmem:[#allocation2 + $0xa0] sm:$0xff]
      %v374 = vld [vmem:[#allocation2 + $0xa8] sm:$0xff]
      %v375 = vld [vmem:[#allocation2 + $0xb0] sm:$0xff]
      %v376 = vld [vmem:[#allocation2 + $0xb8] sm:$0xff]
      %v377 = vld [vmem:[#allocation2 + $0xc0] sm:$0xff]
      %v378 = vld [vmem:[#allocation2 + $0xc8] sm:$0xff]
      %v379 = vld [vmem:[#allocation2 + $0xd0] sm:$0xff]
      %v380 = vld [vmem:[#allocation2 + $0xd8] sm:$0xff]
      %v381 = vld [vmem:[#allocation2 + $0xe0] sm:$0xff]
      %v382 = vld [vmem:[#allocation2 + $0xe8] sm:$0xff]
      %v383 = vld [vmem:[#allocation2 + $0xf0] sm:$0xff]
      %v384 = vld [vmem:[#allocation2 + $0xf8] sm:$0xff]
      %v385 = vld [vmem:[%s5] sm:$0xff]
      %v386 = vld [vmem:[%s5 + $0x8] sm:$0xff]
      %v387 = vld [vmem:[%s5 + $0x10] sm:$0xff]
      %v388 = vld [vmem:[%s5 + $0x18] sm:$0xff]
      %v389 = vld [vmem:[%s5 + $0x20] sm:$0xff]
      %v390 = vld [vmem:[%s5 + $0x28] sm:$0xff]
      %v391 = vld [vmem:[%s5 + $0x30] sm:$0xff]
      %v392 = vld [vmem:[%s5 + $0x38] sm:$0xff]
      %v393 = vld [vmem:[%s5 + $0x40] sm:$0xff]
      %v394 = vld [vmem:[%s5 + $0x48] sm:$0xff]
      %v395 = vld [vmem:[%s5 + $0x50] sm:$0xff]
      %v396 = vld [vmem:[%s5 + $0x58] sm:$0xff]
      %v397 = vld [vmem:[%s5 + $0x60] sm:$0xff]
      %v398 = vld [vmem:[%s5 + $0x68] sm:$0x1]
      %v399 = vld [vmem:[%s1] sm:$0xff]
      %v400 = vld [vmem:[%s1 + $0x8] sm:$0x7f]
      %v401 = vld [vmem:[%s2] sm:$0x1]
      %v403 = vlaneseq
      %v404 = vshrl.u32 %v403, 7
      %v405 = vsub.s32 0, %v404
      %v406 = vrot.slane %v401, %v405
      %v409 = vsel %vm255, %v353, 0
      %v412 = vsel %vm255, %v354, 0
      %v415 = vsel %vm255, %v355, 0
      %v418 = vsel %vm255, %v356, 0
      %v421 = vsel %vm255, %v357, 0
      %v424 = vsel %vm255, %v358, 0
      %v427 = vsel %vm255, %v359, 0
      %v430 = vsel %vm255, %v360, 0
      %v433 = vsel %vm255, %v361, 0
      %v436 = vsel %vm255, %v362, 0
      %v439 = vsel %vm255, %v363, 0
      %v442 = vsel %vm255, %v364, 0
      %v445 = vsel %vm255, %v365, 0
      %v448 = vsel %vm255, %v366, 0
      %v451 = vsel %vm255, %v367, 0
      %v454 = vsel %vm255, %v368, 0
      %v457 = vsel %vm255, %v369, 0
      %v460 = vsel %vm255, %v370, 0
      %v463 = vsel %vm255, %v371, 0
      %v466 = vsel %vm255, %v372, 0
      %v469 = vsel %vm255, %v373, 0
      %v472 = vsel %vm255, %v374, 0
      %v475 = vsel %vm255, %v375, 0
      %v478 = vsel %vm255, %v376, 0
      %v481 = vsel %vm255, %v377, 0
      %v484 = vsel %vm255, %v378, 0
      %v487 = vsel %vm255, %v379, 0
      %v490 = vsel %vm255, %v380, 0
      %v493 = vsel %vm255, %v381, 0
      %v496 = vsel %vm255, %v382, 0
      %v499 = vsel %vm255, %v383, 0
      %v502 = vsel %vm255, %v384, 0
      %vm504 = vcmask 1046528
      %v506 = vsel %vm504, %v400, 0
      %508 = vmatprep.subr.mxu0 0.0
      %509 = vmatpush1.msra.mxu0 0.0
      %510 = vmatprep.subr.mxu0 0.0
      %511 = vmatpush1.msra.mxu0 0.0
      %512 = vmatprep.subr.mxu0 0.0
      %513 = vmatpush1.msra.mxu0 0.0
      %514 = vmatprep.subr.mxu0 0.0
      %515 = vmatpush1.msra.mxu0 0.0
      %516 = vmatprep.subr.mxu0 0.0
      %517 = vmatpush1.msra.mxu0 0.0
      %518 = vmatprep.subr.mxu0 0.0
      %519 = vmatpush1.msra.mxu0 0.0
      %520 = vmatprep.subr.mxu0 0.0
      %521 = vmatpush1.msra.mxu0 0.0
      %522 = vmatprep.subr.mxu0 0.0
      %523 = vmatpush1.msra.mxu0 0.0
      %524 = vmatprep.subr.mxu0 0.0
      %525 = vmatpush1.msra.mxu0 0.0
      %526 = vmatprep.subr.mxu0 0.0
      %527 = vmatpush1.msra.mxu0 0.0
      %528 = vmatprep.subr.mxu0 0.0
      %529 = vmatpush1.msra.mxu0 0.0
      %530 = vmatprep.subr.mxu0 0.0
      %531 = vmatpush1.msra.mxu0 0.0
      %532 = vmatprep.subr.mxu0 0.0
      %533 = vmatpush1.msra.mxu0 0.0
      %534 = vmatprep.subr.mxu0 0.0
      %535 = vmatpush1.msra.mxu0 0.0
      %536 = vmatprep.subr.mxu0 0.0
      %537 = vmatpush1.msra.mxu0 %v506
      %538 = vmatprep.subr.mxu0 0.0
      %539 = vmatpush1.msra.mxu0 %v399
      %540 = vmatprep.subr.mxu0 0.0
      %541 = vmatpush2.msra.mxu0 0.0
      %542 = vmatprep.subr.mxu0 0.0
      %543 = vmatpush2.msra.mxu0 0.0
      %544 = vmatprep.subr.mxu0 0.0
      %545 = vmatpush2.msra.mxu0 0.0
      %546 = vmatprep.subr.mxu0 0.0
      %547 = vmatpush2.msra.mxu0 0.0
      %548 = vmatprep.subr.mxu0 0.0
      %549 = vmatpush2.msra.mxu0 0.0
      %550 = vmatprep.subr.mxu0 0.0
      %551 = vmatpush2.msra.mxu0 0.0
      %552 = vmatprep.subr.mxu0 0.0
      %553 = vmatpush2.msra.mxu0 0.0
      %554 = vmatprep.subr.mxu0 0.0
      %555 = vmatpush2.msra.mxu0 0.0
      %556 = vmatprep.subr.mxu0 0.0
      %557 = vmatpush2.msra.mxu0 0.0
      %558 = vmatprep.subr.mxu0 0.0
      %559 = vmatpush2.msra.mxu0 0.0
      %560 = vmatprep.subr.mxu0 0.0
      %561 = vmatpush2.msra.mxu0 0.0
      %562 = vmatprep.subr.mxu0 0.0
      %563 = vmatpush2.msra.mxu0 0.0
      %564 = vmatprep.subr.mxu0 0.0
      %565 = vmatpush2.msra.mxu0 0.0
      %566 = vmatprep.subr.mxu0 0.0
      %567 = vmatpush2.msra.mxu0 0.0
      %568 = vmatprep.subr.mxu0 0.0
      %569 = vmatpush2.msra.mxu0 0.0
      %570 = vmatprep.subr.mxu0 0.0
      %571 = vmatpush2.msra.mxu0 0.0
      %572 = vmatprep.mubr.f32.mxu0 0.0
      %573 = vmatmul.mubr.f32.gmra.mxu0 %v409
      %v574 = vpop.f32.mrf.mxu0
      %v575 = vadd.f32 %v406, %v574
      %v576 = vpop.f32.mrf.mxu0
      %577 = vmatprep.mubr.f32.mxu0 0.0
      %578 = vmatmul.mubr.f32.gmra.mxu0 %v412
      %v579 = vpop.f32.mrf.mxu0
      %v580 = vadd.f32 %v406, %v579
      %v581 = vpop.f32.mrf.mxu0
      %582 = vmatprep.mubr.f32.mxu0 0.0
      %583 = vmatmul.mubr.f32.gmra.mxu0 %v415
      %v584 = vpop.f32.mrf.mxu0
      %v585 = vadd.f32 %v406, %v584
      %v586 = vpop.f32.mrf.mxu0
      %587 = vmatprep.mubr.f32.mxu0 0.0
      %588 = vmatmul.mubr.f32.gmra.mxu0 %v418
      %v589 = vpop.f32.mrf.mxu0
      %v590 = vadd.f32 %v406, %v589
      %v591 = vpop.f32.mrf.mxu0
      %592 = vmatprep.mubr.f32.mxu0 0.0
      %593 = vmatmul.mubr.f32.gmra.mxu0 %v421
      %v594 = vpop.f32.mrf.mxu0
      %v595 = vadd.f32 %v406, %v594
      %v596 = vpop.f32.mrf.mxu0
      %597 = vmatprep.mubr.f32.mxu0 0.0
      %598 = vmatmul.mubr.f32.gmra.mxu0 %v424
      %v599 = vpop.f32.mrf.mxu0
      %v600 = vadd.f32 %v406, %v599
      %v601 = vpop.f32.mrf.mxu0
      %602 = vmatprep.mubr.f32.mxu0 0.0
      %603 = vmatmul.mubr.f32.gmra.mxu0 %v427
      %v604 = vpop.f32.mrf.mxu0
      %v605 = vadd.f32 %v406, %v604
      %v606 = vpop.f32.mrf.mxu0
      %607 = vmatprep.mubr.f32.mxu0 0.0
      %608 = vmatmul.mubr.f32.gmra.mxu0 %v430
      %v609 = vpop.f32.mrf.mxu0
      %v610 = vadd.f32 %v406, %v609
      %v611 = vpop.f32.mrf.mxu0
      %612 = vmatprep.mubr.f32.mxu0 0.0
      %613 = vmatmul.mubr.f32.gmra.mxu0 %v433
      %v614 = vpop.f32.mrf.mxu0
      %v615 = vadd.f32 %v406, %v614
      %v616 = vpop.f32.mrf.mxu0
      %617 = vmatprep.mubr.f32.mxu0 0.0
      %618 = vmatmul.mubr.f32.gmra.mxu0 %v436
      %v619 = vpop.f32.mrf.mxu0
      %v620 = vadd.f32 %v406, %v619
      %v621 = vpop.f32.mrf.mxu0
      %622 = vmatprep.mubr.f32.mxu0 0.0
      %623 = vmatmul.mubr.f32.gmra.mxu0 %v439
      %v624 = vpop.f32.mrf.mxu0
      %v625 = vadd.f32 %v406, %v624
      %v626 = vpop.f32.mrf.mxu0
      %627 = vmatprep.mubr.f32.mxu0 0.0
      %628 = vmatmul.mubr.f32.gmra.mxu0 %v442
      %v629 = vpop.f32.mrf.mxu0
      %v630 = vadd.f32 %v406, %v629
      %v631 = vpop.f32.mrf.mxu0
      %632 = vmatprep.mubr.f32.mxu0 0.0
      %633 = vmatmul.mubr.f32.gmra.mxu0 %v445
      %v634 = vpop.f32.mrf.mxu0
      %v635 = vadd.f32 %v406, %v634
      %v636 = vpop.f32.mrf.mxu0
      %637 = vmatprep.mubr.f32.mxu0 0.0
      %638 = vmatmul.mubr.f32.gmra.mxu0 %v448
      %v639 = vpop.f32.mrf.mxu0
      %v640 = vadd.f32 %v406, %v639
      %v641 = vpop.f32.mrf.mxu0
      %642 = vmatprep.mubr.f32.mxu0 0.0
      %643 = vmatmul.mubr.f32.gmra.mxu0 %v451
      %v644 = vpop.f32.mrf.mxu0
      %v645 = vadd.f32 %v406, %v644
      %v646 = vpop.f32.mrf.mxu0
      %647 = vmatprep.mubr.f32.mxu0 0.0
      %648 = vmatmul.mubr.f32.gmra.mxu0 %v454
      %v649 = vpop.f32.mrf.mxu0
      %v650 = vadd.f32 %v406, %v649
      %v651 = vpop.f32.mrf.mxu0
      %652 = vmatprep.mubr.f32.mxu0 0.0
      %653 = vmatmul.mubr.f32.gmra.mxu0 %v457
      %v654 = vpop.f32.mrf.mxu0
      %v655 = vadd.f32 %v406, %v654
      %v656 = vpop.f32.mrf.mxu0
      %657 = vmatprep.mubr.f32.mxu0 0.0
      %658 = vmatmul.mubr.f32.gmra.mxu0 %v460
      %v659 = vpop.f32.mrf.mxu0
      %v660 = vadd.f32 %v406, %v659
      %v661 = vpop.f32.mrf.mxu0
      %662 = vmatprep.mubr.f32.mxu0 0.0
      %663 = vmatmul.mubr.f32.gmra.mxu0 %v463
      %v664 = vpop.f32.mrf.mxu0
      %v665 = vadd.f32 %v406, %v664
      %v666 = vpop.f32.mrf.mxu0
      %667 = vmatprep.mubr.f32.mxu0 0.0
      %668 = vmatmul.mubr.f32.gmra.mxu0 %v466
      %v669 = vpop.f32.mrf.mxu0
      %v670 = vadd.f32 %v406, %v669
      %v671 = vpop.f32.mrf.mxu0
      %672 = vmatprep.mubr.f32.mxu0 0.0
      %673 = vmatmul.mubr.f32.gmra.mxu0 %v469
      %v674 = vpop.f32.mrf.mxu0
      %v675 = vadd.f32 %v406, %v674
      %v676 = vpop.f32.mrf.mxu0
      %677 = vmatprep.mubr.f32.mxu0 0.0
      %678 = vmatmul.mubr.f32.gmra.mxu0 %v472
      %v679 = vpop.f32.mrf.mxu0
      %v680 = vadd.f32 %v406, %v679
      %v681 = vpop.f32.mrf.mxu0
      %682 = vmatprep.mubr.f32.mxu0 0.0
      %683 = vmatmul.mubr.f32.gmra.mxu0 %v475
      %v684 = vpop.f32.mrf.mxu0
      %v685 = vadd.f32 %v406, %v684
      %v686 = vpop.f32.mrf.mxu0
      %687 = vmatprep.mubr.f32.mxu0 0.0
      %688 = vmatmul.mubr.f32.gmra.mxu0 %v478
      %v689 = vpop.f32.mrf.mxu0
      %v690 = vadd.f32 %v406, %v689
      %v691 = vpop.f32.mrf.mxu0
      %692 = vmatprep.mubr.f32.mxu0 0.0
      %693 = vmatmul.mubr.f32.gmra.mxu0 %v481
      %v694 = vpop.f32.mrf.mxu0
      %v695 = vadd.f32 %v406, %v694
      %v696 = vpop.f32.mrf.mxu0
      %697 = vmatprep.mubr.f32.mxu0 0.0
      %698 = vmatmul.mubr.f32.gmra.mxu0 %v484
      %v699 = vpop.f32.mrf.mxu0
      %v700 = vadd.f32 %v406, %v699
      %v701 = vpop.f32.mrf.mxu0
      %702 = vmatprep.mubr.f32.mxu0 0.0
      %703 = vmatmul.mubr.f32.gmra.mxu0 %v487
      %v704 = vpop.f32.mrf.mxu0
      %v705 = vadd.f32 %v406, %v704
      %v706 = vpop.f32.mrf.mxu0
      %707 = vmatprep.mubr.f32.mxu0 0.0
      %708 = vmatmul.mubr.f32.gmra.mxu0 %v490
      %v709 = vpop.f32.mrf.mxu0
      %v710 = vadd.f32 %v406, %v709
      %v711 = vpop.f32.mrf.mxu0
      %712 = vmatprep.mubr.f32.mxu0 0.0
      %713 = vmatmul.mubr.f32.gmra.mxu0 %v493
      %v714 = vpop.f32.mrf.mxu0
      %v715 = vadd.f32 %v406, %v714
      %v716 = vpop.f32.mrf.mxu0
      %717 = vmatprep.mubr.f32.mxu0 0.0
      %718 = vmatmul.mubr.f32.gmra.mxu0 %v496
      %v719 = vpop.f32.mrf.mxu0
      %v720 = vadd.f32 %v406, %v719
      %v721 = vpop.f32.mrf.mxu0
      %722 = vmatprep.mubr.f32.mxu0 0.0
      %723 = vmatmul.mubr.f32.gmra.mxu0 %v499
      %v724 = vpop.f32.mrf.mxu0
      %v725 = vadd.f32 %v406, %v724
      %v726 = vpop.f32.mrf.mxu0
      %727 = vmatprep.mubr.f32.mxu0 0.0
      %728 = vmatmul.mubr.f32.gmra.mxu0 %v502
      %v729 = vpop.f32.mrf.mxu0
      %v730 = vadd.f32 %v406, %v729
      %v731 = vpop.f32.mrf.mxu0
      %732 = vdwg.mxu0
      %vm733 = vcmp.ge.f32.partialorder %v575, 0.0
      %vm734 = vcmp.ge.f32.partialorder %v580, 0.0
      %vm735 = vcmp.ge.f32.partialorder %v585, 0.0
      %vm736 = vcmp.ge.f32.partialorder %v590, 0.0
      %vm737 = vcmp.ge.f32.partialorder %v595, 0.0
      %vm738 = vcmp.ge.f32.partialorder %v600, 0.0
      %vm739 = vcmp.ge.f32.partialorder %v605, 0.0
      %vm740 = vcmp.ge.f32.partialorder %v610, 0.0
      %vm741 = vcmp.ge.f32.partialorder %v615, 0.0
      %vm742 = vcmp.ge.f32.partialorder %v620, 0.0
      %vm743 = vcmp.ge.f32.partialorder %v625, 0.0
      %vm744 = vcmp.ge.f32.partialorder %v630, 0.0
      %vm745 = vcmp.ge.f32.partialorder %v635, 0.0
      %vm746 = vcmp.ge.f32.partialorder %v640, 0.0
      %vm747 = vcmp.ge.f32.partialorder %v645, 0.0
      %vm748 = vcmp.ge.f32.partialorder %v650, 0.0
      %vm749 = vcmp.ge.f32.partialorder %v655, 0.0
      %vm750 = vcmp.ge.f32.partialorder %v660, 0.0
      %vm751 = vcmp.ge.f32.partialorder %v665, 0.0
      %vm752 = vcmp.ge.f32.partialorder %v670, 0.0
      %vm753 = vcmp.ge.f32.partialorder %v675, 0.0
      %vm754 = vcmp.ge.f32.partialorder %v680, 0.0
      %vm755 = vcmp.ge.f32.partialorder %v685, 0.0
      %vm756 = vcmp.ge.f32.partialorder %v690, 0.0
      %vm757 = vcmp.ge.f32.partialorder %v695, 0.0
      %vm758 = vcmp.ge.f32.partialorder %v700, 0.0
      %vm759 = vcmp.ge.f32.partialorder %v705, 0.0
      %vm760 = vcmp.ge.f32.partialorder %v710, 0.0
      %vm761 = vcmp.ge.f32.partialorder %v715, 0.0
      %vm762 = vcmp.ge.f32.partialorder %v720, 0.0
      %vm763 = vcmp.ge.f32.partialorder %v725, 0.0
      %vm764 = vcmp.ge.f32.partialorder %v730, 0.0
      %v765 = vmul.f32 %v575, 0.01
      %v766 = vmul.f32 %v580, 0.01
      %v767 = vmul.f32 %v585, 0.01
      %v768 = vmul.f32 %v590, 0.01
      %v769 = vmul.f32 %v595, 0.01
      %v770 = vmul.f32 %v600, 0.01
      %v771 = vmul.f32 %v605, 0.01
      %v772 = vmul.f32 %v610, 0.01
      %v773 = vmul.f32 %v615, 0.01
      %v774 = vmul.f32 %v620, 0.01
      %v775 = vmul.f32 %v625, 0.01
      %v776 = vmul.f32 %v630, 0.01
      %v777 = vmul.f32 %v635, 0.01
      %v778 = vmul.f32 %v640, 0.01
      %v779 = vmul.f32 %v645, 0.01
      %v780 = vmul.f32 %v650, 0.01
      %v781 = vmul.f32 %v655, 0.01
      %v782 = vmul.f32 %v660, 0.01
      %v783 = vmul.f32 %v665, 0.01
      %v784 = vmul.f32 %v670, 0.01
      %v785 = vmul.f32 %v675, 0.01
      %v786 = vmul.f32 %v680, 0.01
      %v787 = vmul.f32 %v685, 0.01
      %v788 = vmul.f32 %v690, 0.01
      %v789 = vmul.f32 %v695, 0.01
      %v790 = vmul.f32 %v700, 0.01
      %v791 = vmul.f32 %v705, 0.01
      %v792 = vmul.f32 %v710, 0.01
      %v793 = vmul.f32 %v715, 0.01
      %v794 = vmul.f32 %v720, 0.01
      %v795 = vmul.f32 %v725, 0.01
      %v796 = vmul.f32 %v730, 0.01
      %v797 = vsel %vm733, %v575, %v765
      %v798 = vsel %vm734, %v580, %v766
      %v799 = vsel %vm735, %v585, %v767
      %v800 = vsel %vm736, %v590, %v768
      %v801 = vsel %vm737, %v595, %v769
      %v802 = vsel %vm738, %v600, %v770
      %v803 = vsel %vm739, %v605, %v771
      %v804 = vsel %vm740, %v610, %v772
      %v805 = vsel %vm741, %v615, %v773
      %v806 = vsel %vm742, %v620, %v774
      %v807 = vsel %vm743, %v625, %v775
      %v808 = vsel %vm744, %v630, %v776
      %v809 = vsel %vm745, %v635, %v777
      %v810 = vsel %vm746, %v640, %v778
      %v811 = vsel %vm747, %v645, %v779
      %v812 = vsel %vm748, %v650, %v780
      %v813 = vsel %vm749, %v655, %v781
      %v814 = vsel %vm750, %v660, %v782
      %v815 = vsel %vm751, %v665, %v783
      %v816 = vsel %vm752, %v670, %v784
      %v817 = vsel %vm753, %v675, %v785
      %v818 = vsel %vm754, %v680, %v786
      %v819 = vsel %vm755, %v685, %v787
      %v820 = vsel %vm756, %v690, %v788
      %v821 = vsel %vm757, %v695, %v789
      %v822 = vsel %vm758, %v700, %v790
      %v823 = vsel %vm759, %v705, %v791
      %v824 = vsel %vm760, %v710, %v792
      %v825 = vsel %vm761, %v715, %v793
      %v826 = vsel %vm762, %v720, %v794
      %v827 = vsel %vm763, %v725, %v795
      %v828 = vsel %vm764, %v730, %v796
      %v829 = vld [vmem:[%s3] sm:$0xff]
      %v830 = vld [vmem:[%s3 + $0x8] sm:$0xff]
      %v831 = vld [vmem:[%s3 + $0x10] sm:$0xff]
      %v832 = vld [vmem:[%s3 + $0x18] sm:$0xff]
      %v833 = vld [vmem:[%s3 + $0x20] sm:$0xff]
      %v834 = vld [vmem:[%s3 + $0x28] sm:$0xff]
      %v835 = vld [vmem:[%s3 + $0x30] sm:$0x3]
      %v836 = vld [vmem:[%s4] sm:$0x1]
      %v838 = vlaneseq
      %v839 = vshrl.u32 %v838, 7
      %v840 = vsub.s32 0, %v839
      %v841 = vrot.slane %v836, %v840
      %vm843 = vcmask 408576
      %v845 = vsel %vm843, %v797, 0
      %v848 = vsel %vm843, %v798, 0
      %v851 = vsel %vm843, %v799, 0
      %v854 = vsel %vm843, %v800, 0
      %v857 = vsel %vm843, %v801, 0
      %v860 = vsel %vm843, %v802, 0
      %v863 = vsel %vm843, %v803, 0
      %v866 = vsel %vm843, %v804, 0
      %v869 = vsel %vm843, %v805, 0
      %v872 = vsel %vm843, %v806, 0
      %v875 = vsel %vm843, %v807, 0
      %v878 = vsel %vm843, %v808, 0
      %v881 = vsel %vm843, %v809, 0
      %v884 = vsel %vm843, %v810, 0
      %v887 = vsel %vm843, %v811, 0
      %v890 = vsel %vm843, %v812, 0
      %v893 = vsel %vm843, %v813, 0
      %v896 = vsel %vm843, %v814, 0
      %v899 = vsel %vm843, %v815, 0
      %v902 = vsel %vm843, %v816, 0
      %v905 = vsel %vm843, %v817, 0
      %v908 = vsel %vm843, %v818, 0
      %v911 = vsel %vm843, %v819, 0
      %v914 = vsel %vm843, %v820, 0
      %v917 = vsel %vm843, %v821, 0
      %v920 = vsel %vm843, %v822, 0
      %v923 = vsel %vm843, %v823, 0
      %v926 = vsel %vm843, %v824, 0
      %v929 = vsel %vm843, %v825, 0
      %v932 = vsel %vm843, %v826, 0
      %v935 = vsel %vm843, %v827, 0
      %v938 = vsel %vm843, %v828, 0
      %vm940 = vcmask 1041408
      %v942 = vsel %vm940, %v835, 0
      %944 = vmatprep.subr.mxu0 0.0
      %945 = vmatpush1.msra.mxu0 0.0
      %946 = vmatprep.subr.mxu0 0.0
      %947 = vmatpush1.msra.mxu0 0.0
      %948 = vmatprep.subr.mxu0 0.0
      %949 = vmatpush1.msra.mxu0 0.0
      %950 = vmatprep.subr.mxu0 0.0
      %951 = vmatpush1.msra.mxu0 0.0
      %952 = vmatprep.subr.mxu0 0.0
      %953 = vmatpush1.msra.mxu0 0.0
      %954 = vmatprep.subr.mxu0 0.0
      %955 = vmatpush1.msra.mxu0 0.0
      %956 = vmatprep.subr.mxu0 0.0
      %957 = vmatpush1.msra.mxu0 0.0
      %958 = vmatprep.subr.mxu0 0.0
      %959 = vmatpush1.msra.mxu0 0.0
      %960 = vmatprep.subr.mxu0 0.0
      %961 = vmatpush1.msra.mxu0 0.0
      %962 = vmatprep.subr.mxu0 0.0
      %963 = vmatpush1.msra.mxu0 %v942
      %964 = vmatprep.subr.mxu0 0.0
      %965 = vmatpush1.msra.mxu0 %v834
      %966 = vmatprep.subr.mxu0 0.0
      %967 = vmatpush1.msra.mxu0 %v833
      %968 = vmatprep.subr.mxu0 0.0
      %969 = vmatpush1.msra.mxu0 %v832
      %970 = vmatprep.subr.mxu0 0.0
      %971 = vmatpush1.msra.mxu0 %v831
      %972 = vmatprep.subr.mxu0 0.0
      %973 = vmatpush1.msra.mxu0 %v830
      %974 = vmatprep.subr.mxu0 0.0
      %975 = vmatpush1.msra.mxu0 %v829
      %976 = vmatprep.subr.mxu0 0.0
      %977 = vmatpush2.msra.mxu0 0.0
      %978 = vmatprep.subr.mxu0 0.0
      %979 = vmatpush2.msra.mxu0 0.0
      %980 = vmatprep.subr.mxu0 0.0
      %981 = vmatpush2.msra.mxu0 0.0
      %982 = vmatprep.subr.mxu0 0.0
      %983 = vmatpush2.msra.mxu0 0.0
      %984 = vmatprep.subr.mxu0 0.0
      %985 = vmatpush2.msra.mxu0 0.0
      %986 = vmatprep.subr.mxu0 0.0
      %987 = vmatpush2.msra.mxu0 0.0
      %988 = vmatprep.subr.mxu0 0.0
      %989 = vmatpush2.msra.mxu0 0.0
      %990 = vmatprep.subr.mxu0 0.0
      %991 = vmatpush2.msra.mxu0 0.0
      %992 = vmatprep.subr.mxu0 0.0
      %993 = vmatpush2.msra.mxu0 0.0
      %994 = vmatprep.subr.mxu0 0.0
      %995 = vmatpush2.msra.mxu0 0.0
      %996 = vmatprep.subr.mxu0 0.0
      %997 = vmatpush2.msra.mxu0 0.0
      %998 = vmatprep.subr.mxu0 0.0
      %999 = vmatpush2.msra.mxu0 0.0
      %1000 = vmatprep.subr.mxu0 0.0
      %1001 = vmatpush2.msra.mxu0 0.0
      %1002 = vmatprep.subr.mxu0 0.0
      %1003 = vmatpush2.msra.mxu0 0.0
      %1004 = vmatprep.subr.mxu0 0.0
      %1005 = vmatpush2.msra.mxu0 0.0
      %1006 = vmatprep.subr.mxu0 0.0
      %1007 = vmatpush2.msra.mxu0 0.0
      %1008 = vmatprep.mubr.f32.mxu0 0.0
      %1009 = vmatmul.mubr.f32.gmra.mxu0 %v845
      %v1010 = vpop.f32.mrf.mxu0
      %v1011 = vadd.f32 %v841, %v1010
      %v1012 = vpop.f32.mrf.mxu0
      %1013 = vmatprep.mubr.f32.mxu0 0.0
      %1014 = vmatmul.mubr.f32.gmra.mxu0 %v848
      %v1015 = vpop.f32.mrf.mxu0
      %v1016 = vadd.f32 %v841, %v1015
      %v1017 = vpop.f32.mrf.mxu0
      %1018 = vmatprep.mubr.f32.mxu0 0.0
      %1019 = vmatmul.mubr.f32.gmra.mxu0 %v851
      %v1020 = vpop.f32.mrf.mxu0
      %v1021 = vadd.f32 %v841, %v1020
      %v1022 = vpop.f32.mrf.mxu0
      %1023 = vmatprep.mubr.f32.mxu0 0.0
      %1024 = vmatmul.mubr.f32.gmra.mxu0 %v854
      %v1025 = vpop.f32.mrf.mxu0
      %v1026 = vadd.f32 %v841, %v1025
      %v1027 = vpop.f32.mrf.mxu0
      %1028 = vmatprep.mubr.f32.mxu0 0.0
      %1029 = vmatmul.mubr.f32.gmra.mxu0 %v857
      %v1030 = vpop.f32.mrf.mxu0
      %v1031 = vadd.f32 %v841, %v1030
      %v1032 = vpop.f32.mrf.mxu0
      %1033 = vmatprep.mubr.f32.mxu0 0.0
      %1034 = vmatmul.mubr.f32.gmra.mxu0 %v860
      %v1035 = vpop.f32.mrf.mxu0
      %v1036 = vadd.f32 %v841, %v1035
      %v1037 = vpop.f32.mrf.mxu0
      %1038 = vmatprep.mubr.f32.mxu0 0.0
      %1039 = vmatmul.mubr.f32.gmra.mxu0 %v863
      %v1040 = vpop.f32.mrf.mxu0
      %v1041 = vadd.f32 %v841, %v1040
      %v1042 = vpop.f32.mrf.mxu0
      %1043 = vmatprep.mubr.f32.mxu0 0.0
      %1044 = vmatmul.mubr.f32.gmra.mxu0 %v866
      %v1045 = vpop.f32.mrf.mxu0
      %v1046 = vadd.f32 %v841, %v1045
      %v1047 = vpop.f32.mrf.mxu0
      %1048 = vmatprep.mubr.f32.mxu0 0.0
      %1049 = vmatmul.mubr.f32.gmra.mxu0 %v869
      %v1050 = vpop.f32.mrf.mxu0
      %v1051 = vadd.f32 %v841, %v1050
      %v1052 = vpop.f32.mrf.mxu0
      %1053 = vmatprep.mubr.f32.mxu0 0.0
      %1054 = vmatmul.mubr.f32.gmra.mxu0 %v872
      %v1055 = vpop.f32.mrf.mxu0
      %v1056 = vadd.f32 %v841, %v1055
      %v1057 = vpop.f32.mrf.mxu0
      %1058 = vmatprep.mubr.f32.mxu0 0.0
      %1059 = vmatmul.mubr.f32.gmra.mxu0 %v875
      %v1060 = vpop.f32.mrf.mxu0
      %v1061 = vadd.f32 %v841, %v1060
      %v1062 = vpop.f32.mrf.mxu0
      %1063 = vmatprep.mubr.f32.mxu0 0.0
      %1064 = vmatmul.mubr.f32.gmra.mxu0 %v878
      %v1065 = vpop.f32.mrf.mxu0
      %v1066 = vadd.f32 %v841, %v1065
      %v1067 = vpop.f32.mrf.mxu0
      %1068 = vmatprep.mubr.f32.mxu0 0.0
      %1069 = vmatmul.mubr.f32.gmra.mxu0 %v881
      %v1070 = vpop.f32.mrf.mxu0
      %v1071 = vadd.f32 %v841, %v1070
      %v1072 = vpop.f32.mrf.mxu0
      %1073 = vmatprep.mubr.f32.mxu0 0.0
      %1074 = vmatmul.mubr.f32.gmra.mxu0 %v884
      %v1075 = vpop.f32.mrf.mxu0
      %v1076 = vadd.f32 %v841, %v1075
      %v1077 = vpop.f32.mrf.mxu0
      %1078 = vmatprep.mubr.f32.mxu0 0.0
      %1079 = vmatmul.mubr.f32.gmra.mxu0 %v887
      %v1080 = vpop.f32.mrf.mxu0
      %v1081 = vadd.f32 %v841, %v1080
      %v1082 = vpop.f32.mrf.mxu0
      %1083 = vmatprep.mubr.f32.mxu0 0.0
      %1084 = vmatmul.mubr.f32.gmra.mxu0 %v890
      %v1085 = vpop.f32.mrf.mxu0
      %v1086 = vadd.f32 %v841, %v1085
      %v1087 = vpop.f32.mrf.mxu0
      %1088 = vmatprep.mubr.f32.mxu0 0.0
      %1089 = vmatmul.mubr.f32.gmra.mxu0 %v893
      %v1090 = vpop.f32.mrf.mxu0
      %v1091 = vadd.f32 %v841, %v1090
      %v1092 = vpop.f32.mrf.mxu0
      %1093 = vmatprep.mubr.f32.mxu0 0.0
      %1094 = vmatmul.mubr.f32.gmra.mxu0 %v896
      %v1095 = vpop.f32.mrf.mxu0
      %v1096 = vadd.f32 %v841, %v1095
      %v1097 = vpop.f32.mrf.mxu0
      %1098 = vmatprep.mubr.f32.mxu0 0.0
      %1099 = vmatmul.mubr.f32.gmra.mxu0 %v899
      %v1100 = vpop.f32.mrf.mxu0
      %v1101 = vadd.f32 %v841, %v1100
      %v1102 = vpop.f32.mrf.mxu0
      %1103 = vmatprep.mubr.f32.mxu0 0.0
      %1104 = vmatmul.mubr.f32.gmra.mxu0 %v902
      %v1105 = vpop.f32.mrf.mxu0
      %v1106 = vadd.f32 %v841, %v1105
      %v1107 = vpop.f32.mrf.mxu0
      %1108 = vmatprep.mubr.f32.mxu0 0.0
      %1109 = vmatmul.mubr.f32.gmra.mxu0 %v905
      %v1110 = vpop.f32.mrf.mxu0
      %v1111 = vadd.f32 %v841, %v1110
      %v1112 = vpop.f32.mrf.mxu0
      %1113 = vmatprep.mubr.f32.mxu0 0.0
      %1114 = vmatmul.mubr.f32.gmra.mxu0 %v908
      %v1115 = vpop.f32.mrf.mxu0
      %v1116 = vadd.f32 %v841, %v1115
      %v1117 = vpop.f32.mrf.mxu0
      %1118 = vmatprep.mubr.f32.mxu0 0.0
      %1119 = vmatmul.mubr.f32.gmra.mxu0 %v911
      %v1120 = vpop.f32.mrf.mxu0
      %v1121 = vadd.f32 %v841, %v1120
      %v1122 = vpop.f32.mrf.mxu0
      %1123 = vmatprep.mubr.f32.mxu0 0.0
      %1124 = vmatmul.mubr.f32.gmra.mxu0 %v914
      %v1125 = vpop.f32.mrf.mxu0
      %v1126 = vadd.f32 %v841, %v1125
      %v1127 = vpop.f32.mrf.mxu0
      %1128 = vmatprep.mubr.f32.mxu0 0.0
      %1129 = vmatmul.mubr.f32.gmra.mxu0 %v917
      %v1130 = vpop.f32.mrf.mxu0
      %v1131 = vadd.f32 %v841, %v1130
      %v1132 = vpop.f32.mrf.mxu0
      %1133 = vmatprep.mubr.f32.mxu0 0.0
      %1134 = vmatmul.mubr.f32.gmra.mxu0 %v920
      %v1135 = vpop.f32.mrf.mxu0
      %v1136 = vadd.f32 %v841, %v1135
      %v1137 = vpop.f32.mrf.mxu0
      %1138 = vmatprep.mubr.f32.mxu0 0.0
      %1139 = vmatmul.mubr.f32.gmra.mxu0 %v923
      %v1140 = vpop.f32.mrf.mxu0
      %v1141 = vadd.f32 %v841, %v1140
      %v1142 = vpop.f32.mrf.mxu0
      %1143 = vmatprep.mubr.f32.mxu0 0.0
      %1144 = vmatmul.mubr.f32.gmra.mxu0 %v926
      %v1145 = vpop.f32.mrf.mxu0
      %v1146 = vadd.f32 %v841, %v1145
      %v1147 = vpop.f32.mrf.mxu0
      %1148 = vmatprep.mubr.f32.mxu0 0.0
      %1149 = vmatmul.mubr.f32.gmra.mxu0 %v929
      %v1150 = vpop.f32.mrf.mxu0
      %v1151 = vadd.f32 %v841, %v1150
      %v1152 = vpop.f32.mrf.mxu0
      %1153 = vmatprep.mubr.f32.mxu0 0.0
      %1154 = vmatmul.mubr.f32.gmra.mxu0 %v932
      %v1155 = vpop.f32.mrf.mxu0
      %v1156 = vadd.f32 %v841, %v1155
      %v1157 = vpop.f32.mrf.mxu0
      %1158 = vmatprep.mubr.f32.mxu0 0.0
      %1159 = vmatmul.mubr.f32.gmra.mxu0 %v935
      %v1160 = vpop.f32.mrf.mxu0
      %v1161 = vadd.f32 %v841, %v1160
      %v1162 = vpop.f32.mrf.mxu0
      %1163 = vmatprep.mubr.f32.mxu0 0.0
      %1164 = vmatmul.mubr.f32.gmra.mxu0 %v938
      %v1165 = vpop.f32.mrf.mxu0
      %v1166 = vadd.f32 %v841, %v1165
      %v1167 = vpop.f32.mrf.mxu0
      %1168 = vdwg.mxu0
      %vm1169 = vcmp.ge.f32.partialorder %v1011, 0.0
      %vm1170 = vcmp.ge.f32.partialorder %v1016, 0.0
      %vm1171 = vcmp.ge.f32.partialorder %v1021, 0.0
      %vm1172 = vcmp.ge.f32.partialorder %v1026, 0.0
      %vm1173 = vcmp.ge.f32.partialorder %v1031, 0.0
      %vm1174 = vcmp.ge.f32.partialorder %v1036, 0.0
      %vm1175 = vcmp.ge.f32.partialorder %v1041, 0.0
      %vm1176 = vcmp.ge.f32.partialorder %v1046, 0.0
      %vm1177 = vcmp.ge.f32.partialorder %v1051, 0.0
      %vm1178 = vcmp.ge.f32.partialorder %v1056, 0.0
      %vm1179 = vcmp.ge.f32.partialorder %v1061, 0.0
      %vm1180 = vcmp.ge.f32.partialorder %v1066, 0.0
      %vm1181 = vcmp.ge.f32.partialorder %v1071, 0.0
      %vm1182 = vcmp.ge.f32.partialorder %v1076, 0.0
      %vm1183 = vcmp.ge.f32.partialorder %v1081, 0.0
      %vm1184 = vcmp.ge.f32.partialorder %v1086, 0.0
      %vm1185 = vcmp.ge.f32.partialorder %v1091, 0.0
      %vm1186 = vcmp.ge.f32.partialorder %v1096, 0.0
      %vm1187 = vcmp.ge.f32.partialorder %v1101, 0.0
      %vm1188 = vcmp.ge.f32.partialorder %v1106, 0.0
      %vm1189 = vcmp.ge.f32.partialorder %v1111, 0.0
      %vm1190 = vcmp.ge.f32.partialorder %v1116, 0.0
      %vm1191 = vcmp.ge.f32.partialorder %v1121, 0.0
      %vm1192 = vcmp.ge.f32.partialorder %v1126, 0.0
      %vm1193 = vcmp.ge.f32.partialorder %v1131, 0.0
      %vm1194 = vcmp.ge.f32.partialorder %v1136, 0.0
      %vm1195 = vcmp.ge.f32.partialorder %v1141, 0.0
      %vm1196 = vcmp.ge.f32.partialorder %v1146, 0.0
      %vm1197 = vcmp.ge.f32.partialorder %v1151, 0.0
      %vm1198 = vcmp.ge.f32.partialorder %v1156, 0.0
      %vm1199 = vcmp.ge.f32.partialorder %v1161, 0.0
      %vm1200 = vcmp.ge.f32.partialorder %v1166, 0.0
      %v1201 = vmul.f32 %v1011, 0.01
      %v1202 = vmul.f32 %v1016, 0.01
      %v1203 = vmul.f32 %v1021, 0.01
      %v1204 = vmul.f32 %v1026, 0.01
      %v1205 = vmul.f32 %v1031, 0.01
      %v1206 = vmul.f32 %v1036, 0.01
      %v1207 = vmul.f32 %v1041, 0.01
      %v1208 = vmul.f32 %v1046, 0.01
      %v1209 = vmul.f32 %v1051, 0.01
      %v1210 = vmul.f32 %v1056, 0.01
      %v1211 = vmul.f32 %v1061, 0.01
      %v1212 = vmul.f32 %v1066, 0.01
      %v1213 = vmul.f32 %v1071, 0.01
      %v1214 = vmul.f32 %v1076, 0.01
      %v1215 = vmul.f32 %v1081, 0.01
      %v1216 = vmul.f32 %v1086, 0.01
      %v1217 = vmul.f32 %v1091, 0.01
      %v1218 = vmul.f32 %v1096, 0.01
      %v1219 = vmul.f32 %v1101, 0.01
      %v1220 = vmul.f32 %v1106, 0.01
      %v1221 = vmul.f32 %v1111, 0.01
      %v1222 = vmul.f32 %v1116, 0.01
      %v1223 = vmul.f32 %v1121, 0.01
      %v1224 = vmul.f32 %v1126, 0.01
      %v1225 = vmul.f32 %v1131, 0.01
      %v1226 = vmul.f32 %v1136, 0.01
      %v1227 = vmul.f32 %v1141, 0.01
      %v1228 = vmul.f32 %v1146, 0.01
      %v1229 = vmul.f32 %v1151, 0.01
      %v1230 = vmul.f32 %v1156, 0.01
      %v1231 = vmul.f32 %v1161, 0.01
      %v1232 = vmul.f32 %v1166, 0.01
      %v1233 = vsel %vm1169, %v1011, %v1201
      %v1234 = vsel %vm1170, %v1016, %v1202
      %v1235 = vsel %vm1171, %v1021, %v1203
      %v1236 = vsel %vm1172, %v1026, %v1204
      %v1237 = vsel %vm1173, %v1031, %v1205
      %v1238 = vsel %vm1174, %v1036, %v1206
      %v1239 = vsel %vm1175, %v1041, %v1207
      %v1240 = vsel %vm1176, %v1046, %v1208
      %v1241 = vsel %vm1177, %v1051, %v1209
      %v1242 = vsel %vm1178, %v1056, %v1210
      %v1243 = vsel %vm1179, %v1061, %v1211
      %v1244 = vsel %vm1180, %v1066, %v1212
      %v1245 = vsel %vm1181, %v1071, %v1213
      %v1246 = vsel %vm1182, %v1076, %v1214
      %v1247 = vsel %vm1183, %v1081, %v1215
      %v1248 = vsel %vm1184, %v1086, %v1216
      %v1249 = vsel %vm1185, %v1091, %v1217
      %v1250 = vsel %vm1186, %v1096, %v1218
      %v1251 = vsel %vm1187, %v1101, %v1219
      %v1252 = vsel %vm1188, %v1106, %v1220
      %v1253 = vsel %vm1189, %v1111, %v1221
      %v1254 = vsel %vm1190, %v1116, %v1222
      %v1255 = vsel %vm1191, %v1121, %v1223
      %v1256 = vsel %vm1192, %v1126, %v1224
      %v1257 = vsel %vm1193, %v1131, %v1225
      %v1258 = vsel %vm1194, %v1136, %v1226
      %v1259 = vsel %vm1195, %v1141, %v1227
      %v1260 = vsel %vm1196, %v1146, %v1228
      %v1261 = vsel %vm1197, %v1151, %v1229
      %v1262 = vsel %vm1198, %v1156, %v1230
      %v1263 = vsel %vm1199, %v1161, %v1231
      %v1264 = vsel %vm1200, %v1166, %v1232
      %vm1265 = vcmask 859136
      %v1267 = vsel %vm1265, %v1233, 0
      %v1270 = vsel %vm1265, %v1234, 0
      %v1273 = vsel %vm1265, %v1235, 0
      %v1276 = vsel %vm1265, %v1236, 0
      %v1279 = vsel %vm1265, %v1237, 0
      %v1282 = vsel %vm1265, %v1238, 0
      %v1285 = vsel %vm1265, %v1239, 0
      %v1288 = vsel %vm1265, %v1240, 0
      %v1291 = vsel %vm1265, %v1241, 0
      %v1294 = vsel %vm1265, %v1242, 0
      %v1297 = vsel %vm1265, %v1243, 0
      %v1300 = vsel %vm1265, %v1244, 0
      %v1303 = vsel %vm1265, %v1245, 0
      %v1306 = vsel %vm1265, %v1246, 0
      %v1309 = vsel %vm1265, %v1247, 0
      %v1312 = vsel %vm1265, %v1248, 0
      %v1315 = vsel %vm1265, %v1249, 0
      %v1318 = vsel %vm1265, %v1250, 0
      %v1321 = vsel %vm1265, %v1251, 0
      %v1324 = vsel %vm1265, %v1252, 0
      %v1327 = vsel %vm1265, %v1253, 0
      %v1330 = vsel %vm1265, %v1254, 0
      %v1333 = vsel %vm1265, %v1255, 0
      %v1336 = vsel %vm1265, %v1256, 0
      %v1339 = vsel %vm1265, %v1257, 0
      %v1342 = vsel %vm1265, %v1258, 0
      %v1345 = vsel %vm1265, %v1259, 0
      %v1348 = vsel %vm1265, %v1260, 0
      %v1351 = vsel %vm1265, %v1261, 0
      %v1354 = vsel %vm1265, %v1262, 0
      %v1357 = vsel %vm1265, %v1263, 0
      %v1360 = vsel %vm1265, %v1264, 0
      %vm1362 = vcmask 1040384
      %v1364 = vsel %vm1362, %v398, 0
      %1366 = vmatprep.subr.mxu0 0.0
      %1367 = vmatpush1.msra.mxu0 0.0
      %1368 = vmatprep.subr.mxu0 0.0
      %1369 = vmatpush1.msra.mxu0 0.0
      %1370 = vmatprep.subr.mxu0 0.0
      %1371 = vmatpush1.msra.mxu0 %v1364
      %1372 = vmatprep.subr.mxu0 0.0
      %1373 = vmatpush1.msra.mxu0 %v397
      %1374 = vmatprep.subr.mxu0 0.0
      %1375 = vmatpush1.msra.mxu0 %v396
      %1376 = vmatprep.subr.mxu0 0.0
      %1377 = vmatpush1.msra.mxu0 %v395
      %1378 = vmatprep.subr.mxu0 0.0
      %1379 = vmatpush1.msra.mxu0 %v394
      %1380 = vmatprep.subr.mxu0 0.0
      %1381 = vmatpush1.msra.mxu0 %v393
      %1382 = vmatprep.subr.mxu0 0.0
      %1383 = vmatpush1.msra.mxu0 %v392
      %1384 = vmatprep.subr.mxu0 0.0
      %1385 = vmatpush1.msra.mxu0 %v391
      %1386 = vmatprep.subr.mxu0 0.0
      %1387 = vmatpush1.msra.mxu0 %v390
      %1388 = vmatprep.subr.mxu0 0.0
      %1389 = vmatpush1.msra.mxu0 %v389
      %1390 = vmatprep.subr.mxu0 0.0
      %1391 = vmatpush1.msra.mxu0 %v388
      %1392 = vmatprep.subr.mxu0 0.0
      %1393 = vmatpush1.msra.mxu0 %v387
      %1394 = vmatprep.subr.mxu0 0.0
      %1395 = vmatpush1.msra.mxu0 %v386
      %1396 = vmatprep.subr.mxu0 0.0
      %1397 = vmatpush1.msra.mxu0 %v385
      %1398 = vmatprep.subr.mxu0 0.0
      %1399 = vmatpush2.msra.mxu0 0.0
      %1400 = vmatprep.subr.mxu0 0.0
      %1401 = vmatpush2.msra.mxu0 0.0
      %1402 = vmatprep.subr.mxu0 0.0
      %1403 = vmatpush2.msra.mxu0 0.0
      %1404 = vmatprep.subr.mxu0 0.0
      %1405 = vmatpush2.msra.mxu0 0.0
      %1406 = vmatprep.subr.mxu0 0.0
      %1407 = vmatpush2.msra.mxu0 0.0
      %1408 = vmatprep.subr.mxu0 0.0
      %1409 = vmatpush2.msra.mxu0 0.0
      %1410 = vmatprep.subr.mxu0 0.0
      %1411 = vmatpush2.msra.mxu0 0.0
      %1412 = vmatprep.subr.mxu0 0.0
      %1413 = vmatpush2.msra.mxu0 0.0
      %1414 = vmatprep.subr.mxu0 0.0
      %1415 = vmatpush2.msra.mxu0 0.0
      %1416 = vmatprep.subr.mxu0 0.0
      %1417 = vmatpush2.msra.mxu0 0.0
      %1418 = vmatprep.subr.mxu0 0.0
      %1419 = vmatpush2.msra.mxu0 0.0
      %1420 = vmatprep.subr.mxu0 0.0
      %1421 = vmatpush2.msra.mxu0 0.0
      %1422 = vmatprep.subr.mxu0 0.0
      %1423 = vmatpush2.msra.mxu0 0.0
      %1424 = vmatprep.subr.mxu0 0.0
      %1425 = vmatpush2.msra.mxu0 0.0
      %1426 = vmatprep.subr.mxu0 0.0
      %1427 = vmatpush2.msra.mxu0 0.0
      %1428 = vmatprep.subr.mxu0 0.0
      %1429 = vmatpush2.msra.mxu0 0.0
      %1430 = vmatprep.mubr.f32.mxu0 0.0
      %1431 = vmatmul.mubr.f32.gmra.mxu0 %v1267
      %v1432 = vpop.f32.mrf.mxu0
      %v1433 = vadd.f32 0.0, %v1432
      %v1434 = vpop.f32.mrf.mxu0
      %1435 = vmatprep.mubr.f32.mxu0 0.0
      %1436 = vmatmul.mubr.f32.gmra.mxu0 %v1270
      %v1437 = vpop.f32.mrf.mxu0
      %v1438 = vadd.f32 0.0, %v1437
      %v1439 = vpop.f32.mrf.mxu0
      %1440 = vmatprep.mubr.f32.mxu0 0.0
      %1441 = vmatmul.mubr.f32.gmra.mxu0 %v1273
      %v1442 = vpop.f32.mrf.mxu0
      %v1443 = vadd.f32 0.0, %v1442
      %v1444 = vpop.f32.mrf.mxu0
      %1445 = vmatprep.mubr.f32.mxu0 0.0
      %1446 = vmatmul.mubr.f32.gmra.mxu0 %v1276
      %v1447 = vpop.f32.mrf.mxu0
      %v1448 = vadd.f32 0.0, %v1447
      %v1449 = vpop.f32.mrf.mxu0
      %1450 = vmatprep.mubr.f32.mxu0 0.0
      %1451 = vmatmul.mubr.f32.gmra.mxu0 %v1279
      %v1452 = vpop.f32.mrf.mxu0
      %v1453 = vadd.f32 0.0, %v1452
      %v1454 = vpop.f32.mrf.mxu0
      %1455 = vmatprep.mubr.f32.mxu0 0.0
      %1456 = vmatmul.mubr.f32.gmra.mxu0 %v1282
      %v1457 = vpop.f32.mrf.mxu0
      %v1458 = vadd.f32 0.0, %v1457
      %v1459 = vpop.f32.mrf.mxu0
      %1460 = vmatprep.mubr.f32.mxu0 0.0
      %1461 = vmatmul.mubr.f32.gmra.mxu0 %v1285
      %v1462 = vpop.f32.mrf.mxu0
      %v1463 = vadd.f32 0.0, %v1462
      %v1464 = vpop.f32.mrf.mxu0
      %1465 = vmatprep.mubr.f32.mxu0 0.0
      %1466 = vmatmul.mubr.f32.gmra.mxu0 %v1288
      %v1467 = vpop.f32.mrf.mxu0
      %v1468 = vadd.f32 0.0, %v1467
      %v1469 = vpop.f32.mrf.mxu0
      %1470 = vmatprep.mubr.f32.mxu0 0.0
      %1471 = vmatmul.mubr.f32.gmra.mxu0 %v1291
      %v1472 = vpop.f32.mrf.mxu0
      %v1473 = vadd.f32 0.0, %v1472
      %v1474 = vpop.f32.mrf.mxu0
      %1475 = vmatprep.mubr.f32.mxu0 0.0
      %1476 = vmatmul.mubr.f32.gmra.mxu0 %v1294
      %v1477 = vpop.f32.mrf.mxu0
      %v1478 = vadd.f32 0.0, %v1477
      %v1479 = vpop.f32.mrf.mxu0
      %1480 = vmatprep.mubr.f32.mxu0 0.0
      %1481 = vmatmul.mubr.f32.gmra.mxu0 %v1297
      %v1482 = vpop.f32.mrf.mxu0
      %v1483 = vadd.f32 0.0, %v1482
      %v1484 = vpop.f32.mrf.mxu0
      %1485 = vmatprep.mubr.f32.mxu0 0.0
      %1486 = vmatmul.mubr.f32.gmra.mxu0 %v1300
      %v1487 = vpop.f32.mrf.mxu0
      %v1488 = vadd.f32 0.0, %v1487
      %v1489 = vpop.f32.mrf.mxu0
      %1490 = vmatprep.mubr.f32.mxu0 0.0
      %1491 = vmatmul.mubr.f32.gmra.mxu0 %v1303
      %v1492 = vpop.f32.mrf.mxu0
      %v1493 = vadd.f32 0.0, %v1492
      %v1494 = vpop.f32.mrf.mxu0
      %1495 = vmatprep.mubr.f32.mxu0 0.0
      %1496 = vmatmul.mubr.f32.gmra.mxu0 %v1306
      %v1497 = vpop.f32.mrf.mxu0
      %v1498 = vadd.f32 0.0, %v1497
      %v1499 = vpop.f32.mrf.mxu0
      %1500 = vmatprep.mubr.f32.mxu0 0.0
      %1501 = vmatmul.mubr.f32.gmra.mxu0 %v1309
      %v1502 = vpop.f32.mrf.mxu0
      %v1503 = vadd.f32 0.0, %v1502
      %v1504 = vpop.f32.mrf.mxu0
      %1505 = vmatprep.mubr.f32.mxu0 0.0
      %1506 = vmatmul.mubr.f32.gmra.mxu0 %v1312
      %v1507 = vpop.f32.mrf.mxu0
      %v1508 = vadd.f32 0.0, %v1507
      %v1509 = vpop.f32.mrf.mxu0
      %1510 = vmatprep.mubr.f32.mxu0 0.0
      %1511 = vmatmul.mubr.f32.gmra.mxu0 %v1315
      %v1512 = vpop.f32.mrf.mxu0
      %v1513 = vadd.f32 0.0, %v1512
      %v1514 = vpop.f32.mrf.mxu0
      %1515 = vmatprep.mubr.f32.mxu0 0.0
      %1516 = vmatmul.mubr.f32.gmra.mxu0 %v1318
      %v1517 = vpop.f32.mrf.mxu0
      %v1518 = vadd.f32 0.0, %v1517
      %v1519 = vpop.f32.mrf.mxu0
      %1520 = vmatprep.mubr.f32.mxu0 0.0
      %1521 = vmatmul.mubr.f32.gmra.mxu0 %v1321
      %v1522 = vpop.f32.mrf.mxu0
      %v1523 = vadd.f32 0.0, %v1522
      %v1524 = vpop.f32.mrf.mxu0
      %1525 = vmatprep.mubr.f32.mxu0 0.0
      %1526 = vmatmul.mubr.f32.gmra.mxu0 %v1324
      %v1527 = vpop.f32.mrf.mxu0
      %v1528 = vadd.f32 0.0, %v1527
      %v1529 = vpop.f32.mrf.mxu0
      %1530 = vmatprep.mubr.f32.mxu0 0.0
      %1531 = vmatmul.mubr.f32.gmra.mxu0 %v1327
      %v1532 = vpop.f32.mrf.mxu0
      %v1533 = vadd.f32 0.0, %v1532
      %v1534 = vpop.f32.mrf.mxu0
      %1535 = vmatprep.mubr.f32.mxu0 0.0
      %1536 = vmatmul.mubr.f32.gmra.mxu0 %v1330
      %v1537 = vpop.f32.mrf.mxu0
      %v1538 = vadd.f32 0.0, %v1537
      %v1539 = vpop.f32.mrf.mxu0
      %1540 = vmatprep.mubr.f32.mxu0 0.0
      %1541 = vmatmul.mubr.f32.gmra.mxu0 %v1333
      %v1542 = vpop.f32.mrf.mxu0
      %v1543 = vadd.f32 0.0, %v1542
      %v1544 = vpop.f32.mrf.mxu0
      %1545 = vmatprep.mubr.f32.mxu0 0.0
      %1546 = vmatmul.mubr.f32.gmra.mxu0 %v1336
      %v1547 = vpop.f32.mrf.mxu0
      %v1548 = vadd.f32 0.0, %v1547
      %v1549 = vpop.f32.mrf.mxu0
      %1550 = vmatprep.mubr.f32.mxu0 0.0
      %1551 = vmatmul.mubr.f32.gmra.mxu0 %v1339
      %v1552 = vpop.f32.mrf.mxu0
      %v1553 = vadd.f32 0.0, %v1552
      %v1554 = vpop.f32.mrf.mxu0
      %1555 = vmatprep.mubr.f32.mxu0 0.0
      %1556 = vmatmul.mubr.f32.gmra.mxu0 %v1342
      %v1557 = vpop.f32.mrf.mxu0
      %v1558 = vadd.f32 0.0, %v1557
      %v1559 = vpop.f32.mrf.mxu0
      %1560 = vmatprep.mubr.f32.mxu0 0.0
      %1561 = vmatmul.mubr.f32.gmra.mxu0 %v1345
      %v1562 = vpop.f32.mrf.mxu0
      %v1563 = vadd.f32 0.0, %v1562
      %v1564 = vpop.f32.mrf.mxu0
      %1565 = vmatprep.mubr.f32.mxu0 0.0
      %1566 = vmatmul.mubr.f32.gmra.mxu0 %v1348
      %v1567 = vpop.f32.mrf.mxu0
      %v1568 = vadd.f32 0.0, %v1567
      %v1569 = vpop.f32.mrf.mxu0
      %1570 = vmatprep.mubr.f32.mxu0 0.0
      %1571 = vmatmul.mubr.f32.gmra.mxu0 %v1351
      %v1572 = vpop.f32.mrf.mxu0
      %v1573 = vadd.f32 0.0, %v1572
      %v1574 = vpop.f32.mrf.mxu0
      %1575 = vmatprep.mubr.f32.mxu0 0.0
      %1576 = vmatmul.mubr.f32.gmra.mxu0 %v1354
      %v1577 = vpop.f32.mrf.mxu0
      %v1578 = vadd.f32 0.0, %v1577
      %v1579 = vpop.f32.mrf.mxu0
      %1580 = vmatprep.mubr.f32.mxu0 0.0
      %1581 = vmatmul.mubr.f32.gmra.mxu0 %v1357
      %v1582 = vpop.f32.mrf.mxu0
      %v1583 = vadd.f32 0.0, %v1582
      %v1584 = vpop.f32.mrf.mxu0
      %1585 = vmatprep.mubr.f32.mxu0 0.0
      %1586 = vmatmul.mubr.f32.gmra.mxu0 %v1360
      %v1587 = vpop.f32.mrf.mxu0
      %v1588 = vadd.f32 0.0, %v1587
      %v1589 = vpop.f32.mrf.mxu0
      %1590 = vdwg.mxu0
      %v1591 = vadd.f32 %v353, %v1433
      %v1592 = vadd.f32 %v354, %v1438
      %v1593 = vadd.f32 %v355, %v1443
      %v1594 = vadd.f32 %v356, %v1448
      %v1595 = vadd.f32 %v357, %v1453
      %v1596 = vadd.f32 %v358, %v1458
      %v1597 = vadd.f32 %v359, %v1463
      %v1598 = vadd.f32 %v360, %v1468
      %v1599 = vadd.f32 %v361, %v1473
      %v1600 = vadd.f32 %v362, %v1478
      %v1601 = vadd.f32 %v363, %v1483
      %v1602 = vadd.f32 %v364, %v1488
      %v1603 = vadd.f32 %v365, %v1493
      %v1604 = vadd.f32 %v366, %v1498
      %v1605 = vadd.f32 %v367, %v1503
      %v1606 = vadd.f32 %v368, %v1508
      %v1607 = vadd.f32 %v369, %v1513
      %v1608 = vadd.f32 %v370, %v1518
      %v1609 = vadd.f32 %v371, %v1523
      %v1610 = vadd.f32 %v372, %v1528
      %v1611 = vadd.f32 %v373, %v1533
      %v1612 = vadd.f32 %v374, %v1538
      %v1613 = vadd.f32 %v375, %v1543
      %v1614 = vadd.f32 %v376, %v1548
      %v1615 = vadd.f32 %v377, %v1553
      %v1616 = vadd.f32 %v378, %v1558
      %v1617 = vadd.f32 %v379, %v1563
      %v1618 = vadd.f32 %v380, %v1568
      %v1619 = vadd.f32 %v381, %v1573
      %v1620 = vadd.f32 %v382, %v1578
      %v1621 = vadd.f32 %v383, %v1583
      %v1622 = vadd.f32 %v384, %v1588
      %s1623 = scalar_lea.vmem %s1, 16
      %v1624 = vld [vmem:[%s1623] sm:$0xff]
      %v1625 = vld [vmem:[%s1623 + $0x8] sm:$0x7f]
      %s1626 = scalar_lea.vmem %s2, 1
      %v1627 = vld [vmem:[%s1626] sm:$0x1]
      %v1629 = vlaneseq
      %v1630 = vshrl.u32 %v1629, 7
      %v1631 = vsub.s32 0, %v1630
      %v1632 = vrot.slane %v1627, %v1631
      %v1635 = vsel %vm255, %v1591, 0
      %v1638 = vsel %vm255, %v1592, 0
      %v1641 = vsel %vm255, %v1593, 0
      %v1644 = vsel %vm255, %v1594, 0
      %v1647 = vsel %vm255, %v1595, 0
      %v1650 = vsel %vm255, %v1596, 0
      %v1653 = vsel %vm255, %v1597, 0
      %v1656 = vsel %vm255, %v1598, 0
      %v1659 = vsel %vm255, %v1599, 0
      %v1662 = vsel %vm255, %v1600, 0
      %v1665 = vsel %vm255, %v1601, 0
      %v1668 = vsel %vm255, %v1602, 0
      %v1671 = vsel %vm255, %v1603, 0
      %v1674 = vsel %vm255, %v1604, 0
      %v1677 = vsel %vm255, %v1605, 0
      %v1680 = vsel %vm255, %v1606, 0
      %v1683 = vsel %vm255, %v1607, 0
      %v1686 = vsel %vm255, %v1608, 0
      %v1689 = vsel %vm255, %v1609, 0
      %v1692 = vsel %vm255, %v1610, 0
      %v1695 = vsel %vm255, %v1611, 0
      %v1698 = vsel %vm255, %v1612, 0
      %v1701 = vsel %vm255, %v1613, 0
      %v1704 = vsel %vm255, %v1614, 0
      %v1707 = vsel %vm255, %v1615, 0
      %v1710 = vsel %vm255, %v1616, 0
      %v1713 = vsel %vm255, %v1617, 0
      %v1716 = vsel %vm255, %v1618, 0
      %v1719 = vsel %vm255, %v1619, 0
      %v1722 = vsel %vm255, %v1620, 0
      %v1725 = vsel %vm255, %v1621, 0
      %v1728 = vsel %vm255, %v1622, 0
      %v1731 = vsel %vm504, %v1625, 0
      %1733 = vmatprep.subr.mxu0 0.0
      %1734 = vmatpush1.msra.mxu0 0.0
      %1735 = vmatprep.subr.mxu0 0.0
      %1736 = vmatpush1.msra.mxu0 0.0
      %1737 = vmatprep.subr.mxu0 0.0
      %1738 = vmatpush1.msra.mxu0 0.0
      %1739 = vmatprep.subr.mxu0 0.0
      %1740 = vmatpush1.msra.mxu0 0.0
      %1741 = vmatprep.subr.mxu0 0.0
      %1742 = vmatpush1.msra.mxu0 0.0
      %1743 = vmatprep.subr.mxu0 0.0
      %1744 = vmatpush1.msra.mxu0 0.0
      %1745 = vmatprep.subr.mxu0 0.0
      %1746 = vmatpush1.msra.mxu0 0.0
      %1747 = vmatprep.subr.mxu0 0.0
      %1748 = vmatpush1.msra.mxu0 0.0
      %1749 = vmatprep.subr.mxu0 0.0
      %1750 = vmatpush1.msra.mxu0 0.0
      %1751 = vmatprep.subr.mxu0 0.0
      %1752 = vmatpush1.msra.mxu0 0.0
      %1753 = vmatprep.subr.mxu0 0.0
      %1754 = vmatpush1.msra.mxu0 0.0
      %1755 = vmatprep.subr.mxu0 0.0
      %1756 = vmatpush1.msra.mxu0 0.0
      %1757 = vmatprep.subr.mxu0 0.0
      %1758 = vmatpush1.msra.mxu0 0.0
      %1759 = vmatprep.subr.mxu0 0.0
      %1760 = vmatpush1.msra.mxu0 0.0
      %1761 = vmatprep.subr.mxu0 0.0
      %1762 = vmatpush1.msra.mxu0 %v1731
      %1763 = vmatprep.subr.mxu0 0.0
      %1764 = vmatpush1.msra.mxu0 %v1624
      %1765 = vmatprep.subr.mxu0 0.0
      %1766 = vmatpush2.msra.mxu0 0.0
      %1767 = vmatprep.subr.mxu0 0.0
      %1768 = vmatpush2.msra.mxu0 0.0
      %1769 = vmatprep.subr.mxu0 0.0
      %1770 = vmatpush2.msra.mxu0 0.0
      %1771 = vmatprep.subr.mxu0 0.0
      %1772 = vmatpush2.msra.mxu0 0.0
      %1773 = vmatprep.subr.mxu0 0.0
      %1774 = vmatpush2.msra.mxu0 0.0
      %1775 = vmatprep.subr.mxu0 0.0
      %1776 = vmatpush2.msra.mxu0 0.0
      %1777 = vmatprep.subr.mxu0 0.0
      %1778 = vmatpush2.msra.mxu0 0.0
      %1779 = vmatprep.subr.mxu0 0.0
      %1780 = vmatpush2.msra.mxu0 0.0
      %1781 = vmatprep.subr.mxu0 0.0
      %1782 = vmatpush2.msra.mxu0 0.0
      %1783 = vmatprep.subr.mxu0 0.0
      %1784 = vmatpush2.msra.mxu0 0.0
      %1785 = vmatprep.subr.mxu0 0.0
      %1786 = vmatpush2.msra.mxu0 0.0
      %1787 = vmatprep.subr.mxu0 0.0
      %1788 = vmatpush2.msra.mxu0 0.0
      %1789 = vmatprep.subr.mxu0 0.0
      %1790 = vmatpush2.msra.mxu0 0.0
      %1791 = vmatprep.subr.mxu0 0.0
      %1792 = vmatpush2.msra.mxu0 0.0
      %1793 = vmatprep.subr.mxu0 0.0
      %1794 = vmatpush2.msra.mxu0 0.0
      %1795 = vmatprep.subr.mxu0 0.0
      %1796 = vmatpush2.msra.mxu0 0.0
      %1797 = vmatprep.mubr.f32.mxu0 0.0
      %1798 = vmatmul.mubr.f32.gmra.mxu0 %v1635
      %v1799 = vpop.f32.mrf.mxu0
      %v1800 = vadd.f32 %v1632, %v1799
      %v1801 = vpop.f32.mrf.mxu0
      %1802 = vmatprep.mubr.f32.mxu0 0.0
      %1803 = vmatmul.mubr.f32.gmra.mxu0 %v1638
      %v1804 = vpop.f32.mrf.mxu0
      %v1805 = vadd.f32 %v1632, %v1804
      %v1806 = vpop.f32.mrf.mxu0
      %1807 = vmatprep.mubr.f32.mxu0 0.0
      %1808 = vmatmul.mubr.f32.gmra.mxu0 %v1641
      %v1809 = vpop.f32.mrf.mxu0
      %v1810 = vadd.f32 %v1632, %v1809
      %v1811 = vpop.f32.mrf.mxu0
      %1812 = vmatprep.mubr.f32.mxu0 0.0
      %1813 = vmatmul.mubr.f32.gmra.mxu0 %v1644
      %v1814 = vpop.f32.mrf.mxu0
      %v1815 = vadd.f32 %v1632, %v1814
      %v1816 = vpop.f32.mrf.mxu0
      %1817 = vmatprep.mubr.f32.mxu0 0.0
      %1818 = vmatmul.mubr.f32.gmra.mxu0 %v1647
      %v1819 = vpop.f32.mrf.mxu0
      %v1820 = vadd.f32 %v1632, %v1819
      %v1821 = vpop.f32.mrf.mxu0
      %1822 = vmatprep.mubr.f32.mxu0 0.0
      %1823 = vmatmul.mubr.f32.gmra.mxu0 %v1650
      %v1824 = vpop.f32.mrf.mxu0
      %v1825 = vadd.f32 %v1632, %v1824
      %v1826 = vpop.f32.mrf.mxu0
      %1827 = vmatprep.mubr.f32.mxu0 0.0
      %1828 = vmatmul.mubr.f32.gmra.mxu0 %v1653
      %v1829 = vpop.f32.mrf.mxu0
      %v1830 = vadd.f32 %v1632, %v1829
      %v1831 = vpop.f32.mrf.mxu0
      %1832 = vmatprep.mubr.f32.mxu0 0.0
      %1833 = vmatmul.mubr.f32.gmra.mxu0 %v1656
      %v1834 = vpop.f32.mrf.mxu0
      %v1835 = vadd.f32 %v1632, %v1834
      %v1836 = vpop.f32.mrf.mxu0
      %1837 = vmatprep.mubr.f32.mxu0 0.0
      %1838 = vmatmul.mubr.f32.gmra.mxu0 %v1659
      %v1839 = vpop.f32.mrf.mxu0
      %v1840 = vadd.f32 %v1632, %v1839
      %v1841 = vpop.f32.mrf.mxu0
      %1842 = vmatprep.mubr.f32.mxu0 0.0
      %1843 = vmatmul.mubr.f32.gmra.mxu0 %v1662
      %v1844 = vpop.f32.mrf.mxu0
      %v1845 = vadd.f32 %v1632, %v1844
      %v1846 = vpop.f32.mrf.mxu0
      %1847 = vmatprep.mubr.f32.mxu0 0.0
      %1848 = vmatmul.mubr.f32.gmra.mxu0 %v1665
      %v1849 = vpop.f32.mrf.mxu0
      %v1850 = vadd.f32 %v1632, %v1849
      %v1851 = vpop.f32.mrf.mxu0
      %1852 = vmatprep.mubr.f32.mxu0 0.0
      %1853 = vmatmul.mubr.f32.gmra.mxu0 %v1668
      %v1854 = vpop.f32.mrf.mxu0
      %v1855 = vadd.f32 %v1632, %v1854
      %v1856 = vpop.f32.mrf.mxu0
      %1857 = vmatprep.mubr.f32.mxu0 0.0
      %1858 = vmatmul.mubr.f32.gmra.mxu0 %v1671
      %v1859 = vpop.f32.mrf.mxu0
      %v1860 = vadd.f32 %v1632, %v1859
      %v1861 = vpop.f32.mrf.mxu0
      %1862 = vmatprep.mubr.f32.mxu0 0.0
      %1863 = vmatmul.mubr.f32.gmra.mxu0 %v1674
      %v1864 = vpop.f32.mrf.mxu0
      %v1865 = vadd.f32 %v1632, %v1864
      %v1866 = vpop.f32.mrf.mxu0
      %1867 = vmatprep.mubr.f32.mxu0 0.0
      %1868 = vmatmul.mubr.f32.gmra.mxu0 %v1677
      %v1869 = vpop.f32.mrf.mxu0
      %v1870 = vadd.f32 %v1632, %v1869
      %v1871 = vpop.f32.mrf.mxu0
      %1872 = vmatprep.mubr.f32.mxu0 0.0
      %1873 = vmatmul.mubr.f32.gmra.mxu0 %v1680
      %v1874 = vpop.f32.mrf.mxu0
      %v1875 = vadd.f32 %v1632, %v1874
      %v1876 = vpop.f32.mrf.mxu0
      %1877 = vmatprep.mubr.f32.mxu0 0.0
      %1878 = vmatmul.mubr.f32.gmra.mxu0 %v1683
      %v1879 = vpop.f32.mrf.mxu0
      %v1880 = vadd.f32 %v1632, %v1879
      %v1881 = vpop.f32.mrf.mxu0
      %1882 = vmatprep.mubr.f32.mxu0 0.0
      %1883 = vmatmul.mubr.f32.gmra.mxu0 %v1686
      %v1884 = vpop.f32.mrf.mxu0
      %v1885 = vadd.f32 %v1632, %v1884
      %v1886 = vpop.f32.mrf.mxu0
      %1887 = vmatprep.mubr.f32.mxu0 0.0
      %1888 = vmatmul.mubr.f32.gmra.mxu0 %v1689
      %v1889 = vpop.f32.mrf.mxu0
      %v1890 = vadd.f32 %v1632, %v1889
      %v1891 = vpop.f32.mrf.mxu0
      %1892 = vmatprep.mubr.f32.mxu0 0.0
      %1893 = vmatmul.mubr.f32.gmra.mxu0 %v1692
      %v1894 = vpop.f32.mrf.mxu0
      %v1895 = vadd.f32 %v1632, %v1894
      %v1896 = vpop.f32.mrf.mxu0
      %1897 = vmatprep.mubr.f32.mxu0 0.0
      %1898 = vmatmul.mubr.f32.gmra.mxu0 %v1695
      %v1899 = vpop.f32.mrf.mxu0
      %v1900 = vadd.f32 %v1632, %v1899
      %v1901 = vpop.f32.mrf.mxu0
      %1902 = vmatprep.mubr.f32.mxu0 0.0
      %1903 = vmatmul.mubr.f32.gmra.mxu0 %v1698
      %v1904 = vpop.f32.mrf.mxu0
      %v1905 = vadd.f32 %v1632, %v1904
      %v1906 = vpop.f32.mrf.mxu0
      %1907 = vmatprep.mubr.f32.mxu0 0.0
      %1908 = vmatmul.mubr.f32.gmra.mxu0 %v1701
      %v1909 = vpop.f32.mrf.mxu0
      %v1910 = vadd.f32 %v1632, %v1909
      %v1911 = vpop.f32.mrf.mxu0
      %1912 = vmatprep.mubr.f32.mxu0 0.0
      %1913 = vmatmul.mubr.f32.gmra.mxu0 %v1704
      %v1914 = vpop.f32.mrf.mxu0
      %v1915 = vadd.f32 %v1632, %v1914
      %v1916 = vpop.f32.mrf.mxu0
      %1917 = vmatprep.mubr.f32.mxu0 0.0
      %1918 = vmatmul.mubr.f32.gmra.mxu0 %v1707
      %v1919 = vpop.f32.mrf.mxu0
      %v1920 = vadd.f32 %v1632, %v1919
      %v1921 = vpop.f32.mrf.mxu0
      %1922 = vmatprep.mubr.f32.mxu0 0.0
      %1923 = vmatmul.mubr.f32.gmra.mxu0 %v1710
      %v1924 = vpop.f32.mrf.mxu0
      %v1925 = vadd.f32 %v1632, %v1924
      %v1926 = vpop.f32.mrf.mxu0
      %1927 = vmatprep.mubr.f32.mxu0 0.0
      %1928 = vmatmul.mubr.f32.gmra.mxu0 %v1713
      %v1929 = vpop.f32.mrf.mxu0
      %v1930 = vadd.f32 %v1632, %v1929
      %v1931 = vpop.f32.mrf.mxu0
      %1932 = vmatprep.mubr.f32.mxu0 0.0
      %1933 = vmatmul.mubr.f32.gmra.mxu0 %v1716
      %v1934 = vpop.f32.mrf.mxu0
      %v1935 = vadd.f32 %v1632, %v1934
      %v1936 = vpop.f32.mrf.mxu0
      %1937 = vmatprep.mubr.f32.mxu0 0.0
      %1938 = vmatmul.mubr.f32.gmra.mxu0 %v1719
      %v1939 = vpop.f32.mrf.mxu0
      %v1940 = vadd.f32 %v1632, %v1939
      %v1941 = vpop.f32.mrf.mxu0
      %1942 = vmatprep.mubr.f32.mxu0 0.0
      %1943 = vmatmul.mubr.f32.gmra.mxu0 %v1722
      %v1944 = vpop.f32.mrf.mxu0
      %v1945 = vadd.f32 %v1632, %v1944
      %v1946 = vpop.f32.mrf.mxu0
      %1947 = vmatprep.mubr.f32.mxu0 0.0
      %1948 = vmatmul.mubr.f32.gmra.mxu0 %v1725
      %v1949 = vpop.f32.mrf.mxu0
      %v1950 = vadd.f32 %v1632, %v1949
      %v1951 = vpop.f32.mrf.mxu0
      %1952 = vmatprep.mubr.f32.mxu0 0.0
      %1953 = vmatmul.mubr.f32.gmra.mxu0 %v1728
      %v1954 = vpop.f32.mrf.mxu0
      %v1955 = vadd.f32 %v1632, %v1954
      %v1956 = vpop.f32.mrf.mxu0
      %1957 = vdwg.mxu0
      %vm1958 = vcmp.ge.f32.partialorder %v1800, 0.0
      %vm1959 = vcmp.ge.f32.partialorder %v1805, 0.0
      %vm1960 = vcmp.ge.f32.partialorder %v1810, 0.0
      %vm1961 = vcmp.ge.f32.partialorder %v1815, 0.0
      %vm1962 = vcmp.ge.f32.partialorder %v1820, 0.0
      %vm1963 = vcmp.ge.f32.partialorder %v1825, 0.0
      %vm1964 = vcmp.ge.f32.partialorder %v1830, 0.0
      %vm1965 = vcmp.ge.f32.partialorder %v1835, 0.0
      %vm1966 = vcmp.ge.f32.partialorder %v1840, 0.0
      %vm1967 = vcmp.ge.f32.partialorder %v1845, 0.0
      %vm1968 = vcmp.ge.f32.partialorder %v1850, 0.0
      %vm1969 = vcmp.ge.f32.partialorder %v1855, 0.0
      %vm1970 = vcmp.ge.f32.partialorder %v1860, 0.0
      %vm1971 = vcmp.ge.f32.partialorder %v1865, 0.0
      %vm1972 = vcmp.ge.f32.partialorder %v1870, 0.0
      %vm1973 = vcmp.ge.f32.partialorder %v1875, 0.0
      %vm1974 = vcmp.ge.f32.partialorder %v1880, 0.0
      %vm1975 = vcmp.ge.f32.partialorder %v1885, 0.0
      %vm1976 = vcmp.ge.f32.partialorder %v1890, 0.0
      %vm1977 = vcmp.ge.f32.partialorder %v1895, 0.0
      %vm1978 = vcmp.ge.f32.partialorder %v1900, 0.0
      %vm1979 = vcmp.ge.f32.partialorder %v1905, 0.0
      %vm1980 = vcmp.ge.f32.partialorder %v1910, 0.0
      %vm1981 = vcmp.ge.f32.partialorder %v1915, 0.0
      %vm1982 = vcmp.ge.f32.partialorder %v1920, 0.0
      %vm1983 = vcmp.ge.f32.partialorder %v1925, 0.0
      %vm1984 = vcmp.ge.f32.partialorder %v1930, 0.0
      %vm1985 = vcmp.ge.f32.partialorder %v1935, 0.0
      %vm1986 = vcmp.ge.f32.partialorder %v1940, 0.0
      %vm1987 = vcmp.ge.f32.partialorder %v1945, 0.0
      %vm1988 = vcmp.ge.f32.partialorder %v1950, 0.0
      %vm1989 = vcmp.ge.f32.partialorder %v1955, 0.0
      %v1990 = vmul.f32 %v1800, 0.01
      %v1991 = vmul.f32 %v1805, 0.01
      %v1992 = vmul.f32 %v1810, 0.01
      %v1993 = vmul.f32 %v1815, 0.01
      %v1994 = vmul.f32 %v1820, 0.01
      %v1995 = vmul.f32 %v1825, 0.01
      %v1996 = vmul.f32 %v1830, 0.01
      %v1997 = vmul.f32 %v1835, 0.01
      %v1998 = vmul.f32 %v1840, 0.01
      %v1999 = vmul.f32 %v1845, 0.01
      %v2000 = vmul.f32 %v1850, 0.01
      %v2001 = vmul.f32 %v1855, 0.01
      %v2002 = vmul.f32 %v1860, 0.01
      %v2003 = vmul.f32 %v1865, 0.01
      %v2004 = vmul.f32 %v1870, 0.01
      %v2005 = vmul.f32 %v1875, 0.01
      %v2006 = vmul.f32 %v1880, 0.01
      %v2007 = vmul.f32 %v1885, 0.01
      %v2008 = vmul.f32 %v1890, 0.01
      %v2009 = vmul.f32 %v1895, 0.01
      %v2010 = vmul.f32 %v1900, 0.01
      %v2011 = vmul.f32 %v1905, 0.01
      %v2012 = vmul.f32 %v1910, 0.01
      %v2013 = vmul.f32 %v1915, 0.01
      %v2014 = vmul.f32 %v1920, 0.01
      %v2015 = vmul.f32 %v1925, 0.01
      %v2016 = vmul.f32 %v1930, 0.01
      %v2017 = vmul.f32 %v1935, 0.01
      %v2018 = vmul.f32 %v1940, 0.01
      %v2019 = vmul.f32 %v1945, 0.01
      %v2020 = vmul.f32 %v1950, 0.01
      %v2021 = vmul.f32 %v1955, 0.01
      %v2022 = vsel %vm1958, %v1800, %v1990
      %v2023 = vsel %vm1959, %v1805, %v1991
      %v2024 = vsel %vm1960, %v1810, %v1992
      %v2025 = vsel %vm1961, %v1815, %v1993
      %v2026 = vsel %vm1962, %v1820, %v1994
      %v2027 = vsel %vm1963, %v1825, %v1995
      %v2028 = vsel %vm1964, %v1830, %v1996
      %v2029 = vsel %vm1965, %v1835, %v1997
      %v2030 = vsel %vm1966, %v1840, %v1998
      %v2031 = vsel %vm1967, %v1845, %v1999
      %v2032 = vsel %vm1968, %v1850, %v2000
      %v2033 = vsel %vm1969, %v1855, %v2001
      %v2034 = vsel %vm1970, %v1860, %v2002
      %v2035 = vsel %vm1971, %v1865, %v2003
      %v2036 = vsel %vm1972, %v1870, %v2004
      %v2037 = vsel %vm1973, %v1875, %v2005
      %v2038 = vsel %vm1974, %v1880, %v2006
      %v2039 = vsel %vm1975, %v1885, %v2007
      %v2040 = vsel %vm1976, %v1890, %v2008
      %v2041 = vsel %vm1977, %v1895, %v2009
      %v2042 = vsel %vm1978, %v1900, %v2010
      %v2043 = vsel %vm1979, %v1905, %v2011
      %v2044 = vsel %vm1980, %v1910, %v2012
      %v2045 = vsel %vm1981, %v1915, %v2013
      %v2046 = vsel %vm1982, %v1920, %v2014
      %v2047 = vsel %vm1983, %v1925, %v2015
      %v2048 = vsel %vm1984, %v1930, %v2016
      %v2049 = vsel %vm1985, %v1935, %v2017
      %v2050 = vsel %vm1986, %v1940, %v2018
      %v2051 = vsel %vm1987, %v1945, %v2019
      %v2052 = vsel %vm1988, %v1950, %v2020
      %v2053 = vsel %vm1989, %v1955, %v2021
      %s2054 = scalar_lea.vmem %s3, 56
      %v2055 = vld [vmem:[%s2054] sm:$0xff]
      %v2056 = vld [vmem:[%s2054 + $0x8] sm:$0xff]
      %v2057 = vld [vmem:[%s2054 + $0x10] sm:$0xff]
      %v2058 = vld [vmem:[%s2054 + $0x18] sm:$0xff]
      %v2059 = vld [vmem:[%s2054 + $0x20] sm:$0xff]
      %v2060 = vld [vmem:[%s2054 + $0x28] sm:$0xff]
      %v2061 = vld [vmem:[%s2054 + $0x30] sm:$0x3]
      %s2062 = scalar_lea.vmem %s4, 1
      %v2063 = vld [vmem:[%s2062] sm:$0x1]
      %v2065 = vlaneseq
      %v2066 = vshrl.u32 %v2065, 7
      %v2067 = vsub.s32 0, %v2066
      %v2068 = vrot.slane %v2063, %v2067
      %v2071 = vsel %vm843, %v2022, 0
      %v2074 = vsel %vm843, %v2023, 0
      %v2077 = vsel %vm843, %v2024, 0
      %v2080 = vsel %vm843, %v2025, 0
      %v2083 = vsel %vm843, %v2026, 0
      %v2086 = vsel %vm843, %v2027, 0
      %v2089 = vsel %vm843, %v2028, 0
      %v2092 = vsel %vm843, %v2029, 0
      %v2095 = vsel %vm843, %v2030, 0
      %v2098 = vsel %vm843, %v2031, 0
      %v2101 = vsel %vm843, %v2032, 0
      %v2104 = vsel %vm843, %v2033, 0
      %v2107 = vsel %vm843, %v2034, 0
      %v2110 = vsel %vm843, %v2035, 0
      %v2113 = vsel %vm843, %v2036, 0
      %v2116 = vsel %vm843, %v2037, 0
      %v2119 = vsel %vm843, %v2038, 0
      %v2122 = vsel %vm843, %v2039, 0
      %v2125 = vsel %vm843, %v2040, 0
      %v2128 = vsel %vm843, %v2041, 0
      %v2131 = vsel %vm843, %v2042, 0
      %v2134 = vsel %vm843, %v2043, 0
      %v2137 = vsel %vm843, %v2044, 0
      %v2140 = vsel %vm843, %v2045, 0
      %v2143 = vsel %vm843, %v2046, 0
      %v2146 = vsel %vm843, %v2047, 0
      %v2149 = vsel %vm843, %v2048, 0
      %v2152 = vsel %vm843, %v2049, 0
      %v2155 = vsel %vm843, %v2050, 0
      %v2158 = vsel %vm843, %v2051, 0
      %v2161 = vsel %vm843, %v2052, 0
      %v2164 = vsel %vm843, %v2053, 0
      %v2167 = vsel %vm940, %v2061, 0
      %2169 = vmatprep.subr.mxu0 0.0
      %2170 = vmatpush1.msra.mxu0 0.0
      %2171 = vmatprep.subr.mxu0 0.0
      %2172 = vmatpush1.msra.mxu0 0.0
      %2173 = vmatprep.subr.mxu0 0.0
      %2174 = vmatpush1.msra.mxu0 0.0
      %2175 = vmatprep.subr.mxu0 0.0
      %2176 = vmatpush1.msra.mxu0 0.0
      %2177 = vmatprep.subr.mxu0 0.0
      %2178 = vmatpush1.msra.mxu0 0.0
      %2179 = vmatprep.subr.mxu0 0.0
      %2180 = vmatpush1.msra.mxu0 0.0
      %2181 = vmatprep.subr.mxu0 0.0
      %2182 = vmatpush1.msra.mxu0 0.0
      %2183 = vmatprep.subr.mxu0 0.0
      %2184 = vmatpush1.msra.mxu0 0.0
      %2185 = vmatprep.subr.mxu0 0.0
      %2186 = vmatpush1.msra.mxu0 0.0
      %2187 = vmatprep.subr.mxu0 0.0
      %2188 = vmatpush1.msra.mxu0 %v2167
      %2189 = vmatprep.subr.mxu0 0.0
      %2190 = vmatpush1.msra.mxu0 %v2060
      %2191 = vmatprep.subr.mxu0 0.0
      %2192 = vmatpush1.msra.mxu0 %v2059
      %2193 = vmatprep.subr.mxu0 0.0
      %2194 = vmatpush1.msra.mxu0 %v2058
      %2195 = vmatprep.subr.mxu0 0.0
      %2196 = vmatpush1.msra.mxu0 %v2057
      %2197 = vmatprep.subr.mxu0 0.0
      %2198 = vmatpush1.msra.mxu0 %v2056
      %2199 = vmatprep.subr.mxu0 0.0
      %2200 = vmatpush1.msra.mxu0 %v2055
      %2201 = vmatprep.subr.mxu0 0.0
      %2202 = vmatpush2.msra.mxu0 0.0
      %2203 = vmatprep.subr.mxu0 0.0
      %2204 = vmatpush2.msra.mxu0 0.0
      %2205 = vmatprep.subr.mxu0 0.0
      %2206 = vmatpush2.msra.mxu0 0.0
      %2207 = vmatprep.subr.mxu0 0.0
      %2208 = vmatpush2.msra.mxu0 0.0
      %2209 = vmatprep.subr.mxu0 0.0
      %2210 = vmatpush2.msra.mxu0 0.0
      %2211 = vmatprep.subr.mxu0 0.0
      %2212 = vmatpush2.msra.mxu0 0.0
      %2213 = vmatprep.subr.mxu0 0.0
      %2214 = vmatpush2.msra.mxu0 0.0
      %2215 = vmatprep.subr.mxu0 0.0
      %2216 = vmatpush2.msra.mxu0 0.0
      %2217 = vmatprep.subr.mxu0 0.0
      %2218 = vmatpush2.msra.mxu0 0.0
      %2219 = vmatprep.subr.mxu0 0.0
      %2220 = vmatpush2.msra.mxu0 0.0
      %2221 = vmatprep.subr.mxu0 0.0
      %2222 = vmatpush2.msra.mxu0 0.0
      %2223 = vmatprep.subr.mxu0 0.0
      %2224 = vmatpush2.msra.mxu0 0.0
      %2225 = vmatprep.subr.mxu0 0.0
      %2226 = vmatpush2.msra.mxu0 0.0
      %2227 = vmatprep.subr.mxu0 0.0
      %2228 = vmatpush2.msra.mxu0 0.0
      %2229 = vmatprep.subr.mxu0 0.0
      %2230 = vmatpush2.msra.mxu0 0.0
      %2231 = vmatprep.subr.mxu0 0.0
      %2232 = vmatpush2.msra.mxu0 0.0
      %2233 = vmatprep.mubr.f32.mxu0 0.0
      %2234 = vmatmul.mubr.f32.gmra.mxu0 %v2071
      %v2235 = vpop.f32.mrf.mxu0
      %v2236 = vadd.f32 %v2068, %v2235
      %v2237 = vpop.f32.mrf.mxu0
      %2238 = vmatprep.mubr.f32.mxu0 0.0
      %2239 = vmatmul.mubr.f32.gmra.mxu0 %v2074
      %v2240 = vpop.f32.mrf.mxu0
      %v2241 = vadd.f32 %v2068, %v2240
      %v2242 = vpop.f32.mrf.mxu0
      %2243 = vmatprep.mubr.f32.mxu0 0.0
      %2244 = vmatmul.mubr.f32.gmra.mxu0 %v2077
      %v2245 = vpop.f32.mrf.mxu0
      %v2246 = vadd.f32 %v2068, %v2245
      %v2247 = vpop.f32.mrf.mxu0
      %2248 = vmatprep.mubr.f32.mxu0 0.0
      %2249 = vmatmul.mubr.f32.gmra.mxu0 %v2080
      %v2250 = vpop.f32.mrf.mxu0
      %v2251 = vadd.f32 %v2068, %v2250
      %v2252 = vpop.f32.mrf.mxu0
      %2253 = vmatprep.mubr.f32.mxu0 0.0
      %2254 = vmatmul.mubr.f32.gmra.mxu0 %v2083
      %v2255 = vpop.f32.mrf.mxu0
      %v2256 = vadd.f32 %v2068, %v2255
      %v2257 = vpop.f32.mrf.mxu0
      %2258 = vmatprep.mubr.f32.mxu0 0.0
      %2259 = vmatmul.mubr.f32.gmra.mxu0 %v2086
      %v2260 = vpop.f32.mrf.mxu0
      %v2261 = vadd.f32 %v2068, %v2260
      %v2262 = vpop.f32.mrf.mxu0
      %2263 = vmatprep.mubr.f32.mxu0 0.0
      %2264 = vmatmul.mubr.f32.gmra.mxu0 %v2089
      %v2265 = vpop.f32.mrf.mxu0
      %v2266 = vadd.f32 %v2068, %v2265
      %v2267 = vpop.f32.mrf.mxu0
      %2268 = vmatprep.mubr.f32.mxu0 0.0
      %2269 = vmatmul.mubr.f32.gmra.mxu0 %v2092
      %v2270 = vpop.f32.mrf.mxu0
      %v2271 = vadd.f32 %v2068, %v2270
      %v2272 = vpop.f32.mrf.mxu0
      %2273 = vmatprep.mubr.f32.mxu0 0.0
      %2274 = vmatmul.mubr.f32.gmra.mxu0 %v2095
      %v2275 = vpop.f32.mrf.mxu0
      %v2276 = vadd.f32 %v2068, %v2275
      %v2277 = vpop.f32.mrf.mxu0
      %2278 = vmatprep.mubr.f32.mxu0 0.0
      %2279 = vmatmul.mubr.f32.gmra.mxu0 %v2098
      %v2280 = vpop.f32.mrf.mxu0
      %v2281 = vadd.f32 %v2068, %v2280
      %v2282 = vpop.f32.mrf.mxu0
      %2283 = vmatprep.mubr.f32.mxu0 0.0
      %2284 = vmatmul.mubr.f32.gmra.mxu0 %v2101
      %v2285 = vpop.f32.mrf.mxu0
      %v2286 = vadd.f32 %v2068, %v2285
      %v2287 = vpop.f32.mrf.mxu0
      %2288 = vmatprep.mubr.f32.mxu0 0.0
      %2289 = vmatmul.mubr.f32.gmra.mxu0 %v2104
      %v2290 = vpop.f32.mrf.mxu0
      %v2291 = vadd.f32 %v2068, %v2290
      %v2292 = vpop.f32.mrf.mxu0
      %2293 = vmatprep.mubr.f32.mxu0 0.0
      %2294 = vmatmul.mubr.f32.gmra.mxu0 %v2107
      %v2295 = vpop.f32.mrf.mxu0
      %v2296 = vadd.f32 %v2068, %v2295
      %v2297 = vpop.f32.mrf.mxu0
      %2298 = vmatprep.mubr.f32.mxu0 0.0
      %2299 = vmatmul.mubr.f32.gmra.mxu0 %v2110
      %v2300 = vpop.f32.mrf.mxu0
      %v2301 = vadd.f32 %v2068, %v2300
      %v2302 = vpop.f32.mrf.mxu0
      %2303 = vmatprep.mubr.f32.mxu0 0.0
      %2304 = vmatmul.mubr.f32.gmra.mxu0 %v2113
      %v2305 = vpop.f32.mrf.mxu0
      %v2306 = vadd.f32 %v2068, %v2305
      %v2307 = vpop.f32.mrf.mxu0
      %2308 = vmatprep.mubr.f32.mxu0 0.0
      %2309 = vmatmul.mubr.f32.gmra.mxu0 %v2116
      %v2310 = vpop.f32.mrf.mxu0
      %v2311 = vadd.f32 %v2068, %v2310
      %v2312 = vpop.f32.mrf.mxu0
      %2313 = vmatprep.mubr.f32.mxu0 0.0
      %2314 = vmatmul.mubr.f32.gmra.mxu0 %v2119
      %v2315 = vpop.f32.mrf.mxu0
      %v2316 = vadd.f32 %v2068, %v2315
      %v2317 = vpop.f32.mrf.mxu0
      %2318 = vmatprep.mubr.f32.mxu0 0.0
      %2319 = vmatmul.mubr.f32.gmra.mxu0 %v2122
      %v2320 = vpop.f32.mrf.mxu0
      %v2321 = vadd.f32 %v2068, %v2320
      %v2322 = vpop.f32.mrf.mxu0
      %2323 = vmatprep.mubr.f32.mxu0 0.0
      %2324 = vmatmul.mubr.f32.gmra.mxu0 %v2125
      %v2325 = vpop.f32.mrf.mxu0
      %v2326 = vadd.f32 %v2068, %v2325
      %v2327 = vpop.f32.mrf.mxu0
      %2328 = vmatprep.mubr.f32.mxu0 0.0
      %2329 = vmatmul.mubr.f32.gmra.mxu0 %v2128
      %v2330 = vpop.f32.mrf.mxu0
      %v2331 = vadd.f32 %v2068, %v2330
      %v2332 = vpop.f32.mrf.mxu0
      %2333 = vmatprep.mubr.f32.mxu0 0.0
      %2334 = vmatmul.mubr.f32.gmra.mxu0 %v2131
      %v2335 = vpop.f32.mrf.mxu0
      %v2336 = vadd.f32 %v2068, %v2335
      %v2337 = vpop.f32.mrf.mxu0
      %2338 = vmatprep.mubr.f32.mxu0 0.0
      %2339 = vmatmul.mubr.f32.gmra.mxu0 %v2134
      %v2340 = vpop.f32.mrf.mxu0
      %v2341 = vadd.f32 %v2068, %v2340
      %v2342 = vpop.f32.mrf.mxu0
      %2343 = vmatprep.mubr.f32.mxu0 0.0
      %2344 = vmatmul.mubr.f32.gmra.mxu0 %v2137
      %v2345 = vpop.f32.mrf.mxu0
      %v2346 = vadd.f32 %v2068, %v2345
      %v2347 = vpop.f32.mrf.mxu0
      %2348 = vmatprep.mubr.f32.mxu0 0.0
      %2349 = vmatmul.mubr.f32.gmra.mxu0 %v2140
      %v2350 = vpop.f32.mrf.mxu0
      %v2351 = vadd.f32 %v2068, %v2350
      %v2352 = vpop.f32.mrf.mxu0
      %2353 = vmatprep.mubr.f32.mxu0 0.0
      %2354 = vmatmul.mubr.f32.gmra.mxu0 %v2143
      %v2355 = vpop.f32.mrf.mxu0
      %v2356 = vadd.f32 %v2068, %v2355
      %v2357 = vpop.f32.mrf.mxu0
      %2358 = vmatprep.mubr.f32.mxu0 0.0
      %2359 = vmatmul.mubr.f32.gmra.mxu0 %v2146
      %v2360 = vpop.f32.mrf.mxu0
      %v2361 = vadd.f32 %v2068, %v2360
      %v2362 = vpop.f32.mrf.mxu0
      %2363 = vmatprep.mubr.f32.mxu0 0.0
      %2364 = vmatmul.mubr.f32.gmra.mxu0 %v2149
      %v2365 = vpop.f32.mrf.mxu0
      %v2366 = vadd.f32 %v2068, %v2365
      %v2367 = vpop.f32.mrf.mxu0
      %2368 = vmatprep.mubr.f32.mxu0 0.0
      %2369 = vmatmul.mubr.f32.gmra.mxu0 %v2152
      %v2370 = vpop.f32.mrf.mxu0
      %v2371 = vadd.f32 %v2068, %v2370
      %v2372 = vpop.f32.mrf.mxu0
      %2373 = vmatprep.mubr.f32.mxu0 0.0
      %2374 = vmatmul.mubr.f32.gmra.mxu0 %v2155
      %v2375 = vpop.f32.mrf.mxu0
      %v2376 = vadd.f32 %v2068, %v2375
      %v2377 = vpop.f32.mrf.mxu0
      %2378 = vmatprep.mubr.f32.mxu0 0.0
      %2379 = vmatmul.mubr.f32.gmra.mxu0 %v2158
      %v2380 = vpop.f32.mrf.mxu0
      %v2381 = vadd.f32 %v2068, %v2380
      %v2382 = vpop.f32.mrf.mxu0
      %2383 = vmatprep.mubr.f32.mxu0 0.0
      %2384 = vmatmul.mubr.f32.gmra.mxu0 %v2161
      %v2385 = vpop.f32.mrf.mxu0
      %v2386 = vadd.f32 %v2068, %v2385
      %v2387 = vpop.f32.mrf.mxu0
      %2388 = vmatprep.mubr.f32.mxu0 0.0
      %2389 = vmatmul.mubr.f32.gmra.mxu0 %v2164
      %v2390 = vpop.f32.mrf.mxu0
      %v2391 = vadd.f32 %v2068, %v2390
      %v2392 = vpop.f32.mrf.mxu0
      %2393 = vdwg.mxu0
      %vm2394 = vcmp.ge.f32.partialorder %v2236, 0.0
      %vm2395 = vcmp.ge.f32.partialorder %v2241, 0.0
      %vm2396 = vcmp.ge.f32.partialorder %v2246, 0.0
      %vm2397 = vcmp.ge.f32.partialorder %v2251, 0.0
      %vm2398 = vcmp.ge.f32.partialorder %v2256, 0.0
      %vm2399 = vcmp.ge.f32.partialorder %v2261, 0.0
      %vm2400 = vcmp.ge.f32.partialorder %v2266, 0.0
      %vm2401 = vcmp.ge.f32.partialorder %v2271, 0.0
      %vm2402 = vcmp.ge.f32.partialorder %v2276, 0.0
      %vm2403 = vcmp.ge.f32.partialorder %v2281, 0.0
      %vm2404 = vcmp.ge.f32.partialorder %v2286, 0.0
      %vm2405 = vcmp.ge.f32.partialorder %v2291, 0.0
      %vm2406 = vcmp.ge.f32.partialorder %v2296, 0.0
      %vm2407 = vcmp.ge.f32.partialorder %v2301, 0.0
      %vm2408 = vcmp.ge.f32.partialorder %v2306, 0.0
      %vm2409 = vcmp.ge.f32.partialorder %v2311, 0.0
      %vm2410 = vcmp.ge.f32.partialorder %v2316, 0.0
      %vm2411 = vcmp.ge.f32.partialorder %v2321, 0.0
      %vm2412 = vcmp.ge.f32.partialorder %v2326, 0.0
      %vm2413 = vcmp.ge.f32.partialorder %v2331, 0.0
      %vm2414 = vcmp.ge.f32.partialorder %v2336, 0.0
      %vm2415 = vcmp.ge.f32.partialorder %v2341, 0.0
      %vm2416 = vcmp.ge.f32.partialorder %v2346, 0.0
      %vm2417 = vcmp.ge.f32.partialorder %v2351, 0.0
      %vm2418 = vcmp.ge.f32.partialorder %v2356, 0.0
      %vm2419 = vcmp.ge.f32.partialorder %v2361, 0.0
      %vm2420 = vcmp.ge.f32.partialorder %v2366, 0.0
      %vm2421 = vcmp.ge.f32.partialorder %v2371, 0.0
      %vm2422 = vcmp.ge.f32.partialorder %v2376, 0.0
      %vm2423 = vcmp.ge.f32.partialorder %v2381, 0.0
      %vm2424 = vcmp.ge.f32.partialorder %v2386, 0.0
      %vm2425 = vcmp.ge.f32.partialorder %v2391, 0.0
      %v2426 = vmul.f32 %v2236, 0.01
      %v2427 = vmul.f32 %v2241, 0.01
      %v2428 = vmul.f32 %v2246, 0.01
      %v2429 = vmul.f32 %v2251, 0.01
      %v2430 = vmul.f32 %v2256, 0.01
      %v2431 = vmul.f32 %v2261, 0.01
      %v2432 = vmul.f32 %v2266, 0.01
      %v2433 = vmul.f32 %v2271, 0.01
      %v2434 = vmul.f32 %v2276, 0.01
      %v2435 = vmul.f32 %v2281, 0.01
      %v2436 = vmul.f32 %v2286, 0.01
      %v2437 = vmul.f32 %v2291, 0.01
      %v2438 = vmul.f32 %v2296, 0.01
      %v2439 = vmul.f32 %v2301, 0.01
      %v2440 = vmul.f32 %v2306, 0.01
      %v2441 = vmul.f32 %v2311, 0.01
      %v2442 = vmul.f32 %v2316, 0.01
      %v2443 = vmul.f32 %v2321, 0.01
      %v2444 = vmul.f32 %v2326, 0.01
      %v2445 = vmul.f32 %v2331, 0.01
      %v2446 = vmul.f32 %v2336, 0.01
      %v2447 = vmul.f32 %v2341, 0.01
      %v2448 = vmul.f32 %v2346, 0.01
      %v2449 = vmul.f32 %v2351, 0.01
      %v2450 = vmul.f32 %v2356, 0.01
      %v2451 = vmul.f32 %v2361, 0.01
      %v2452 = vmul.f32 %v2366, 0.01
      %v2453 = vmul.f32 %v2371, 0.01
      %v2454 = vmul.f32 %v2376, 0.01
      %v2455 = vmul.f32 %v2381, 0.01
      %v2456 = vmul.f32 %v2386, 0.01
      %v2457 = vmul.f32 %v2391, 0.01
      %v2458 = vsel %vm2394, %v2236, %v2426
      %v2459 = vsel %vm2395, %v2241, %v2427
      %v2460 = vsel %vm2396, %v2246, %v2428
      %v2461 = vsel %vm2397, %v2251, %v2429
      %v2462 = vsel %vm2398, %v2256, %v2430
      %v2463 = vsel %vm2399, %v2261, %v2431
      %v2464 = vsel %vm2400, %v2266, %v2432
      %v2465 = vsel %vm2401, %v2271, %v2433
      %v2466 = vsel %vm2402, %v2276, %v2434
      %v2467 = vsel %vm2403, %v2281, %v2435
      %v2468 = vsel %vm2404, %v2286, %v2436
      %v2469 = vsel %vm2405, %v2291, %v2437
      %v2470 = vsel %vm2406, %v2296, %v2438
      %v2471 = vsel %vm2407, %v2301, %v2439
      %v2472 = vsel %vm2408, %v2306, %v2440
      %v2473 = vsel %vm2409, %v2311, %v2441
      %v2474 = vsel %vm2410, %v2316, %v2442
      %v2475 = vsel %vm2411, %v2321, %v2443
      %v2476 = vsel %vm2412, %v2326, %v2444
      %v2477 = vsel %vm2413, %v2331, %v2445
      %v2478 = vsel %vm2414, %v2336, %v2446
      %v2479 = vsel %vm2415, %v2341, %v2447
      %v2480 = vsel %vm2416, %v2346, %v2448
      %v2481 = vsel %vm2417, %v2351, %v2449
      %v2482 = vsel %vm2418, %v2356, %v2450
      %v2483 = vsel %vm2419, %v2361, %v2451
      %v2484 = vsel %vm2420, %v2366, %v2452
      %v2485 = vsel %vm2421, %v2371, %v2453
      %v2486 = vsel %vm2422, %v2376, %v2454
      %v2487 = vsel %vm2423, %v2381, %v2455
      %v2488 = vsel %vm2424, %v2386, %v2456
      %v2489 = vsel %vm2425, %v2391, %v2457
      %v2491 = vsel %vm1265, %v2458, 0
      %v2494 = vsel %vm1265, %v2459, 0
      %v2497 = vsel %vm1265, %v2460, 0
      %v2500 = vsel %vm1265, %v2461, 0
      %v2503 = vsel %vm1265, %v2462, 0
      %v2506 = vsel %vm1265, %v2463, 0
      %v2509 = vsel %vm1265, %v2464, 0
      %v2512 = vsel %vm1265, %v2465, 0
      %v2515 = vsel %vm1265, %v2466, 0
      %v2518 = vsel %vm1265, %v2467, 0
      %v2521 = vsel %vm1265, %v2468, 0
      %v2524 = vsel %vm1265, %v2469, 0
      %v2527 = vsel %vm1265, %v2470, 0
      %v2530 = vsel %vm1265, %v2471, 0
      %v2533 = vsel %vm1265, %v2472, 0
      %v2536 = vsel %vm1265, %v2473, 0
      %v2539 = vsel %vm1265, %v2474, 0
      %v2542 = vsel %vm1265, %v2475, 0
      %v2545 = vsel %vm1265, %v2476, 0
      %v2548 = vsel %vm1265, %v2477, 0
      %v2551 = vsel %vm1265, %v2478, 0
      %v2554 = vsel %vm1265, %v2479, 0
      %v2557 = vsel %vm1265, %v2480, 0
      %v2560 = vsel %vm1265, %v2481, 0
      %v2563 = vsel %vm1265, %v2482, 0
      %v2566 = vsel %vm1265, %v2483, 0
      %v2569 = vsel %vm1265, %v2484, 0
      %v2572 = vsel %vm1265, %v2485, 0
      %v2575 = vsel %vm1265, %v2486, 0
      %v2578 = vsel %vm1265, %v2487, 0
      %v2581 = vsel %vm1265, %v2488, 0
      %v2584 = vsel %vm1265, %v2489, 0
      %2586 = vmatprep.subr.mxu0 0.0
      %2587 = vmatpush1.msra.mxu0 0.0
      %2588 = vmatprep.subr.mxu0 0.0
      %2589 = vmatpush1.msra.mxu0 0.0
      %2590 = vmatprep.subr.mxu0 0.0
      %2591 = vmatpush1.msra.mxu0 %v1364
      %2592 = vmatprep.subr.mxu0 0.0
      %2593 = vmatpush1.msra.mxu0 %v397
      %2594 = vmatprep.subr.mxu0 0.0
      %2595 = vmatpush1.msra.mxu0 %v396
      %2596 = vmatprep.subr.mxu0 0.0
      %2597 = vmatpush1.msra.mxu0 %v395
      %2598 = vmatprep.subr.mxu0 0.0
      %2599 = vmatpush1.msra.mxu0 %v394
      %2600 = vmatprep.subr.mxu0 0.0
      %2601 = vmatpush1.msra.mxu0 %v393
      %2602 = vmatprep.subr.mxu0 0.0
      %2603 = vmatpush1.msra.mxu0 %v392
      %2604 = vmatprep.subr.mxu0 0.0
      %2605 = vmatpush1.msra.mxu0 %v391
      %2606 = vmatprep.subr.mxu0 0.0
      %2607 = vmatpush1.msra.mxu0 %v390
      %2608 = vmatprep.subr.mxu0 0.0
      %2609 = vmatpush1.msra.mxu0 %v389
      %2610 = vmatprep.subr.mxu0 0.0
      %2611 = vmatpush1.msra.mxu0 %v388
      %2612 = vmatprep.subr.mxu0 0.0
      %2613 = vmatpush1.msra.mxu0 %v387
      %2614 = vmatprep.subr.mxu0 0.0
      %2615 = vmatpush1.msra.mxu0 %v386
      %2616 = vmatprep.subr.mxu0 0.0
      %2617 = vmatpush1.msra.mxu0 %v385
      %2618 = vmatprep.subr.mxu0 0.0
      %2619 = vmatpush2.msra.mxu0 0.0
      %2620 = vmatprep.subr.mxu0 0.0
      %2621 = vmatpush2.msra.mxu0 0.0
      %2622 = vmatprep.subr.mxu0 0.0
      %2623 = vmatpush2.msra.mxu0 0.0
      %2624 = vmatprep.subr.mxu0 0.0
      %2625 = vmatpush2.msra.mxu0 0.0
      %2626 = vmatprep.subr.mxu0 0.0
      %2627 = vmatpush2.msra.mxu0 0.0
      %2628 = vmatprep.subr.mxu0 0.0
      %2629 = vmatpush2.msra.mxu0 0.0
      %2630 = vmatprep.subr.mxu0 0.0
      %2631 = vmatpush2.msra.mxu0 0.0
      %2632 = vmatprep.subr.mxu0 0.0
      %2633 = vmatpush2.msra.mxu0 0.0
      %2634 = vmatprep.subr.mxu0 0.0
      %2635 = vmatpush2.msra.mxu0 0.0
      %2636 = vmatprep.subr.mxu0 0.0
      %2637 = vmatpush2.msra.mxu0 0.0
      %2638 = vmatprep.subr.mxu0 0.0
      %2639 = vmatpush2.msra.mxu0 0.0
      %2640 = vmatprep.subr.mxu0 0.0
      %2641 = vmatpush2.msra.mxu0 0.0
      %2642 = vmatprep.subr.mxu0 0.0
      %2643 = vmatpush2.msra.mxu0 0.0
      %2644 = vmatprep.subr.mxu0 0.0
      %2645 = vmatpush2.msra.mxu0 0.0
      %2646 = vmatprep.subr.mxu0 0.0
      %2647 = vmatpush2.msra.mxu0 0.0
      %2648 = vmatprep.subr.mxu0 0.0
      %2649 = vmatpush2.msra.mxu0 0.0
      %2650 = vmatprep.mubr.f32.mxu0 0.0
      %2651 = vmatmul.mubr.f32.gmra.mxu0 %v2491
      %v2652 = vpop.f32.mrf.mxu0
      %v2653 = vadd.f32 0.0, %v2652
      %v2654 = vpop.f32.mrf.mxu0
      %2655 = vmatprep.mubr.f32.mxu0 0.0
      %2656 = vmatmul.mubr.f32.gmra.mxu0 %v2494
      %v2657 = vpop.f32.mrf.mxu0
      %v2658 = vadd.f32 0.0, %v2657
      %v2659 = vpop.f32.mrf.mxu0
      %2660 = vmatprep.mubr.f32.mxu0 0.0
      %2661 = vmatmul.mubr.f32.gmra.mxu0 %v2497
      %v2662 = vpop.f32.mrf.mxu0
      %v2663 = vadd.f32 0.0, %v2662
      %v2664 = vpop.f32.mrf.mxu0
      %2665 = vmatprep.mubr.f32.mxu0 0.0
      %2666 = vmatmul.mubr.f32.gmra.mxu0 %v2500
      %v2667 = vpop.f32.mrf.mxu0
      %v2668 = vadd.f32 0.0, %v2667
      %v2669 = vpop.f32.mrf.mxu0
      %2670 = vmatprep.mubr.f32.mxu0 0.0
      %2671 = vmatmul.mubr.f32.gmra.mxu0 %v2503
      %v2672 = vpop.f32.mrf.mxu0
      %v2673 = vadd.f32 0.0, %v2672
      %v2674 = vpop.f32.mrf.mxu0
      %2675 = vmatprep.mubr.f32.mxu0 0.0
      %2676 = vmatmul.mubr.f32.gmra.mxu0 %v2506
      %v2677 = vpop.f32.mrf.mxu0
      %v2678 = vadd.f32 0.0, %v2677
      %v2679 = vpop.f32.mrf.mxu0
      %2680 = vmatprep.mubr.f32.mxu0 0.0
      %2681 = vmatmul.mubr.f32.gmra.mxu0 %v2509
      %v2682 = vpop.f32.mrf.mxu0
      %v2683 = vadd.f32 0.0, %v2682
      %v2684 = vpop.f32.mrf.mxu0
      %2685 = vmatprep.mubr.f32.mxu0 0.0
      %2686 = vmatmul.mubr.f32.gmra.mxu0 %v2512
      %v2687 = vpop.f32.mrf.mxu0
      %v2688 = vadd.f32 0.0, %v2687
      %v2689 = vpop.f32.mrf.mxu0
      %2690 = vmatprep.mubr.f32.mxu0 0.0
      %2691 = vmatmul.mubr.f32.gmra.mxu0 %v2515
      %v2692 = vpop.f32.mrf.mxu0
      %v2693 = vadd.f32 0.0, %v2692
      %v2694 = vpop.f32.mrf.mxu0
      %2695 = vmatprep.mubr.f32.mxu0 0.0
      %2696 = vmatmul.mubr.f32.gmra.mxu0 %v2518
      %v2697 = vpop.f32.mrf.mxu0
      %v2698 = vadd.f32 0.0, %v2697
      %v2699 = vpop.f32.mrf.mxu0
      %2700 = vmatprep.mubr.f32.mxu0 0.0
      %2701 = vmatmul.mubr.f32.gmra.mxu0 %v2521
      %v2702 = vpop.f32.mrf.mxu0
      %v2703 = vadd.f32 0.0, %v2702
      %v2704 = vpop.f32.mrf.mxu0
      %2705 = vmatprep.mubr.f32.mxu0 0.0
      %2706 = vmatmul.mubr.f32.gmra.mxu0 %v2524
      %v2707 = vpop.f32.mrf.mxu0
      %v2708 = vadd.f32 0.0, %v2707
      %v2709 = vpop.f32.mrf.mxu0
      %2710 = vmatprep.mubr.f32.mxu0 0.0
      %2711 = vmatmul.mubr.f32.gmra.mxu0 %v2527
      %v2712 = vpop.f32.mrf.mxu0
      %v2713 = vadd.f32 0.0, %v2712
      %v2714 = vpop.f32.mrf.mxu0
      %2715 = vmatprep.mubr.f32.mxu0 0.0
      %2716 = vmatmul.mubr.f32.gmra.mxu0 %v2530
      %v2717 = vpop.f32.mrf.mxu0
      %v2718 = vadd.f32 0.0, %v2717
      %v2719 = vpop.f32.mrf.mxu0
      %2720 = vmatprep.mubr.f32.mxu0 0.0
      %2721 = vmatmul.mubr.f32.gmra.mxu0 %v2533
      %v2722 = vpop.f32.mrf.mxu0
      %v2723 = vadd.f32 0.0, %v2722
      %v2724 = vpop.f32.mrf.mxu0
      %2725 = vmatprep.mubr.f32.mxu0 0.0
      %2726 = vmatmul.mubr.f32.gmra.mxu0 %v2536
      %v2727 = vpop.f32.mrf.mxu0
      %v2728 = vadd.f32 0.0, %v2727
      %v2729 = vpop.f32.mrf.mxu0
      %2730 = vmatprep.mubr.f32.mxu0 0.0
      %2731 = vmatmul.mubr.f32.gmra.mxu0 %v2539
      %v2732 = vpop.f32.mrf.mxu0
      %v2733 = vadd.f32 0.0, %v2732
      %v2734 = vpop.f32.mrf.mxu0
      %2735 = vmatprep.mubr.f32.mxu0 0.0
      %2736 = vmatmul.mubr.f32.gmra.mxu0 %v2542
      %v2737 = vpop.f32.mrf.mxu0
      %v2738 = vadd.f32 0.0, %v2737
      %v2739 = vpop.f32.mrf.mxu0
      %2740 = vmatprep.mubr.f32.mxu0 0.0
      %2741 = vmatmul.mubr.f32.gmra.mxu0 %v2545
      %v2742 = vpop.f32.mrf.mxu0
      %v2743 = vadd.f32 0.0, %v2742
      %v2744 = vpop.f32.mrf.mxu0
      %2745 = vmatprep.mubr.f32.mxu0 0.0
      %2746 = vmatmul.mubr.f32.gmra.mxu0 %v2548
      %v2747 = vpop.f32.mrf.mxu0
      %v2748 = vadd.f32 0.0, %v2747
      %v2749 = vpop.f32.mrf.mxu0
      %2750 = vmatprep.mubr.f32.mxu0 0.0
      %2751 = vmatmul.mubr.f32.gmra.mxu0 %v2551
      %v2752 = vpop.f32.mrf.mxu0
      %v2753 = vadd.f32 0.0, %v2752
      %v2754 = vpop.f32.mrf.mxu0
      %2755 = vmatprep.mubr.f32.mxu0 0.0
      %2756 = vmatmul.mubr.f32.gmra.mxu0 %v2554
      %v2757 = vpop.f32.mrf.mxu0
      %v2758 = vadd.f32 0.0, %v2757
      %v2759 = vpop.f32.mrf.mxu0
      %2760 = vmatprep.mubr.f32.mxu0 0.0
      %2761 = vmatmul.mubr.f32.gmra.mxu0 %v2557
      %v2762 = vpop.f32.mrf.mxu0
      %v2763 = vadd.f32 0.0, %v2762
      %v2764 = vpop.f32.mrf.mxu0
      %2765 = vmatprep.mubr.f32.mxu0 0.0
      %2766 = vmatmul.mubr.f32.gmra.mxu0 %v2560
      %v2767 = vpop.f32.mrf.mxu0
      %v2768 = vadd.f32 0.0, %v2767
      %v2769 = vpop.f32.mrf.mxu0
      %2770 = vmatprep.mubr.f32.mxu0 0.0
      %2771 = vmatmul.mubr.f32.gmra.mxu0 %v2563
      %v2772 = vpop.f32.mrf.mxu0
      %v2773 = vadd.f32 0.0, %v2772
      %v2774 = vpop.f32.mrf.mxu0
      %2775 = vmatprep.mubr.f32.mxu0 0.0
      %2776 = vmatmul.mubr.f32.gmra.mxu0 %v2566
      %v2777 = vpop.f32.mrf.mxu0
      %v2778 = vadd.f32 0.0, %v2777
      %v2779 = vpop.f32.mrf.mxu0
      %2780 = vmatprep.mubr.f32.mxu0 0.0
      %2781 = vmatmul.mubr.f32.gmra.mxu0 %v2569
      %v2782 = vpop.f32.mrf.mxu0
      %v2783 = vadd.f32 0.0, %v2782
      %v2784 = vpop.f32.mrf.mxu0
      %2785 = vmatprep.mubr.f32.mxu0 0.0
      %2786 = vmatmul.mubr.f32.gmra.mxu0 %v2572
      %v2787 = vpop.f32.mrf.mxu0
      %v2788 = vadd.f32 0.0, %v2787
      %v2789 = vpop.f32.mrf.mxu0
      %2790 = vmatprep.mubr.f32.mxu0 0.0
      %2791 = vmatmul.mubr.f32.gmra.mxu0 %v2575
      %v2792 = vpop.f32.mrf.mxu0
      %v2793 = vadd.f32 0.0, %v2792
      %v2794 = vpop.f32.mrf.mxu0
      %2795 = vmatprep.mubr.f32.mxu0 0.0
      %2796 = vmatmul.mubr.f32.gmra.mxu0 %v2578
      %v2797 = vpop.f32.mrf.mxu0
      %v2798 = vadd.f32 0.0, %v2797
      %v2799 = vpop.f32.mrf.mxu0
      %2800 = vmatprep.mubr.f32.mxu0 0.0
      %2801 = vmatmul.mubr.f32.gmra.mxu0 %v2581
      %v2802 = vpop.f32.mrf.mxu0
      %v2803 = vadd.f32 0.0, %v2802
      %v2804 = vpop.f32.mrf.mxu0
      %2805 = vmatprep.mubr.f32.mxu0 0.0
      %2806 = vmatmul.mubr.f32.gmra.mxu0 %v2584
      %v2807 = vpop.f32.mrf.mxu0
      %v2808 = vadd.f32 0.0, %v2807
      %v2809 = vpop.f32.mrf.mxu0
      %2810 = vdwg.mxu0
      %v2811 = vadd.f32 %v1591, %v2653
      %v2812 = vadd.f32 %v1592, %v2658
      %v2813 = vadd.f32 %v1593, %v2663
      %v2814 = vadd.f32 %v1594, %v2668
      %v2815 = vadd.f32 %v1595, %v2673
      %v2816 = vadd.f32 %v1596, %v2678
      %v2817 = vadd.f32 %v1597, %v2683
      %v2818 = vadd.f32 %v1598, %v2688
      %v2819 = vadd.f32 %v1599, %v2693
      %v2820 = vadd.f32 %v1600, %v2698
      %v2821 = vadd.f32 %v1601, %v2703
      %v2822 = vadd.f32 %v1602, %v2708
      %v2823 = vadd.f32 %v1603, %v2713
      %v2824 = vadd.f32 %v1604, %v2718
      %v2825 = vadd.f32 %v1605, %v2723
      %v2826 = vadd.f32 %v1606, %v2728
      %v2827 = vadd.f32 %v1607, %v2733
      %v2828 = vadd.f32 %v1608, %v2738
      %v2829 = vadd.f32 %v1609, %v2743
      %v2830 = vadd.f32 %v1610, %v2748
      %v2831 = vadd.f32 %v1611, %v2753
      %v2832 = vadd.f32 %v1612, %v2758
      %v2833 = vadd.f32 %v1613, %v2763
      %v2834 = vadd.f32 %v1614, %v2768
      %v2835 = vadd.f32 %v1615, %v2773
      %v2836 = vadd.f32 %v1616, %v2778
      %v2837 = vadd.f32 %v1617, %v2783
      %v2838 = vadd.f32 %v1618, %v2788
      %v2839 = vadd.f32 %v1619, %v2793
      %v2840 = vadd.f32 %v1620, %v2798
      %v2841 = vadd.f32 %v1621, %v2803
      %v2842 = vadd.f32 %v1622, %v2808
      %s2843 = scalar_lea.vmem %s1, 32
      %v2844 = vld [vmem:[%s2843] sm:$0xff]
      %v2845 = vld [vmem:[%s2843 + $0x8] sm:$0x7f]
      %s2846 = scalar_lea.vmem %s2, 2
      %v2847 = vld [vmem:[%s2846] sm:$0x1]
      %v2849 = vlaneseq
      %v2850 = vshrl.u32 %v2849, 7
      %v2851 = vsub.s32 0, %v2850
      %v2852 = vrot.slane %v2847, %v2851
      %v2855 = vsel %vm255, %v2811, 0
      %v2858 = vsel %vm255, %v2812, 0
      %v2861 = vsel %vm255, %v2813, 0
      %v2864 = vsel %vm255, %v2814, 0
      %v2867 = vsel %vm255, %v2815, 0
      %v2870 = vsel %vm255, %v2816, 0
      %v2873 = vsel %vm255, %v2817, 0
      %v2876 = vsel %vm255, %v2818, 0
      %v2879 = vsel %vm255, %v2819, 0
      %v2882 = vsel %vm255, %v2820, 0
      %v2885 = vsel %vm255, %v2821, 0
      %v2888 = vsel %vm255, %v2822, 0
      %v2891 = vsel %vm255, %v2823, 0
      %v2894 = vsel %vm255, %v2824, 0
      %v2897 = vsel %vm255, %v2825, 0
      %v2900 = vsel %vm255, %v2826, 0
      %v2903 = vsel %vm255, %v2827, 0
      %v2906 = vsel %vm255, %v2828, 0
      %v2909 = vsel %vm255, %v2829, 0
      %v2912 = vsel %vm255, %v2830, 0
      %v2915 = vsel %vm255, %v2831, 0
      %v2918 = vsel %vm255, %v2832, 0
      %v2921 = vsel %vm255, %v2833, 0
      %v2924 = vsel %vm255, %v2834, 0
      %v2927 = vsel %vm255, %v2835, 0
      %v2930 = vsel %vm255, %v2836, 0
      %v2933 = vsel %vm255, %v2837, 0
      %v2936 = vsel %vm255, %v2838, 0
      %v2939 = vsel %vm255, %v2839, 0
      %v2942 = vsel %vm255, %v2840, 0
      %v2945 = vsel %vm255, %v2841, 0
      %v2948 = vsel %vm255, %v2842, 0
      %v2951 = vsel %vm504, %v2845, 0
      %2953 = vmatprep.subr.mxu0 0.0
      %2954 = vmatpush1.msra.mxu0 0.0
      %2955 = vmatprep.subr.mxu0 0.0
      %2956 = vmatpush1.msra.mxu0 0.0
      %2957 = vmatprep.subr.mxu0 0.0
      %2958 = vmatpush1.msra.mxu0 0.0
      %2959 = vmatprep.subr.mxu0 0.0
      %2960 = vmatpush1.msra.mxu0 0.0
      %2961 = vmatprep.subr.mxu0 0.0
      %2962 = vmatpush1.msra.mxu0 0.0
      %2963 = vmatprep.subr.mxu0 0.0
      %2964 = vmatpush1.msra.mxu0 0.0
      %2965 = vmatprep.subr.mxu0 0.0
      %2966 = vmatpush1.msra.mxu0 0.0
      %2967 = vmatprep.subr.mxu0 0.0
      %2968 = vmatpush1.msra.mxu0 0.0
      %2969 = vmatprep.subr.mxu0 0.0
      %2970 = vmatpush1.msra.mxu0 0.0
      %2971 = vmatprep.subr.mxu0 0.0
      %2972 = vmatpush1.msra.mxu0 0.0
      %2973 = vmatprep.subr.mxu0 0.0
      %2974 = vmatpush1.msra.mxu0 0.0
      %2975 = vmatprep.subr.mxu0 0.0
      %2976 = vmatpush1.msra.mxu0 0.0
      %2977 = vmatprep.subr.mxu0 0.0
      %2978 = vmatpush1.msra.mxu0 0.0
      %2979 = vmatprep.subr.mxu0 0.0
      %2980 = vmatpush1.msra.mxu0 0.0
      %2981 = vmatprep.subr.mxu0 0.0
      %2982 = vmatpush1.msra.mxu0 %v2951
      %2983 = vmatprep.subr.mxu0 0.0
      %2984 = vmatpush1.msra.mxu0 %v2844
      %2985 = vmatprep.subr.mxu0 0.0
      %2986 = vmatpush2.msra.mxu0 0.0
      %2987 = vmatprep.subr.mxu0 0.0
      %2988 = vmatpush2.msra.mxu0 0.0
      %2989 = vmatprep.subr.mxu0 0.0
      %2990 = vmatpush2.msra.mxu0 0.0
      %2991 = vmatprep.subr.mxu0 0.0
      %2992 = vmatpush2.msra.mxu0 0.0
      %2993 = vmatprep.subr.mxu0 0.0
      %2994 = vmatpush2.msra.mxu0 0.0
      %2995 = vmatprep.subr.mxu0 0.0
      %2996 = vmatpush2.msra.mxu0 0.0
      %2997 = vmatprep.subr.mxu0 0.0
      %2998 = vmatpush2.msra.mxu0 0.0
      %2999 = vmatprep.subr.mxu0 0.0
      %3000 = vmatpush2.msra.mxu0 0.0
      %3001 = vmatprep.subr.mxu0 0.0
      %3002 = vmatpush2.msra.mxu0 0.0
      %3003 = vmatprep.subr.mxu0 0.0
      %3004 = vmatpush2.msra.mxu0 0.0
      %3005 = vmatprep.subr.mxu0 0.0
      %3006 = vmatpush2.msra.mxu0 0.0
      %3007 = vmatprep.subr.mxu0 0.0
      %3008 = vmatpush2.msra.mxu0 0.0
      %3009 = vmatprep.subr.mxu0 0.0
      %3010 = vmatpush2.msra.mxu0 0.0
      %3011 = vmatprep.subr.mxu0 0.0
      %3012 = vmatpush2.msra.mxu0 0.0
      %3013 = vmatprep.subr.mxu0 0.0
      %3014 = vmatpush2.msra.mxu0 0.0
      %3015 = vmatprep.subr.mxu0 0.0
      %3016 = vmatpush2.msra.mxu0 0.0
      %3017 = vmatprep.mubr.f32.mxu0 0.0
      %3018 = vmatmul.mubr.f32.gmra.mxu0 %v2855
      %v3019 = vpop.f32.mrf.mxu0
      %v3020 = vadd.f32 %v2852, %v3019
      %v3021 = vpop.f32.mrf.mxu0
      %3022 = vmatprep.mubr.f32.mxu0 0.0
      %3023 = vmatmul.mubr.f32.gmra.mxu0 %v2858
      %v3024 = vpop.f32.mrf.mxu0
      %v3025 = vadd.f32 %v2852, %v3024
      %v3026 = vpop.f32.mrf.mxu0
      %3027 = vmatprep.mubr.f32.mxu0 0.0
      %3028 = vmatmul.mubr.f32.gmra.mxu0 %v2861
      %v3029 = vpop.f32.mrf.mxu0
      %v3030 = vadd.f32 %v2852, %v3029
      %v3031 = vpop.f32.mrf.mxu0
      %3032 = vmatprep.mubr.f32.mxu0 0.0
      %3033 = vmatmul.mubr.f32.gmra.mxu0 %v2864
      %v3034 = vpop.f32.mrf.mxu0
      %v3035 = vadd.f32 %v2852, %v3034
      %v3036 = vpop.f32.mrf.mxu0
      %3037 = vmatprep.mubr.f32.mxu0 0.0
      %3038 = vmatmul.mubr.f32.gmra.mxu0 %v2867
      %v3039 = vpop.f32.mrf.mxu0
      %v3040 = vadd.f32 %v2852, %v3039
      %v3041 = vpop.f32.mrf.mxu0
      %3042 = vmatprep.mubr.f32.mxu0 0.0
      %3043 = vmatmul.mubr.f32.gmra.mxu0 %v2870
      %v3044 = vpop.f32.mrf.mxu0
      %v3045 = vadd.f32 %v2852, %v3044
      %v3046 = vpop.f32.mrf.mxu0
      %3047 = vmatprep.mubr.f32.mxu0 0.0
      %3048 = vmatmul.mubr.f32.gmra.mxu0 %v2873
      %v3049 = vpop.f32.mrf.mxu0
      %v3050 = vadd.f32 %v2852, %v3049
      %v3051 = vpop.f32.mrf.mxu0
      %3052 = vmatprep.mubr.f32.mxu0 0.0
      %3053 = vmatmul.mubr.f32.gmra.mxu0 %v2876
      %v3054 = vpop.f32.mrf.mxu0
      %v3055 = vadd.f32 %v2852, %v3054
      %v3056 = vpop.f32.mrf.mxu0
      %3057 = vmatprep.mubr.f32.mxu0 0.0
      %3058 = vmatmul.mubr.f32.gmra.mxu0 %v2879
      %v3059 = vpop.f32.mrf.mxu0
      %v3060 = vadd.f32 %v2852, %v3059
      %v3061 = vpop.f32.mrf.mxu0
      %3062 = vmatprep.mubr.f32.mxu0 0.0
      %3063 = vmatmul.mubr.f32.gmra.mxu0 %v2882
      %v3064 = vpop.f32.mrf.mxu0
      %v3065 = vadd.f32 %v2852, %v3064
      %v3066 = vpop.f32.mrf.mxu0
      %3067 = vmatprep.mubr.f32.mxu0 0.0
      %3068 = vmatmul.mubr.f32.gmra.mxu0 %v2885
      %v3069 = vpop.f32.mrf.mxu0
      %v3070 = vadd.f32 %v2852, %v3069
      %v3071 = vpop.f32.mrf.mxu0
      %3072 = vmatprep.mubr.f32.mxu0 0.0
      %3073 = vmatmul.mubr.f32.gmra.mxu0 %v2888
      %v3074 = vpop.f32.mrf.mxu0
      %v3075 = vadd.f32 %v2852, %v3074
      %v3076 = vpop.f32.mrf.mxu0
      %3077 = vmatprep.mubr.f32.mxu0 0.0
      %3078 = vmatmul.mubr.f32.gmra.mxu0 %v2891
      %v3079 = vpop.f32.mrf.mxu0
      %v3080 = vadd.f32 %v2852, %v3079
      %v3081 = vpop.f32.mrf.mxu0
      %3082 = vmatprep.mubr.f32.mxu0 0.0
      %3083 = vmatmul.mubr.f32.gmra.mxu0 %v2894
      %v3084 = vpop.f32.mrf.mxu0
      %v3085 = vadd.f32 %v2852, %v3084
      %v3086 = vpop.f32.mrf.mxu0
      %3087 = vmatprep.mubr.f32.mxu0 0.0
      %3088 = vmatmul.mubr.f32.gmra.mxu0 %v2897
      %v3089 = vpop.f32.mrf.mxu0
      %v3090 = vadd.f32 %v2852, %v3089
      %v3091 = vpop.f32.mrf.mxu0
      %3092 = vmatprep.mubr.f32.mxu0 0.0
      %3093 = vmatmul.mubr.f32.gmra.mxu0 %v2900
      %v3094 = vpop.f32.mrf.mxu0
      %v3095 = vadd.f32 %v2852, %v3094
      %v3096 = vpop.f32.mrf.mxu0
      %3097 = vmatprep.mubr.f32.mxu0 0.0
      %3098 = vmatmul.mubr.f32.gmra.mxu0 %v2903
      %v3099 = vpop.f32.mrf.mxu0
      %v3100 = vadd.f32 %v2852, %v3099
      %v3101 = vpop.f32.mrf.mxu0
      %3102 = vmatprep.mubr.f32.mxu0 0.0
      %3103 = vmatmul.mubr.f32.gmra.mxu0 %v2906
      %v3104 = vpop.f32.mrf.mxu0
      %v3105 = vadd.f32 %v2852, %v3104
      %v3106 = vpop.f32.mrf.mxu0
      %3107 = vmatprep.mubr.f32.mxu0 0.0
      %3108 = vmatmul.mubr.f32.gmra.mxu0 %v2909
      %v3109 = vpop.f32.mrf.mxu0
      %v3110 = vadd.f32 %v2852, %v3109
      %v3111 = vpop.f32.mrf.mxu0
      %3112 = vmatprep.mubr.f32.mxu0 0.0
      %3113 = vmatmul.mubr.f32.gmra.mxu0 %v2912
      %v3114 = vpop.f32.mrf.mxu0
      %v3115 = vadd.f32 %v2852, %v3114
      %v3116 = vpop.f32.mrf.mxu0
      %3117 = vmatprep.mubr.f32.mxu0 0.0
      %3118 = vmatmul.mubr.f32.gmra.mxu0 %v2915
      %v3119 = vpop.f32.mrf.mxu0
      %v3120 = vadd.f32 %v2852, %v3119
      %v3121 = vpop.f32.mrf.mxu0
      %3122 = vmatprep.mubr.f32.mxu0 0.0
      %3123 = vmatmul.mubr.f32.gmra.mxu0 %v2918
      %v3124 = vpop.f32.mrf.mxu0
      %v3125 = vadd.f32 %v2852, %v3124
      %v3126 = vpop.f32.mrf.mxu0
      %3127 = vmatprep.mubr.f32.mxu0 0.0
      %3128 = vmatmul.mubr.f32.gmra.mxu0 %v2921
      %v3129 = vpop.f32.mrf.mxu0
      %v3130 = vadd.f32 %v2852, %v3129
      %v3131 = vpop.f32.mrf.mxu0
      %3132 = vmatprep.mubr.f32.mxu0 0.0
      %3133 = vmatmul.mubr.f32.gmra.mxu0 %v2924
      %v3134 = vpop.f32.mrf.mxu0
      %v3135 = vadd.f32 %v2852, %v3134
      %v3136 = vpop.f32.mrf.mxu0
      %3137 = vmatprep.mubr.f32.mxu0 0.0
      %3138 = vmatmul.mubr.f32.gmra.mxu0 %v2927
      %v3139 = vpop.f32.mrf.mxu0
      %v3140 = vadd.f32 %v2852, %v3139
      %v3141 = vpop.f32.mrf.mxu0
      %3142 = vmatprep.mubr.f32.mxu0 0.0
      %3143 = vmatmul.mubr.f32.gmra.mxu0 %v2930
      %v3144 = vpop.f32.mrf.mxu0
      %v3145 = vadd.f32 %v2852, %v3144
      %v3146 = vpop.f32.mrf.mxu0
      %3147 = vmatprep.mubr.f32.mxu0 0.0
      %3148 = vmatmul.mubr.f32.gmra.mxu0 %v2933
      %v3149 = vpop.f32.mrf.mxu0
      %v3150 = vadd.f32 %v2852, %v3149
      %v3151 = vpop.f32.mrf.mxu0
      %3152 = vmatprep.mubr.f32.mxu0 0.0
      %3153 = vmatmul.mubr.f32.gmra.mxu0 %v2936
      %v3154 = vpop.f32.mrf.mxu0
      %v3155 = vadd.f32 %v2852, %v3154
      %v3156 = vpop.f32.mrf.mxu0
      %3157 = vmatprep.mubr.f32.mxu0 0.0
      %3158 = vmatmul.mubr.f32.gmra.mxu0 %v2939
      %v3159 = vpop.f32.mrf.mxu0
      %v3160 = vadd.f32 %v2852, %v3159
      %v3161 = vpop.f32.mrf.mxu0
      %3162 = vmatprep.mubr.f32.mxu0 0.0
      %3163 = vmatmul.mubr.f32.gmra.mxu0 %v2942
      %v3164 = vpop.f32.mrf.mxu0
      %v3165 = vadd.f32 %v2852, %v3164
      %v3166 = vpop.f32.mrf.mxu0
      %3167 = vmatprep.mubr.f32.mxu0 0.0
      %3168 = vmatmul.mubr.f32.gmra.mxu0 %v2945
      %v3169 = vpop.f32.mrf.mxu0
      %v3170 = vadd.f32 %v2852, %v3169
      %v3171 = vpop.f32.mrf.mxu0
      %3172 = vmatprep.mubr.f32.mxu0 0.0
      %3173 = vmatmul.mubr.f32.gmra.mxu0 %v2948
      %v3174 = vpop.f32.mrf.mxu0
      %v3175 = vadd.f32 %v2852, %v3174
      %v3176 = vpop.f32.mrf.mxu0
      %3177 = vdwg.mxu0
      %vm3178 = vcmp.ge.f32.partialorder %v3020, 0.0
      %vm3179 = vcmp.ge.f32.partialorder %v3025, 0.0
      %vm3180 = vcmp.ge.f32.partialorder %v3030, 0.0
      %vm3181 = vcmp.ge.f32.partialorder %v3035, 0.0
      %vm3182 = vcmp.ge.f32.partialorder %v3040, 0.0
      %vm3183 = vcmp.ge.f32.partialorder %v3045, 0.0
      %vm3184 = vcmp.ge.f32.partialorder %v3050, 0.0
      %vm3185 = vcmp.ge.f32.partialorder %v3055, 0.0
      %vm3186 = vcmp.ge.f32.partialorder %v3060, 0.0
      %vm3187 = vcmp.ge.f32.partialorder %v3065, 0.0
      %vm3188 = vcmp.ge.f32.partialorder %v3070, 0.0
      %vm3189 = vcmp.ge.f32.partialorder %v3075, 0.0
      %vm3190 = vcmp.ge.f32.partialorder %v3080, 0.0
      %vm3191 = vcmp.ge.f32.partialorder %v3085, 0.0
      %vm3192 = vcmp.ge.f32.partialorder %v3090, 0.0
      %vm3193 = vcmp.ge.f32.partialorder %v3095, 0.0
      %vm3194 = vcmp.ge.f32.partialorder %v3100, 0.0
      %vm3195 = vcmp.ge.f32.partialorder %v3105, 0.0
      %vm3196 = vcmp.ge.f32.partialorder %v3110, 0.0
      %vm3197 = vcmp.ge.f32.partialorder %v3115, 0.0
      %vm3198 = vcmp.ge.f32.partialorder %v3120, 0.0
      %vm3199 = vcmp.ge.f32.partialorder %v3125, 0.0
      %vm3200 = vcmp.ge.f32.partialorder %v3130, 0.0
      %vm3201 = vcmp.ge.f32.partialorder %v3135, 0.0
      %vm3202 = vcmp.ge.f32.partialorder %v3140, 0.0
      %vm3203 = vcmp.ge.f32.partialorder %v3145, 0.0
      %vm3204 = vcmp.ge.f32.partialorder %v3150, 0.0
      %vm3205 = vcmp.ge.f32.partialorder %v3155, 0.0
      %vm3206 = vcmp.ge.f32.partialorder %v3160, 0.0
      %vm3207 = vcmp.ge.f32.partialorder %v3165, 0.0
      %vm3208 = vcmp.ge.f32.partialorder %v3170, 0.0
      %vm3209 = vcmp.ge.f32.partialorder %v3175, 0.0
      %v3210 = vmul.f32 %v3020, 0.01
      %v3211 = vmul.f32 %v3025, 0.01
      %v3212 = vmul.f32 %v3030, 0.01
      %v3213 = vmul.f32 %v3035, 0.01
      %v3214 = vmul.f32 %v3040, 0.01
      %v3215 = vmul.f32 %v3045, 0.01
      %v3216 = vmul.f32 %v3050, 0.01
      %v3217 = vmul.f32 %v3055, 0.01
      %v3218 = vmul.f32 %v3060, 0.01
      %v3219 = vmul.f32 %v3065, 0.01
      %v3220 = vmul.f32 %v3070, 0.01
      %v3221 = vmul.f32 %v3075, 0.01
      %v3222 = vmul.f32 %v3080, 0.01
      %v3223 = vmul.f32 %v3085, 0.01
      %v3224 = vmul.f32 %v3090, 0.01
      %v3225 = vmul.f32 %v3095, 0.01
      %v3226 = vmul.f32 %v3100, 0.01
      %v3227 = vmul.f32 %v3105, 0.01
      %v3228 = vmul.f32 %v3110, 0.01
      %v3229 = vmul.f32 %v3115, 0.01
      %v3230 = vmul.f32 %v3120, 0.01
      %v3231 = vmul.f32 %v3125, 0.01
      %v3232 = vmul.f32 %v3130, 0.01
      %v3233 = vmul.f32 %v3135, 0.01
      %v3234 = vmul.f32 %v3140, 0.01
      %v3235 = vmul.f32 %v3145, 0.01
      %v3236 = vmul.f32 %v3150, 0.01
      %v3237 = vmul.f32 %v3155, 0.01
      %v3238 = vmul.f32 %v3160, 0.01
      %v3239 = vmul.f32 %v3165, 0.01
      %v3240 = vmul.f32 %v3170, 0.01
      %v3241 = vmul.f32 %v3175, 0.01
      %v3242 = vsel %vm3178, %v3020, %v3210
      %v3243 = vsel %vm3179, %v3025, %v3211
      %v3244 = vsel %vm3180, %v3030, %v3212
      %v3245 = vsel %vm3181, %v3035, %v3213
      %v3246 = vsel %vm3182, %v3040, %v3214
      %v3247 = vsel %vm3183, %v3045, %v3215
      %v3248 = vsel %vm3184, %v3050, %v3216
      %v3249 = vsel %vm3185, %v3055, %v3217
      %v3250 = vsel %vm3186, %v3060, %v3218
      %v3251 = vsel %vm3187, %v3065, %v3219
      %v3252 = vsel %vm3188, %v3070, %v3220
      %v3253 = vsel %vm3189, %v3075, %v3221
      %v3254 = vsel %vm3190, %v3080, %v3222
      %v3255 = vsel %vm3191, %v3085, %v3223
      %v3256 = vsel %vm3192, %v3090, %v3224
      %v3257 = vsel %vm3193, %v3095, %v3225
      %v3258 = vsel %vm3194, %v3100, %v3226
      %v3259 = vsel %vm3195, %v3105, %v3227
      %v3260 = vsel %vm3196, %v3110, %v3228
      %v3261 = vsel %vm3197, %v3115, %v3229
      %v3262 = vsel %vm3198, %v3120, %v3230
      %v3263 = vsel %vm3199, %v3125, %v3231
      %v3264 = vsel %vm3200, %v3130, %v3232
      %v3265 = vsel %vm3201, %v3135, %v3233
      %v3266 = vsel %vm3202, %v3140, %v3234
      %v3267 = vsel %vm3203, %v3145, %v3235
      %v3268 = vsel %vm3204, %v3150, %v3236
      %v3269 = vsel %vm3205, %v3155, %v3237
      %v3270 = vsel %vm3206, %v3160, %v3238
      %v3271 = vsel %vm3207, %v3165, %v3239
      %v3272 = vsel %vm3208, %v3170, %v3240
      %v3273 = vsel %vm3209, %v3175, %v3241
      %s3274 = scalar_lea.vmem %s3, 112
      %v3275 = vld [vmem:[%s3274] sm:$0xff]
      %v3276 = vld [vmem:[%s3274 + $0x8] sm:$0xff]
      %v3277 = vld [vmem:[%s3274 + $0x10] sm:$0xff]
      %v3278 = vld [vmem:[%s3274 + $0x18] sm:$0xff]
      %v3279 = vld [vmem:[%s3274 + $0x20] sm:$0xff]
      %v3280 = vld [vmem:[%s3274 + $0x28] sm:$0xff]
      %v3281 = vld [vmem:[%s3274 + $0x30] sm:$0x3]
      %s3282 = scalar_lea.vmem %s4, 2
      %v3283 = vld [vmem:[%s3282] sm:$0x1]
      %v3285 = vlaneseq
      %v3286 = vshrl.u32 %v3285, 7
      %v3287 = vsub.s32 0, %v3286
      %v3288 = vrot.slane %v3283, %v3287
      %v3291 = vsel %vm843, %v3242, 0
      %v3294 = vsel %vm843, %v3243, 0
      %v3297 = vsel %vm843, %v3244, 0
      %v3300 = vsel %vm843, %v3245, 0
      %v3303 = vsel %vm843, %v3246, 0
      %v3306 = vsel %vm843, %v3247, 0
      %v3309 = vsel %vm843, %v3248, 0
      %v3312 = vsel %vm843, %v3249, 0
      %v3315 = vsel %vm843, %v3250, 0
      %v3318 = vsel %vm843, %v3251, 0
      %v3321 = vsel %vm843, %v3252, 0
      %v3324 = vsel %vm843, %v3253, 0
      %v3327 = vsel %vm843, %v3254, 0
      %v3330 = vsel %vm843, %v3255, 0
      %v3333 = vsel %vm843, %v3256, 0
      %v3336 = vsel %vm843, %v3257, 0
      %v3339 = vsel %vm843, %v3258, 0
      %v3342 = vsel %vm843, %v3259, 0
      %v3345 = vsel %vm843, %v3260, 0
      %v3348 = vsel %vm843, %v3261, 0
      %v3351 = vsel %vm843, %v3262, 0
      %v3354 = vsel %vm843, %v3263, 0
      %v3357 = vsel %vm843, %v3264, 0
      %v3360 = vsel %vm843, %v3265, 0
      %v3363 = vsel %vm843, %v3266, 0
      %v3366 = vsel %vm843, %v3267, 0
      %v3369 = vsel %vm843, %v3268, 0
      %v3372 = vsel %vm843, %v3269, 0
      %v3375 = vsel %vm843, %v3270, 0
      %v3378 = vsel %vm843, %v3271, 0
      %v3381 = vsel %vm843, %v3272, 0
      %v3384 = vsel %vm843, %v3273, 0
      %v3387 = vsel %vm940, %v3281, 0
      %3389 = vmatprep.subr.mxu0 0.0
      %3390 = vmatpush1.msra.mxu0 0.0
      %3391 = vmatprep.subr.mxu0 0.0
      %3392 = vmatpush1.msra.mxu0 0.0
      %3393 = vmatprep.subr.mxu0 0.0
      %3394 = vmatpush1.msra.mxu0 0.0
      %3395 = vmatprep.subr.mxu0 0.0
      %3396 = vmatpush1.msra.mxu0 0.0
      %3397 = vmatprep.subr.mxu0 0.0
      %3398 = vmatpush1.msra.mxu0 0.0
      %3399 = vmatprep.subr.mxu0 0.0
      %3400 = vmatpush1.msra.mxu0 0.0
      %3401 = vmatprep.subr.mxu0 0.0
      %3402 = vmatpush1.msra.mxu0 0.0
      %3403 = vmatprep.subr.mxu0 0.0
      %3404 = vmatpush1.msra.mxu0 0.0
      %3405 = vmatprep.subr.mxu0 0.0
      %3406 = vmatpush1.msra.mxu0 0.0
      %3407 = vmatprep.subr.mxu0 0.0
      %3408 = vmatpush1.msra.mxu0 %v3387
      %3409 = vmatprep.subr.mxu0 0.0
      %3410 = vmatpush1.msra.mxu0 %v3280
      %3411 = vmatprep.subr.mxu0 0.0
      %3412 = vmatpush1.msra.mxu0 %v3279
      %3413 = vmatprep.subr.mxu0 0.0
      %3414 = vmatpush1.msra.mxu0 %v3278
      %3415 = vmatprep.subr.mxu0 0.0
      %3416 = vmatpush1.msra.mxu0 %v3277
      %3417 = vmatprep.subr.mxu0 0.0
      %3418 = vmatpush1.msra.mxu0 %v3276
      %3419 = vmatprep.subr.mxu0 0.0
      %3420 = vmatpush1.msra.mxu0 %v3275
      %3421 = vmatprep.subr.mxu0 0.0
      %3422 = vmatpush2.msra.mxu0 0.0
      %3423 = vmatprep.subr.mxu0 0.0
      %3424 = vmatpush2.msra.mxu0 0.0
      %3425 = vmatprep.subr.mxu0 0.0
      %3426 = vmatpush2.msra.mxu0 0.0
      %3427 = vmatprep.subr.mxu0 0.0
      %3428 = vmatpush2.msra.mxu0 0.0
      %3429 = vmatprep.subr.mxu0 0.0
      %3430 = vmatpush2.msra.mxu0 0.0
      %3431 = vmatprep.subr.mxu0 0.0
      %3432 = vmatpush2.msra.mxu0 0.0
      %3433 = vmatprep.subr.mxu0 0.0
      %3434 = vmatpush2.msra.mxu0 0.0
      %3435 = vmatprep.subr.mxu0 0.0
      %3436 = vmatpush2.msra.mxu0 0.0
      %3437 = vmatprep.subr.mxu0 0.0
      %3438 = vmatpush2.msra.mxu0 0.0
      %3439 = vmatprep.subr.mxu0 0.0
      %3440 = vmatpush2.msra.mxu0 0.0
      %3441 = vmatprep.subr.mxu0 0.0
      %3442 = vmatpush2.msra.mxu0 0.0
      %3443 = vmatprep.subr.mxu0 0.0
      %3444 = vmatpush2.msra.mxu0 0.0
      %3445 = vmatprep.subr.mxu0 0.0
      %3446 = vmatpush2.msra.mxu0 0.0
      %3447 = vmatprep.subr.mxu0 0.0
      %3448 = vmatpush2.msra.mxu0 0.0
      %3449 = vmatprep.subr.mxu0 0.0
      %3450 = vmatpush2.msra.mxu0 0.0
      %3451 = vmatprep.subr.mxu0 0.0
      %3452 = vmatpush2.msra.mxu0 0.0
      %3453 = vmatprep.mubr.f32.mxu0 0.0
      %3454 = vmatmul.mubr.f32.gmra.mxu0 %v3291
      %v3455 = vpop.f32.mrf.mxu0
      %v3456 = vadd.f32 %v3288, %v3455
      %v3457 = vpop.f32.mrf.mxu0
      %3458 = vmatprep.mubr.f32.mxu0 0.0
      %3459 = vmatmul.mubr.f32.gmra.mxu0 %v3294
      %v3460 = vpop.f32.mrf.mxu0
      %v3461 = vadd.f32 %v3288, %v3460
      %v3462 = vpop.f32.mrf.mxu0
      %3463 = vmatprep.mubr.f32.mxu0 0.0
      %3464 = vmatmul.mubr.f32.gmra.mxu0 %v3297
      %v3465 = vpop.f32.mrf.mxu0
      %v3466 = vadd.f32 %v3288, %v3465
      %v3467 = vpop.f32.mrf.mxu0
      %3468 = vmatprep.mubr.f32.mxu0 0.0
      %3469 = vmatmul.mubr.f32.gmra.mxu0 %v3300
      %v3470 = vpop.f32.mrf.mxu0
      %v3471 = vadd.f32 %v3288, %v3470
      %v3472 = vpop.f32.mrf.mxu0
      %3473 = vmatprep.mubr.f32.mxu0 0.0
      %3474 = vmatmul.mubr.f32.gmra.mxu0 %v3303
      %v3475 = vpop.f32.mrf.mxu0
      %v3476 = vadd.f32 %v3288, %v3475
      %v3477 = vpop.f32.mrf.mxu0
      %3478 = vmatprep.mubr.f32.mxu0 0.0
      %3479 = vmatmul.mubr.f32.gmra.mxu0 %v3306
      %v3480 = vpop.f32.mrf.mxu0
      %v3481 = vadd.f32 %v3288, %v3480
      %v3482 = vpop.f32.mrf.mxu0
      %3483 = vmatprep.mubr.f32.mxu0 0.0
      %3484 = vmatmul.mubr.f32.gmra.mxu0 %v3309
      %v3485 = vpop.f32.mrf.mxu0
      %v3486 = vadd.f32 %v3288, %v3485
      %v3487 = vpop.f32.mrf.mxu0
      %3488 = vmatprep.mubr.f32.mxu0 0.0
      %3489 = vmatmul.mubr.f32.gmra.mxu0 %v3312
      %v3490 = vpop.f32.mrf.mxu0
      %v3491 = vadd.f32 %v3288, %v3490
      %v3492 = vpop.f32.mrf.mxu0
      %3493 = vmatprep.mubr.f32.mxu0 0.0
      %3494 = vmatmul.mubr.f32.gmra.mxu0 %v3315
      %v3495 = vpop.f32.mrf.mxu0
      %v3496 = vadd.f32 %v3288, %v3495
      %v3497 = vpop.f32.mrf.mxu0
      %3498 = vmatprep.mubr.f32.mxu0 0.0
      %3499 = vmatmul.mubr.f32.gmra.mxu0 %v3318
      %v3500 = vpop.f32.mrf.mxu0
      %v3501 = vadd.f32 %v3288, %v3500
      %v3502 = vpop.f32.mrf.mxu0
      %3503 = vmatprep.mubr.f32.mxu0 0.0
      %3504 = vmatmul.mubr.f32.gmra.mxu0 %v3321
      %v3505 = vpop.f32.mrf.mxu0
      %v3506 = vadd.f32 %v3288, %v3505
      %v3507 = vpop.f32.mrf.mxu0
      %3508 = vmatprep.mubr.f32.mxu0 0.0
      %3509 = vmatmul.mubr.f32.gmra.mxu0 %v3324
      %v3510 = vpop.f32.mrf.mxu0
      %v3511 = vadd.f32 %v3288, %v3510
      %v3512 = vpop.f32.mrf.mxu0
      %3513 = vmatprep.mubr.f32.mxu0 0.0
      %3514 = vmatmul.mubr.f32.gmra.mxu0 %v3327
      %v3515 = vpop.f32.mrf.mxu0
      %v3516 = vadd.f32 %v3288, %v3515
      %v3517 = vpop.f32.mrf.mxu0
      %3518 = vmatprep.mubr.f32.mxu0 0.0
      %3519 = vmatmul.mubr.f32.gmra.mxu0 %v3330
      %v3520 = vpop.f32.mrf.mxu0
      %v3521 = vadd.f32 %v3288, %v3520
      %v3522 = vpop.f32.mrf.mxu0
      %3523 = vmatprep.mubr.f32.mxu0 0.0
      %3524 = vmatmul.mubr.f32.gmra.mxu0 %v3333
      %v3525 = vpop.f32.mrf.mxu0
      %v3526 = vadd.f32 %v3288, %v3525
      %v3527 = vpop.f32.mrf.mxu0
      %3528 = vmatprep.mubr.f32.mxu0 0.0
      %3529 = vmatmul.mubr.f32.gmra.mxu0 %v3336
      %v3530 = vpop.f32.mrf.mxu0
      %v3531 = vadd.f32 %v3288, %v3530
      %v3532 = vpop.f32.mrf.mxu0
      %3533 = vmatprep.mubr.f32.mxu0 0.0
      %3534 = vmatmul.mubr.f32.gmra.mxu0 %v3339
      %v3535 = vpop.f32.mrf.mxu0
      %v3536 = vadd.f32 %v3288, %v3535
      %v3537 = vpop.f32.mrf.mxu0
      %3538 = vmatprep.mubr.f32.mxu0 0.0
      %3539 = vmatmul.mubr.f32.gmra.mxu0 %v3342
      %v3540 = vpop.f32.mrf.mxu0
      %v3541 = vadd.f32 %v3288, %v3540
      %v3542 = vpop.f32.mrf.mxu0
      %3543 = vmatprep.mubr.f32.mxu0 0.0
      %3544 = vmatmul.mubr.f32.gmra.mxu0 %v3345
      %v3545 = vpop.f32.mrf.mxu0
      %v3546 = vadd.f32 %v3288, %v3545
      %v3547 = vpop.f32.mrf.mxu0
      %3548 = vmatprep.mubr.f32.mxu0 0.0
      %3549 = vmatmul.mubr.f32.gmra.mxu0 %v3348
      %v3550 = vpop.f32.mrf.mxu0
      %v3551 = vadd.f32 %v3288, %v3550
      %v3552 = vpop.f32.mrf.mxu0
      %3553 = vmatprep.mubr.f32.mxu0 0.0
      %3554 = vmatmul.mubr.f32.gmra.mxu0 %v3351
      %v3555 = vpop.f32.mrf.mxu0
      %v3556 = vadd.f32 %v3288, %v3555
      %v3557 = vpop.f32.mrf.mxu0
      %3558 = vmatprep.mubr.f32.mxu0 0.0
      %3559 = vmatmul.mubr.f32.gmra.mxu0 %v3354
      %v3560 = vpop.f32.mrf.mxu0
      %v3561 = vadd.f32 %v3288, %v3560
      %v3562 = vpop.f32.mrf.mxu0
      %3563 = vmatprep.mubr.f32.mxu0 0.0
      %3564 = vmatmul.mubr.f32.gmra.mxu0 %v3357
      %v3565 = vpop.f32.mrf.mxu0
      %v3566 = vadd.f32 %v3288, %v3565
      %v3567 = vpop.f32.mrf.mxu0
      %3568 = vmatprep.mubr.f32.mxu0 0.0
      %3569 = vmatmul.mubr.f32.gmra.mxu0 %v3360
      %v3570 = vpop.f32.mrf.mxu0
      %v3571 = vadd.f32 %v3288, %v3570
      %v3572 = vpop.f32.mrf.mxu0
      %3573 = vmatprep.mubr.f32.mxu0 0.0
      %3574 = vmatmul.mubr.f32.gmra.mxu0 %v3363
      %v3575 = vpop.f32.mrf.mxu0
      %v3576 = vadd.f32 %v3288, %v3575
      %v3577 = vpop.f32.mrf.mxu0
      %3578 = vmatprep.mubr.f32.mxu0 0.0
      %3579 = vmatmul.mubr.f32.gmra.mxu0 %v3366
      %v3580 = vpop.f32.mrf.mxu0
      %v3581 = vadd.f32 %v3288, %v3580
      %v3582 = vpop.f32.mrf.mxu0
      %3583 = vmatprep.mubr.f32.mxu0 0.0
      %3584 = vmatmul.mubr.f32.gmra.mxu0 %v3369
      %v3585 = vpop.f32.mrf.mxu0
      %v3586 = vadd.f32 %v3288, %v3585
      %v3587 = vpop.f32.mrf.mxu0
      %3588 = vmatprep.mubr.f32.mxu0 0.0
      %3589 = vmatmul.mubr.f32.gmra.mxu0 %v3372
      %v3590 = vpop.f32.mrf.mxu0
      %v3591 = vadd.f32 %v3288, %v3590
      %v3592 = vpop.f32.mrf.mxu0
      %3593 = vmatprep.mubr.f32.mxu0 0.0
      %3594 = vmatmul.mubr.f32.gmra.mxu0 %v3375
      %v3595 = vpop.f32.mrf.mxu0
      %v3596 = vadd.f32 %v3288, %v3595
      %v3597 = vpop.f32.mrf.mxu0
      %3598 = vmatprep.mubr.f32.mxu0 0.0
      %3599 = vmatmul.mubr.f32.gmra.mxu0 %v3378
      %v3600 = vpop.f32.mrf.mxu0
      %v3601 = vadd.f32 %v3288, %v3600
      %v3602 = vpop.f32.mrf.mxu0
      %3603 = vmatprep.mubr.f32.mxu0 0.0
      %3604 = vmatmul.mubr.f32.gmra.mxu0 %v3381
      %v3605 = vpop.f32.mrf.mxu0
      %v3606 = vadd.f32 %v3288, %v3605
      %v3607 = vpop.f32.mrf.mxu0
      %3608 = vmatprep.mubr.f32.mxu0 0.0
      %3609 = vmatmul.mubr.f32.gmra.mxu0 %v3384
      %v3610 = vpop.f32.mrf.mxu0
      %v3611 = vadd.f32 %v3288, %v3610
      %v3612 = vpop.f32.mrf.mxu0
      %3613 = vdwg.mxu0
      %vm3614 = vcmp.ge.f32.partialorder %v3456, 0.0
      %vm3615 = vcmp.ge.f32.partialorder %v3461, 0.0
      %vm3616 = vcmp.ge.f32.partialorder %v3466, 0.0
      %vm3617 = vcmp.ge.f32.partialorder %v3471, 0.0
      %vm3618 = vcmp.ge.f32.partialorder %v3476, 0.0
      %vm3619 = vcmp.ge.f32.partialorder %v3481, 0.0
      %vm3620 = vcmp.ge.f32.partialorder %v3486, 0.0
      %vm3621 = vcmp.ge.f32.partialorder %v3491, 0.0
      %vm3622 = vcmp.ge.f32.partialorder %v3496, 0.0
      %vm3623 = vcmp.ge.f32.partialorder %v3501, 0.0
      %vm3624 = vcmp.ge.f32.partialorder %v3506, 0.0
      %vm3625 = vcmp.ge.f32.partialorder %v3511, 0.0
      %vm3626 = vcmp.ge.f32.partialorder %v3516, 0.0
      %vm3627 = vcmp.ge.f32.partialorder %v3521, 0.0
      %vm3628 = vcmp.ge.f32.partialorder %v3526, 0.0
      %vm3629 = vcmp.ge.f32.partialorder %v3531, 0.0
      %vm3630 = vcmp.ge.f32.partialorder %v3536, 0.0
      %vm3631 = vcmp.ge.f32.partialorder %v3541, 0.0
      %vm3632 = vcmp.ge.f32.partialorder %v3546, 0.0
      %vm3633 = vcmp.ge.f32.partialorder %v3551, 0.0
      %vm3634 = vcmp.ge.f32.partialorder %v3556, 0.0
      %vm3635 = vcmp.ge.f32.partialorder %v3561, 0.0
      %vm3636 = vcmp.ge.f32.partialorder %v3566, 0.0
      %vm3637 = vcmp.ge.f32.partialorder %v3571, 0.0
      %vm3638 = vcmp.ge.f32.partialorder %v3576, 0.0
      %vm3639 = vcmp.ge.f32.partialorder %v3581, 0.0
      %vm3640 = vcmp.ge.f32.partialorder %v3586, 0.0
      %vm3641 = vcmp.ge.f32.partialorder %v3591, 0.0
      %vm3642 = vcmp.ge.f32.partialorder %v3596, 0.0
      %vm3643 = vcmp.ge.f32.partialorder %v3601, 0.0
      %vm3644 = vcmp.ge.f32.partialorder %v3606, 0.0
      %vm3645 = vcmp.ge.f32.partialorder %v3611, 0.0
      %v3646 = vmul.f32 %v3456, 0.01
      %v3647 = vmul.f32 %v3461, 0.01
      %v3648 = vmul.f32 %v3466, 0.01
      %v3649 = vmul.f32 %v3471, 0.01
      %v3650 = vmul.f32 %v3476, 0.01
      %v3651 = vmul.f32 %v3481, 0.01
      %v3652 = vmul.f32 %v3486, 0.01
      %v3653 = vmul.f32 %v3491, 0.01
      %v3654 = vmul.f32 %v3496, 0.01
      %v3655 = vmul.f32 %v3501, 0.01
      %v3656 = vmul.f32 %v3506, 0.01
      %v3657 = vmul.f32 %v3511, 0.01
      %v3658 = vmul.f32 %v3516, 0.01
      %v3659 = vmul.f32 %v3521, 0.01
      %v3660 = vmul.f32 %v3526, 0.01
      %v3661 = vmul.f32 %v3531, 0.01
      %v3662 = vmul.f32 %v3536, 0.01
      %v3663 = vmul.f32 %v3541, 0.01
      %v3664 = vmul.f32 %v3546, 0.01
      %v3665 = vmul.f32 %v3551, 0.01
      %v3666 = vmul.f32 %v3556, 0.01
      %v3667 = vmul.f32 %v3561, 0.01
      %v3668 = vmul.f32 %v3566, 0.01
      %v3669 = vmul.f32 %v3571, 0.01
      %v3670 = vmul.f32 %v3576, 0.01
      %v3671 = vmul.f32 %v3581, 0.01
      %v3672 = vmul.f32 %v3586, 0.01
      %v3673 = vmul.f32 %v3591, 0.01
      %v3674 = vmul.f32 %v3596, 0.01
      %v3675 = vmul.f32 %v3601, 0.01
      %v3676 = vmul.f32 %v3606, 0.01
      %v3677 = vmul.f32 %v3611, 0.01
      %v3678 = vsel %vm3614, %v3456, %v3646
      %v3679 = vsel %vm3615, %v3461, %v3647
      %v3680 = vsel %vm3616, %v3466, %v3648
      %v3681 = vsel %vm3617, %v3471, %v3649
      %v3682 = vsel %vm3618, %v3476, %v3650
      %v3683 = vsel %vm3619, %v3481, %v3651
      %v3684 = vsel %vm3620, %v3486, %v3652
      %v3685 = vsel %vm3621, %v3491, %v3653
      %v3686 = vsel %vm3622, %v3496, %v3654
      %v3687 = vsel %vm3623, %v3501, %v3655
      %v3688 = vsel %vm3624, %v3506, %v3656
      %v3689 = vsel %vm3625, %v3511, %v3657
      %v3690 = vsel %vm3626, %v3516, %v3658
      %v3691 = vsel %vm3627, %v3521, %v3659
      %v3692 = vsel %vm3628, %v3526, %v3660
      %v3693 = vsel %vm3629, %v3531, %v3661
      %v3694 = vsel %vm3630, %v3536, %v3662
      %v3695 = vsel %vm3631, %v3541, %v3663
      %v3696 = vsel %vm3632, %v3546, %v3664
      %v3697 = vsel %vm3633, %v3551, %v3665
      %v3698 = vsel %vm3634, %v3556, %v3666
      %v3699 = vsel %vm3635, %v3561, %v3667
      %v3700 = vsel %vm3636, %v3566, %v3668
      %v3701 = vsel %vm3637, %v3571, %v3669
      %v3702 = vsel %vm3638, %v3576, %v3670
      %v3703 = vsel %vm3639, %v3581, %v3671
      %v3704 = vsel %vm3640, %v3586, %v3672
      %v3705 = vsel %vm3641, %v3591, %v3673
      %v3706 = vsel %vm3642, %v3596, %v3674
      %v3707 = vsel %vm3643, %v3601, %v3675
      %v3708 = vsel %vm3644, %v3606, %v3676
      %v3709 = vsel %vm3645, %v3611, %v3677
      %v3711 = vsel %vm1265, %v3678, 0
      %v3714 = vsel %vm1265, %v3679, 0
      %v3717 = vsel %vm1265, %v3680, 0
      %v3720 = vsel %vm1265, %v3681, 0
      %v3723 = vsel %vm1265, %v3682, 0
      %v3726 = vsel %vm1265, %v3683, 0
      %v3729 = vsel %vm1265, %v3684, 0
      %v3732 = vsel %vm1265, %v3685, 0
      %v3735 = vsel %vm1265, %v3686, 0
      %v3738 = vsel %vm1265, %v3687, 0
      %v3741 = vsel %vm1265, %v3688, 0
      %v3744 = vsel %vm1265, %v3689, 0
      %v3747 = vsel %vm1265, %v3690, 0
      %v3750 = vsel %vm1265, %v3691, 0
      %v3753 = vsel %vm1265, %v3692, 0
      %v3756 = vsel %vm1265, %v3693, 0
      %v3759 = vsel %vm1265, %v3694, 0
      %v3762 = vsel %vm1265, %v3695, 0
      %v3765 = vsel %vm1265, %v3696, 0
      %v3768 = vsel %vm1265, %v3697, 0
      %v3771 = vsel %vm1265, %v3698, 0
      %v3774 = vsel %vm1265, %v3699, 0
      %v3777 = vsel %vm1265, %v3700, 0
      %v3780 = vsel %vm1265, %v3701, 0
      %v3783 = vsel %vm1265, %v3702, 0
      %v3786 = vsel %vm1265, %v3703, 0
      %v3789 = vsel %vm1265, %v3704, 0
      %v3792 = vsel %vm1265, %v3705, 0
      %v3795 = vsel %vm1265, %v3706, 0
      %v3798 = vsel %vm1265, %v3707, 0
      %v3801 = vsel %vm1265, %v3708, 0
      %v3804 = vsel %vm1265, %v3709, 0
      %3806 = vmatprep.subr.mxu0 0.0
      %3807 = vmatpush1.msra.mxu0 0.0
      %3808 = vmatprep.subr.mxu0 0.0
      %3809 = vmatpush1.msra.mxu0 0.0
      %3810 = vmatprep.subr.mxu0 0.0
      %3811 = vmatpush1.msra.mxu0 %v1364
      %3812 = vmatprep.subr.mxu0 0.0
      %3813 = vmatpush1.msra.mxu0 %v397
      %3814 = vmatprep.subr.mxu0 0.0
      %3815 = vmatpush1.msra.mxu0 %v396
      %3816 = vmatprep.subr.mxu0 0.0
      %3817 = vmatpush1.msra.mxu0 %v395
      %3818 = vmatprep.subr.mxu0 0.0
      %3819 = vmatpush1.msra.mxu0 %v394
      %3820 = vmatprep.subr.mxu0 0.0
      %3821 = vmatpush1.msra.mxu0 %v393
      %3822 = vmatprep.subr.mxu0 0.0
      %3823 = vmatpush1.msra.mxu0 %v392
      %3824 = vmatprep.subr.mxu0 0.0
      %3825 = vmatpush1.msra.mxu0 %v391
      %3826 = vmatprep.subr.mxu0 0.0
      %3827 = vmatpush1.msra.mxu0 %v390
      %3828 = vmatprep.subr.mxu0 0.0
      %3829 = vmatpush1.msra.mxu0 %v389
      %3830 = vmatprep.subr.mxu0 0.0
      %3831 = vmatpush1.msra.mxu0 %v388
      %3832 = vmatprep.subr.mxu0 0.0
      %3833 = vmatpush1.msra.mxu0 %v387
      %3834 = vmatprep.subr.mxu0 0.0
      %3835 = vmatpush1.msra.mxu0 %v386
      %3836 = vmatprep.subr.mxu0 0.0
      %3837 = vmatpush1.msra.mxu0 %v385
      %3838 = vmatprep.subr.mxu0 0.0
      %3839 = vmatpush2.msra.mxu0 0.0
      %3840 = vmatprep.subr.mxu0 0.0
      %3841 = vmatpush2.msra.mxu0 0.0
      %3842 = vmatprep.subr.mxu0 0.0
      %3843 = vmatpush2.msra.mxu0 0.0
      %3844 = vmatprep.subr.mxu0 0.0
      %3845 = vmatpush2.msra.mxu0 0.0
      %3846 = vmatprep.subr.mxu0 0.0
      %3847 = vmatpush2.msra.mxu0 0.0
      %3848 = vmatprep.subr.mxu0 0.0
      %3849 = vmatpush2.msra.mxu0 0.0
      %3850 = vmatprep.subr.mxu0 0.0
      %3851 = vmatpush2.msra.mxu0 0.0
      %3852 = vmatprep.subr.mxu0 0.0
      %3853 = vmatpush2.msra.mxu0 0.0
      %3854 = vmatprep.subr.mxu0 0.0
      %3855 = vmatpush2.msra.mxu0 0.0
      %3856 = vmatprep.subr.mxu0 0.0
      %3857 = vmatpush2.msra.mxu0 0.0
      %3858 = vmatprep.subr.mxu0 0.0
      %3859 = vmatpush2.msra.mxu0 0.0
      %3860 = vmatprep.subr.mxu0 0.0
      %3861 = vmatpush2.msra.mxu0 0.0
      %3862 = vmatprep.subr.mxu0 0.0
      %3863 = vmatpush2.msra.mxu0 0.0
      %3864 = vmatprep.subr.mxu0 0.0
      %3865 = vmatpush2.msra.mxu0 0.0
      %3866 = vmatprep.subr.mxu0 0.0
      %3867 = vmatpush2.msra.mxu0 0.0
      %3868 = vmatprep.subr.mxu0 0.0
      %3869 = vmatpush2.msra.mxu0 0.0
      %3870 = vmatprep.mubr.f32.mxu0 0.0
      %3871 = vmatmul.mubr.f32.gmra.mxu0 %v3711
      %v3872 = vpop.f32.mrf.mxu0
      %v3873 = vadd.f32 0.0, %v3872
      %v3874 = vpop.f32.mrf.mxu0
      %3875 = vmatprep.mubr.f32.mxu0 0.0
      %3876 = vmatmul.mubr.f32.gmra.mxu0 %v3714
      %v3877 = vpop.f32.mrf.mxu0
      %v3878 = vadd.f32 0.0, %v3877
      %v3879 = vpop.f32.mrf.mxu0
      %3880 = vmatprep.mubr.f32.mxu0 0.0
      %3881 = vmatmul.mubr.f32.gmra.mxu0 %v3717
      %v3882 = vpop.f32.mrf.mxu0
      %v3883 = vadd.f32 0.0, %v3882
      %v3884 = vpop.f32.mrf.mxu0
      %3885 = vmatprep.mubr.f32.mxu0 0.0
      %3886 = vmatmul.mubr.f32.gmra.mxu0 %v3720
      %v3887 = vpop.f32.mrf.mxu0
      %v3888 = vadd.f32 0.0, %v3887
      %v3889 = vpop.f32.mrf.mxu0
      %3890 = vmatprep.mubr.f32.mxu0 0.0
      %3891 = vmatmul.mubr.f32.gmra.mxu0 %v3723
      %v3892 = vpop.f32.mrf.mxu0
      %v3893 = vadd.f32 0.0, %v3892
      %v3894 = vpop.f32.mrf.mxu0
      %3895 = vmatprep.mubr.f32.mxu0 0.0
      %3896 = vmatmul.mubr.f32.gmra.mxu0 %v3726
      %v3897 = vpop.f32.mrf.mxu0
      %v3898 = vadd.f32 0.0, %v3897
      %v3899 = vpop.f32.mrf.mxu0
      %3900 = vmatprep.mubr.f32.mxu0 0.0
      %3901 = vmatmul.mubr.f32.gmra.mxu0 %v3729
      %v3902 = vpop.f32.mrf.mxu0
      %v3903 = vadd.f32 0.0, %v3902
      %v3904 = vpop.f32.mrf.mxu0
      %3905 = vmatprep.mubr.f32.mxu0 0.0
      %3906 = vmatmul.mubr.f32.gmra.mxu0 %v3732
      %v3907 = vpop.f32.mrf.mxu0
      %v3908 = vadd.f32 0.0, %v3907
      %v3909 = vpop.f32.mrf.mxu0
      %3910 = vmatprep.mubr.f32.mxu0 0.0
      %3911 = vmatmul.mubr.f32.gmra.mxu0 %v3735
      %v3912 = vpop.f32.mrf.mxu0
      %v3913 = vadd.f32 0.0, %v3912
      %v3914 = vpop.f32.mrf.mxu0
      %3915 = vmatprep.mubr.f32.mxu0 0.0
      %3916 = vmatmul.mubr.f32.gmra.mxu0 %v3738
      %v3917 = vpop.f32.mrf.mxu0
      %v3918 = vadd.f32 0.0, %v3917
      %v3919 = vpop.f32.mrf.mxu0
      %3920 = vmatprep.mubr.f32.mxu0 0.0
      %3921 = vmatmul.mubr.f32.gmra.mxu0 %v3741
      %v3922 = vpop.f32.mrf.mxu0
      %v3923 = vadd.f32 0.0, %v3922
      %v3924 = vpop.f32.mrf.mxu0
      %3925 = vmatprep.mubr.f32.mxu0 0.0
      %3926 = vmatmul.mubr.f32.gmra.mxu0 %v3744
      %v3927 = vpop.f32.mrf.mxu0
      %v3928 = vadd.f32 0.0, %v3927
      %v3929 = vpop.f32.mrf.mxu0
      %3930 = vmatprep.mubr.f32.mxu0 0.0
      %3931 = vmatmul.mubr.f32.gmra.mxu0 %v3747
      %v3932 = vpop.f32.mrf.mxu0
      %v3933 = vadd.f32 0.0, %v3932
      %v3934 = vpop.f32.mrf.mxu0
      %3935 = vmatprep.mubr.f32.mxu0 0.0
      %3936 = vmatmul.mubr.f32.gmra.mxu0 %v3750
      %v3937 = vpop.f32.mrf.mxu0
      %v3938 = vadd.f32 0.0, %v3937
      %v3939 = vpop.f32.mrf.mxu0
      %3940 = vmatprep.mubr.f32.mxu0 0.0
      %3941 = vmatmul.mubr.f32.gmra.mxu0 %v3753
      %v3942 = vpop.f32.mrf.mxu0
      %v3943 = vadd.f32 0.0, %v3942
      %v3944 = vpop.f32.mrf.mxu0
      %3945 = vmatprep.mubr.f32.mxu0 0.0
      %3946 = vmatmul.mubr.f32.gmra.mxu0 %v3756
      %v3947 = vpop.f32.mrf.mxu0
      %v3948 = vadd.f32 0.0, %v3947
      %v3949 = vpop.f32.mrf.mxu0
      %3950 = vmatprep.mubr.f32.mxu0 0.0
      %3951 = vmatmul.mubr.f32.gmra.mxu0 %v3759
      %v3952 = vpop.f32.mrf.mxu0
      %v3953 = vadd.f32 0.0, %v3952
      %v3954 = vpop.f32.mrf.mxu0
      %3955 = vmatprep.mubr.f32.mxu0 0.0
      %3956 = vmatmul.mubr.f32.gmra.mxu0 %v3762
      %v3957 = vpop.f32.mrf.mxu0
      %v3958 = vadd.f32 0.0, %v3957
      %v3959 = vpop.f32.mrf.mxu0
      %3960 = vmatprep.mubr.f32.mxu0 0.0
      %3961 = vmatmul.mubr.f32.gmra.mxu0 %v3765
      %v3962 = vpop.f32.mrf.mxu0
      %v3963 = vadd.f32 0.0, %v3962
      %v3964 = vpop.f32.mrf.mxu0
      %3965 = vmatprep.mubr.f32.mxu0 0.0
      %3966 = vmatmul.mubr.f32.gmra.mxu0 %v3768
      %v3967 = vpop.f32.mrf.mxu0
      %v3968 = vadd.f32 0.0, %v3967
      %v3969 = vpop.f32.mrf.mxu0
      %3970 = vmatprep.mubr.f32.mxu0 0.0
      %3971 = vmatmul.mubr.f32.gmra.mxu0 %v3771
      %v3972 = vpop.f32.mrf.mxu0
      %v3973 = vadd.f32 0.0, %v3972
      %v3974 = vpop.f32.mrf.mxu0
      %3975 = vmatprep.mubr.f32.mxu0 0.0
      %3976 = vmatmul.mubr.f32.gmra.mxu0 %v3774
      %v3977 = vpop.f32.mrf.mxu0
      %v3978 = vadd.f32 0.0, %v3977
      %v3979 = vpop.f32.mrf.mxu0
      %3980 = vmatprep.mubr.f32.mxu0 0.0
      %3981 = vmatmul.mubr.f32.gmra.mxu0 %v3777
      %v3982 = vpop.f32.mrf.mxu0
      %v3983 = vadd.f32 0.0, %v3982
      %v3984 = vpop.f32.mrf.mxu0
      %3985 = vmatprep.mubr.f32.mxu0 0.0
      %3986 = vmatmul.mubr.f32.gmra.mxu0 %v3780
      %v3987 = vpop.f32.mrf.mxu0
      %v3988 = vadd.f32 0.0, %v3987
      %v3989 = vpop.f32.mrf.mxu0
      %3990 = vmatprep.mubr.f32.mxu0 0.0
      %3991 = vmatmul.mubr.f32.gmra.mxu0 %v3783
      %v3992 = vpop.f32.mrf.mxu0
      %v3993 = vadd.f32 0.0, %v3992
      %v3994 = vpop.f32.mrf.mxu0
      %3995 = vmatprep.mubr.f32.mxu0 0.0
      %3996 = vmatmul.mubr.f32.gmra.mxu0 %v3786
      %v3997 = vpop.f32.mrf.mxu0
      %v3998 = vadd.f32 0.0, %v3997
      %v3999 = vpop.f32.mrf.mxu0
      %4000 = vmatprep.mubr.f32.mxu0 0.0
      %4001 = vmatmul.mubr.f32.gmra.mxu0 %v3789
      %v4002 = vpop.f32.mrf.mxu0
      %v4003 = vadd.f32 0.0, %v4002
      %v4004 = vpop.f32.mrf.mxu0
      %4005 = vmatprep.mubr.f32.mxu0 0.0
      %4006 = vmatmul.mubr.f32.gmra.mxu0 %v3792
      %v4007 = vpop.f32.mrf.mxu0
      %v4008 = vadd.f32 0.0, %v4007
      %v4009 = vpop.f32.mrf.mxu0
      %4010 = vmatprep.mubr.f32.mxu0 0.0
      %4011 = vmatmul.mubr.f32.gmra.mxu0 %v3795
      %v4012 = vpop.f32.mrf.mxu0
      %v4013 = vadd.f32 0.0, %v4012
      %v4014 = vpop.f32.mrf.mxu0
      %4015 = vmatprep.mubr.f32.mxu0 0.0
      %4016 = vmatmul.mubr.f32.gmra.mxu0 %v3798
      %v4017 = vpop.f32.mrf.mxu0
      %v4018 = vadd.f32 0.0, %v4017
      %v4019 = vpop.f32.mrf.mxu0
      %4020 = vmatprep.mubr.f32.mxu0 0.0
      %4021 = vmatmul.mubr.f32.gmra.mxu0 %v3801
      %v4022 = vpop.f32.mrf.mxu0
      %v4023 = vadd.f32 0.0, %v4022
      %v4024 = vpop.f32.mrf.mxu0
      %4025 = vmatprep.mubr.f32.mxu0 0.0
      %4026 = vmatmul.mubr.f32.gmra.mxu0 %v3804
      %v4027 = vpop.f32.mrf.mxu0
      %v4028 = vadd.f32 0.0, %v4027
      %v4029 = vpop.f32.mrf.mxu0
      %4030 = vdwg.mxu0
      %v4031 = vadd.f32 %v2811, %v3873
      %v4032 = vadd.f32 %v2812, %v3878
      %v4033 = vadd.f32 %v2813, %v3883
      %v4034 = vadd.f32 %v2814, %v3888
      %v4035 = vadd.f32 %v2815, %v3893
      %v4036 = vadd.f32 %v2816, %v3898
      %v4037 = vadd.f32 %v2817, %v3903
      %v4038 = vadd.f32 %v2818, %v3908
      %v4039 = vadd.f32 %v2819, %v3913
      %v4040 = vadd.f32 %v2820, %v3918
      %v4041 = vadd.f32 %v2821, %v3923
      %v4042 = vadd.f32 %v2822, %v3928
      %v4043 = vadd.f32 %v2823, %v3933
      %v4044 = vadd.f32 %v2824, %v3938
      %v4045 = vadd.f32 %v2825, %v3943
      %v4046 = vadd.f32 %v2826, %v3948
      %v4047 = vadd.f32 %v2827, %v3953
      %v4048 = vadd.f32 %v2828, %v3958
      %v4049 = vadd.f32 %v2829, %v3963
      %v4050 = vadd.f32 %v2830, %v3968
      %v4051 = vadd.f32 %v2831, %v3973
      %v4052 = vadd.f32 %v2832, %v3978
      %v4053 = vadd.f32 %v2833, %v3983
      %v4054 = vadd.f32 %v2834, %v3988
      %v4055 = vadd.f32 %v2835, %v3993
      %v4056 = vadd.f32 %v2836, %v3998
      %v4057 = vadd.f32 %v2837, %v4003
      %v4058 = vadd.f32 %v2838, %v4008
      %v4059 = vadd.f32 %v2839, %v4013
      %v4060 = vadd.f32 %v2840, %v4018
      %v4061 = vadd.f32 %v2841, %v4023
      %v4062 = vadd.f32 %v2842, %v4028
      %s4063 = scalar_lea.vmem %s5, 112
      %v4064 = vld [vmem:[%s4063] sm:$0xff]
      %v4065 = vld [vmem:[%s4063 + $0x8] sm:$0xff]
      %v4066 = vld [vmem:[%s4063 + $0x10] sm:$0xff]
      %v4067 = vld [vmem:[%s4063 + $0x18] sm:$0xff]
      %v4068 = vld [vmem:[%s4063 + $0x20] sm:$0xff]
      %v4069 = vld [vmem:[%s4063 + $0x28] sm:$0xff]
      %v4070 = vld [vmem:[%s4063 + $0x30] sm:$0xff]
      %v4071 = vld [vmem:[%s4063 + $0x38] sm:$0xff]
      %v4072 = vld [vmem:[%s4063 + $0x40] sm:$0xff]
      %v4073 = vld [vmem:[%s4063 + $0x48] sm:$0xff]
      %v4074 = vld [vmem:[%s4063 + $0x50] sm:$0xff]
      %v4075 = vld [vmem:[%s4063 + $0x58] sm:$0xff]
      %v4076 = vld [vmem:[%s4063 + $0x60] sm:$0xff]
      %v4077 = vld [vmem:[%s4063 + $0x68] sm:$0x1]
      %s4078 = scalar_lea.vmem %s1, 48
      %v4079 = vld [vmem:[%s4078] sm:$0xff]
      %v4080 = vld [vmem:[%s4078 + $0x8] sm:$0x7f]
      %s4081 = scalar_lea.vmem %s2, 3
      %v4082 = vld [vmem:[%s4081] sm:$0x1]
      %v4084 = vlaneseq
      %v4085 = vshrl.u32 %v4084, 7
      %v4086 = vsub.s32 0, %v4085
      %v4087 = vrot.slane %v4082, %v4086
      %v4090 = vsel %vm255, %v4031, 0
      %v4093 = vsel %vm255, %v4032, 0
      %v4096 = vsel %vm255, %v4033, 0
      %v4099 = vsel %vm255, %v4034, 0
      %v4102 = vsel %vm255, %v4035, 0
      %v4105 = vsel %vm255, %v4036, 0
      %v4108 = vsel %vm255, %v4037, 0
      %v4111 = vsel %vm255, %v4038, 0
      %v4114 = vsel %vm255, %v4039, 0
      %v4117 = vsel %vm255, %v4040, 0
      %v4120 = vsel %vm255, %v4041, 0
      %v4123 = vsel %vm255, %v4042, 0
      %v4126 = vsel %vm255, %v4043, 0
      %v4129 = vsel %vm255, %v4044, 0
      %v4132 = vsel %vm255, %v4045, 0
      %v4135 = vsel %vm255, %v4046, 0
      %v4138 = vsel %vm255, %v4047, 0
      %v4141 = vsel %vm255, %v4048, 0
      %v4144 = vsel %vm255, %v4049, 0
      %v4147 = vsel %vm255, %v4050, 0
      %v4150 = vsel %vm255, %v4051, 0
      %v4153 = vsel %vm255, %v4052, 0
      %v4156 = vsel %vm255, %v4053, 0
      %v4159 = vsel %vm255, %v4054, 0
      %v4162 = vsel %vm255, %v4055, 0
      %v4165 = vsel %vm255, %v4056, 0
      %v4168 = vsel %vm255, %v4057, 0
      %v4171 = vsel %vm255, %v4058, 0
      %v4174 = vsel %vm255, %v4059, 0
      %v4177 = vsel %vm255, %v4060, 0
      %v4180 = vsel %vm255, %v4061, 0
      %v4183 = vsel %vm255, %v4062, 0
      %v4186 = vsel %vm504, %v4080, 0
      %4188 = vmatprep.subr.mxu0 0.0
      %4189 = vmatpush1.msra.mxu0 0.0
      %4190 = vmatprep.subr.mxu0 0.0
      %4191 = vmatpush1.msra.mxu0 0.0
      %4192 = vmatprep.subr.mxu0 0.0
      %4193 = vmatpush1.msra.mxu0 0.0
      %4194 = vmatprep.subr.mxu0 0.0
      %4195 = vmatpush1.msra.mxu0 0.0
      %4196 = vmatprep.subr.mxu0 0.0
      %4197 = vmatpush1.msra.mxu0 0.0
      %4198 = vmatprep.subr.mxu0 0.0
      %4199 = vmatpush1.msra.mxu0 0.0
      %4200 = vmatprep.subr.mxu0 0.0
      %4201 = vmatpush1.msra.mxu0 0.0
      %4202 = vmatprep.subr.mxu0 0.0
      %4203 = vmatpush1.msra.mxu0 0.0
      %4204 = vmatprep.subr.mxu0 0.0
      %4205 = vmatpush1.msra.mxu0 0.0
      %4206 = vmatprep.subr.mxu0 0.0
      %4207 = vmatpush1.msra.mxu0 0.0
      %4208 = vmatprep.subr.mxu0 0.0
      %4209 = vmatpush1.msra.mxu0 0.0
      %4210 = vmatprep.subr.mxu0 0.0
      %4211 = vmatpush1.msra.mxu0 0.0
      %4212 = vmatprep.subr.mxu0 0.0
      %4213 = vmatpush1.msra.mxu0 0.0
      %4214 = vmatprep.subr.mxu0 0.0
      %4215 = vmatpush1.msra.mxu0 0.0
      %4216 = vmatprep.subr.mxu0 0.0
      %4217 = vmatpush1.msra.mxu0 %v4186
      %4218 = vmatprep.subr.mxu0 0.0
      %4219 = vmatpush1.msra.mxu0 %v4079
      %4220 = vmatprep.subr.mxu0 0.0
      %4221 = vmatpush2.msra.mxu0 0.0
      %4222 = vmatprep.subr.mxu0 0.0
      %4223 = vmatpush2.msra.mxu0 0.0
      %4224 = vmatprep.subr.mxu0 0.0
      %4225 = vmatpush2.msra.mxu0 0.0
      %4226 = vmatprep.subr.mxu0 0.0
      %4227 = vmatpush2.msra.mxu0 0.0
      %4228 = vmatprep.subr.mxu0 0.0
      %4229 = vmatpush2.msra.mxu0 0.0
      %4230 = vmatprep.subr.mxu0 0.0
      %4231 = vmatpush2.msra.mxu0 0.0
      %4232 = vmatprep.subr.mxu0 0.0
      %4233 = vmatpush2.msra.mxu0 0.0
      %4234 = vmatprep.subr.mxu0 0.0
      %4235 = vmatpush2.msra.mxu0 0.0
      %4236 = vmatprep.subr.mxu0 0.0
      %4237 = vmatpush2.msra.mxu0 0.0
      %4238 = vmatprep.subr.mxu0 0.0
      %4239 = vmatpush2.msra.mxu0 0.0
      %4240 = vmatprep.subr.mxu0 0.0
      %4241 = vmatpush2.msra.mxu0 0.0
      %4242 = vmatprep.subr.mxu0 0.0
      %4243 = vmatpush2.msra.mxu0 0.0
      %4244 = vmatprep.subr.mxu0 0.0
      %4245 = vmatpush2.msra.mxu0 0.0
      %4246 = vmatprep.subr.mxu0 0.0
      %4247 = vmatpush2.msra.mxu0 0.0
      %4248 = vmatprep.subr.mxu0 0.0
      %4249 = vmatpush2.msra.mxu0 0.0
      %4250 = vmatprep.subr.mxu0 0.0
      %4251 = vmatpush2.msra.mxu0 0.0
      %4252 = vmatprep.mubr.f32.mxu0 0.0
      %4253 = vmatmul.mubr.f32.gmra.mxu0 %v4090
      %v4254 = vpop.f32.mrf.mxu0
      %v4255 = vadd.f32 %v4087, %v4254
      %v4256 = vpop.f32.mrf.mxu0
      %4257 = vmatprep.mubr.f32.mxu0 0.0
      %4258 = vmatmul.mubr.f32.gmra.mxu0 %v4093
      %v4259 = vpop.f32.mrf.mxu0
      %v4260 = vadd.f32 %v4087, %v4259
      %v4261 = vpop.f32.mrf.mxu0
      %4262 = vmatprep.mubr.f32.mxu0 0.0
      %4263 = vmatmul.mubr.f32.gmra.mxu0 %v4096
      %v4264 = vpop.f32.mrf.mxu0
      %v4265 = vadd.f32 %v4087, %v4264
      %v4266 = vpop.f32.mrf.mxu0
      %4267 = vmatprep.mubr.f32.mxu0 0.0
      %4268 = vmatmul.mubr.f32.gmra.mxu0 %v4099
      %v4269 = vpop.f32.mrf.mxu0
      %v4270 = vadd.f32 %v4087, %v4269
      %v4271 = vpop.f32.mrf.mxu0
      %4272 = vmatprep.mubr.f32.mxu0 0.0
      %4273 = vmatmul.mubr.f32.gmra.mxu0 %v4102
      %v4274 = vpop.f32.mrf.mxu0
      %v4275 = vadd.f32 %v4087, %v4274
      %v4276 = vpop.f32.mrf.mxu0
      %4277 = vmatprep.mubr.f32.mxu0 0.0
      %4278 = vmatmul.mubr.f32.gmra.mxu0 %v4105
      %v4279 = vpop.f32.mrf.mxu0
      %v4280 = vadd.f32 %v4087, %v4279
      %v4281 = vpop.f32.mrf.mxu0
      %4282 = vmatprep.mubr.f32.mxu0 0.0
      %4283 = vmatmul.mubr.f32.gmra.mxu0 %v4108
      %v4284 = vpop.f32.mrf.mxu0
      %v4285 = vadd.f32 %v4087, %v4284
      %v4286 = vpop.f32.mrf.mxu0
      %4287 = vmatprep.mubr.f32.mxu0 0.0
      %4288 = vmatmul.mubr.f32.gmra.mxu0 %v4111
      %v4289 = vpop.f32.mrf.mxu0
      %v4290 = vadd.f32 %v4087, %v4289
      %v4291 = vpop.f32.mrf.mxu0
      %4292 = vmatprep.mubr.f32.mxu0 0.0
      %4293 = vmatmul.mubr.f32.gmra.mxu0 %v4114
      %v4294 = vpop.f32.mrf.mxu0
      %v4295 = vadd.f32 %v4087, %v4294
      %v4296 = vpop.f32.mrf.mxu0
      %4297 = vmatprep.mubr.f32.mxu0 0.0
      %4298 = vmatmul.mubr.f32.gmra.mxu0 %v4117
      %v4299 = vpop.f32.mrf.mxu0
      %v4300 = vadd.f32 %v4087, %v4299
      %v4301 = vpop.f32.mrf.mxu0
      %4302 = vmatprep.mubr.f32.mxu0 0.0
      %4303 = vmatmul.mubr.f32.gmra.mxu0 %v4120
      %v4304 = vpop.f32.mrf.mxu0
      %v4305 = vadd.f32 %v4087, %v4304
      %v4306 = vpop.f32.mrf.mxu0
      %4307 = vmatprep.mubr.f32.mxu0 0.0
      %4308 = vmatmul.mubr.f32.gmra.mxu0 %v4123
      %v4309 = vpop.f32.mrf.mxu0
      %v4310 = vadd.f32 %v4087, %v4309
      %v4311 = vpop.f32.mrf.mxu0
      %4312 = vmatprep.mubr.f32.mxu0 0.0
      %4313 = vmatmul.mubr.f32.gmra.mxu0 %v4126
      %v4314 = vpop.f32.mrf.mxu0
      %v4315 = vadd.f32 %v4087, %v4314
      %v4316 = vpop.f32.mrf.mxu0
      %4317 = vmatprep.mubr.f32.mxu0 0.0
      %4318 = vmatmul.mubr.f32.gmra.mxu0 %v4129
      %v4319 = vpop.f32.mrf.mxu0
      %v4320 = vadd.f32 %v4087, %v4319
      %v4321 = vpop.f32.mrf.mxu0
      %4322 = vmatprep.mubr.f32.mxu0 0.0
      %4323 = vmatmul.mubr.f32.gmra.mxu0 %v4132
      %v4324 = vpop.f32.mrf.mxu0
      %v4325 = vadd.f32 %v4087, %v4324
      %v4326 = vpop.f32.mrf.mxu0
      %4327 = vmatprep.mubr.f32.mxu0 0.0
      %4328 = vmatmul.mubr.f32.gmra.mxu0 %v4135
      %v4329 = vpop.f32.mrf.mxu0
      %v4330 = vadd.f32 %v4087, %v4329
      %v4331 = vpop.f32.mrf.mxu0
      %4332 = vmatprep.mubr.f32.mxu0 0.0
      %4333 = vmatmul.mubr.f32.gmra.mxu0 %v4138
      %v4334 = vpop.f32.mrf.mxu0
      %v4335 = vadd.f32 %v4087, %v4334
      %v4336 = vpop.f32.mrf.mxu0
      %4337 = vmatprep.mubr.f32.mxu0 0.0
      %4338 = vmatmul.mubr.f32.gmra.mxu0 %v4141
      %v4339 = vpop.f32.mrf.mxu0
      %v4340 = vadd.f32 %v4087, %v4339
      %v4341 = vpop.f32.mrf.mxu0
      %4342 = vmatprep.mubr.f32.mxu0 0.0
      %4343 = vmatmul.mubr.f32.gmra.mxu0 %v4144
      %v4344 = vpop.f32.mrf.mxu0
      %v4345 = vadd.f32 %v4087, %v4344
      %v4346 = vpop.f32.mrf.mxu0
      %4347 = vmatprep.mubr.f32.mxu0 0.0
      %4348 = vmatmul.mubr.f32.gmra.mxu0 %v4147
      %v4349 = vpop.f32.mrf.mxu0
      %v4350 = vadd.f32 %v4087, %v4349
      %v4351 = vpop.f32.mrf.mxu0
      %4352 = vmatprep.mubr.f32.mxu0 0.0
      %4353 = vmatmul.mubr.f32.gmra.mxu0 %v4150
      %v4354 = vpop.f32.mrf.mxu0
      %v4355 = vadd.f32 %v4087, %v4354
      %v4356 = vpop.f32.mrf.mxu0
      %4357 = vmatprep.mubr.f32.mxu0 0.0
      %4358 = vmatmul.mubr.f32.gmra.mxu0 %v4153
      %v4359 = vpop.f32.mrf.mxu0
      %v4360 = vadd.f32 %v4087, %v4359
      %v4361 = vpop.f32.mrf.mxu0
      %4362 = vmatprep.mubr.f32.mxu0 0.0
      %4363 = vmatmul.mubr.f32.gmra.mxu0 %v4156
      %v4364 = vpop.f32.mrf.mxu0
      %v4365 = vadd.f32 %v4087, %v4364
      %v4366 = vpop.f32.mrf.mxu0
      %4367 = vmatprep.mubr.f32.mxu0 0.0
      %4368 = vmatmul.mubr.f32.gmra.mxu0 %v4159
      %v4369 = vpop.f32.mrf.mxu0
      %v4370 = vadd.f32 %v4087, %v4369
      %v4371 = vpop.f32.mrf.mxu0
      %4372 = vmatprep.mubr.f32.mxu0 0.0
      %4373 = vmatmul.mubr.f32.gmra.mxu0 %v4162
      %v4374 = vpop.f32.mrf.mxu0
      %v4375 = vadd.f32 %v4087, %v4374
      %v4376 = vpop.f32.mrf.mxu0
      %4377 = vmatprep.mubr.f32.mxu0 0.0
      %4378 = vmatmul.mubr.f32.gmra.mxu0 %v4165
      %v4379 = vpop.f32.mrf.mxu0
      %v4380 = vadd.f32 %v4087, %v4379
      %v4381 = vpop.f32.mrf.mxu0
      %4382 = vmatprep.mubr.f32.mxu0 0.0
      %4383 = vmatmul.mubr.f32.gmra.mxu0 %v4168
      %v4384 = vpop.f32.mrf.mxu0
      %v4385 = vadd.f32 %v4087, %v4384
      %v4386 = vpop.f32.mrf.mxu0
      %4387 = vmatprep.mubr.f32.mxu0 0.0
      %4388 = vmatmul.mubr.f32.gmra.mxu0 %v4171
      %v4389 = vpop.f32.mrf.mxu0
      %v4390 = vadd.f32 %v4087, %v4389
      %v4391 = vpop.f32.mrf.mxu0
      %4392 = vmatprep.mubr.f32.mxu0 0.0
      %4393 = vmatmul.mubr.f32.gmra.mxu0 %v4174
      %v4394 = vpop.f32.mrf.mxu0
      %v4395 = vadd.f32 %v4087, %v4394
      %v4396 = vpop.f32.mrf.mxu0
      %4397 = vmatprep.mubr.f32.mxu0 0.0
      %4398 = vmatmul.mubr.f32.gmra.mxu0 %v4177
      %v4399 = vpop.f32.mrf.mxu0
      %v4400 = vadd.f32 %v4087, %v4399
      %v4401 = vpop.f32.mrf.mxu0
      %4402 = vmatprep.mubr.f32.mxu0 0.0
      %4403 = vmatmul.mubr.f32.gmra.mxu0 %v4180
      %v4404 = vpop.f32.mrf.mxu0
      %v4405 = vadd.f32 %v4087, %v4404
      %v4406 = vpop.f32.mrf.mxu0
      %4407 = vmatprep.mubr.f32.mxu0 0.0
      %4408 = vmatmul.mubr.f32.gmra.mxu0 %v4183
      %v4409 = vpop.f32.mrf.mxu0
      %v4410 = vadd.f32 %v4087, %v4409
      %v4411 = vpop.f32.mrf.mxu0
      %4412 = vdwg.mxu0
      %vm4413 = vcmp.ge.f32.partialorder %v4255, 0.0
      %vm4414 = vcmp.ge.f32.partialorder %v4260, 0.0
      %vm4415 = vcmp.ge.f32.partialorder %v4265, 0.0
      %vm4416 = vcmp.ge.f32.partialorder %v4270, 0.0
      %vm4417 = vcmp.ge.f32.partialorder %v4275, 0.0
      %vm4418 = vcmp.ge.f32.partialorder %v4280, 0.0
      %vm4419 = vcmp.ge.f32.partialorder %v4285, 0.0
      %vm4420 = vcmp.ge.f32.partialorder %v4290, 0.0
      %vm4421 = vcmp.ge.f32.partialorder %v4295, 0.0
      %vm4422 = vcmp.ge.f32.partialorder %v4300, 0.0
      %vm4423 = vcmp.ge.f32.partialorder %v4305, 0.0
      %vm4424 = vcmp.ge.f32.partialorder %v4310, 0.0
      %vm4425 = vcmp.ge.f32.partialorder %v4315, 0.0
      %vm4426 = vcmp.ge.f32.partialorder %v4320, 0.0
      %vm4427 = vcmp.ge.f32.partialorder %v4325, 0.0
      %vm4428 = vcmp.ge.f32.partialorder %v4330, 0.0
      %vm4429 = vcmp.ge.f32.partialorder %v4335, 0.0
      %vm4430 = vcmp.ge.f32.partialorder %v4340, 0.0
      %vm4431 = vcmp.ge.f32.partialorder %v4345, 0.0
      %vm4432 = vcmp.ge.f32.partialorder %v4350, 0.0
      %vm4433 = vcmp.ge.f32.partialorder %v4355, 0.0
      %vm4434 = vcmp.ge.f32.partialorder %v4360, 0.0
      %vm4435 = vcmp.ge.f32.partialorder %v4365, 0.0
      %vm4436 = vcmp.ge.f32.partialorder %v4370, 0.0
      %vm4437 = vcmp.ge.f32.partialorder %v4375, 0.0
      %vm4438 = vcmp.ge.f32.partialorder %v4380, 0.0
      %vm4439 = vcmp.ge.f32.partialorder %v4385, 0.0
      %vm4440 = vcmp.ge.f32.partialorder %v4390, 0.0
      %vm4441 = vcmp.ge.f32.partialorder %v4395, 0.0
      %vm4442 = vcmp.ge.f32.partialorder %v4400, 0.0
      %vm4443 = vcmp.ge.f32.partialorder %v4405, 0.0
      %vm4444 = vcmp.ge.f32.partialorder %v4410, 0.0
      %v4445 = vmul.f32 %v4255, 0.01
      %v4446 = vmul.f32 %v4260, 0.01
      %v4447 = vmul.f32 %v4265, 0.01
      %v4448 = vmul.f32 %v4270, 0.01
      %v4449 = vmul.f32 %v4275, 0.01
      %v4450 = vmul.f32 %v4280, 0.01
      %v4451 = vmul.f32 %v4285, 0.01
      %v4452 = vmul.f32 %v4290, 0.01
      %v4453 = vmul.f32 %v4295, 0.01
      %v4454 = vmul.f32 %v4300, 0.01
      %v4455 = vmul.f32 %v4305, 0.01
      %v4456 = vmul.f32 %v4310, 0.01
      %v4457 = vmul.f32 %v4315, 0.01
      %v4458 = vmul.f32 %v4320, 0.01
      %v4459 = vmul.f32 %v4325, 0.01
      %v4460 = vmul.f32 %v4330, 0.01
      %v4461 = vmul.f32 %v4335, 0.01
      %v4462 = vmul.f32 %v4340, 0.01
      %v4463 = vmul.f32 %v4345, 0.01
      %v4464 = vmul.f32 %v4350, 0.01
      %v4465 = vmul.f32 %v4355, 0.01
      %v4466 = vmul.f32 %v4360, 0.01
      %v4467 = vmul.f32 %v4365, 0.01
      %v4468 = vmul.f32 %v4370, 0.01
      %v4469 = vmul.f32 %v4375, 0.01
      %v4470 = vmul.f32 %v4380, 0.01
      %v4471 = vmul.f32 %v4385, 0.01
      %v4472 = vmul.f32 %v4390, 0.01
      %v4473 = vmul.f32 %v4395, 0.01
      %v4474 = vmul.f32 %v4400, 0.01
      %v4475 = vmul.f32 %v4405, 0.01
      %v4476 = vmul.f32 %v4410, 0.01
      %v4477 = vsel %vm4413, %v4255, %v4445
      %v4478 = vsel %vm4414, %v4260, %v4446
      %v4479 = vsel %vm4415, %v4265, %v4447
      %v4480 = vsel %vm4416, %v4270, %v4448
      %v4481 = vsel %vm4417, %v4275, %v4449
      %v4482 = vsel %vm4418, %v4280, %v4450
      %v4483 = vsel %vm4419, %v4285, %v4451
      %v4484 = vsel %vm4420, %v4290, %v4452
      %v4485 = vsel %vm4421, %v4295, %v4453
      %v4486 = vsel %vm4422, %v4300, %v4454
      %v4487 = vsel %vm4423, %v4305, %v4455
      %v4488 = vsel %vm4424, %v4310, %v4456
      %v4489 = vsel %vm4425, %v4315, %v4457
      %v4490 = vsel %vm4426, %v4320, %v4458
      %v4491 = vsel %vm4427, %v4325, %v4459
      %v4492 = vsel %vm4428, %v4330, %v4460
      %v4493 = vsel %vm4429, %v4335, %v4461
      %v4494 = vsel %vm4430, %v4340, %v4462
      %v4495 = vsel %vm4431, %v4345, %v4463
      %v4496 = vsel %vm4432, %v4350, %v4464
      %v4497 = vsel %vm4433, %v4355, %v4465
      %v4498 = vsel %vm4434, %v4360, %v4466
      %v4499 = vsel %vm4435, %v4365, %v4467
      %v4500 = vsel %vm4436, %v4370, %v4468
      %v4501 = vsel %vm4437, %v4375, %v4469
      %v4502 = vsel %vm4438, %v4380, %v4470
      %v4503 = vsel %vm4439, %v4385, %v4471
      %v4504 = vsel %vm4440, %v4390, %v4472
      %v4505 = vsel %vm4441, %v4395, %v4473
      %v4506 = vsel %vm4442, %v4400, %v4474
      %v4507 = vsel %vm4443, %v4405, %v4475
      %v4508 = vsel %vm4444, %v4410, %v4476
      %s4509 = scalar_lea.vmem %s3, 168
      %v4510 = vld [vmem:[%s4509] sm:$0xff]
      %v4511 = vld [vmem:[%s4509 + $0x8] sm:$0xff]
      %v4512 = vld [vmem:[%s4509 + $0x10] sm:$0xff]
      %v4513 = vld [vmem:[%s4509 + $0x18] sm:$0xff]
      %v4514 = vld [vmem:[%s4509 + $0x20] sm:$0xff]
      %v4515 = vld [vmem:[%s4509 + $0x28] sm:$0xff]
      %v4516 = vld [vmem:[%s4509 + $0x30] sm:$0x3]
      %s4517 = scalar_lea.vmem %s4, 3
      %v4518 = vld [vmem:[%s4517] sm:$0x1]
      %v4520 = vlaneseq
      %v4521 = vshrl.u32 %v4520, 7
      %v4522 = vsub.s32 0, %v4521
      %v4523 = vrot.slane %v4518, %v4522
      %v4526 = vsel %vm843, %v4477, 0
      %v4529 = vsel %vm843, %v4478, 0
      %v4532 = vsel %vm843, %v4479, 0
      %v4535 = vsel %vm843, %v4480, 0
      %v4538 = vsel %vm843, %v4481, 0
      %v4541 = vsel %vm843, %v4482, 0
      %v4544 = vsel %vm843, %v4483, 0
      %v4547 = vsel %vm843, %v4484, 0
      %v4550 = vsel %vm843, %v4485, 0
      %v4553 = vsel %vm843, %v4486, 0
      %v4556 = vsel %vm843, %v4487, 0
      %v4559 = vsel %vm843, %v4488, 0
      %v4562 = vsel %vm843, %v4489, 0
      %v4565 = vsel %vm843, %v4490, 0
      %v4568 = vsel %vm843, %v4491, 0
      %v4571 = vsel %vm843, %v4492, 0
      %v4574 = vsel %vm843, %v4493, 0
      %v4577 = vsel %vm843, %v4494, 0
      %v4580 = vsel %vm843, %v4495, 0
      %v4583 = vsel %vm843, %v4496, 0
      %v4586 = vsel %vm843, %v4497, 0
      %v4589 = vsel %vm843, %v4498, 0
      %v4592 = vsel %vm843, %v4499, 0
      %v4595 = vsel %vm843, %v4500, 0
      %v4598 = vsel %vm843, %v4501, 0
      %v4601 = vsel %vm843, %v4502, 0
      %v4604 = vsel %vm843, %v4503, 0
      %v4607 = vsel %vm843, %v4504, 0
      %v4610 = vsel %vm843, %v4505, 0
      %v4613 = vsel %vm843, %v4506, 0
      %v4616 = vsel %vm843, %v4507, 0
      %v4619 = vsel %vm843, %v4508, 0
      %v4622 = vsel %vm940, %v4516, 0
      %4624 = vmatprep.subr.mxu0 0.0
      %4625 = vmatpush1.msra.mxu0 0.0
      %4626 = vmatprep.subr.mxu0 0.0
      %4627 = vmatpush1.msra.mxu0 0.0
      %4628 = vmatprep.subr.mxu0 0.0
      %4629 = vmatpush1.msra.mxu0 0.0
      %4630 = vmatprep.subr.mxu0 0.0
      %4631 = vmatpush1.msra.mxu0 0.0
      %4632 = vmatprep.subr.mxu0 0.0
      %4633 = vmatpush1.msra.mxu0 0.0
      %4634 = vmatprep.subr.mxu0 0.0
      %4635 = vmatpush1.msra.mxu0 0.0
      %4636 = vmatprep.subr.mxu0 0.0
      %4637 = vmatpush1.msra.mxu0 0.0
      %4638 = vmatprep.subr.mxu0 0.0
      %4639 = vmatpush1.msra.mxu0 0.0
      %4640 = vmatprep.subr.mxu0 0.0
      %4641 = vmatpush1.msra.mxu0 0.0
      %4642 = vmatprep.subr.mxu0 0.0
      %4643 = vmatpush1.msra.mxu0 %v4622
      %4644 = vmatprep.subr.mxu0 0.0
      %4645 = vmatpush1.msra.mxu0 %v4515
      %4646 = vmatprep.subr.mxu0 0.0
      %4647 = vmatpush1.msra.mxu0 %v4514
      %4648 = vmatprep.subr.mxu0 0.0
      %4649 = vmatpush1.msra.mxu0 %v4513
      %4650 = vmatprep.subr.mxu0 0.0
      %4651 = vmatpush1.msra.mxu0 %v4512
      %4652 = vmatprep.subr.mxu0 0.0
      %4653 = vmatpush1.msra.mxu0 %v4511
      %4654 = vmatprep.subr.mxu0 0.0
      %4655 = vmatpush1.msra.mxu0 %v4510
      %4656 = vmatprep.subr.mxu0 0.0
      %4657 = vmatpush2.msra.mxu0 0.0
      %4658 = vmatprep.subr.mxu0 0.0
      %4659 = vmatpush2.msra.mxu0 0.0
      %4660 = vmatprep.subr.mxu0 0.0
      %4661 = vmatpush2.msra.mxu0 0.0
      %4662 = vmatprep.subr.mxu0 0.0
      %4663 = vmatpush2.msra.mxu0 0.0
      %4664 = vmatprep.subr.mxu0 0.0
      %4665 = vmatpush2.msra.mxu0 0.0
      %4666 = vmatprep.subr.mxu0 0.0
      %4667 = vmatpush2.msra.mxu0 0.0
      %4668 = vmatprep.subr.mxu0 0.0
      %4669 = vmatpush2.msra.mxu0 0.0
      %4670 = vmatprep.subr.mxu0 0.0
      %4671 = vmatpush2.msra.mxu0 0.0
      %4672 = vmatprep.subr.mxu0 0.0
      %4673 = vmatpush2.msra.mxu0 0.0
      %4674 = vmatprep.subr.mxu0 0.0
      %4675 = vmatpush2.msra.mxu0 0.0
      %4676 = vmatprep.subr.mxu0 0.0
      %4677 = vmatpush2.msra.mxu0 0.0
      %4678 = vmatprep.subr.mxu0 0.0
      %4679 = vmatpush2.msra.mxu0 0.0
      %4680 = vmatprep.subr.mxu0 0.0
      %4681 = vmatpush2.msra.mxu0 0.0
      %4682 = vmatprep.subr.mxu0 0.0
      %4683 = vmatpush2.msra.mxu0 0.0
      %4684 = vmatprep.subr.mxu0 0.0
      %4685 = vmatpush2.msra.mxu0 0.0
      %4686 = vmatprep.subr.mxu0 0.0
      %4687 = vmatpush2.msra.mxu0 0.0
      %4688 = vmatprep.mubr.f32.mxu0 0.0
      %4689 = vmatmul.mubr.f32.gmra.mxu0 %v4526
      %v4690 = vpop.f32.mrf.mxu0
      %v4691 = vadd.f32 %v4523, %v4690
      %v4692 = vpop.f32.mrf.mxu0
      %4693 = vmatprep.mubr.f32.mxu0 0.0
      %4694 = vmatmul.mubr.f32.gmra.mxu0 %v4529
      %v4695 = vpop.f32.mrf.mxu0
      %v4696 = vadd.f32 %v4523, %v4695
      %v4697 = vpop.f32.mrf.mxu0
      %4698 = vmatprep.mubr.f32.mxu0 0.0
      %4699 = vmatmul.mubr.f32.gmra.mxu0 %v4532
      %v4700 = vpop.f32.mrf.mxu0
      %v4701 = vadd.f32 %v4523, %v4700
      %v4702 = vpop.f32.mrf.mxu0
      %4703 = vmatprep.mubr.f32.mxu0 0.0
      %4704 = vmatmul.mubr.f32.gmra.mxu0 %v4535
      %v4705 = vpop.f32.mrf.mxu0
      %v4706 = vadd.f32 %v4523, %v4705
      %v4707 = vpop.f32.mrf.mxu0
      %4708 = vmatprep.mubr.f32.mxu0 0.0
      %4709 = vmatmul.mubr.f32.gmra.mxu0 %v4538
      %v4710 = vpop.f32.mrf.mxu0
      %v4711 = vadd.f32 %v4523, %v4710
      %v4712 = vpop.f32.mrf.mxu0
      %4713 = vmatprep.mubr.f32.mxu0 0.0
      %4714 = vmatmul.mubr.f32.gmra.mxu0 %v4541
      %v4715 = vpop.f32.mrf.mxu0
      %v4716 = vadd.f32 %v4523, %v4715
      %v4717 = vpop.f32.mrf.mxu0
      %4718 = vmatprep.mubr.f32.mxu0 0.0
      %4719 = vmatmul.mubr.f32.gmra.mxu0 %v4544
      %v4720 = vpop.f32.mrf.mxu0
      %v4721 = vadd.f32 %v4523, %v4720
      %v4722 = vpop.f32.mrf.mxu0
      %4723 = vmatprep.mubr.f32.mxu0 0.0
      %4724 = vmatmul.mubr.f32.gmra.mxu0 %v4547
      %v4725 = vpop.f32.mrf.mxu0
      %v4726 = vadd.f32 %v4523, %v4725
      %v4727 = vpop.f32.mrf.mxu0
      %4728 = vmatprep.mubr.f32.mxu0 0.0
      %4729 = vmatmul.mubr.f32.gmra.mxu0 %v4550
      %v4730 = vpop.f32.mrf.mxu0
      %v4731 = vadd.f32 %v4523, %v4730
      %v4732 = vpop.f32.mrf.mxu0
      %4733 = vmatprep.mubr.f32.mxu0 0.0
      %4734 = vmatmul.mubr.f32.gmra.mxu0 %v4553
      %v4735 = vpop.f32.mrf.mxu0
      %v4736 = vadd.f32 %v4523, %v4735
      %v4737 = vpop.f32.mrf.mxu0
      %4738 = vmatprep.mubr.f32.mxu0 0.0
      %4739 = vmatmul.mubr.f32.gmra.mxu0 %v4556
      %v4740 = vpop.f32.mrf.mxu0
      %v4741 = vadd.f32 %v4523, %v4740
      %v4742 = vpop.f32.mrf.mxu0
      %4743 = vmatprep.mubr.f32.mxu0 0.0
      %4744 = vmatmul.mubr.f32.gmra.mxu0 %v4559
      %v4745 = vpop.f32.mrf.mxu0
      %v4746 = vadd.f32 %v4523, %v4745
      %v4747 = vpop.f32.mrf.mxu0
      %4748 = vmatprep.mubr.f32.mxu0 0.0
      %4749 = vmatmul.mubr.f32.gmra.mxu0 %v4562
      %v4750 = vpop.f32.mrf.mxu0
      %v4751 = vadd.f32 %v4523, %v4750
      %v4752 = vpop.f32.mrf.mxu0
      %4753 = vmatprep.mubr.f32.mxu0 0.0
      %4754 = vmatmul.mubr.f32.gmra.mxu0 %v4565
      %v4755 = vpop.f32.mrf.mxu0
      %v4756 = vadd.f32 %v4523, %v4755
      %v4757 = vpop.f32.mrf.mxu0
      %4758 = vmatprep.mubr.f32.mxu0 0.0
      %4759 = vmatmul.mubr.f32.gmra.mxu0 %v4568
      %v4760 = vpop.f32.mrf.mxu0
      %v4761 = vadd.f32 %v4523, %v4760
      %v4762 = vpop.f32.mrf.mxu0
      %4763 = vmatprep.mubr.f32.mxu0 0.0
      %4764 = vmatmul.mubr.f32.gmra.mxu0 %v4571
      %v4765 = vpop.f32.mrf.mxu0
      %v4766 = vadd.f32 %v4523, %v4765
      %v4767 = vpop.f32.mrf.mxu0
      %4768 = vmatprep.mubr.f32.mxu0 0.0
      %4769 = vmatmul.mubr.f32.gmra.mxu0 %v4574
      %v4770 = vpop.f32.mrf.mxu0
      %v4771 = vadd.f32 %v4523, %v4770
      %v4772 = vpop.f32.mrf.mxu0
      %4773 = vmatprep.mubr.f32.mxu0 0.0
      %4774 = vmatmul.mubr.f32.gmra.mxu0 %v4577
      %v4775 = vpop.f32.mrf.mxu0
      %v4776 = vadd.f32 %v4523, %v4775
      %v4777 = vpop.f32.mrf.mxu0
      %4778 = vmatprep.mubr.f32.mxu0 0.0
      %4779 = vmatmul.mubr.f32.gmra.mxu0 %v4580
      %v4780 = vpop.f32.mrf.mxu0
      %v4781 = vadd.f32 %v4523, %v4780
      %v4782 = vpop.f32.mrf.mxu0
      %4783 = vmatprep.mubr.f32.mxu0 0.0
      %4784 = vmatmul.mubr.f32.gmra.mxu0 %v4583
      %v4785 = vpop.f32.mrf.mxu0
      %v4786 = vadd.f32 %v4523, %v4785
      %v4787 = vpop.f32.mrf.mxu0
      %4788 = vmatprep.mubr.f32.mxu0 0.0
      %4789 = vmatmul.mubr.f32.gmra.mxu0 %v4586
      %v4790 = vpop.f32.mrf.mxu0
      %v4791 = vadd.f32 %v4523, %v4790
      %v4792 = vpop.f32.mrf.mxu0
      %4793 = vmatprep.mubr.f32.mxu0 0.0
      %4794 = vmatmul.mubr.f32.gmra.mxu0 %v4589
      %v4795 = vpop.f32.mrf.mxu0
      %v4796 = vadd.f32 %v4523, %v4795
      %v4797 = vpop.f32.mrf.mxu0
      %4798 = vmatprep.mubr.f32.mxu0 0.0
      %4799 = vmatmul.mubr.f32.gmra.mxu0 %v4592
      %v4800 = vpop.f32.mrf.mxu0
      %v4801 = vadd.f32 %v4523, %v4800
      %v4802 = vpop.f32.mrf.mxu0
      %4803 = vmatprep.mubr.f32.mxu0 0.0
      %4804 = vmatmul.mubr.f32.gmra.mxu0 %v4595
      %v4805 = vpop.f32.mrf.mxu0
      %v4806 = vadd.f32 %v4523, %v4805
      %v4807 = vpop.f32.mrf.mxu0
      %4808 = vmatprep.mubr.f32.mxu0 0.0
      %4809 = vmatmul.mubr.f32.gmra.mxu0 %v4598
      %v4810 = vpop.f32.mrf.mxu0
      %v4811 = vadd.f32 %v4523, %v4810
      %v4812 = vpop.f32.mrf.mxu0
      %4813 = vmatprep.mubr.f32.mxu0 0.0
      %4814 = vmatmul.mubr.f32.gmra.mxu0 %v4601
      %v4815 = vpop.f32.mrf.mxu0
      %v4816 = vadd.f32 %v4523, %v4815
      %v4817 = vpop.f32.mrf.mxu0
      %4818 = vmatprep.mubr.f32.mxu0 0.0
      %4819 = vmatmul.mubr.f32.gmra.mxu0 %v4604
      %v4820 = vpop.f32.mrf.mxu0
      %v4821 = vadd.f32 %v4523, %v4820
      %v4822 = vpop.f32.mrf.mxu0
      %4823 = vmatprep.mubr.f32.mxu0 0.0
      %4824 = vmatmul.mubr.f32.gmra.mxu0 %v4607
      %v4825 = vpop.f32.mrf.mxu0
      %v4826 = vadd.f32 %v4523, %v4825
      %v4827 = vpop.f32.mrf.mxu0
      %4828 = vmatprep.mubr.f32.mxu0 0.0
      %4829 = vmatmul.mubr.f32.gmra.mxu0 %v4610
      %v4830 = vpop.f32.mrf.mxu0
      %v4831 = vadd.f32 %v4523, %v4830
      %v4832 = vpop.f32.mrf.mxu0
      %4833 = vmatprep.mubr.f32.mxu0 0.0
      %4834 = vmatmul.mubr.f32.gmra.mxu0 %v4613
      %v4835 = vpop.f32.mrf.mxu0
      %v4836 = vadd.f32 %v4523, %v4835
      %v4837 = vpop.f32.mrf.mxu0
      %4838 = vmatprep.mubr.f32.mxu0 0.0
      %4839 = vmatmul.mubr.f32.gmra.mxu0 %v4616
      %v4840 = vpop.f32.mrf.mxu0
      %v4841 = vadd.f32 %v4523, %v4840
      %v4842 = vpop.f32.mrf.mxu0
      %4843 = vmatprep.mubr.f32.mxu0 0.0
      %4844 = vmatmul.mubr.f32.gmra.mxu0 %v4619
      %v4845 = vpop.f32.mrf.mxu0
      %v4846 = vadd.f32 %v4523, %v4845
      %v4847 = vpop.f32.mrf.mxu0
      %4848 = vdwg.mxu0
      %vm4849 = vcmp.ge.f32.partialorder %v4691, 0.0
      %vm4850 = vcmp.ge.f32.partialorder %v4696, 0.0
      %vm4851 = vcmp.ge.f32.partialorder %v4701, 0.0
      %vm4852 = vcmp.ge.f32.partialorder %v4706, 0.0
      %vm4853 = vcmp.ge.f32.partialorder %v4711, 0.0
      %vm4854 = vcmp.ge.f32.partialorder %v4716, 0.0
      %vm4855 = vcmp.ge.f32.partialorder %v4721, 0.0
      %vm4856 = vcmp.ge.f32.partialorder %v4726, 0.0
      %vm4857 = vcmp.ge.f32.partialorder %v4731, 0.0
      %vm4858 = vcmp.ge.f32.partialorder %v4736, 0.0
      %vm4859 = vcmp.ge.f32.partialorder %v4741, 0.0
      %vm4860 = vcmp.ge.f32.partialorder %v4746, 0.0
      %vm4861 = vcmp.ge.f32.partialorder %v4751, 0.0
      %vm4862 = vcmp.ge.f32.partialorder %v4756, 0.0
      %vm4863 = vcmp.ge.f32.partialorder %v4761, 0.0
      %vm4864 = vcmp.ge.f32.partialorder %v4766, 0.0
      %vm4865 = vcmp.ge.f32.partialorder %v4771, 0.0
      %vm4866 = vcmp.ge.f32.partialorder %v4776, 0.0
      %vm4867 = vcmp.ge.f32.partialorder %v4781, 0.0
      %vm4868 = vcmp.ge.f32.partialorder %v4786, 0.0
      %vm4869 = vcmp.ge.f32.partialorder %v4791, 0.0
      %vm4870 = vcmp.ge.f32.partialorder %v4796, 0.0
      %vm4871 = vcmp.ge.f32.partialorder %v4801, 0.0
      %vm4872 = vcmp.ge.f32.partialorder %v4806, 0.0
      %vm4873 = vcmp.ge.f32.partialorder %v4811, 0.0
      %vm4874 = vcmp.ge.f32.partialorder %v4816, 0.0
      %vm4875 = vcmp.ge.f32.partialorder %v4821, 0.0
      %vm4876 = vcmp.ge.f32.partialorder %v4826, 0.0
      %vm4877 = vcmp.ge.f32.partialorder %v4831, 0.0
      %vm4878 = vcmp.ge.f32.partialorder %v4836, 0.0
      %vm4879 = vcmp.ge.f32.partialorder %v4841, 0.0
      %vm4880 = vcmp.ge.f32.partialorder %v4846, 0.0
      %v4881 = vmul.f32 %v4691, 0.01
      %v4882 = vmul.f32 %v4696, 0.01
      %v4883 = vmul.f32 %v4701, 0.01
      %v4884 = vmul.f32 %v4706, 0.01
      %v4885 = vmul.f32 %v4711, 0.01
      %v4886 = vmul.f32 %v4716, 0.01
      %v4887 = vmul.f32 %v4721, 0.01
      %v4888 = vmul.f32 %v4726, 0.01
      %v4889 = vmul.f32 %v4731, 0.01
      %v4890 = vmul.f32 %v4736, 0.01
      %v4891 = vmul.f32 %v4741, 0.01
      %v4892 = vmul.f32 %v4746, 0.01
      %v4893 = vmul.f32 %v4751, 0.01
      %v4894 = vmul.f32 %v4756, 0.01
      %v4895 = vmul.f32 %v4761, 0.01
      %v4896 = vmul.f32 %v4766, 0.01
      %v4897 = vmul.f32 %v4771, 0.01
      %v4898 = vmul.f32 %v4776, 0.01
      %v4899 = vmul.f32 %v4781, 0.01
      %v4900 = vmul.f32 %v4786, 0.01
      %v4901 = vmul.f32 %v4791, 0.01
      %v4902 = vmul.f32 %v4796, 0.01
      %v4903 = vmul.f32 %v4801, 0.01
      %v4904 = vmul.f32 %v4806, 0.01
      %v4905 = vmul.f32 %v4811, 0.01
      %v4906 = vmul.f32 %v4816, 0.01
      %v4907 = vmul.f32 %v4821, 0.01
      %v4908 = vmul.f32 %v4826, 0.01
      %v4909 = vmul.f32 %v4831, 0.01
      %v4910 = vmul.f32 %v4836, 0.01
      %v4911 = vmul.f32 %v4841, 0.01
      %v4912 = vmul.f32 %v4846, 0.01
      %v4913 = vsel %vm4849, %v4691, %v4881
      %v4914 = vsel %vm4850, %v4696, %v4882
      %v4915 = vsel %vm4851, %v4701, %v4883
      %v4916 = vsel %vm4852, %v4706, %v4884
      %v4917 = vsel %vm4853, %v4711, %v4885
      %v4918 = vsel %vm4854, %v4716, %v4886
      %v4919 = vsel %vm4855, %v4721, %v4887
      %v4920 = vsel %vm4856, %v4726, %v4888
      %v4921 = vsel %vm4857, %v4731, %v4889
      %v4922 = vsel %vm4858, %v4736, %v4890
      %v4923 = vsel %vm4859, %v4741, %v4891
      %v4924 = vsel %vm4860, %v4746, %v4892
      %v4925 = vsel %vm4861, %v4751, %v4893
      %v4926 = vsel %vm4862, %v4756, %v4894
      %v4927 = vsel %vm4863, %v4761, %v4895
      %v4928 = vsel %vm4864, %v4766, %v4896
      %v4929 = vsel %vm4865, %v4771, %v4897
      %v4930 = vsel %vm4866, %v4776, %v4898
      %v4931 = vsel %vm4867, %v4781, %v4899
      %v4932 = vsel %vm4868, %v4786, %v4900
      %v4933 = vsel %vm4869, %v4791, %v4901
      %v4934 = vsel %vm4870, %v4796, %v4902
      %v4935 = vsel %vm4871, %v4801, %v4903
      %v4936 = vsel %vm4872, %v4806, %v4904
      %v4937 = vsel %vm4873, %v4811, %v4905
      %v4938 = vsel %vm4874, %v4816, %v4906
      %v4939 = vsel %vm4875, %v4821, %v4907
      %v4940 = vsel %vm4876, %v4826, %v4908
      %v4941 = vsel %vm4877, %v4831, %v4909
      %v4942 = vsel %vm4878, %v4836, %v4910
      %v4943 = vsel %vm4879, %v4841, %v4911
      %v4944 = vsel %vm4880, %v4846, %v4912
      %v4946 = vsel %vm1265, %v4913, 0
      %v4949 = vsel %vm1265, %v4914, 0
      %v4952 = vsel %vm1265, %v4915, 0
      %v4955 = vsel %vm1265, %v4916, 0
      %v4958 = vsel %vm1265, %v4917, 0
      %v4961 = vsel %vm1265, %v4918, 0
      %v4964 = vsel %vm1265, %v4919, 0
      %v4967 = vsel %vm1265, %v4920, 0
      %v4970 = vsel %vm1265, %v4921, 0
      %v4973 = vsel %vm1265, %v4922, 0
      %v4976 = vsel %vm1265, %v4923, 0
      %v4979 = vsel %vm1265, %v4924, 0
      %v4982 = vsel %vm1265, %v4925, 0
      %v4985 = vsel %vm1265, %v4926, 0
      %v4988 = vsel %vm1265, %v4927, 0
      %v4991 = vsel %vm1265, %v4928, 0
      %v4994 = vsel %vm1265, %v4929, 0
      %v4997 = vsel %vm1265, %v4930, 0
      %v5000 = vsel %vm1265, %v4931, 0
      %v5003 = vsel %vm1265, %v4932, 0
      %v5006 = vsel %vm1265, %v4933, 0
      %v5009 = vsel %vm1265, %v4934, 0
      %v5012 = vsel %vm1265, %v4935, 0
      %v5015 = vsel %vm1265, %v4936, 0
      %v5018 = vsel %vm1265, %v4937, 0
      %v5021 = vsel %vm1265, %v4938, 0
      %v5024 = vsel %vm1265, %v4939, 0
      %v5027 = vsel %vm1265, %v4940, 0
      %v5030 = vsel %vm1265, %v4941, 0
      %v5033 = vsel %vm1265, %v4942, 0
      %v5036 = vsel %vm1265, %v4943, 0
      %v5039 = vsel %vm1265, %v4944, 0
      %v5042 = vsel %vm1362, %v4077, 0
      %5044 = vmatprep.subr.mxu0 0.0
      %5045 = vmatpush1.msra.mxu0 0.0
      %5046 = vmatprep.subr.mxu0 0.0
      %5047 = vmatpush1.msra.mxu0 0.0
      %5048 = vmatprep.subr.mxu0 0.0
      %5049 = vmatpush1.msra.mxu0 %v5042
      %5050 = vmatprep.subr.mxu0 0.0
      %5051 = vmatpush1.msra.mxu0 %v4076
      %5052 = vmatprep.subr.mxu0 0.0
      %5053 = vmatpush1.msra.mxu0 %v4075
      %5054 = vmatprep.subr.mxu0 0.0
      %5055 = vmatpush1.msra.mxu0 %v4074
      %5056 = vmatprep.subr.mxu0 0.0
      %5057 = vmatpush1.msra.mxu0 %v4073
      %5058 = vmatprep.subr.mxu0 0.0
      %5059 = vmatpush1.msra.mxu0 %v4072
      %5060 = vmatprep.subr.mxu0 0.0
      %5061 = vmatpush1.msra.mxu0 %v4071
      %5062 = vmatprep.subr.mxu0 0.0
      %5063 = vmatpush1.msra.mxu0 %v4070
      %5064 = vmatprep.subr.mxu0 0.0
      %5065 = vmatpush1.msra.mxu0 %v4069
      %5066 = vmatprep.subr.mxu0 0.0
      %5067 = vmatpush1.msra.mxu0 %v4068
      %5068 = vmatprep.subr.mxu0 0.0
      %5069 = vmatpush1.msra.mxu0 %v4067
      %5070 = vmatprep.subr.mxu0 0.0
      %5071 = vmatpush1.msra.mxu0 %v4066
      %5072 = vmatprep.subr.mxu0 0.0
      %5073 = vmatpush1.msra.mxu0 %v4065
      %5074 = vmatprep.subr.mxu0 0.0
      %5075 = vmatpush1.msra.mxu0 %v4064
      %5076 = vmatprep.subr.mxu0 0.0
      %5077 = vmatpush2.msra.mxu0 0.0
      %5078 = vmatprep.subr.mxu0 0.0
      %5079 = vmatpush2.msra.mxu0 0.0
      %5080 = vmatprep.subr.mxu0 0.0
      %5081 = vmatpush2.msra.mxu0 0.0
      %5082 = vmatprep.subr.mxu0 0.0
      %5083 = vmatpush2.msra.mxu0 0.0
      %5084 = vmatprep.subr.mxu0 0.0
      %5085 = vmatpush2.msra.mxu0 0.0
      %5086 = vmatprep.subr.mxu0 0.0
      %5087 = vmatpush2.msra.mxu0 0.0
      %5088 = vmatprep.subr.mxu0 0.0
      %5089 = vmatpush2.msra.mxu0 0.0
      %5090 = vmatprep.subr.mxu0 0.0
      %5091 = vmatpush2.msra.mxu0 0.0
      %5092 = vmatprep.subr.mxu0 0.0
      %5093 = vmatpush2.msra.mxu0 0.0
      %5094 = vmatprep.subr.mxu0 0.0
      %5095 = vmatpush2.msra.mxu0 0.0
      %5096 = vmatprep.subr.mxu0 0.0
      %5097 = vmatpush2.msra.mxu0 0.0
      %5098 = vmatprep.subr.mxu0 0.0
      %5099 = vmatpush2.msra.mxu0 0.0
      %5100 = vmatprep.subr.mxu0 0.0
      %5101 = vmatpush2.msra.mxu0 0.0
      %5102 = vmatprep.subr.mxu0 0.0
      %5103 = vmatpush2.msra.mxu0 0.0
      %5104 = vmatprep.subr.mxu0 0.0
      %5105 = vmatpush2.msra.mxu0 0.0
      %5106 = vmatprep.subr.mxu0 0.0
      %5107 = vmatpush2.msra.mxu0 0.0
      %5108 = vmatprep.mubr.f32.mxu0 0.0
      %5109 = vmatmul.mubr.f32.gmra.mxu0 %v4946
      %v5110 = vpop.f32.mrf.mxu0
      %v5111 = vadd.f32 0.0, %v5110
      %v5112 = vpop.f32.mrf.mxu0
      %5113 = vmatprep.mubr.f32.mxu0 0.0
      %5114 = vmatmul.mubr.f32.gmra.mxu0 %v4949
      %v5115 = vpop.f32.mrf.mxu0
      %v5116 = vadd.f32 0.0, %v5115
      %v5117 = vpop.f32.mrf.mxu0
      %5118 = vmatprep.mubr.f32.mxu0 0.0
      %5119 = vmatmul.mubr.f32.gmra.mxu0 %v4952
      %v5120 = vpop.f32.mrf.mxu0
      %v5121 = vadd.f32 0.0, %v5120
      %v5122 = vpop.f32.mrf.mxu0
      %5123 = vmatprep.mubr.f32.mxu0 0.0
      %5124 = vmatmul.mubr.f32.gmra.mxu0 %v4955
      %v5125 = vpop.f32.mrf.mxu0
      %v5126 = vadd.f32 0.0, %v5125
      %v5127 = vpop.f32.mrf.mxu0
      %5128 = vmatprep.mubr.f32.mxu0 0.0
      %5129 = vmatmul.mubr.f32.gmra.mxu0 %v4958
      %v5130 = vpop.f32.mrf.mxu0
      %v5131 = vadd.f32 0.0, %v5130
      %v5132 = vpop.f32.mrf.mxu0
      %5133 = vmatprep.mubr.f32.mxu0 0.0
      %5134 = vmatmul.mubr.f32.gmra.mxu0 %v4961
      %v5135 = vpop.f32.mrf.mxu0
      %v5136 = vadd.f32 0.0, %v5135
      %v5137 = vpop.f32.mrf.mxu0
      %5138 = vmatprep.mubr.f32.mxu0 0.0
      %5139 = vmatmul.mubr.f32.gmra.mxu0 %v4964
      %v5140 = vpop.f32.mrf.mxu0
      %v5141 = vadd.f32 0.0, %v5140
      %v5142 = vpop.f32.mrf.mxu0
      %5143 = vmatprep.mubr.f32.mxu0 0.0
      %5144 = vmatmul.mubr.f32.gmra.mxu0 %v4967
      %v5145 = vpop.f32.mrf.mxu0
      %v5146 = vadd.f32 0.0, %v5145
      %v5147 = vpop.f32.mrf.mxu0
      %5148 = vmatprep.mubr.f32.mxu0 0.0
      %5149 = vmatmul.mubr.f32.gmra.mxu0 %v4970
      %v5150 = vpop.f32.mrf.mxu0
      %v5151 = vadd.f32 0.0, %v5150
      %v5152 = vpop.f32.mrf.mxu0
      %5153 = vmatprep.mubr.f32.mxu0 0.0
      %5154 = vmatmul.mubr.f32.gmra.mxu0 %v4973
      %v5155 = vpop.f32.mrf.mxu0
      %v5156 = vadd.f32 0.0, %v5155
      %v5157 = vpop.f32.mrf.mxu0
      %5158 = vmatprep.mubr.f32.mxu0 0.0
      %5159 = vmatmul.mubr.f32.gmra.mxu0 %v4976
      %v5160 = vpop.f32.mrf.mxu0
      %v5161 = vadd.f32 0.0, %v5160
      %v5162 = vpop.f32.mrf.mxu0
      %5163 = vmatprep.mubr.f32.mxu0 0.0
      %5164 = vmatmul.mubr.f32.gmra.mxu0 %v4979
      %v5165 = vpop.f32.mrf.mxu0
      %v5166 = vadd.f32 0.0, %v5165
      %v5167 = vpop.f32.mrf.mxu0
      %5168 = vmatprep.mubr.f32.mxu0 0.0
      %5169 = vmatmul.mubr.f32.gmra.mxu0 %v4982
      %v5170 = vpop.f32.mrf.mxu0
      %v5171 = vadd.f32 0.0, %v5170
      %v5172 = vpop.f32.mrf.mxu0
      %5173 = vmatprep.mubr.f32.mxu0 0.0
      %5174 = vmatmul.mubr.f32.gmra.mxu0 %v4985
      %v5175 = vpop.f32.mrf.mxu0
      %v5176 = vadd.f32 0.0, %v5175
      %v5177 = vpop.f32.mrf.mxu0
      %5178 = vmatprep.mubr.f32.mxu0 0.0
      %5179 = vmatmul.mubr.f32.gmra.mxu0 %v4988
      %v5180 = vpop.f32.mrf.mxu0
      %v5181 = vadd.f32 0.0, %v5180
      %v5182 = vpop.f32.mrf.mxu0
      %5183 = vmatprep.mubr.f32.mxu0 0.0
      %5184 = vmatmul.mubr.f32.gmra.mxu0 %v4991
      %v5185 = vpop.f32.mrf.mxu0
      %v5186 = vadd.f32 0.0, %v5185
      %v5187 = vpop.f32.mrf.mxu0
      %5188 = vmatprep.mubr.f32.mxu0 0.0
      %5189 = vmatmul.mubr.f32.gmra.mxu0 %v4994
      %v5190 = vpop.f32.mrf.mxu0
      %v5191 = vadd.f32 0.0, %v5190
      %v5192 = vpop.f32.mrf.mxu0
      %5193 = vmatprep.mubr.f32.mxu0 0.0
      %5194 = vmatmul.mubr.f32.gmra.mxu0 %v4997
      %v5195 = vpop.f32.mrf.mxu0
      %v5196 = vadd.f32 0.0, %v5195
      %v5197 = vpop.f32.mrf.mxu0
      %5198 = vmatprep.mubr.f32.mxu0 0.0
      %5199 = vmatmul.mubr.f32.gmra.mxu0 %v5000
      %v5200 = vpop.f32.mrf.mxu0
      %v5201 = vadd.f32 0.0, %v5200
      %v5202 = vpop.f32.mrf.mxu0
      %5203 = vmatprep.mubr.f32.mxu0 0.0
      %5204 = vmatmul.mubr.f32.gmra.mxu0 %v5003
      %v5205 = vpop.f32.mrf.mxu0
      %v5206 = vadd.f32 0.0, %v5205
      %v5207 = vpop.f32.mrf.mxu0
      %5208 = vmatprep.mubr.f32.mxu0 0.0
      %5209 = vmatmul.mubr.f32.gmra.mxu0 %v5006
      %v5210 = vpop.f32.mrf.mxu0
      %v5211 = vadd.f32 0.0, %v5210
      %v5212 = vpop.f32.mrf.mxu0
      %5213 = vmatprep.mubr.f32.mxu0 0.0
      %5214 = vmatmul.mubr.f32.gmra.mxu0 %v5009
      %v5215 = vpop.f32.mrf.mxu0
      %v5216 = vadd.f32 0.0, %v5215
      %v5217 = vpop.f32.mrf.mxu0
      %5218 = vmatprep.mubr.f32.mxu0 0.0
      %5219 = vmatmul.mubr.f32.gmra.mxu0 %v5012
      %v5220 = vpop.f32.mrf.mxu0
      %v5221 = vadd.f32 0.0, %v5220
      %v5222 = vpop.f32.mrf.mxu0
      %5223 = vmatprep.mubr.f32.mxu0 0.0
      %5224 = vmatmul.mubr.f32.gmra.mxu0 %v5015
      %v5225 = vpop.f32.mrf.mxu0
      %v5226 = vadd.f32 0.0, %v5225
      %v5227 = vpop.f32.mrf.mxu0
      %5228 = vmatprep.mubr.f32.mxu0 0.0
      %5229 = vmatmul.mubr.f32.gmra.mxu0 %v5018
      %v5230 = vpop.f32.mrf.mxu0
      %v5231 = vadd.f32 0.0, %v5230
      %v5232 = vpop.f32.mrf.mxu0
      %5233 = vmatprep.mubr.f32.mxu0 0.0
      %5234 = vmatmul.mubr.f32.gmra.mxu0 %v5021
      %v5235 = vpop.f32.mrf.mxu0
      %v5236 = vadd.f32 0.0, %v5235
      %v5237 = vpop.f32.mrf.mxu0
      %5238 = vmatprep.mubr.f32.mxu0 0.0
      %5239 = vmatmul.mubr.f32.gmra.mxu0 %v5024
      %v5240 = vpop.f32.mrf.mxu0
      %v5241 = vadd.f32 0.0, %v5240
      %v5242 = vpop.f32.mrf.mxu0
      %5243 = vmatprep.mubr.f32.mxu0 0.0
      %5244 = vmatmul.mubr.f32.gmra.mxu0 %v5027
      %v5245 = vpop.f32.mrf.mxu0
      %v5246 = vadd.f32 0.0, %v5245
      %v5247 = vpop.f32.mrf.mxu0
      %5248 = vmatprep.mubr.f32.mxu0 0.0
      %5249 = vmatmul.mubr.f32.gmra.mxu0 %v5030
      %v5250 = vpop.f32.mrf.mxu0
      %v5251 = vadd.f32 0.0, %v5250
      %v5252 = vpop.f32.mrf.mxu0
      %5253 = vmatprep.mubr.f32.mxu0 0.0
      %5254 = vmatmul.mubr.f32.gmra.mxu0 %v5033
      %v5255 = vpop.f32.mrf.mxu0
      %v5256 = vadd.f32 0.0, %v5255
      %v5257 = vpop.f32.mrf.mxu0
      %5258 = vmatprep.mubr.f32.mxu0 0.0
      %5259 = vmatmul.mubr.f32.gmra.mxu0 %v5036
      %v5260 = vpop.f32.mrf.mxu0
      %v5261 = vadd.f32 0.0, %v5260
      %v5262 = vpop.f32.mrf.mxu0
      %5263 = vmatprep.mubr.f32.mxu0 0.0
      %5264 = vmatmul.mubr.f32.gmra.mxu0 %v5039
      %v5265 = vpop.f32.mrf.mxu0
      %v5266 = vadd.f32 0.0, %v5265
      %v5267 = vpop.f32.mrf.mxu0
      %5268 = vdwg.mxu0
      %v5269 = vadd.f32 %v4031, %v5111
      %v5270 = vadd.f32 %v4032, %v5116
      %v5271 = vadd.f32 %v4033, %v5121
      %v5272 = vadd.f32 %v4034, %v5126
      %v5273 = vadd.f32 %v4035, %v5131
      %v5274 = vadd.f32 %v4036, %v5136
      %v5275 = vadd.f32 %v4037, %v5141
      %v5276 = vadd.f32 %v4038, %v5146
      %v5277 = vadd.f32 %v4039, %v5151
      %v5278 = vadd.f32 %v4040, %v5156
      %v5279 = vadd.f32 %v4041, %v5161
      %v5280 = vadd.f32 %v4042, %v5166
      %v5281 = vadd.f32 %v4043, %v5171
      %v5282 = vadd.f32 %v4044, %v5176
      %v5283 = vadd.f32 %v4045, %v5181
      %v5284 = vadd.f32 %v4046, %v5186
      %v5285 = vadd.f32 %v4047, %v5191
      %v5286 = vadd.f32 %v4048, %v5196
      %v5287 = vadd.f32 %v4049, %v5201
      %v5288 = vadd.f32 %v4050, %v5206
      %v5289 = vadd.f32 %v4051, %v5211
      %v5290 = vadd.f32 %v4052, %v5216
      %v5291 = vadd.f32 %v4053, %v5221
      %v5292 = vadd.f32 %v4054, %v5226
      %v5293 = vadd.f32 %v4055, %v5231
      %v5294 = vadd.f32 %v4056, %v5236
      %v5295 = vadd.f32 %v4057, %v5241
      %v5296 = vadd.f32 %v4058, %v5246
      %v5297 = vadd.f32 %v4059, %v5251
      %v5298 = vadd.f32 %v4060, %v5256
      %v5299 = vadd.f32 %v4061, %v5261
      %v5300 = vadd.f32 %v4062, %v5266
      %s5301 = scalar_lea.vmem %s1, 64
      %v5302 = vld [vmem:[%s5301] sm:$0xff]
      %v5303 = vld [vmem:[%s5301 + $0x8] sm:$0x7f]
      %s5304 = scalar_lea.vmem %s2, 4
      %v5305 = vld [vmem:[%s5304] sm:$0x1]
      %v5307 = vlaneseq
      %v5308 = vshrl.u32 %v5307, 7
      %v5309 = vsub.s32 0, %v5308
      %v5310 = vrot.slane %v5305, %v5309
      %v5313 = vsel %vm255, %v5269, 0
      %v5316 = vsel %vm255, %v5270, 0
      %v5319 = vsel %vm255, %v5271, 0
      %v5322 = vsel %vm255, %v5272, 0
      %v5325 = vsel %vm255, %v5273, 0
      %v5328 = vsel %vm255, %v5274, 0
      %v5331 = vsel %vm255, %v5275, 0
      %v5334 = vsel %vm255, %v5276, 0
      %v5337 = vsel %vm255, %v5277, 0
      %v5340 = vsel %vm255, %v5278, 0
      %v5343 = vsel %vm255, %v5279, 0
      %v5346 = vsel %vm255, %v5280, 0
      %v5349 = vsel %vm255, %v5281, 0
      %v5352 = vsel %vm255, %v5282, 0
      %v5355 = vsel %vm255, %v5283, 0
      %v5358 = vsel %vm255, %v5284, 0
      %v5361 = vsel %vm255, %v5285, 0
      %v5364 = vsel %vm255, %v5286, 0
      %v5367 = vsel %vm255, %v5287, 0
      %v5370 = vsel %vm255, %v5288, 0
      %v5373 = vsel %vm255, %v5289, 0
      %v5376 = vsel %vm255, %v5290, 0
      %v5379 = vsel %vm255, %v5291, 0
      %v5382 = vsel %vm255, %v5292, 0
      %v5385 = vsel %vm255, %v5293, 0
      %v5388 = vsel %vm255, %v5294, 0
      %v5391 = vsel %vm255, %v5295, 0
      %v5394 = vsel %vm255, %v5296, 0
      %v5397 = vsel %vm255, %v5297, 0
      %v5400 = vsel %vm255, %v5298, 0
      %v5403 = vsel %vm255, %v5299, 0
      %v5406 = vsel %vm255, %v5300, 0
      %v5409 = vsel %vm504, %v5303, 0
      %5411 = vmatprep.subr.mxu0 0.0
      %5412 = vmatpush1.msra.mxu0 0.0
      %5413 = vmatprep.subr.mxu0 0.0
      %5414 = vmatpush1.msra.mxu0 0.0
      %5415 = vmatprep.subr.mxu0 0.0
      %5416 = vmatpush1.msra.mxu0 0.0
      %5417 = vmatprep.subr.mxu0 0.0
      %5418 = vmatpush1.msra.mxu0 0.0
      %5419 = vmatprep.subr.mxu0 0.0
      %5420 = vmatpush1.msra.mxu0 0.0
      %5421 = vmatprep.subr.mxu0 0.0
      %5422 = vmatpush1.msra.mxu0 0.0
      %5423 = vmatprep.subr.mxu0 0.0
      %5424 = vmatpush1.msra.mxu0 0.0
      %5425 = vmatprep.subr.mxu0 0.0
      %5426 = vmatpush1.msra.mxu0 0.0
      %5427 = vmatprep.subr.mxu0 0.0
      %5428 = vmatpush1.msra.mxu0 0.0
      %5429 = vmatprep.subr.mxu0 0.0
      %5430 = vmatpush1.msra.mxu0 0.0
      %5431 = vmatprep.subr.mxu0 0.0
      %5432 = vmatpush1.msra.mxu0 0.0
      %5433 = vmatprep.subr.mxu0 0.0
      %5434 = vmatpush1.msra.mxu0 0.0
      %5435 = vmatprep.subr.mxu0 0.0
      %5436 = vmatpush1.msra.mxu0 0.0
      %5437 = vmatprep.subr.mxu0 0.0
      %5438 = vmatpush1.msra.mxu0 0.0
      %5439 = vmatprep.subr.mxu0 0.0
      %5440 = vmatpush1.msra.mxu0 %v5409
      %5441 = vmatprep.subr.mxu0 0.0
      %5442 = vmatpush1.msra.mxu0 %v5302
      %5443 = vmatprep.subr.mxu0 0.0
      %5444 = vmatpush2.msra.mxu0 0.0
      %5445 = vmatprep.subr.mxu0 0.0
      %5446 = vmatpush2.msra.mxu0 0.0
      %5447 = vmatprep.subr.mxu0 0.0
      %5448 = vmatpush2.msra.mxu0 0.0
      %5449 = vmatprep.subr.mxu0 0.0
      %5450 = vmatpush2.msra.mxu0 0.0
      %5451 = vmatprep.subr.mxu0 0.0
      %5452 = vmatpush2.msra.mxu0 0.0
      %5453 = vmatprep.subr.mxu0 0.0
      %5454 = vmatpush2.msra.mxu0 0.0
      %5455 = vmatprep.subr.mxu0 0.0
      %5456 = vmatpush2.msra.mxu0 0.0
      %5457 = vmatprep.subr.mxu0 0.0
      %5458 = vmatpush2.msra.mxu0 0.0
      %5459 = vmatprep.subr.mxu0 0.0
      %5460 = vmatpush2.msra.mxu0 0.0
      %5461 = vmatprep.subr.mxu0 0.0
      %5462 = vmatpush2.msra.mxu0 0.0
      %5463 = vmatprep.subr.mxu0 0.0
      %5464 = vmatpush2.msra.mxu0 0.0
      %5465 = vmatprep.subr.mxu0 0.0
      %5466 = vmatpush2.msra.mxu0 0.0
      %5467 = vmatprep.subr.mxu0 0.0
      %5468 = vmatpush2.msra.mxu0 0.0
      %5469 = vmatprep.subr.mxu0 0.0
      %5470 = vmatpush2.msra.mxu0 0.0
      %5471 = vmatprep.subr.mxu0 0.0
      %5472 = vmatpush2.msra.mxu0 0.0
      %5473 = vmatprep.subr.mxu0 0.0
      %5474 = vmatpush2.msra.mxu0 0.0
      %5475 = vmatprep.mubr.f32.mxu0 0.0
      %5476 = vmatmul.mubr.f32.gmra.mxu0 %v5313
      %v5477 = vpop.f32.mrf.mxu0
      %v5478 = vadd.f32 %v5310, %v5477
      %v5479 = vpop.f32.mrf.mxu0
      %5480 = vmatprep.mubr.f32.mxu0 0.0
      %5481 = vmatmul.mubr.f32.gmra.mxu0 %v5316
      %v5482 = vpop.f32.mrf.mxu0
      %v5483 = vadd.f32 %v5310, %v5482
      %v5484 = vpop.f32.mrf.mxu0
      %5485 = vmatprep.mubr.f32.mxu0 0.0
      %5486 = vmatmul.mubr.f32.gmra.mxu0 %v5319
      %v5487 = vpop.f32.mrf.mxu0
      %v5488 = vadd.f32 %v5310, %v5487
      %v5489 = vpop.f32.mrf.mxu0
      %5490 = vmatprep.mubr.f32.mxu0 0.0
      %5491 = vmatmul.mubr.f32.gmra.mxu0 %v5322
      %v5492 = vpop.f32.mrf.mxu0
      %v5493 = vadd.f32 %v5310, %v5492
      %v5494 = vpop.f32.mrf.mxu0
      %5495 = vmatprep.mubr.f32.mxu0 0.0
      %5496 = vmatmul.mubr.f32.gmra.mxu0 %v5325
      %v5497 = vpop.f32.mrf.mxu0
      %v5498 = vadd.f32 %v5310, %v5497
      %v5499 = vpop.f32.mrf.mxu0
      %5500 = vmatprep.mubr.f32.mxu0 0.0
      %5501 = vmatmul.mubr.f32.gmra.mxu0 %v5328
      %v5502 = vpop.f32.mrf.mxu0
      %v5503 = vadd.f32 %v5310, %v5502
      %v5504 = vpop.f32.mrf.mxu0
      %5505 = vmatprep.mubr.f32.mxu0 0.0
      %5506 = vmatmul.mubr.f32.gmra.mxu0 %v5331
      %v5507 = vpop.f32.mrf.mxu0
      %v5508 = vadd.f32 %v5310, %v5507
      %v5509 = vpop.f32.mrf.mxu0
      %5510 = vmatprep.mubr.f32.mxu0 0.0
      %5511 = vmatmul.mubr.f32.gmra.mxu0 %v5334
      %v5512 = vpop.f32.mrf.mxu0
      %v5513 = vadd.f32 %v5310, %v5512
      %v5514 = vpop.f32.mrf.mxu0
      %5515 = vmatprep.mubr.f32.mxu0 0.0
      %5516 = vmatmul.mubr.f32.gmra.mxu0 %v5337
      %v5517 = vpop.f32.mrf.mxu0
      %v5518 = vadd.f32 %v5310, %v5517
      %v5519 = vpop.f32.mrf.mxu0
      %5520 = vmatprep.mubr.f32.mxu0 0.0
      %5521 = vmatmul.mubr.f32.gmra.mxu0 %v5340
      %v5522 = vpop.f32.mrf.mxu0
      %v5523 = vadd.f32 %v5310, %v5522
      %v5524 = vpop.f32.mrf.mxu0
      %5525 = vmatprep.mubr.f32.mxu0 0.0
      %5526 = vmatmul.mubr.f32.gmra.mxu0 %v5343
      %v5527 = vpop.f32.mrf.mxu0
      %v5528 = vadd.f32 %v5310, %v5527
      %v5529 = vpop.f32.mrf.mxu0
      %5530 = vmatprep.mubr.f32.mxu0 0.0
      %5531 = vmatmul.mubr.f32.gmra.mxu0 %v5346
      %v5532 = vpop.f32.mrf.mxu0
      %v5533 = vadd.f32 %v5310, %v5532
      %v5534 = vpop.f32.mrf.mxu0
      %5535 = vmatprep.mubr.f32.mxu0 0.0
      %5536 = vmatmul.mubr.f32.gmra.mxu0 %v5349
      %v5537 = vpop.f32.mrf.mxu0
      %v5538 = vadd.f32 %v5310, %v5537
      %v5539 = vpop.f32.mrf.mxu0
      %5540 = vmatprep.mubr.f32.mxu0 0.0
      %5541 = vmatmul.mubr.f32.gmra.mxu0 %v5352
      %v5542 = vpop.f32.mrf.mxu0
      %v5543 = vadd.f32 %v5310, %v5542
      %v5544 = vpop.f32.mrf.mxu0
      %5545 = vmatprep.mubr.f32.mxu0 0.0
      %5546 = vmatmul.mubr.f32.gmra.mxu0 %v5355
      %v5547 = vpop.f32.mrf.mxu0
      %v5548 = vadd.f32 %v5310, %v5547
      %v5549 = vpop.f32.mrf.mxu0
      %5550 = vmatprep.mubr.f32.mxu0 0.0
      %5551 = vmatmul.mubr.f32.gmra.mxu0 %v5358
      %v5552 = vpop.f32.mrf.mxu0
      %v5553 = vadd.f32 %v5310, %v5552
      %v5554 = vpop.f32.mrf.mxu0
      %5555 = vmatprep.mubr.f32.mxu0 0.0
      %5556 = vmatmul.mubr.f32.gmra.mxu0 %v5361
      %v5557 = vpop.f32.mrf.mxu0
      %v5558 = vadd.f32 %v5310, %v5557
      %v5559 = vpop.f32.mrf.mxu0
      %5560 = vmatprep.mubr.f32.mxu0 0.0
      %5561 = vmatmul.mubr.f32.gmra.mxu0 %v5364
      %v5562 = vpop.f32.mrf.mxu0
      %v5563 = vadd.f32 %v5310, %v5562
      %v5564 = vpop.f32.mrf.mxu0
      %5565 = vmatprep.mubr.f32.mxu0 0.0
      %5566 = vmatmul.mubr.f32.gmra.mxu0 %v5367
      %v5567 = vpop.f32.mrf.mxu0
      %v5568 = vadd.f32 %v5310, %v5567
      %v5569 = vpop.f32.mrf.mxu0
      %5570 = vmatprep.mubr.f32.mxu0 0.0
      %5571 = vmatmul.mubr.f32.gmra.mxu0 %v5370
      %v5572 = vpop.f32.mrf.mxu0
      %v5573 = vadd.f32 %v5310, %v5572
      %v5574 = vpop.f32.mrf.mxu0
      %5575 = vmatprep.mubr.f32.mxu0 0.0
      %5576 = vmatmul.mubr.f32.gmra.mxu0 %v5373
      %v5577 = vpop.f32.mrf.mxu0
      %v5578 = vadd.f32 %v5310, %v5577
      %v5579 = vpop.f32.mrf.mxu0
      %5580 = vmatprep.mubr.f32.mxu0 0.0
      %5581 = vmatmul.mubr.f32.gmra.mxu0 %v5376
      %v5582 = vpop.f32.mrf.mxu0
      %v5583 = vadd.f32 %v5310, %v5582
      %v5584 = vpop.f32.mrf.mxu0
      %5585 = vmatprep.mubr.f32.mxu0 0.0
      %5586 = vmatmul.mubr.f32.gmra.mxu0 %v5379
      %v5587 = vpop.f32.mrf.mxu0
      %v5588 = vadd.f32 %v5310, %v5587
      %v5589 = vpop.f32.mrf.mxu0
      %5590 = vmatprep.mubr.f32.mxu0 0.0
      %5591 = vmatmul.mubr.f32.gmra.mxu0 %v5382
      %v5592 = vpop.f32.mrf.mxu0
      %v5593 = vadd.f32 %v5310, %v5592
      %v5594 = vpop.f32.mrf.mxu0
      %5595 = vmatprep.mubr.f32.mxu0 0.0
      %5596 = vmatmul.mubr.f32.gmra.mxu0 %v5385
      %v5597 = vpop.f32.mrf.mxu0
      %v5598 = vadd.f32 %v5310, %v5597
      %v5599 = vpop.f32.mrf.mxu0
      %5600 = vmatprep.mubr.f32.mxu0 0.0
      %5601 = vmatmul.mubr.f32.gmra.mxu0 %v5388
      %v5602 = vpop.f32.mrf.mxu0
      %v5603 = vadd.f32 %v5310, %v5602
      %v5604 = vpop.f32.mrf.mxu0
      %5605 = vmatprep.mubr.f32.mxu0 0.0
      %5606 = vmatmul.mubr.f32.gmra.mxu0 %v5391
      %v5607 = vpop.f32.mrf.mxu0
      %v5608 = vadd.f32 %v5310, %v5607
      %v5609 = vpop.f32.mrf.mxu0
      %5610 = vmatprep.mubr.f32.mxu0 0.0
      %5611 = vmatmul.mubr.f32.gmra.mxu0 %v5394
      %v5612 = vpop.f32.mrf.mxu0
      %v5613 = vadd.f32 %v5310, %v5612
      %v5614 = vpop.f32.mrf.mxu0
      %5615 = vmatprep.mubr.f32.mxu0 0.0
      %5616 = vmatmul.mubr.f32.gmra.mxu0 %v5397
      %v5617 = vpop.f32.mrf.mxu0
      %v5618 = vadd.f32 %v5310, %v5617
      %v5619 = vpop.f32.mrf.mxu0
      %5620 = vmatprep.mubr.f32.mxu0 0.0
      %5621 = vmatmul.mubr.f32.gmra.mxu0 %v5400
      %v5622 = vpop.f32.mrf.mxu0
      %v5623 = vadd.f32 %v5310, %v5622
      %v5624 = vpop.f32.mrf.mxu0
      %5625 = vmatprep.mubr.f32.mxu0 0.0
      %5626 = vmatmul.mubr.f32.gmra.mxu0 %v5403
      %v5627 = vpop.f32.mrf.mxu0
      %v5628 = vadd.f32 %v5310, %v5627
      %v5629 = vpop.f32.mrf.mxu0
      %5630 = vmatprep.mubr.f32.mxu0 0.0
      %5631 = vmatmul.mubr.f32.gmra.mxu0 %v5406
      %v5632 = vpop.f32.mrf.mxu0
      %v5633 = vadd.f32 %v5310, %v5632
      %v5634 = vpop.f32.mrf.mxu0
      %5635 = vdwg.mxu0
      %vm5636 = vcmp.ge.f32.partialorder %v5478, 0.0
      %vm5637 = vcmp.ge.f32.partialorder %v5483, 0.0
      %vm5638 = vcmp.ge.f32.partialorder %v5488, 0.0
      %vm5639 = vcmp.ge.f32.partialorder %v5493, 0.0
      %vm5640 = vcmp.ge.f32.partialorder %v5498, 0.0
      %vm5641 = vcmp.ge.f32.partialorder %v5503, 0.0
      %vm5642 = vcmp.ge.f32.partialorder %v5508, 0.0
      %vm5643 = vcmp.ge.f32.partialorder %v5513, 0.0
      %vm5644 = vcmp.ge.f32.partialorder %v5518, 0.0
      %vm5645 = vcmp.ge.f32.partialorder %v5523, 0.0
      %vm5646 = vcmp.ge.f32.partialorder %v5528, 0.0
      %vm5647 = vcmp.ge.f32.partialorder %v5533, 0.0
      %vm5648 = vcmp.ge.f32.partialorder %v5538, 0.0
      %vm5649 = vcmp.ge.f32.partialorder %v5543, 0.0
      %vm5650 = vcmp.ge.f32.partialorder %v5548, 0.0
      %vm5651 = vcmp.ge.f32.partialorder %v5553, 0.0
      %vm5652 = vcmp.ge.f32.partialorder %v5558, 0.0
      %vm5653 = vcmp.ge.f32.partialorder %v5563, 0.0
      %vm5654 = vcmp.ge.f32.partialorder %v5568, 0.0
      %vm5655 = vcmp.ge.f32.partialorder %v5573, 0.0
      %vm5656 = vcmp.ge.f32.partialorder %v5578, 0.0
      %vm5657 = vcmp.ge.f32.partialorder %v5583, 0.0
      %vm5658 = vcmp.ge.f32.partialorder %v5588, 0.0
      %vm5659 = vcmp.ge.f32.partialorder %v5593, 0.0
      %vm5660 = vcmp.ge.f32.partialorder %v5598, 0.0
      %vm5661 = vcmp.ge.f32.partialorder %v5603, 0.0
      %vm5662 = vcmp.ge.f32.partialorder %v5608, 0.0
      %vm5663 = vcmp.ge.f32.partialorder %v5613, 0.0
      %vm5664 = vcmp.ge.f32.partialorder %v5618, 0.0
      %vm5665 = vcmp.ge.f32.partialorder %v5623, 0.0
      %vm5666 = vcmp.ge.f32.partialorder %v5628, 0.0
      %vm5667 = vcmp.ge.f32.partialorder %v5633, 0.0
      %v5668 = vmul.f32 %v5478, 0.01
      %v5669 = vmul.f32 %v5483, 0.01
      %v5670 = vmul.f32 %v5488, 0.01
      %v5671 = vmul.f32 %v5493, 0.01
      %v5672 = vmul.f32 %v5498, 0.01
      %v5673 = vmul.f32 %v5503, 0.01
      %v5674 = vmul.f32 %v5508, 0.01
      %v5675 = vmul.f32 %v5513, 0.01
      %v5676 = vmul.f32 %v5518, 0.01
      %v5677 = vmul.f32 %v5523, 0.01
      %v5678 = vmul.f32 %v5528, 0.01
      %v5679 = vmul.f32 %v5533, 0.01
      %v5680 = vmul.f32 %v5538, 0.01
      %v5681 = vmul.f32 %v5543, 0.01
      %v5682 = vmul.f32 %v5548, 0.01
      %v5683 = vmul.f32 %v5553, 0.01
      %v5684 = vmul.f32 %v5558, 0.01
      %v5685 = vmul.f32 %v5563, 0.01
      %v5686 = vmul.f32 %v5568, 0.01
      %v5687 = vmul.f32 %v5573, 0.01
      %v5688 = vmul.f32 %v5578, 0.01
      %v5689 = vmul.f32 %v5583, 0.01
      %v5690 = vmul.f32 %v5588, 0.01
      %v5691 = vmul.f32 %v5593, 0.01
      %v5692 = vmul.f32 %v5598, 0.01
      %v5693 = vmul.f32 %v5603, 0.01
      %v5694 = vmul.f32 %v5608, 0.01
      %v5695 = vmul.f32 %v5613, 0.01
      %v5696 = vmul.f32 %v5618, 0.01
      %v5697 = vmul.f32 %v5623, 0.01
      %v5698 = vmul.f32 %v5628, 0.01
      %v5699 = vmul.f32 %v5633, 0.01
      %v5700 = vsel %vm5636, %v5478, %v5668
      %v5701 = vsel %vm5637, %v5483, %v5669
      %v5702 = vsel %vm5638, %v5488, %v5670
      %v5703 = vsel %vm5639, %v5493, %v5671
      %v5704 = vsel %vm5640, %v5498, %v5672
      %v5705 = vsel %vm5641, %v5503, %v5673
      %v5706 = vsel %vm5642, %v5508, %v5674
      %v5707 = vsel %vm5643, %v5513, %v5675
      %v5708 = vsel %vm5644, %v5518, %v5676
      %v5709 = vsel %vm5645, %v5523, %v5677
      %v5710 = vsel %vm5646, %v5528, %v5678
      %v5711 = vsel %vm5647, %v5533, %v5679
      %v5712 = vsel %vm5648, %v5538, %v5680
      %v5713 = vsel %vm5649, %v5543, %v5681
      %v5714 = vsel %vm5650, %v5548, %v5682
      %v5715 = vsel %vm5651, %v5553, %v5683
      %v5716 = vsel %vm5652, %v5558, %v5684
      %v5717 = vsel %vm5653, %v5563, %v5685
      %v5718 = vsel %vm5654, %v5568, %v5686
      %v5719 = vsel %vm5655, %v5573, %v5687
      %v5720 = vsel %vm5656, %v5578, %v5688
      %v5721 = vsel %vm5657, %v5583, %v5689
      %v5722 = vsel %vm5658, %v5588, %v5690
      %v5723 = vsel %vm5659, %v5593, %v5691
      %v5724 = vsel %vm5660, %v5598, %v5692
      %v5725 = vsel %vm5661, %v5603, %v5693
      %v5726 = vsel %vm5662, %v5608, %v5694
      %v5727 = vsel %vm5663, %v5613, %v5695
      %v5728 = vsel %vm5664, %v5618, %v5696
      %v5729 = vsel %vm5665, %v5623, %v5697
      %v5730 = vsel %vm5666, %v5628, %v5698
      %v5731 = vsel %vm5667, %v5633, %v5699
      %s5732 = scalar_lea.vmem %s3, 224
      %v5733 = vld [vmem:[%s5732] sm:$0xff]
      %v5734 = vld [vmem:[%s5732 + $0x8] sm:$0xff]
      %v5735 = vld [vmem:[%s5732 + $0x10] sm:$0xff]
      %v5736 = vld [vmem:[%s5732 + $0x18] sm:$0xff]
      %v5737 = vld [vmem:[%s5732 + $0x20] sm:$0xff]
      %v5738 = vld [vmem:[%s5732 + $0x28] sm:$0xff]
      %v5739 = vld [vmem:[%s5732 + $0x30] sm:$0x3]
      %s5740 = scalar_lea.vmem %s4, 4
      %v5741 = vld [vmem:[%s5740] sm:$0x1]
      %v5743 = vlaneseq
      %v5744 = vshrl.u32 %v5743, 7
      %v5745 = vsub.s32 0, %v5744
      %v5746 = vrot.slane %v5741, %v5745
      %v5749 = vsel %vm843, %v5700, 0
      %v5752 = vsel %vm843, %v5701, 0
      %v5755 = vsel %vm843, %v5702, 0
      %v5758 = vsel %vm843, %v5703, 0
      %v5761 = vsel %vm843, %v5704, 0
      %v5764 = vsel %vm843, %v5705, 0
      %v5767 = vsel %vm843, %v5706, 0
      %v5770 = vsel %vm843, %v5707, 0
      %v5773 = vsel %vm843, %v5708, 0
      %v5776 = vsel %vm843, %v5709, 0
      %v5779 = vsel %vm843, %v5710, 0
      %v5782 = vsel %vm843, %v5711, 0
      %v5785 = vsel %vm843, %v5712, 0
      %v5788 = vsel %vm843, %v5713, 0
      %v5791 = vsel %vm843, %v5714, 0
      %v5794 = vsel %vm843, %v5715, 0
      %v5797 = vsel %vm843, %v5716, 0
      %v5800 = vsel %vm843, %v5717, 0
      %v5803 = vsel %vm843, %v5718, 0
      %v5806 = vsel %vm843, %v5719, 0
      %v5809 = vsel %vm843, %v5720, 0
      %v5812 = vsel %vm843, %v5721, 0
      %v5815 = vsel %vm843, %v5722, 0
      %v5818 = vsel %vm843, %v5723, 0
      %v5821 = vsel %vm843, %v5724, 0
      %v5824 = vsel %vm843, %v5725, 0
      %v5827 = vsel %vm843, %v5726, 0
      %v5830 = vsel %vm843, %v5727, 0
      %v5833 = vsel %vm843, %v5728, 0
      %v5836 = vsel %vm843, %v5729, 0
      %v5839 = vsel %vm843, %v5730, 0
      %v5842 = vsel %vm843, %v5731, 0
      %v5845 = vsel %vm940, %v5739, 0
      %5847 = vmatprep.subr.mxu0 0.0
      %5848 = vmatpush1.msra.mxu0 0.0
      %5849 = vmatprep.subr.mxu0 0.0
      %5850 = vmatpush1.msra.mxu0 0.0
      %5851 = vmatprep.subr.mxu0 0.0
      %5852 = vmatpush1.msra.mxu0 0.0
      %5853 = vmatprep.subr.mxu0 0.0
      %5854 = vmatpush1.msra.mxu0 0.0
      %5855 = vmatprep.subr.mxu0 0.0
      %5856 = vmatpush1.msra.mxu0 0.0
      %5857 = vmatprep.subr.mxu0 0.0
      %5858 = vmatpush1.msra.mxu0 0.0
      %5859 = vmatprep.subr.mxu0 0.0
      %5860 = vmatpush1.msra.mxu0 0.0
      %5861 = vmatprep.subr.mxu0 0.0
      %5862 = vmatpush1.msra.mxu0 0.0
      %5863 = vmatprep.subr.mxu0 0.0
      %5864 = vmatpush1.msra.mxu0 0.0
      %5865 = vmatprep.subr.mxu0 0.0
      %5866 = vmatpush1.msra.mxu0 %v5845
      %5867 = vmatprep.subr.mxu0 0.0
      %5868 = vmatpush1.msra.mxu0 %v5738
      %5869 = vmatprep.subr.mxu0 0.0
      %5870 = vmatpush1.msra.mxu0 %v5737
      %5871 = vmatprep.subr.mxu0 0.0
      %5872 = vmatpush1.msra.mxu0 %v5736
      %5873 = vmatprep.subr.mxu0 0.0
      %5874 = vmatpush1.msra.mxu0 %v5735
      %5875 = vmatprep.subr.mxu0 0.0
      %5876 = vmatpush1.msra.mxu0 %v5734
      %5877 = vmatprep.subr.mxu0 0.0
      %5878 = vmatpush1.msra.mxu0 %v5733
      %5879 = vmatprep.subr.mxu0 0.0
      %5880 = vmatpush2.msra.mxu0 0.0
      %5881 = vmatprep.subr.mxu0 0.0
      %5882 = vmatpush2.msra.mxu0 0.0
      %5883 = vmatprep.subr.mxu0 0.0
      %5884 = vmatpush2.msra.mxu0 0.0
      %5885 = vmatprep.subr.mxu0 0.0
      %5886 = vmatpush2.msra.mxu0 0.0
      %5887 = vmatprep.subr.mxu0 0.0
      %5888 = vmatpush2.msra.mxu0 0.0
      %5889 = vmatprep.subr.mxu0 0.0
      %5890 = vmatpush2.msra.mxu0 0.0
      %5891 = vmatprep.subr.mxu0 0.0
      %5892 = vmatpush2.msra.mxu0 0.0
      %5893 = vmatprep.subr.mxu0 0.0
      %5894 = vmatpush2.msra.mxu0 0.0
      %5895 = vmatprep.subr.mxu0 0.0
      %5896 = vmatpush2.msra.mxu0 0.0
      %5897 = vmatprep.subr.mxu0 0.0
      %5898 = vmatpush2.msra.mxu0 0.0
      %5899 = vmatprep.subr.mxu0 0.0
      %5900 = vmatpush2.msra.mxu0 0.0
      %5901 = vmatprep.subr.mxu0 0.0
      %5902 = vmatpush2.msra.mxu0 0.0
      %5903 = vmatprep.subr.mxu0 0.0
      %5904 = vmatpush2.msra.mxu0 0.0
      %5905 = vmatprep.subr.mxu0 0.0
      %5906 = vmatpush2.msra.mxu0 0.0
      %5907 = vmatprep.subr.mxu0 0.0
      %5908 = vmatpush2.msra.mxu0 0.0
      %5909 = vmatprep.subr.mxu0 0.0
      %5910 = vmatpush2.msra.mxu0 0.0
      %5911 = vmatprep.mubr.f32.mxu0 0.0
      %5912 = vmatmul.mubr.f32.gmra.mxu0 %v5749
      %v5913 = vpop.f32.mrf.mxu0
      %v5914 = vadd.f32 %v5746, %v5913
      %v5915 = vpop.f32.mrf.mxu0
      %5916 = vmatprep.mubr.f32.mxu0 0.0
      %5917 = vmatmul.mubr.f32.gmra.mxu0 %v5752
      %v5918 = vpop.f32.mrf.mxu0
      %v5919 = vadd.f32 %v5746, %v5918
      %v5920 = vpop.f32.mrf.mxu0
      %5921 = vmatprep.mubr.f32.mxu0 0.0
      %5922 = vmatmul.mubr.f32.gmra.mxu0 %v5755
      %v5923 = vpop.f32.mrf.mxu0
      %v5924 = vadd.f32 %v5746, %v5923
      %v5925 = vpop.f32.mrf.mxu0
      %5926 = vmatprep.mubr.f32.mxu0 0.0
      %5927 = vmatmul.mubr.f32.gmra.mxu0 %v5758
      %v5928 = vpop.f32.mrf.mxu0
      %v5929 = vadd.f32 %v5746, %v5928
      %v5930 = vpop.f32.mrf.mxu0
      %5931 = vmatprep.mubr.f32.mxu0 0.0
      %5932 = vmatmul.mubr.f32.gmra.mxu0 %v5761
      %v5933 = vpop.f32.mrf.mxu0
      %v5934 = vadd.f32 %v5746, %v5933
      %v5935 = vpop.f32.mrf.mxu0
      %5936 = vmatprep.mubr.f32.mxu0 0.0
      %5937 = vmatmul.mubr.f32.gmra.mxu0 %v5764
      %v5938 = vpop.f32.mrf.mxu0
      %v5939 = vadd.f32 %v5746, %v5938
      %v5940 = vpop.f32.mrf.mxu0
      %5941 = vmatprep.mubr.f32.mxu0 0.0
      %5942 = vmatmul.mubr.f32.gmra.mxu0 %v5767
      %v5943 = vpop.f32.mrf.mxu0
      %v5944 = vadd.f32 %v5746, %v5943
      %v5945 = vpop.f32.mrf.mxu0
      %5946 = vmatprep.mubr.f32.mxu0 0.0
      %5947 = vmatmul.mubr.f32.gmra.mxu0 %v5770
      %v5948 = vpop.f32.mrf.mxu0
      %v5949 = vadd.f32 %v5746, %v5948
      %v5950 = vpop.f32.mrf.mxu0
      %5951 = vmatprep.mubr.f32.mxu0 0.0
      %5952 = vmatmul.mubr.f32.gmra.mxu0 %v5773
      %v5953 = vpop.f32.mrf.mxu0
      %v5954 = vadd.f32 %v5746, %v5953
      %v5955 = vpop.f32.mrf.mxu0
      %5956 = vmatprep.mubr.f32.mxu0 0.0
      %5957 = vmatmul.mubr.f32.gmra.mxu0 %v5776
      %v5958 = vpop.f32.mrf.mxu0
      %v5959 = vadd.f32 %v5746, %v5958
      %v5960 = vpop.f32.mrf.mxu0
      %5961 = vmatprep.mubr.f32.mxu0 0.0
      %5962 = vmatmul.mubr.f32.gmra.mxu0 %v5779
      %v5963 = vpop.f32.mrf.mxu0
      %v5964 = vadd.f32 %v5746, %v5963
      %v5965 = vpop.f32.mrf.mxu0
      %5966 = vmatprep.mubr.f32.mxu0 0.0
      %5967 = vmatmul.mubr.f32.gmra.mxu0 %v5782
      %v5968 = vpop.f32.mrf.mxu0
      %v5969 = vadd.f32 %v5746, %v5968
      %v5970 = vpop.f32.mrf.mxu0
      %5971 = vmatprep.mubr.f32.mxu0 0.0
      %5972 = vmatmul.mubr.f32.gmra.mxu0 %v5785
      %v5973 = vpop.f32.mrf.mxu0
      %v5974 = vadd.f32 %v5746, %v5973
      %v5975 = vpop.f32.mrf.mxu0
      %5976 = vmatprep.mubr.f32.mxu0 0.0
      %5977 = vmatmul.mubr.f32.gmra.mxu0 %v5788
      %v5978 = vpop.f32.mrf.mxu0
      %v5979 = vadd.f32 %v5746, %v5978
      %v5980 = vpop.f32.mrf.mxu0
      %5981 = vmatprep.mubr.f32.mxu0 0.0
      %5982 = vmatmul.mubr.f32.gmra.mxu0 %v5791
      %v5983 = vpop.f32.mrf.mxu0
      %v5984 = vadd.f32 %v5746, %v5983
      %v5985 = vpop.f32.mrf.mxu0
      %5986 = vmatprep.mubr.f32.mxu0 0.0
      %5987 = vmatmul.mubr.f32.gmra.mxu0 %v5794
      %v5988 = vpop.f32.mrf.mxu0
      %v5989 = vadd.f32 %v5746, %v5988
      %v5990 = vpop.f32.mrf.mxu0
      %5991 = vmatprep.mubr.f32.mxu0 0.0
      %5992 = vmatmul.mubr.f32.gmra.mxu0 %v5797
      %v5993 = vpop.f32.mrf.mxu0
      %v5994 = vadd.f32 %v5746, %v5993
      %v5995 = vpop.f32.mrf.mxu0
      %5996 = vmatprep.mubr.f32.mxu0 0.0
      %5997 = vmatmul.mubr.f32.gmra.mxu0 %v5800
      %v5998 = vpop.f32.mrf.mxu0
      %v5999 = vadd.f32 %v5746, %v5998
      %v6000 = vpop.f32.mrf.mxu0
      %6001 = vmatprep.mubr.f32.mxu0 0.0
      %6002 = vmatmul.mubr.f32.gmra.mxu0 %v5803
      %v6003 = vpop.f32.mrf.mxu0
      %v6004 = vadd.f32 %v5746, %v6003
      %v6005 = vpop.f32.mrf.mxu0
      %6006 = vmatprep.mubr.f32.mxu0 0.0
      %6007 = vmatmul.mubr.f32.gmra.mxu0 %v5806
      %v6008 = vpop.f32.mrf.mxu0
      %v6009 = vadd.f32 %v5746, %v6008
      %v6010 = vpop.f32.mrf.mxu0
      %6011 = vmatprep.mubr.f32.mxu0 0.0
      %6012 = vmatmul.mubr.f32.gmra.mxu0 %v5809
      %v6013 = vpop.f32.mrf.mxu0
      %v6014 = vadd.f32 %v5746, %v6013
      %v6015 = vpop.f32.mrf.mxu0
      %6016 = vmatprep.mubr.f32.mxu0 0.0
      %6017 = vmatmul.mubr.f32.gmra.mxu0 %v5812
      %v6018 = vpop.f32.mrf.mxu0
      %v6019 = vadd.f32 %v5746, %v6018
      %v6020 = vpop.f32.mrf.mxu0
      %6021 = vmatprep.mubr.f32.mxu0 0.0
      %6022 = vmatmul.mubr.f32.gmra.mxu0 %v5815
      %v6023 = vpop.f32.mrf.mxu0
      %v6024 = vadd.f32 %v5746, %v6023
      %v6025 = vpop.f32.mrf.mxu0
      %6026 = vmatprep.mubr.f32.mxu0 0.0
      %6027 = vmatmul.mubr.f32.gmra.mxu0 %v5818
      %v6028 = vpop.f32.mrf.mxu0
      %v6029 = vadd.f32 %v5746, %v6028
      %v6030 = vpop.f32.mrf.mxu0
      %6031 = vmatprep.mubr.f32.mxu0 0.0
      %6032 = vmatmul.mubr.f32.gmra.mxu0 %v5821
      %v6033 = vpop.f32.mrf.mxu0
      %v6034 = vadd.f32 %v5746, %v6033
      %v6035 = vpop.f32.mrf.mxu0
      %6036 = vmatprep.mubr.f32.mxu0 0.0
      %6037 = vmatmul.mubr.f32.gmra.mxu0 %v5824
      %v6038 = vpop.f32.mrf.mxu0
      %v6039 = vadd.f32 %v5746, %v6038
      %v6040 = vpop.f32.mrf.mxu0
      %6041 = vmatprep.mubr.f32.mxu0 0.0
      %6042 = vmatmul.mubr.f32.gmra.mxu0 %v5827
      %v6043 = vpop.f32.mrf.mxu0
      %v6044 = vadd.f32 %v5746, %v6043
      %v6045 = vpop.f32.mrf.mxu0
      %6046 = vmatprep.mubr.f32.mxu0 0.0
      %6047 = vmatmul.mubr.f32.gmra.mxu0 %v5830
      %v6048 = vpop.f32.mrf.mxu0
      %v6049 = vadd.f32 %v5746, %v6048
      %v6050 = vpop.f32.mrf.mxu0
      %6051 = vmatprep.mubr.f32.mxu0 0.0
      %6052 = vmatmul.mubr.f32.gmra.mxu0 %v5833
      %v6053 = vpop.f32.mrf.mxu0
      %v6054 = vadd.f32 %v5746, %v6053
      %v6055 = vpop.f32.mrf.mxu0
      %6056 = vmatprep.mubr.f32.mxu0 0.0
      %6057 = vmatmul.mubr.f32.gmra.mxu0 %v5836
      %v6058 = vpop.f32.mrf.mxu0
      %v6059 = vadd.f32 %v5746, %v6058
      %v6060 = vpop.f32.mrf.mxu0
      %6061 = vmatprep.mubr.f32.mxu0 0.0
      %6062 = vmatmul.mubr.f32.gmra.mxu0 %v5839
      %v6063 = vpop.f32.mrf.mxu0
      %v6064 = vadd.f32 %v5746, %v6063
      %v6065 = vpop.f32.mrf.mxu0
      %6066 = vmatprep.mubr.f32.mxu0 0.0
      %6067 = vmatmul.mubr.f32.gmra.mxu0 %v5842
      %v6068 = vpop.f32.mrf.mxu0
      %v6069 = vadd.f32 %v5746, %v6068
      %v6070 = vpop.f32.mrf.mxu0
      %6071 = vdwg.mxu0
      %vm6072 = vcmp.ge.f32.partialorder %v5914, 0.0
      %vm6073 = vcmp.ge.f32.partialorder %v5919, 0.0
      %vm6074 = vcmp.ge.f32.partialorder %v5924, 0.0
      %vm6075 = vcmp.ge.f32.partialorder %v5929, 0.0
      %vm6076 = vcmp.ge.f32.partialorder %v5934, 0.0
      %vm6077 = vcmp.ge.f32.partialorder %v5939, 0.0
      %vm6078 = vcmp.ge.f32.partialorder %v5944, 0.0
      %vm6079 = vcmp.ge.f32.partialorder %v5949, 0.0
      %vm6080 = vcmp.ge.f32.partialorder %v5954, 0.0
      %vm6081 = vcmp.ge.f32.partialorder %v5959, 0.0
      %vm6082 = vcmp.ge.f32.partialorder %v5964, 0.0
      %vm6083 = vcmp.ge.f32.partialorder %v5969, 0.0
      %vm6084 = vcmp.ge.f32.partialorder %v5974, 0.0
      %vm6085 = vcmp.ge.f32.partialorder %v5979, 0.0
      %vm6086 = vcmp.ge.f32.partialorder %v5984, 0.0
      %vm6087 = vcmp.ge.f32.partialorder %v5989, 0.0
      %vm6088 = vcmp.ge.f32.partialorder %v5994, 0.0
      %vm6089 = vcmp.ge.f32.partialorder %v5999, 0.0
      %vm6090 = vcmp.ge.f32.partialorder %v6004, 0.0
      %vm6091 = vcmp.ge.f32.partialorder %v6009, 0.0
      %vm6092 = vcmp.ge.f32.partialorder %v6014, 0.0
      %vm6093 = vcmp.ge.f32.partialorder %v6019, 0.0
      %vm6094 = vcmp.ge.f32.partialorder %v6024, 0.0
      %vm6095 = vcmp.ge.f32.partialorder %v6029, 0.0
      %vm6096 = vcmp.ge.f32.partialorder %v6034, 0.0
      %vm6097 = vcmp.ge.f32.partialorder %v6039, 0.0
      %vm6098 = vcmp.ge.f32.partialorder %v6044, 0.0
      %vm6099 = vcmp.ge.f32.partialorder %v6049, 0.0
      %vm6100 = vcmp.ge.f32.partialorder %v6054, 0.0
      %vm6101 = vcmp.ge.f32.partialorder %v6059, 0.0
      %vm6102 = vcmp.ge.f32.partialorder %v6064, 0.0
      %vm6103 = vcmp.ge.f32.partialorder %v6069, 0.0
      %v6104 = vmul.f32 %v5914, 0.01
      %v6105 = vmul.f32 %v5919, 0.01
      %v6106 = vmul.f32 %v5924, 0.01
      %v6107 = vmul.f32 %v5929, 0.01
      %v6108 = vmul.f32 %v5934, 0.01
      %v6109 = vmul.f32 %v5939, 0.01
      %v6110 = vmul.f32 %v5944, 0.01
      %v6111 = vmul.f32 %v5949, 0.01
      %v6112 = vmul.f32 %v5954, 0.01
      %v6113 = vmul.f32 %v5959, 0.01
      %v6114 = vmul.f32 %v5964, 0.01
      %v6115 = vmul.f32 %v5969, 0.01
      %v6116 = vmul.f32 %v5974, 0.01
      %v6117 = vmul.f32 %v5979, 0.01
      %v6118 = vmul.f32 %v5984, 0.01
      %v6119 = vmul.f32 %v5989, 0.01
      %v6120 = vmul.f32 %v5994, 0.01
      %v6121 = vmul.f32 %v5999, 0.01
      %v6122 = vmul.f32 %v6004, 0.01
      %v6123 = vmul.f32 %v6009, 0.01
      %v6124 = vmul.f32 %v6014, 0.01
      %v6125 = vmul.f32 %v6019, 0.01
      %v6126 = vmul.f32 %v6024, 0.01
      %v6127 = vmul.f32 %v6029, 0.01
      %v6128 = vmul.f32 %v6034, 0.01
      %v6129 = vmul.f32 %v6039, 0.01
      %v6130 = vmul.f32 %v6044, 0.01
      %v6131 = vmul.f32 %v6049, 0.01
      %v6132 = vmul.f32 %v6054, 0.01
      %v6133 = vmul.f32 %v6059, 0.01
      %v6134 = vmul.f32 %v6064, 0.01
      %v6135 = vmul.f32 %v6069, 0.01
      %v6136 = vsel %vm6072, %v5914, %v6104
      %v6137 = vsel %vm6073, %v5919, %v6105
      %v6138 = vsel %vm6074, %v5924, %v6106
      %v6139 = vsel %vm6075, %v5929, %v6107
      %v6140 = vsel %vm6076, %v5934, %v6108
      %v6141 = vsel %vm6077, %v5939, %v6109
      %v6142 = vsel %vm6078, %v5944, %v6110
      %v6143 = vsel %vm6079, %v5949, %v6111
      %v6144 = vsel %vm6080, %v5954, %v6112
      %v6145 = vsel %vm6081, %v5959, %v6113
      %v6146 = vsel %vm6082, %v5964, %v6114
      %v6147 = vsel %vm6083, %v5969, %v6115
      %v6148 = vsel %vm6084, %v5974, %v6116
      %v6149 = vsel %vm6085, %v5979, %v6117
      %v6150 = vsel %vm6086, %v5984, %v6118
      %v6151 = vsel %vm6087, %v5989, %v6119
      %v6152 = vsel %vm6088, %v5994, %v6120
      %v6153 = vsel %vm6089, %v5999, %v6121
      %v6154 = vsel %vm6090, %v6004, %v6122
      %v6155 = vsel %vm6091, %v6009, %v6123
      %v6156 = vsel %vm6092, %v6014, %v6124
      %v6157 = vsel %vm6093, %v6019, %v6125
      %v6158 = vsel %vm6094, %v6024, %v6126
      %v6159 = vsel %vm6095, %v6029, %v6127
      %v6160 = vsel %vm6096, %v6034, %v6128
      %v6161 = vsel %vm6097, %v6039, %v6129
      %v6162 = vsel %vm6098, %v6044, %v6130
      %v6163 = vsel %vm6099, %v6049, %v6131
      %v6164 = vsel %vm6100, %v6054, %v6132
      %v6165 = vsel %vm6101, %v6059, %v6133
      %v6166 = vsel %vm6102, %v6064, %v6134
      %v6167 = vsel %vm6103, %v6069, %v6135
      %v6169 = vsel %vm1265, %v6136, 0
      %v6172 = vsel %vm1265, %v6137, 0
      %v6175 = vsel %vm1265, %v6138, 0
      %v6178 = vsel %vm1265, %v6139, 0
      %v6181 = vsel %vm1265, %v6140, 0
      %v6184 = vsel %vm1265, %v6141, 0
      %v6187 = vsel %vm1265, %v6142, 0
      %v6190 = vsel %vm1265, %v6143, 0
      %v6193 = vsel %vm1265, %v6144, 0
      %v6196 = vsel %vm1265, %v6145, 0
      %v6199 = vsel %vm1265, %v6146, 0
      %v6202 = vsel %vm1265, %v6147, 0
      %v6205 = vsel %vm1265, %v6148, 0
      %v6208 = vsel %vm1265, %v6149, 0
      %v6211 = vsel %vm1265, %v6150, 0
      %v6214 = vsel %vm1265, %v6151, 0
      %v6217 = vsel %vm1265, %v6152, 0
      %v6220 = vsel %vm1265, %v6153, 0
      %v6223 = vsel %vm1265, %v6154, 0
      %v6226 = vsel %vm1265, %v6155, 0
      %v6229 = vsel %vm1265, %v6156, 0
      %v6232 = vsel %vm1265, %v6157, 0
      %v6235 = vsel %vm1265, %v6158, 0
      %v6238 = vsel %vm1265, %v6159, 0
      %v6241 = vsel %vm1265, %v6160, 0
      %v6244 = vsel %vm1265, %v6161, 0
      %v6247 = vsel %vm1265, %v6162, 0
      %v6250 = vsel %vm1265, %v6163, 0
      %v6253 = vsel %vm1265, %v6164, 0
      %v6256 = vsel %vm1265, %v6165, 0
      %v6259 = vsel %vm1265, %v6166, 0
      %v6262 = vsel %vm1265, %v6167, 0
      %6264 = vmatprep.subr.mxu0 0.0
      %6265 = vmatpush1.msra.mxu0 0.0
      %6266 = vmatprep.subr.mxu0 0.0
      %6267 = vmatpush1.msra.mxu0 0.0
      %6268 = vmatprep.subr.mxu0 0.0
      %6269 = vmatpush1.msra.mxu0 %v5042
      %6270 = vmatprep.subr.mxu0 0.0
      %6271 = vmatpush1.msra.mxu0 %v4076
      %6272 = vmatprep.subr.mxu0 0.0
      %6273 = vmatpush1.msra.mxu0 %v4075
      %6274 = vmatprep.subr.mxu0 0.0
      %6275 = vmatpush1.msra.mxu0 %v4074
      %6276 = vmatprep.subr.mxu0 0.0
      %6277 = vmatpush1.msra.mxu0 %v4073
      %6278 = vmatprep.subr.mxu0 0.0
      %6279 = vmatpush1.msra.mxu0 %v4072
      %6280 = vmatprep.subr.mxu0 0.0
      %6281 = vmatpush1.msra.mxu0 %v4071
      %6282 = vmatprep.subr.mxu0 0.0
      %6283 = vmatpush1.msra.mxu0 %v4070
      %6284 = vmatprep.subr.mxu0 0.0
      %6285 = vmatpush1.msra.mxu0 %v4069
      %6286 = vmatprep.subr.mxu0 0.0
      %6287 = vmatpush1.msra.mxu0 %v4068
      %6288 = vmatprep.subr.mxu0 0.0
      %6289 = vmatpush1.msra.mxu0 %v4067
      %6290 = vmatprep.subr.mxu0 0.0
      %6291 = vmatpush1.msra.mxu0 %v4066
      %6292 = vmatprep.subr.mxu0 0.0
      %6293 = vmatpush1.msra.mxu0 %v4065
      %6294 = vmatprep.subr.mxu0 0.0
      %6295 = vmatpush1.msra.mxu0 %v4064
      %6296 = vmatprep.subr.mxu0 0.0
      %6297 = vmatpush2.msra.mxu0 0.0
      %6298 = vmatprep.subr.mxu0 0.0
      %6299 = vmatpush2.msra.mxu0 0.0
      %6300 = vmatprep.subr.mxu0 0.0
      %6301 = vmatpush2.msra.mxu0 0.0
      %6302 = vmatprep.subr.mxu0 0.0
      %6303 = vmatpush2.msra.mxu0 0.0
      %6304 = vmatprep.subr.mxu0 0.0
      %6305 = vmatpush2.msra.mxu0 0.0
      %6306 = vmatprep.subr.mxu0 0.0
      %6307 = vmatpush2.msra.mxu0 0.0
      %6308 = vmatprep.subr.mxu0 0.0
      %6309 = vmatpush2.msra.mxu0 0.0
      %6310 = vmatprep.subr.mxu0 0.0
      %6311 = vmatpush2.msra.mxu0 0.0
      %6312 = vmatprep.subr.mxu0 0.0
      %6313 = vmatpush2.msra.mxu0 0.0
      %6314 = vmatprep.subr.mxu0 0.0
      %6315 = vmatpush2.msra.mxu0 0.0
      %6316 = vmatprep.subr.mxu0 0.0
      %6317 = vmatpush2.msra.mxu0 0.0
      %6318 = vmatprep.subr.mxu0 0.0
      %6319 = vmatpush2.msra.mxu0 0.0
      %6320 = vmatprep.subr.mxu0 0.0
      %6321 = vmatpush2.msra.mxu0 0.0
      %6322 = vmatprep.subr.mxu0 0.0
      %6323 = vmatpush2.msra.mxu0 0.0
      %6324 = vmatprep.subr.mxu0 0.0
      %6325 = vmatpush2.msra.mxu0 0.0
      %6326 = vmatprep.subr.mxu0 0.0
      %6327 = vmatpush2.msra.mxu0 0.0
      %6328 = vmatprep.mubr.f32.mxu0 0.0
      %6329 = vmatmul.mubr.f32.gmra.mxu0 %v6169
      %v6330 = vpop.f32.mrf.mxu0
      %v6331 = vadd.f32 0.0, %v6330
      %v6332 = vpop.f32.mrf.mxu0
      %6333 = vmatprep.mubr.f32.mxu0 0.0
      %6334 = vmatmul.mubr.f32.gmra.mxu0 %v6172
      %v6335 = vpop.f32.mrf.mxu0
      %v6336 = vadd.f32 0.0, %v6335
      %v6337 = vpop.f32.mrf.mxu0
      %6338 = vmatprep.mubr.f32.mxu0 0.0
      %6339 = vmatmul.mubr.f32.gmra.mxu0 %v6175
      %v6340 = vpop.f32.mrf.mxu0
      %v6341 = vadd.f32 0.0, %v6340
      %v6342 = vpop.f32.mrf.mxu0
      %6343 = vmatprep.mubr.f32.mxu0 0.0
      %6344 = vmatmul.mubr.f32.gmra.mxu0 %v6178
      %v6345 = vpop.f32.mrf.mxu0
      %v6346 = vadd.f32 0.0, %v6345
      %v6347 = vpop.f32.mrf.mxu0
      %6348 = vmatprep.mubr.f32.mxu0 0.0
      %6349 = vmatmul.mubr.f32.gmra.mxu0 %v6181
      %v6350 = vpop.f32.mrf.mxu0
      %v6351 = vadd.f32 0.0, %v6350
      %v6352 = vpop.f32.mrf.mxu0
      %6353 = vmatprep.mubr.f32.mxu0 0.0
      %6354 = vmatmul.mubr.f32.gmra.mxu0 %v6184
      %v6355 = vpop.f32.mrf.mxu0
      %v6356 = vadd.f32 0.0, %v6355
      %v6357 = vpop.f32.mrf.mxu0
      %6358 = vmatprep.mubr.f32.mxu0 0.0
      %6359 = vmatmul.mubr.f32.gmra.mxu0 %v6187
      %v6360 = vpop.f32.mrf.mxu0
      %v6361 = vadd.f32 0.0, %v6360
      %v6362 = vpop.f32.mrf.mxu0
      %6363 = vmatprep.mubr.f32.mxu0 0.0
      %6364 = vmatmul.mubr.f32.gmra.mxu0 %v6190
      %v6365 = vpop.f32.mrf.mxu0
      %v6366 = vadd.f32 0.0, %v6365
      %v6367 = vpop.f32.mrf.mxu0
      %6368 = vmatprep.mubr.f32.mxu0 0.0
      %6369 = vmatmul.mubr.f32.gmra.mxu0 %v6193
      %v6370 = vpop.f32.mrf.mxu0
      %v6371 = vadd.f32 0.0, %v6370
      %v6372 = vpop.f32.mrf.mxu0
      %6373 = vmatprep.mubr.f32.mxu0 0.0
      %6374 = vmatmul.mubr.f32.gmra.mxu0 %v6196
      %v6375 = vpop.f32.mrf.mxu0
      %v6376 = vadd.f32 0.0, %v6375
      %v6377 = vpop.f32.mrf.mxu0
      %6378 = vmatprep.mubr.f32.mxu0 0.0
      %6379 = vmatmul.mubr.f32.gmra.mxu0 %v6199
      %v6380 = vpop.f32.mrf.mxu0
      %v6381 = vadd.f32 0.0, %v6380
      %v6382 = vpop.f32.mrf.mxu0
      %6383 = vmatprep.mubr.f32.mxu0 0.0
      %6384 = vmatmul.mubr.f32.gmra.mxu0 %v6202
      %v6385 = vpop.f32.mrf.mxu0
      %v6386 = vadd.f32 0.0, %v6385
      %v6387 = vpop.f32.mrf.mxu0
      %6388 = vmatprep.mubr.f32.mxu0 0.0
      %6389 = vmatmul.mubr.f32.gmra.mxu0 %v6205
      %v6390 = vpop.f32.mrf.mxu0
      %v6391 = vadd.f32 0.0, %v6390
      %v6392 = vpop.f32.mrf.mxu0
      %6393 = vmatprep.mubr.f32.mxu0 0.0
      %6394 = vmatmul.mubr.f32.gmra.mxu0 %v6208
      %v6395 = vpop.f32.mrf.mxu0
      %v6396 = vadd.f32 0.0, %v6395
      %v6397 = vpop.f32.mrf.mxu0
      %6398 = vmatprep.mubr.f32.mxu0 0.0
      %6399 = vmatmul.mubr.f32.gmra.mxu0 %v6211
      %v6400 = vpop.f32.mrf.mxu0
      %v6401 = vadd.f32 0.0, %v6400
      %v6402 = vpop.f32.mrf.mxu0
      %6403 = vmatprep.mubr.f32.mxu0 0.0
      %6404 = vmatmul.mubr.f32.gmra.mxu0 %v6214
      %v6405 = vpop.f32.mrf.mxu0
      %v6406 = vadd.f32 0.0, %v6405
      %v6407 = vpop.f32.mrf.mxu0
      %6408 = vmatprep.mubr.f32.mxu0 0.0
      %6409 = vmatmul.mubr.f32.gmra.mxu0 %v6217
      %v6410 = vpop.f32.mrf.mxu0
      %v6411 = vadd.f32 0.0, %v6410
      %v6412 = vpop.f32.mrf.mxu0
      %6413 = vmatprep.mubr.f32.mxu0 0.0
      %6414 = vmatmul.mubr.f32.gmra.mxu0 %v6220
      %v6415 = vpop.f32.mrf.mxu0
      %v6416 = vadd.f32 0.0, %v6415
      %v6417 = vpop.f32.mrf.mxu0
      %6418 = vmatprep.mubr.f32.mxu0 0.0
      %6419 = vmatmul.mubr.f32.gmra.mxu0 %v6223
      %v6420 = vpop.f32.mrf.mxu0
      %v6421 = vadd.f32 0.0, %v6420
      %v6422 = vpop.f32.mrf.mxu0
      %6423 = vmatprep.mubr.f32.mxu0 0.0
      %6424 = vmatmul.mubr.f32.gmra.mxu0 %v6226
      %v6425 = vpop.f32.mrf.mxu0
      %v6426 = vadd.f32 0.0, %v6425
      %v6427 = vpop.f32.mrf.mxu0
      %6428 = vmatprep.mubr.f32.mxu0 0.0
      %6429 = vmatmul.mubr.f32.gmra.mxu0 %v6229
      %v6430 = vpop.f32.mrf.mxu0
      %v6431 = vadd.f32 0.0, %v6430
      %v6432 = vpop.f32.mrf.mxu0
      %6433 = vmatprep.mubr.f32.mxu0 0.0
      %6434 = vmatmul.mubr.f32.gmra.mxu0 %v6232
      %v6435 = vpop.f32.mrf.mxu0
      %v6436 = vadd.f32 0.0, %v6435
      %v6437 = vpop.f32.mrf.mxu0
      %6438 = vmatprep.mubr.f32.mxu0 0.0
      %6439 = vmatmul.mubr.f32.gmra.mxu0 %v6235
      %v6440 = vpop.f32.mrf.mxu0
      %v6441 = vadd.f32 0.0, %v6440
      %v6442 = vpop.f32.mrf.mxu0
      %6443 = vmatprep.mubr.f32.mxu0 0.0
      %6444 = vmatmul.mubr.f32.gmra.mxu0 %v6238
      %v6445 = vpop.f32.mrf.mxu0
      %v6446 = vadd.f32 0.0, %v6445
      %v6447 = vpop.f32.mrf.mxu0
      %6448 = vmatprep.mubr.f32.mxu0 0.0
      %6449 = vmatmul.mubr.f32.gmra.mxu0 %v6241
      %v6450 = vpop.f32.mrf.mxu0
      %v6451 = vadd.f32 0.0, %v6450
      %v6452 = vpop.f32.mrf.mxu0
      %6453 = vmatprep.mubr.f32.mxu0 0.0
      %6454 = vmatmul.mubr.f32.gmra.mxu0 %v6244
      %v6455 = vpop.f32.mrf.mxu0
      %v6456 = vadd.f32 0.0, %v6455
      %v6457 = vpop.f32.mrf.mxu0
      %6458 = vmatprep.mubr.f32.mxu0 0.0
      %6459 = vmatmul.mubr.f32.gmra.mxu0 %v6247
      %v6460 = vpop.f32.mrf.mxu0
      %v6461 = vadd.f32 0.0, %v6460
      %v6462 = vpop.f32.mrf.mxu0
      %6463 = vmatprep.mubr.f32.mxu0 0.0
      %6464 = vmatmul.mubr.f32.gmra.mxu0 %v6250
      %v6465 = vpop.f32.mrf.mxu0
      %v6466 = vadd.f32 0.0, %v6465
      %v6467 = vpop.f32.mrf.mxu0
      %6468 = vmatprep.mubr.f32.mxu0 0.0
      %6469 = vmatmul.mubr.f32.gmra.mxu0 %v6253
      %v6470 = vpop.f32.mrf.mxu0
      %v6471 = vadd.f32 0.0, %v6470
      %v6472 = vpop.f32.mrf.mxu0
      %6473 = vmatprep.mubr.f32.mxu0 0.0
      %6474 = vmatmul.mubr.f32.gmra.mxu0 %v6256
      %v6475 = vpop.f32.mrf.mxu0
      %v6476 = vadd.f32 0.0, %v6475
      %v6477 = vpop.f32.mrf.mxu0
      %6478 = vmatprep.mubr.f32.mxu0 0.0
      %6479 = vmatmul.mubr.f32.gmra.mxu0 %v6259
      %v6480 = vpop.f32.mrf.mxu0
      %v6481 = vadd.f32 0.0, %v6480
      %v6482 = vpop.f32.mrf.mxu0
      %6483 = vmatprep.mubr.f32.mxu0 0.0
      %6484 = vmatmul.mubr.f32.gmra.mxu0 %v6262
      %v6485 = vpop.f32.mrf.mxu0
      %v6486 = vadd.f32 0.0, %v6485
      %v6487 = vpop.f32.mrf.mxu0
      %6488 = vdwg.mxu0
      %v6489 = vadd.f32 %v5269, %v6331
      %v6490 = vadd.f32 %v5270, %v6336
      %v6491 = vadd.f32 %v5271, %v6341
      %v6492 = vadd.f32 %v5272, %v6346
      %v6493 = vadd.f32 %v5273, %v6351
      %v6494 = vadd.f32 %v5274, %v6356
      %v6495 = vadd.f32 %v5275, %v6361
      %v6496 = vadd.f32 %v5276, %v6366
      %v6497 = vadd.f32 %v5277, %v6371
      %v6498 = vadd.f32 %v5278, %v6376
      %v6499 = vadd.f32 %v5279, %v6381
      %v6500 = vadd.f32 %v5280, %v6386
      %v6501 = vadd.f32 %v5281, %v6391
      %v6502 = vadd.f32 %v5282, %v6396
      %v6503 = vadd.f32 %v5283, %v6401
      %v6504 = vadd.f32 %v5284, %v6406
      %v6505 = vadd.f32 %v5285, %v6411
      %v6506 = vadd.f32 %v5286, %v6416
      %v6507 = vadd.f32 %v5287, %v6421
      %v6508 = vadd.f32 %v5288, %v6426
      %v6509 = vadd.f32 %v5289, %v6431
      %v6510 = vadd.f32 %v5290, %v6436
      %v6511 = vadd.f32 %v5291, %v6441
      %v6512 = vadd.f32 %v5292, %v6446
      %v6513 = vadd.f32 %v5293, %v6451
      %v6514 = vadd.f32 %v5294, %v6456
      %v6515 = vadd.f32 %v5295, %v6461
      %v6516 = vadd.f32 %v5296, %v6466
      %v6517 = vadd.f32 %v5297, %v6471
      %v6518 = vadd.f32 %v5298, %v6476
      %v6519 = vadd.f32 %v5299, %v6481
      %v6520 = vadd.f32 %v5300, %v6486
      %s6521 = scalar_lea.vmem %s1, 80
      %v6522 = vld [vmem:[%s6521] sm:$0xff]
      %v6523 = vld [vmem:[%s6521 + $0x8] sm:$0x7f]
      %s6524 = scalar_lea.vmem %s2, 5
      %v6525 = vld [vmem:[%s6524] sm:$0x1]
      %v6527 = vlaneseq
      %v6528 = vshrl.u32 %v6527, 7
      %v6529 = vsub.s32 0, %v6528
      %v6530 = vrot.slane %v6525, %v6529
      %v6533 = vsel %vm255, %v6489, 0
      %v6536 = vsel %vm255, %v6490, 0
      %v6539 = vsel %vm255, %v6491, 0
      %v6542 = vsel %vm255, %v6492, 0
      %v6545 = vsel %vm255, %v6493, 0
      %v6548 = vsel %vm255, %v6494, 0
      %v6551 = vsel %vm255, %v6495, 0
      %v6554 = vsel %vm255, %v6496, 0
      %v6557 = vsel %vm255, %v6497, 0
      %v6560 = vsel %vm255, %v6498, 0
      %v6563 = vsel %vm255, %v6499, 0
      %v6566 = vsel %vm255, %v6500, 0
      %v6569 = vsel %vm255, %v6501, 0
      %v6572 = vsel %vm255, %v6502, 0
      %v6575 = vsel %vm255, %v6503, 0
      %v6578 = vsel %vm255, %v6504, 0
      %v6581 = vsel %vm255, %v6505, 0
      %v6584 = vsel %vm255, %v6506, 0
      %v6587 = vsel %vm255, %v6507, 0
      %v6590 = vsel %vm255, %v6508, 0
      %v6593 = vsel %vm255, %v6509, 0
      %v6596 = vsel %vm255, %v6510, 0
      %v6599 = vsel %vm255, %v6511, 0
      %v6602 = vsel %vm255, %v6512, 0
      %v6605 = vsel %vm255, %v6513, 0
      %v6608 = vsel %vm255, %v6514, 0
      %v6611 = vsel %vm255, %v6515, 0
      %v6614 = vsel %vm255, %v6516, 0
      %v6617 = vsel %vm255, %v6517, 0
      %v6620 = vsel %vm255, %v6518, 0
      %v6623 = vsel %vm255, %v6519, 0
      %v6626 = vsel %vm255, %v6520, 0
      %v6629 = vsel %vm504, %v6523, 0
      %6631 = vmatprep.subr.mxu0 0.0
      %6632 = vmatpush1.msra.mxu0 0.0
      %6633 = vmatprep.subr.mxu0 0.0
      %6634 = vmatpush1.msra.mxu0 0.0
      %6635 = vmatprep.subr.mxu0 0.0
      %6636 = vmatpush1.msra.mxu0 0.0
      %6637 = vmatprep.subr.mxu0 0.0
      %6638 = vmatpush1.msra.mxu0 0.0
      %6639 = vmatprep.subr.mxu0 0.0
      %6640 = vmatpush1.msra.mxu0 0.0
      %6641 = vmatprep.subr.mxu0 0.0
      %6642 = vmatpush1.msra.mxu0 0.0
      %6643 = vmatprep.subr.mxu0 0.0
      %6644 = vmatpush1.msra.mxu0 0.0
      %6645 = vmatprep.subr.mxu0 0.0
      %6646 = vmatpush1.msra.mxu0 0.0
      %6647 = vmatprep.subr.mxu0 0.0
      %6648 = vmatpush1.msra.mxu0 0.0
      %6649 = vmatprep.subr.mxu0 0.0
      %6650 = vmatpush1.msra.mxu0 0.0
      %6651 = vmatprep.subr.mxu0 0.0
      %6652 = vmatpush1.msra.mxu0 0.0
      %6653 = vmatprep.subr.mxu0 0.0
      %6654 = vmatpush1.msra.mxu0 0.0
      %6655 = vmatprep.subr.mxu0 0.0
      %6656 = vmatpush1.msra.mxu0 0.0
      %6657 = vmatprep.subr.mxu0 0.0
      %6658 = vmatpush1.msra.mxu0 0.0
      %6659 = vmatprep.subr.mxu0 0.0
      %6660 = vmatpush1.msra.mxu0 %v6629
      %6661 = vmatprep.subr.mxu0 0.0
      %6662 = vmatpush1.msra.mxu0 %v6522
      %6663 = vmatprep.subr.mxu0 0.0
      %6664 = vmatpush2.msra.mxu0 0.0
      %6665 = vmatprep.subr.mxu0 0.0
      %6666 = vmatpush2.msra.mxu0 0.0
      %6667 = vmatprep.subr.mxu0 0.0
      %6668 = vmatpush2.msra.mxu0 0.0
      %6669 = vmatprep.subr.mxu0 0.0
      %6670 = vmatpush2.msra.mxu0 0.0
      %6671 = vmatprep.subr.mxu0 0.0
      %6672 = vmatpush2.msra.mxu0 0.0
      %6673 = vmatprep.subr.mxu0 0.0
      %6674 = vmatpush2.msra.mxu0 0.0
      %6675 = vmatprep.subr.mxu0 0.0
      %6676 = vmatpush2.msra.mxu0 0.0
      %6677 = vmatprep.subr.mxu0 0.0
      %6678 = vmatpush2.msra.mxu0 0.0
      %6679 = vmatprep.subr.mxu0 0.0
      %6680 = vmatpush2.msra.mxu0 0.0
      %6681 = vmatprep.subr.mxu0 0.0
      %6682 = vmatpush2.msra.mxu0 0.0
      %6683 = vmatprep.subr.mxu0 0.0
      %6684 = vmatpush2.msra.mxu0 0.0
      %6685 = vmatprep.subr.mxu0 0.0
      %6686 = vmatpush2.msra.mxu0 0.0
      %6687 = vmatprep.subr.mxu0 0.0
      %6688 = vmatpush2.msra.mxu0 0.0
      %6689 = vmatprep.subr.mxu0 0.0
      %6690 = vmatpush2.msra.mxu0 0.0
      %6691 = vmatprep.subr.mxu0 0.0
      %6692 = vmatpush2.msra.mxu0 0.0
      %6693 = vmatprep.subr.mxu0 0.0
      %6694 = vmatpush2.msra.mxu0 0.0
      %6695 = vmatprep.mubr.f32.mxu0 0.0
      %6696 = vmatmul.mubr.f32.gmra.mxu0 %v6533
      %v6697 = vpop.f32.mrf.mxu0
      %v6698 = vadd.f32 %v6530, %v6697
      %v6699 = vpop.f32.mrf.mxu0
      %6700 = vmatprep.mubr.f32.mxu0 0.0
      %6701 = vmatmul.mubr.f32.gmra.mxu0 %v6536
      %v6702 = vpop.f32.mrf.mxu0
      %v6703 = vadd.f32 %v6530, %v6702
      %v6704 = vpop.f32.mrf.mxu0
      %6705 = vmatprep.mubr.f32.mxu0 0.0
      %6706 = vmatmul.mubr.f32.gmra.mxu0 %v6539
      %v6707 = vpop.f32.mrf.mxu0
      %v6708 = vadd.f32 %v6530, %v6707
      %v6709 = vpop.f32.mrf.mxu0
      %6710 = vmatprep.mubr.f32.mxu0 0.0
      %6711 = vmatmul.mubr.f32.gmra.mxu0 %v6542
      %v6712 = vpop.f32.mrf.mxu0
      %v6713 = vadd.f32 %v6530, %v6712
      %v6714 = vpop.f32.mrf.mxu0
      %6715 = vmatprep.mubr.f32.mxu0 0.0
      %6716 = vmatmul.mubr.f32.gmra.mxu0 %v6545
      %v6717 = vpop.f32.mrf.mxu0
      %v6718 = vadd.f32 %v6530, %v6717
      %v6719 = vpop.f32.mrf.mxu0
      %6720 = vmatprep.mubr.f32.mxu0 0.0
      %6721 = vmatmul.mubr.f32.gmra.mxu0 %v6548
      %v6722 = vpop.f32.mrf.mxu0
      %v6723 = vadd.f32 %v6530, %v6722
      %v6724 = vpop.f32.mrf.mxu0
      %6725 = vmatprep.mubr.f32.mxu0 0.0
      %6726 = vmatmul.mubr.f32.gmra.mxu0 %v6551
      %v6727 = vpop.f32.mrf.mxu0
      %v6728 = vadd.f32 %v6530, %v6727
      %v6729 = vpop.f32.mrf.mxu0
      %6730 = vmatprep.mubr.f32.mxu0 0.0
      %6731 = vmatmul.mubr.f32.gmra.mxu0 %v6554
      %v6732 = vpop.f32.mrf.mxu0
      %v6733 = vadd.f32 %v6530, %v6732
      %v6734 = vpop.f32.mrf.mxu0
      %6735 = vmatprep.mubr.f32.mxu0 0.0
      %6736 = vmatmul.mubr.f32.gmra.mxu0 %v6557
      %v6737 = vpop.f32.mrf.mxu0
      %v6738 = vadd.f32 %v6530, %v6737
      %v6739 = vpop.f32.mrf.mxu0
      %6740 = vmatprep.mubr.f32.mxu0 0.0
      %6741 = vmatmul.mubr.f32.gmra.mxu0 %v6560
      %v6742 = vpop.f32.mrf.mxu0
      %v6743 = vadd.f32 %v6530, %v6742
      %v6744 = vpop.f32.mrf.mxu0
      %6745 = vmatprep.mubr.f32.mxu0 0.0
      %6746 = vmatmul.mubr.f32.gmra.mxu0 %v6563
      %v6747 = vpop.f32.mrf.mxu0
      %v6748 = vadd.f32 %v6530, %v6747
      %v6749 = vpop.f32.mrf.mxu0
      %6750 = vmatprep.mubr.f32.mxu0 0.0
      %6751 = vmatmul.mubr.f32.gmra.mxu0 %v6566
      %v6752 = vpop.f32.mrf.mxu0
      %v6753 = vadd.f32 %v6530, %v6752
      %v6754 = vpop.f32.mrf.mxu0
      %6755 = vmatprep.mubr.f32.mxu0 0.0
      %6756 = vmatmul.mubr.f32.gmra.mxu0 %v6569
      %v6757 = vpop.f32.mrf.mxu0
      %v6758 = vadd.f32 %v6530, %v6757
      %v6759 = vpop.f32.mrf.mxu0
      %6760 = vmatprep.mubr.f32.mxu0 0.0
      %6761 = vmatmul.mubr.f32.gmra.mxu0 %v6572
      %v6762 = vpop.f32.mrf.mxu0
      %v6763 = vadd.f32 %v6530, %v6762
      %v6764 = vpop.f32.mrf.mxu0
      %6765 = vmatprep.mubr.f32.mxu0 0.0
      %6766 = vmatmul.mubr.f32.gmra.mxu0 %v6575
      %v6767 = vpop.f32.mrf.mxu0
      %v6768 = vadd.f32 %v6530, %v6767
      %v6769 = vpop.f32.mrf.mxu0
      %6770 = vmatprep.mubr.f32.mxu0 0.0
      %6771 = vmatmul.mubr.f32.gmra.mxu0 %v6578
      %v6772 = vpop.f32.mrf.mxu0
      %v6773 = vadd.f32 %v6530, %v6772
      %v6774 = vpop.f32.mrf.mxu0
      %6775 = vmatprep.mubr.f32.mxu0 0.0
      %6776 = vmatmul.mubr.f32.gmra.mxu0 %v6581
      %v6777 = vpop.f32.mrf.mxu0
      %v6778 = vadd.f32 %v6530, %v6777
      %v6779 = vpop.f32.mrf.mxu0
      %6780 = vmatprep.mubr.f32.mxu0 0.0
      %6781 = vmatmul.mubr.f32.gmra.mxu0 %v6584
      %v6782 = vpop.f32.mrf.mxu0
      %v6783 = vadd.f32 %v6530, %v6782
      %v6784 = vpop.f32.mrf.mxu0
      %6785 = vmatprep.mubr.f32.mxu0 0.0
      %6786 = vmatmul.mubr.f32.gmra.mxu0 %v6587
      %v6787 = vpop.f32.mrf.mxu0
      %v6788 = vadd.f32 %v6530, %v6787
      %v6789 = vpop.f32.mrf.mxu0
      %6790 = vmatprep.mubr.f32.mxu0 0.0
      %6791 = vmatmul.mubr.f32.gmra.mxu0 %v6590
      %v6792 = vpop.f32.mrf.mxu0
      %v6793 = vadd.f32 %v6530, %v6792
      %v6794 = vpop.f32.mrf.mxu0
      %6795 = vmatprep.mubr.f32.mxu0 0.0
      %6796 = vmatmul.mubr.f32.gmra.mxu0 %v6593
      %v6797 = vpop.f32.mrf.mxu0
      %v6798 = vadd.f32 %v6530, %v6797
      %v6799 = vpop.f32.mrf.mxu0
      %6800 = vmatprep.mubr.f32.mxu0 0.0
      %6801 = vmatmul.mubr.f32.gmra.mxu0 %v6596
      %v6802 = vpop.f32.mrf.mxu0
      %v6803 = vadd.f32 %v6530, %v6802
      %v6804 = vpop.f32.mrf.mxu0
      %6805 = vmatprep.mubr.f32.mxu0 0.0
      %6806 = vmatmul.mubr.f32.gmra.mxu0 %v6599
      %v6807 = vpop.f32.mrf.mxu0
      %v6808 = vadd.f32 %v6530, %v6807
      %v6809 = vpop.f32.mrf.mxu0
      %6810 = vmatprep.mubr.f32.mxu0 0.0
      %6811 = vmatmul.mubr.f32.gmra.mxu0 %v6602
      %v6812 = vpop.f32.mrf.mxu0
      %v6813 = vadd.f32 %v6530, %v6812
      %v6814 = vpop.f32.mrf.mxu0
      %6815 = vmatprep.mubr.f32.mxu0 0.0
      %6816 = vmatmul.mubr.f32.gmra.mxu0 %v6605
      %v6817 = vpop.f32.mrf.mxu0
      %v6818 = vadd.f32 %v6530, %v6817
      %v6819 = vpop.f32.mrf.mxu0
      %6820 = vmatprep.mubr.f32.mxu0 0.0
      %6821 = vmatmul.mubr.f32.gmra.mxu0 %v6608
      %v6822 = vpop.f32.mrf.mxu0
      %v6823 = vadd.f32 %v6530, %v6822
      %v6824 = vpop.f32.mrf.mxu0
      %6825 = vmatprep.mubr.f32.mxu0 0.0
      %6826 = vmatmul.mubr.f32.gmra.mxu0 %v6611
      %v6827 = vpop.f32.mrf.mxu0
      %v6828 = vadd.f32 %v6530, %v6827
      %v6829 = vpop.f32.mrf.mxu0
      %6830 = vmatprep.mubr.f32.mxu0 0.0
      %6831 = vmatmul.mubr.f32.gmra.mxu0 %v6614
      %v6832 = vpop.f32.mrf.mxu0
      %v6833 = vadd.f32 %v6530, %v6832
      %v6834 = vpop.f32.mrf.mxu0
      %6835 = vmatprep.mubr.f32.mxu0 0.0
      %6836 = vmatmul.mubr.f32.gmra.mxu0 %v6617
      %v6837 = vpop.f32.mrf.mxu0
      %v6838 = vadd.f32 %v6530, %v6837
      %v6839 = vpop.f32.mrf.mxu0
      %6840 = vmatprep.mubr.f32.mxu0 0.0
      %6841 = vmatmul.mubr.f32.gmra.mxu0 %v6620
      %v6842 = vpop.f32.mrf.mxu0
      %v6843 = vadd.f32 %v6530, %v6842
      %v6844 = vpop.f32.mrf.mxu0
      %6845 = vmatprep.mubr.f32.mxu0 0.0
      %6846 = vmatmul.mubr.f32.gmra.mxu0 %v6623
      %v6847 = vpop.f32.mrf.mxu0
      %v6848 = vadd.f32 %v6530, %v6847
      %v6849 = vpop.f32.mrf.mxu0
      %6850 = vmatprep.mubr.f32.mxu0 0.0
      %6851 = vmatmul.mubr.f32.gmra.mxu0 %v6626
      %v6852 = vpop.f32.mrf.mxu0
      %v6853 = vadd.f32 %v6530, %v6852
      %v6854 = vpop.f32.mrf.mxu0
      %6855 = vdwg.mxu0
      %vm6856 = vcmp.ge.f32.partialorder %v6698, 0.0
      %vm6857 = vcmp.ge.f32.partialorder %v6703, 0.0
      %vm6858 = vcmp.ge.f32.partialorder %v6708, 0.0
      %vm6859 = vcmp.ge.f32.partialorder %v6713, 0.0
      %vm6860 = vcmp.ge.f32.partialorder %v6718, 0.0
      %vm6861 = vcmp.ge.f32.partialorder %v6723, 0.0
      %vm6862 = vcmp.ge.f32.partialorder %v6728, 0.0
      %vm6863 = vcmp.ge.f32.partialorder %v6733, 0.0
      %vm6864 = vcmp.ge.f32.partialorder %v6738, 0.0
      %vm6865 = vcmp.ge.f32.partialorder %v6743, 0.0
      %vm6866 = vcmp.ge.f32.partialorder %v6748, 0.0
      %vm6867 = vcmp.ge.f32.partialorder %v6753, 0.0
      %vm6868 = vcmp.ge.f32.partialorder %v6758, 0.0
      %vm6869 = vcmp.ge.f32.partialorder %v6763, 0.0
      %vm6870 = vcmp.ge.f32.partialorder %v6768, 0.0
      %vm6871 = vcmp.ge.f32.partialorder %v6773, 0.0
      %vm6872 = vcmp.ge.f32.partialorder %v6778, 0.0
      %vm6873 = vcmp.ge.f32.partialorder %v6783, 0.0
      %vm6874 = vcmp.ge.f32.partialorder %v6788, 0.0
      %vm6875 = vcmp.ge.f32.partialorder %v6793, 0.0
      %vm6876 = vcmp.ge.f32.partialorder %v6798, 0.0
      %vm6877 = vcmp.ge.f32.partialorder %v6803, 0.0
      %vm6878 = vcmp.ge.f32.partialorder %v6808, 0.0
      %vm6879 = vcmp.ge.f32.partialorder %v6813, 0.0
      %vm6880 = vcmp.ge.f32.partialorder %v6818, 0.0
      %vm6881 = vcmp.ge.f32.partialorder %v6823, 0.0
      %vm6882 = vcmp.ge.f32.partialorder %v6828, 0.0
      %vm6883 = vcmp.ge.f32.partialorder %v6833, 0.0
      %vm6884 = vcmp.ge.f32.partialorder %v6838, 0.0
      %vm6885 = vcmp.ge.f32.partialorder %v6843, 0.0
      %vm6886 = vcmp.ge.f32.partialorder %v6848, 0.0
      %vm6887 = vcmp.ge.f32.partialorder %v6853, 0.0
      %v6888 = vmul.f32 %v6698, 0.01
      %v6889 = vmul.f32 %v6703, 0.01
      %v6890 = vmul.f32 %v6708, 0.01
      %v6891 = vmul.f32 %v6713, 0.01
      %v6892 = vmul.f32 %v6718, 0.01
      %v6893 = vmul.f32 %v6723, 0.01
      %v6894 = vmul.f32 %v6728, 0.01
      %v6895 = vmul.f32 %v6733, 0.01
      %v6896 = vmul.f32 %v6738, 0.01
      %v6897 = vmul.f32 %v6743, 0.01
      %v6898 = vmul.f32 %v6748, 0.01
      %v6899 = vmul.f32 %v6753, 0.01
      %v6900 = vmul.f32 %v6758, 0.01
      %v6901 = vmul.f32 %v6763, 0.01
      %v6902 = vmul.f32 %v6768, 0.01
      %v6903 = vmul.f32 %v6773, 0.01
      %v6904 = vmul.f32 %v6778, 0.01
      %v6905 = vmul.f32 %v6783, 0.01
      %v6906 = vmul.f32 %v6788, 0.01
      %v6907 = vmul.f32 %v6793, 0.01
      %v6908 = vmul.f32 %v6798, 0.01
      %v6909 = vmul.f32 %v6803, 0.01
      %v6910 = vmul.f32 %v6808, 0.01
      %v6911 = vmul.f32 %v6813, 0.01
      %v6912 = vmul.f32 %v6818, 0.01
      %v6913 = vmul.f32 %v6823, 0.01
      %v6914 = vmul.f32 %v6828, 0.01
      %v6915 = vmul.f32 %v6833, 0.01
      %v6916 = vmul.f32 %v6838, 0.01
      %v6917 = vmul.f32 %v6843, 0.01
      %v6918 = vmul.f32 %v6848, 0.01
      %v6919 = vmul.f32 %v6853, 0.01
      %v6920 = vsel %vm6856, %v6698, %v6888
      %v6921 = vsel %vm6857, %v6703, %v6889
      %v6922 = vsel %vm6858, %v6708, %v6890
      %v6923 = vsel %vm6859, %v6713, %v6891
      %v6924 = vsel %vm6860, %v6718, %v6892
      %v6925 = vsel %vm6861, %v6723, %v6893
      %v6926 = vsel %vm6862, %v6728, %v6894
      %v6927 = vsel %vm6863, %v6733, %v6895
      %v6928 = vsel %vm6864, %v6738, %v6896
      %v6929 = vsel %vm6865, %v6743, %v6897
      %v6930 = vsel %vm6866, %v6748, %v6898
      %v6931 = vsel %vm6867, %v6753, %v6899
      %v6932 = vsel %vm6868, %v6758, %v6900
      %v6933 = vsel %vm6869, %v6763, %v6901
      %v6934 = vsel %vm6870, %v6768, %v6902
      %v6935 = vsel %vm6871, %v6773, %v6903
      %v6936 = vsel %vm6872, %v6778, %v6904
      %v6937 = vsel %vm6873, %v6783, %v6905
      %v6938 = vsel %vm6874, %v6788, %v6906
      %v6939 = vsel %vm6875, %v6793, %v6907
      %v6940 = vsel %vm6876, %v6798, %v6908
      %v6941 = vsel %vm6877, %v6803, %v6909
      %v6942 = vsel %vm6878, %v6808, %v6910
      %v6943 = vsel %vm6879, %v6813, %v6911
      %v6944 = vsel %vm6880, %v6818, %v6912
      %v6945 = vsel %vm6881, %v6823, %v6913
      %v6946 = vsel %vm6882, %v6828, %v6914
      %v6947 = vsel %vm6883, %v6833, %v6915
      %v6948 = vsel %vm6884, %v6838, %v6916
      %v6949 = vsel %vm6885, %v6843, %v6917
      %v6950 = vsel %vm6886, %v6848, %v6918
      %v6951 = vsel %vm6887, %v6853, %v6919
      %s6952 = scalar_lea.vmem %s3, 280
      %v6953 = vld [vmem:[%s6952] sm:$0xff]
      %v6954 = vld [vmem:[%s6952 + $0x8] sm:$0xff]
      %v6955 = vld [vmem:[%s6952 + $0x10] sm:$0xff]
      %v6956 = vld [vmem:[%s6952 + $0x18] sm:$0xff]
      %v6957 = vld [vmem:[%s6952 + $0x20] sm:$0xff]
      %v6958 = vld [vmem:[%s6952 + $0x28] sm:$0xff]
      %v6959 = vld [vmem:[%s6952 + $0x30] sm:$0x3]
      %s6960 = scalar_lea.vmem %s4, 5
      %v6961 = vld [vmem:[%s6960] sm:$0x1]
      %v6963 = vlaneseq
      %v6964 = vshrl.u32 %v6963, 7
      %v6965 = vsub.s32 0, %v6964
      %v6966 = vrot.slane %v6961, %v6965
      %v6969 = vsel %vm843, %v6920, 0
      %v6972 = vsel %vm843, %v6921, 0
      %v6975 = vsel %vm843, %v6922, 0
      %v6978 = vsel %vm843, %v6923, 0
      %v6981 = vsel %vm843, %v6924, 0
      %v6984 = vsel %vm843, %v6925, 0
      %v6987 = vsel %vm843, %v6926, 0
      %v6990 = vsel %vm843, %v6927, 0
      %v6993 = vsel %vm843, %v6928, 0
      %v6996 = vsel %vm843, %v6929, 0
      %v6999 = vsel %vm843, %v6930, 0
      %v7002 = vsel %vm843, %v6931, 0
      %v7005 = vsel %vm843, %v6932, 0
      %v7008 = vsel %vm843, %v6933, 0
      %v7011 = vsel %vm843, %v6934, 0
      %v7014 = vsel %vm843, %v6935, 0
      %v7017 = vsel %vm843, %v6936, 0
      %v7020 = vsel %vm843, %v6937, 0
      %v7023 = vsel %vm843, %v6938, 0
      %v7026 = vsel %vm843, %v6939, 0
      %v7029 = vsel %vm843, %v6940, 0
      %v7032 = vsel %vm843, %v6941, 0
      %v7035 = vsel %vm843, %v6942, 0
      %v7038 = vsel %vm843, %v6943, 0
      %v7041 = vsel %vm843, %v6944, 0
      %v7044 = vsel %vm843, %v6945, 0
      %v7047 = vsel %vm843, %v6946, 0
      %v7050 = vsel %vm843, %v6947, 0
      %v7053 = vsel %vm843, %v6948, 0
      %v7056 = vsel %vm843, %v6949, 0
      %v7059 = vsel %vm843, %v6950, 0
      %v7062 = vsel %vm843, %v6951, 0
      %v7065 = vsel %vm940, %v6959, 0
      %7067 = vmatprep.subr.mxu0 0.0
      %7068 = vmatpush1.msra.mxu0 0.0
      %7069 = vmatprep.subr.mxu0 0.0
      %7070 = vmatpush1.msra.mxu0 0.0
      %7071 = vmatprep.subr.mxu0 0.0
      %7072 = vmatpush1.msra.mxu0 0.0
      %7073 = vmatprep.subr.mxu0 0.0
      %7074 = vmatpush1.msra.mxu0 0.0
      %7075 = vmatprep.subr.mxu0 0.0
      %7076 = vmatpush1.msra.mxu0 0.0
      %7077 = vmatprep.subr.mxu0 0.0
      %7078 = vmatpush1.msra.mxu0 0.0
      %7079 = vmatprep.subr.mxu0 0.0
      %7080 = vmatpush1.msra.mxu0 0.0
      %7081 = vmatprep.subr.mxu0 0.0
      %7082 = vmatpush1.msra.mxu0 0.0
      %7083 = vmatprep.subr.mxu0 0.0
      %7084 = vmatpush1.msra.mxu0 0.0
      %7085 = vmatprep.subr.mxu0 0.0
      %7086 = vmatpush1.msra.mxu0 %v7065
      %7087 = vmatprep.subr.mxu0 0.0
      %7088 = vmatpush1.msra.mxu0 %v6958
      %7089 = vmatprep.subr.mxu0 0.0
      %7090 = vmatpush1.msra.mxu0 %v6957
      %7091 = vmatprep.subr.mxu0 0.0
      %7092 = vmatpush1.msra.mxu0 %v6956
      %7093 = vmatprep.subr.mxu0 0.0
      %7094 = vmatpush1.msra.mxu0 %v6955
      %7095 = vmatprep.subr.mxu0 0.0
      %7096 = vmatpush1.msra.mxu0 %v6954
      %7097 = vmatprep.subr.mxu0 0.0
      %7098 = vmatpush1.msra.mxu0 %v6953
      %7099 = vmatprep.subr.mxu0 0.0
      %7100 = vmatpush2.msra.mxu0 0.0
      %7101 = vmatprep.subr.mxu0 0.0
      %7102 = vmatpush2.msra.mxu0 0.0
      %7103 = vmatprep.subr.mxu0 0.0
      %7104 = vmatpush2.msra.mxu0 0.0
      %7105 = vmatprep.subr.mxu0 0.0
      %7106 = vmatpush2.msra.mxu0 0.0
      %7107 = vmatprep.subr.mxu0 0.0
      %7108 = vmatpush2.msra.mxu0 0.0
      %7109 = vmatprep.subr.mxu0 0.0
      %7110 = vmatpush2.msra.mxu0 0.0
      %7111 = vmatprep.subr.mxu0 0.0
      %7112 = vmatpush2.msra.mxu0 0.0
      %7113 = vmatprep.subr.mxu0 0.0
      %7114 = vmatpush2.msra.mxu0 0.0
      %7115 = vmatprep.subr.mxu0 0.0
      %7116 = vmatpush2.msra.mxu0 0.0
      %7117 = vmatprep.subr.mxu0 0.0
      %7118 = vmatpush2.msra.mxu0 0.0
      %7119 = vmatprep.subr.mxu0 0.0
      %7120 = vmatpush2.msra.mxu0 0.0
      %7121 = vmatprep.subr.mxu0 0.0
      %7122 = vmatpush2.msra.mxu0 0.0
      %7123 = vmatprep.subr.mxu0 0.0
      %7124 = vmatpush2.msra.mxu0 0.0
      %7125 = vmatprep.subr.mxu0 0.0
      %7126 = vmatpush2.msra.mxu0 0.0
      %7127 = vmatprep.subr.mxu0 0.0
      %7128 = vmatpush2.msra.mxu0 0.0
      %7129 = vmatprep.subr.mxu0 0.0
      %7130 = vmatpush2.msra.mxu0 0.0
      %7131 = vmatprep.mubr.f32.mxu0 0.0
      %7132 = vmatmul.mubr.f32.gmra.mxu0 %v6969
      %v7133 = vpop.f32.mrf.mxu0
      %v7134 = vadd.f32 %v6966, %v7133
      %v7135 = vpop.f32.mrf.mxu0
      %7136 = vmatprep.mubr.f32.mxu0 0.0
      %7137 = vmatmul.mubr.f32.gmra.mxu0 %v6972
      %v7138 = vpop.f32.mrf.mxu0
      %v7139 = vadd.f32 %v6966, %v7138
      %v7140 = vpop.f32.mrf.mxu0
      %7141 = vmatprep.mubr.f32.mxu0 0.0
      %7142 = vmatmul.mubr.f32.gmra.mxu0 %v6975
      %v7143 = vpop.f32.mrf.mxu0
      %v7144 = vadd.f32 %v6966, %v7143
      %v7145 = vpop.f32.mrf.mxu0
      %7146 = vmatprep.mubr.f32.mxu0 0.0
      %7147 = vmatmul.mubr.f32.gmra.mxu0 %v6978
      %v7148 = vpop.f32.mrf.mxu0
      %v7149 = vadd.f32 %v6966, %v7148
      %v7150 = vpop.f32.mrf.mxu0
      %7151 = vmatprep.mubr.f32.mxu0 0.0
      %7152 = vmatmul.mubr.f32.gmra.mxu0 %v6981
      %v7153 = vpop.f32.mrf.mxu0
      %v7154 = vadd.f32 %v6966, %v7153
      %v7155 = vpop.f32.mrf.mxu0
      %7156 = vmatprep.mubr.f32.mxu0 0.0
      %7157 = vmatmul.mubr.f32.gmra.mxu0 %v6984
      %v7158 = vpop.f32.mrf.mxu0
      %v7159 = vadd.f32 %v6966, %v7158
      %v7160 = vpop.f32.mrf.mxu0
      %7161 = vmatprep.mubr.f32.mxu0 0.0
      %7162 = vmatmul.mubr.f32.gmra.mxu0 %v6987
      %v7163 = vpop.f32.mrf.mxu0
      %v7164 = vadd.f32 %v6966, %v7163
      %v7165 = vpop.f32.mrf.mxu0
      %7166 = vmatprep.mubr.f32.mxu0 0.0
      %7167 = vmatmul.mubr.f32.gmra.mxu0 %v6990
      %v7168 = vpop.f32.mrf.mxu0
      %v7169 = vadd.f32 %v6966, %v7168
      %v7170 = vpop.f32.mrf.mxu0
      %7171 = vmatprep.mubr.f32.mxu0 0.0
      %7172 = vmatmul.mubr.f32.gmra.mxu0 %v6993
      %v7173 = vpop.f32.mrf.mxu0
      %v7174 = vadd.f32 %v6966, %v7173
      %v7175 = vpop.f32.mrf.mxu0
      %7176 = vmatprep.mubr.f32.mxu0 0.0
      %7177 = vmatmul.mubr.f32.gmra.mxu0 %v6996
      %v7178 = vpop.f32.mrf.mxu0
      %v7179 = vadd.f32 %v6966, %v7178
      %v7180 = vpop.f32.mrf.mxu0
      %7181 = vmatprep.mubr.f32.mxu0 0.0
      %7182 = vmatmul.mubr.f32.gmra.mxu0 %v6999
      %v7183 = vpop.f32.mrf.mxu0
      %v7184 = vadd.f32 %v6966, %v7183
      %v7185 = vpop.f32.mrf.mxu0
      %7186 = vmatprep.mubr.f32.mxu0 0.0
      %7187 = vmatmul.mubr.f32.gmra.mxu0 %v7002
      %v7188 = vpop.f32.mrf.mxu0
      %v7189 = vadd.f32 %v6966, %v7188
      %v7190 = vpop.f32.mrf.mxu0
      %7191 = vmatprep.mubr.f32.mxu0 0.0
      %7192 = vmatmul.mubr.f32.gmra.mxu0 %v7005
      %v7193 = vpop.f32.mrf.mxu0
      %v7194 = vadd.f32 %v6966, %v7193
      %v7195 = vpop.f32.mrf.mxu0
      %7196 = vmatprep.mubr.f32.mxu0 0.0
      %7197 = vmatmul.mubr.f32.gmra.mxu0 %v7008
      %v7198 = vpop.f32.mrf.mxu0
      %v7199 = vadd.f32 %v6966, %v7198
      %v7200 = vpop.f32.mrf.mxu0
      %7201 = vmatprep.mubr.f32.mxu0 0.0
      %7202 = vmatmul.mubr.f32.gmra.mxu0 %v7011
      %v7203 = vpop.f32.mrf.mxu0
      %v7204 = vadd.f32 %v6966, %v7203
      %v7205 = vpop.f32.mrf.mxu0
      %7206 = vmatprep.mubr.f32.mxu0 0.0
      %7207 = vmatmul.mubr.f32.gmra.mxu0 %v7014
      %v7208 = vpop.f32.mrf.mxu0
      %v7209 = vadd.f32 %v6966, %v7208
      %v7210 = vpop.f32.mrf.mxu0
      %7211 = vmatprep.mubr.f32.mxu0 0.0
      %7212 = vmatmul.mubr.f32.gmra.mxu0 %v7017
      %v7213 = vpop.f32.mrf.mxu0
      %v7214 = vadd.f32 %v6966, %v7213
      %v7215 = vpop.f32.mrf.mxu0
      %7216 = vmatprep.mubr.f32.mxu0 0.0
      %7217 = vmatmul.mubr.f32.gmra.mxu0 %v7020
      %v7218 = vpop.f32.mrf.mxu0
      %v7219 = vadd.f32 %v6966, %v7218
      %v7220 = vpop.f32.mrf.mxu0
      %7221 = vmatprep.mubr.f32.mxu0 0.0
      %7222 = vmatmul.mubr.f32.gmra.mxu0 %v7023
      %v7223 = vpop.f32.mrf.mxu0
      %v7224 = vadd.f32 %v6966, %v7223
      %v7225 = vpop.f32.mrf.mxu0
      %7226 = vmatprep.mubr.f32.mxu0 0.0
      %7227 = vmatmul.mubr.f32.gmra.mxu0 %v7026
      %v7228 = vpop.f32.mrf.mxu0
      %v7229 = vadd.f32 %v6966, %v7228
      %v7230 = vpop.f32.mrf.mxu0
      %7231 = vmatprep.mubr.f32.mxu0 0.0
      %7232 = vmatmul.mubr.f32.gmra.mxu0 %v7029
      %v7233 = vpop.f32.mrf.mxu0
      %v7234 = vadd.f32 %v6966, %v7233
      %v7235 = vpop.f32.mrf.mxu0
      %7236 = vmatprep.mubr.f32.mxu0 0.0
      %7237 = vmatmul.mubr.f32.gmra.mxu0 %v7032
      %v7238 = vpop.f32.mrf.mxu0
      %v7239 = vadd.f32 %v6966, %v7238
      %v7240 = vpop.f32.mrf.mxu0
      %7241 = vmatprep.mubr.f32.mxu0 0.0
      %7242 = vmatmul.mubr.f32.gmra.mxu0 %v7035
      %v7243 = vpop.f32.mrf.mxu0
      %v7244 = vadd.f32 %v6966, %v7243
      %v7245 = vpop.f32.mrf.mxu0
      %7246 = vmatprep.mubr.f32.mxu0 0.0
      %7247 = vmatmul.mubr.f32.gmra.mxu0 %v7038
      %v7248 = vpop.f32.mrf.mxu0
      %v7249 = vadd.f32 %v6966, %v7248
      %v7250 = vpop.f32.mrf.mxu0
      %7251 = vmatprep.mubr.f32.mxu0 0.0
      %7252 = vmatmul.mubr.f32.gmra.mxu0 %v7041
      %v7253 = vpop.f32.mrf.mxu0
      %v7254 = vadd.f32 %v6966, %v7253
      %v7255 = vpop.f32.mrf.mxu0
      %7256 = vmatprep.mubr.f32.mxu0 0.0
      %7257 = vmatmul.mubr.f32.gmra.mxu0 %v7044
      %v7258 = vpop.f32.mrf.mxu0
      %v7259 = vadd.f32 %v6966, %v7258
      %v7260 = vpop.f32.mrf.mxu0
      %7261 = vmatprep.mubr.f32.mxu0 0.0
      %7262 = vmatmul.mubr.f32.gmra.mxu0 %v7047
      %v7263 = vpop.f32.mrf.mxu0
      %v7264 = vadd.f32 %v6966, %v7263
      %v7265 = vpop.f32.mrf.mxu0
      %7266 = vmatprep.mubr.f32.mxu0 0.0
      %7267 = vmatmul.mubr.f32.gmra.mxu0 %v7050
      %v7268 = vpop.f32.mrf.mxu0
      %v7269 = vadd.f32 %v6966, %v7268
      %v7270 = vpop.f32.mrf.mxu0
      %7271 = vmatprep.mubr.f32.mxu0 0.0
      %7272 = vmatmul.mubr.f32.gmra.mxu0 %v7053
      %v7273 = vpop.f32.mrf.mxu0
      %v7274 = vadd.f32 %v6966, %v7273
      %v7275 = vpop.f32.mrf.mxu0
      %7276 = vmatprep.mubr.f32.mxu0 0.0
      %7277 = vmatmul.mubr.f32.gmra.mxu0 %v7056
      %v7278 = vpop.f32.mrf.mxu0
      %v7279 = vadd.f32 %v6966, %v7278
      %v7280 = vpop.f32.mrf.mxu0
      %7281 = vmatprep.mubr.f32.mxu0 0.0
      %7282 = vmatmul.mubr.f32.gmra.mxu0 %v7059
      %v7283 = vpop.f32.mrf.mxu0
      %v7284 = vadd.f32 %v6966, %v7283
      %v7285 = vpop.f32.mrf.mxu0
      %7286 = vmatprep.mubr.f32.mxu0 0.0
      %7287 = vmatmul.mubr.f32.gmra.mxu0 %v7062
      %v7288 = vpop.f32.mrf.mxu0
      %v7289 = vadd.f32 %v6966, %v7288
      %v7290 = vpop.f32.mrf.mxu0
      %7291 = vdwg.mxu0
      %vm7292 = vcmp.ge.f32.partialorder %v7134, 0.0
      %vm7293 = vcmp.ge.f32.partialorder %v7139, 0.0
      %vm7294 = vcmp.ge.f32.partialorder %v7144, 0.0
      %vm7295 = vcmp.ge.f32.partialorder %v7149, 0.0
      %vm7296 = vcmp.ge.f32.partialorder %v7154, 0.0
      %vm7297 = vcmp.ge.f32.partialorder %v7159, 0.0
      %vm7298 = vcmp.ge.f32.partialorder %v7164, 0.0
      %vm7299 = vcmp.ge.f32.partialorder %v7169, 0.0
      %vm7300 = vcmp.ge.f32.partialorder %v7174, 0.0
      %vm7301 = vcmp.ge.f32.partialorder %v7179, 0.0
      %vm7302 = vcmp.ge.f32.partialorder %v7184, 0.0
      %vm7303 = vcmp.ge.f32.partialorder %v7189, 0.0
      %vm7304 = vcmp.ge.f32.partialorder %v7194, 0.0
      %vm7305 = vcmp.ge.f32.partialorder %v7199, 0.0
      %vm7306 = vcmp.ge.f32.partialorder %v7204, 0.0
      %vm7307 = vcmp.ge.f32.partialorder %v7209, 0.0
      %vm7308 = vcmp.ge.f32.partialorder %v7214, 0.0
      %vm7309 = vcmp.ge.f32.partialorder %v7219, 0.0
      %vm7310 = vcmp.ge.f32.partialorder %v7224, 0.0
      %vm7311 = vcmp.ge.f32.partialorder %v7229, 0.0
      %vm7312 = vcmp.ge.f32.partialorder %v7234, 0.0
      %vm7313 = vcmp.ge.f32.partialorder %v7239, 0.0
      %vm7314 = vcmp.ge.f32.partialorder %v7244, 0.0
      %vm7315 = vcmp.ge.f32.partialorder %v7249, 0.0
      %vm7316 = vcmp.ge.f32.partialorder %v7254, 0.0
      %vm7317 = vcmp.ge.f32.partialorder %v7259, 0.0
      %vm7318 = vcmp.ge.f32.partialorder %v7264, 0.0
      %vm7319 = vcmp.ge.f32.partialorder %v7269, 0.0
      %vm7320 = vcmp.ge.f32.partialorder %v7274, 0.0
      %vm7321 = vcmp.ge.f32.partialorder %v7279, 0.0
      %vm7322 = vcmp.ge.f32.partialorder %v7284, 0.0
      %vm7323 = vcmp.ge.f32.partialorder %v7289, 0.0
      %v7324 = vmul.f32 %v7134, 0.01
      %v7325 = vmul.f32 %v7139, 0.01
      %v7326 = vmul.f32 %v7144, 0.01
      %v7327 = vmul.f32 %v7149, 0.01
      %v7328 = vmul.f32 %v7154, 0.01
      %v7329 = vmul.f32 %v7159, 0.01
      %v7330 = vmul.f32 %v7164, 0.01
      %v7331 = vmul.f32 %v7169, 0.01
      %v7332 = vmul.f32 %v7174, 0.01
      %v7333 = vmul.f32 %v7179, 0.01
      %v7334 = vmul.f32 %v7184, 0.01
      %v7335 = vmul.f32 %v7189, 0.01
      %v7336 = vmul.f32 %v7194, 0.01
      %v7337 = vmul.f32 %v7199, 0.01
      %v7338 = vmul.f32 %v7204, 0.01
      %v7339 = vmul.f32 %v7209, 0.01
      %v7340 = vmul.f32 %v7214, 0.01
      %v7341 = vmul.f32 %v7219, 0.01
      %v7342 = vmul.f32 %v7224, 0.01
      %v7343 = vmul.f32 %v7229, 0.01
      %v7344 = vmul.f32 %v7234, 0.01
      %v7345 = vmul.f32 %v7239, 0.01
      %v7346 = vmul.f32 %v7244, 0.01
      %v7347 = vmul.f32 %v7249, 0.01
      %v7348 = vmul.f32 %v7254, 0.01
      %v7349 = vmul.f32 %v7259, 0.01
      %v7350 = vmul.f32 %v7264, 0.01
      %v7351 = vmul.f32 %v7269, 0.01
      %v7352 = vmul.f32 %v7274, 0.01
      %v7353 = vmul.f32 %v7279, 0.01
      %v7354 = vmul.f32 %v7284, 0.01
      %v7355 = vmul.f32 %v7289, 0.01
      %v7356 = vsel %vm7292, %v7134, %v7324
      %v7357 = vsel %vm7293, %v7139, %v7325
      %v7358 = vsel %vm7294, %v7144, %v7326
      %v7359 = vsel %vm7295, %v7149, %v7327
      %v7360 = vsel %vm7296, %v7154, %v7328
      %v7361 = vsel %vm7297, %v7159, %v7329
      %v7362 = vsel %vm7298, %v7164, %v7330
      %v7363 = vsel %vm7299, %v7169, %v7331
      %v7364 = vsel %vm7300, %v7174, %v7332
      %v7365 = vsel %vm7301, %v7179, %v7333
      %v7366 = vsel %vm7302, %v7184, %v7334
      %v7367 = vsel %vm7303, %v7189, %v7335
      %v7368 = vsel %vm7304, %v7194, %v7336
      %v7369 = vsel %vm7305, %v7199, %v7337
      %v7370 = vsel %vm7306, %v7204, %v7338
      %v7371 = vsel %vm7307, %v7209, %v7339
      %v7372 = vsel %vm7308, %v7214, %v7340
      %v7373 = vsel %vm7309, %v7219, %v7341
      %v7374 = vsel %vm7310, %v7224, %v7342
      %v7375 = vsel %vm7311, %v7229, %v7343
      %v7376 = vsel %vm7312, %v7234, %v7344
      %v7377 = vsel %vm7313, %v7239, %v7345
      %v7378 = vsel %vm7314, %v7244, %v7346
      %v7379 = vsel %vm7315, %v7249, %v7347
      %v7380 = vsel %vm7316, %v7254, %v7348
      %v7381 = vsel %vm7317, %v7259, %v7349
      %v7382 = vsel %vm7318, %v7264, %v7350
      %v7383 = vsel %vm7319, %v7269, %v7351
      %v7384 = vsel %vm7320, %v7274, %v7352
      %v7385 = vsel %vm7321, %v7279, %v7353
      %v7386 = vsel %vm7322, %v7284, %v7354
      %v7387 = vsel %vm7323, %v7289, %v7355
      %v7389 = vsel %vm1265, %v7356, 0
      %v7392 = vsel %vm1265, %v7357, 0
      %v7395 = vsel %vm1265, %v7358, 0
      %v7398 = vsel %vm1265, %v7359, 0
      %v7401 = vsel %vm1265, %v7360, 0
      %v7404 = vsel %vm1265, %v7361, 0
      %v7407 = vsel %vm1265, %v7362, 0
      %v7410 = vsel %vm1265, %v7363, 0
      %v7413 = vsel %vm1265, %v7364, 0
      %v7416 = vsel %vm1265, %v7365, 0
      %v7419 = vsel %vm1265, %v7366, 0
      %v7422 = vsel %vm1265, %v7367, 0
      %v7425 = vsel %vm1265, %v7368, 0
      %v7428 = vsel %vm1265, %v7369, 0
      %v7431 = vsel %vm1265, %v7370, 0
      %v7434 = vsel %vm1265, %v7371, 0
      %v7437 = vsel %vm1265, %v7372, 0
      %v7440 = vsel %vm1265, %v7373, 0
      %v7443 = vsel %vm1265, %v7374, 0
      %v7446 = vsel %vm1265, %v7375, 0
      %v7449 = vsel %vm1265, %v7376, 0
      %v7452 = vsel %vm1265, %v7377, 0
      %v7455 = vsel %vm1265, %v7378, 0
      %v7458 = vsel %vm1265, %v7379, 0
      %v7461 = vsel %vm1265, %v7380, 0
      %v7464 = vsel %vm1265, %v7381, 0
      %v7467 = vsel %vm1265, %v7382, 0
      %v7470 = vsel %vm1265, %v7383, 0
      %v7473 = vsel %vm1265, %v7384, 0
      %v7476 = vsel %vm1265, %v7385, 0
      %v7479 = vsel %vm1265, %v7386, 0
      %v7482 = vsel %vm1265, %v7387, 0
      %7484 = vmatprep.subr.mxu0 0.0
      %7485 = vmatpush1.msra.mxu0 0.0
      %7486 = vmatprep.subr.mxu0 0.0
      %7487 = vmatpush1.msra.mxu0 0.0
      %7488 = vmatprep.subr.mxu0 0.0
      %7489 = vmatpush1.msra.mxu0 %v5042
      %7490 = vmatprep.subr.mxu0 0.0
      %7491 = vmatpush1.msra.mxu0 %v4076
      %7492 = vmatprep.subr.mxu0 0.0
      %7493 = vmatpush1.msra.mxu0 %v4075
      %7494 = vmatprep.subr.mxu0 0.0
      %7495 = vmatpush1.msra.mxu0 %v4074
      %7496 = vmatprep.subr.mxu0 0.0
      %7497 = vmatpush1.msra.mxu0 %v4073
      %7498 = vmatprep.subr.mxu0 0.0
      %7499 = vmatpush1.msra.mxu0 %v4072
      %7500 = vmatprep.subr.mxu0 0.0
      %7501 = vmatpush1.msra.mxu0 %v4071
      %7502 = vmatprep.subr.mxu0 0.0
      %7503 = vmatpush1.msra.mxu0 %v4070
      %7504 = vmatprep.subr.mxu0 0.0
      %7505 = vmatpush1.msra.mxu0 %v4069
      %7506 = vmatprep.subr.mxu0 0.0
      %7507 = vmatpush1.msra.mxu0 %v4068
      %7508 = vmatprep.subr.mxu0 0.0
      %7509 = vmatpush1.msra.mxu0 %v4067
      %7510 = vmatprep.subr.mxu0 0.0
      %7511 = vmatpush1.msra.mxu0 %v4066
      %7512 = vmatprep.subr.mxu0 0.0
      %7513 = vmatpush1.msra.mxu0 %v4065
      %7514 = vmatprep.subr.mxu0 0.0
      %7515 = vmatpush1.msra.mxu0 %v4064
      %7516 = vmatprep.subr.mxu0 0.0
      %7517 = vmatpush2.msra.mxu0 0.0
      %7518 = vmatprep.subr.mxu0 0.0
      %7519 = vmatpush2.msra.mxu0 0.0
      %7520 = vmatprep.subr.mxu0 0.0
      %7521 = vmatpush2.msra.mxu0 0.0
      %7522 = vmatprep.subr.mxu0 0.0
      %7523 = vmatpush2.msra.mxu0 0.0
      %7524 = vmatprep.subr.mxu0 0.0
      %7525 = vmatpush2.msra.mxu0 0.0
      %7526 = vmatprep.subr.mxu0 0.0
      %7527 = vmatpush2.msra.mxu0 0.0
      %7528 = vmatprep.subr.mxu0 0.0
      %7529 = vmatpush2.msra.mxu0 0.0
      %7530 = vmatprep.subr.mxu0 0.0
      %7531 = vmatpush2.msra.mxu0 0.0
      %7532 = vmatprep.subr.mxu0 0.0
      %7533 = vmatpush2.msra.mxu0 0.0
      %7534 = vmatprep.subr.mxu0 0.0
      %7535 = vmatpush2.msra.mxu0 0.0
      %7536 = vmatprep.subr.mxu0 0.0
      %7537 = vmatpush2.msra.mxu0 0.0
      %7538 = vmatprep.subr.mxu0 0.0
      %7539 = vmatpush2.msra.mxu0 0.0
      %7540 = vmatprep.subr.mxu0 0.0
      %7541 = vmatpush2.msra.mxu0 0.0
      %7542 = vmatprep.subr.mxu0 0.0
      %7543 = vmatpush2.msra.mxu0 0.0
      %7544 = vmatprep.subr.mxu0 0.0
      %7545 = vmatpush2.msra.mxu0 0.0
      %7546 = vmatprep.subr.mxu0 0.0
      %7547 = vmatpush2.msra.mxu0 0.0
      %7548 = vmatprep.mubr.f32.mxu0 0.0
      %7549 = vmatmul.mubr.f32.gmra.mxu0 %v7389
      %v7550 = vpop.f32.mrf.mxu0
      %v7551 = vadd.f32 0.0, %v7550
      %v7552 = vpop.f32.mrf.mxu0
      %7553 = vmatprep.mubr.f32.mxu0 0.0
      %7554 = vmatmul.mubr.f32.gmra.mxu0 %v7392
      %v7555 = vpop.f32.mrf.mxu0
      %v7556 = vadd.f32 0.0, %v7555
      %v7557 = vpop.f32.mrf.mxu0
      %7558 = vmatprep.mubr.f32.mxu0 0.0
      %7559 = vmatmul.mubr.f32.gmra.mxu0 %v7395
      %v7560 = vpop.f32.mrf.mxu0
      %v7561 = vadd.f32 0.0, %v7560
      %v7562 = vpop.f32.mrf.mxu0
      %7563 = vmatprep.mubr.f32.mxu0 0.0
      %7564 = vmatmul.mubr.f32.gmra.mxu0 %v7398
      %v7565 = vpop.f32.mrf.mxu0
      %v7566 = vadd.f32 0.0, %v7565
      %v7567 = vpop.f32.mrf.mxu0
      %7568 = vmatprep.mubr.f32.mxu0 0.0
      %7569 = vmatmul.mubr.f32.gmra.mxu0 %v7401
      %v7570 = vpop.f32.mrf.mxu0
      %v7571 = vadd.f32 0.0, %v7570
      %v7572 = vpop.f32.mrf.mxu0
      %7573 = vmatprep.mubr.f32.mxu0 0.0
      %7574 = vmatmul.mubr.f32.gmra.mxu0 %v7404
      %v7575 = vpop.f32.mrf.mxu0
      %v7576 = vadd.f32 0.0, %v7575
      %v7577 = vpop.f32.mrf.mxu0
      %7578 = vmatprep.mubr.f32.mxu0 0.0
      %7579 = vmatmul.mubr.f32.gmra.mxu0 %v7407
      %v7580 = vpop.f32.mrf.mxu0
      %v7581 = vadd.f32 0.0, %v7580
      %v7582 = vpop.f32.mrf.mxu0
      %7583 = vmatprep.mubr.f32.mxu0 0.0
      %7584 = vmatmul.mubr.f32.gmra.mxu0 %v7410
      %v7585 = vpop.f32.mrf.mxu0
      %v7586 = vadd.f32 0.0, %v7585
      %v7587 = vpop.f32.mrf.mxu0
      %7588 = vmatprep.mubr.f32.mxu0 0.0
      %7589 = vmatmul.mubr.f32.gmra.mxu0 %v7413
      %v7590 = vpop.f32.mrf.mxu0
      %v7591 = vadd.f32 0.0, %v7590
      %v7592 = vpop.f32.mrf.mxu0
      %7593 = vmatprep.mubr.f32.mxu0 0.0
      %7594 = vmatmul.mubr.f32.gmra.mxu0 %v7416
      %v7595 = vpop.f32.mrf.mxu0
      %v7596 = vadd.f32 0.0, %v7595
      %v7597 = vpop.f32.mrf.mxu0
      %7598 = vmatprep.mubr.f32.mxu0 0.0
      %7599 = vmatmul.mubr.f32.gmra.mxu0 %v7419
      %v7600 = vpop.f32.mrf.mxu0
      %v7601 = vadd.f32 0.0, %v7600
      %v7602 = vpop.f32.mrf.mxu0
      %7603 = vmatprep.mubr.f32.mxu0 0.0
      %7604 = vmatmul.mubr.f32.gmra.mxu0 %v7422
      %v7605 = vpop.f32.mrf.mxu0
      %v7606 = vadd.f32 0.0, %v7605
      %v7607 = vpop.f32.mrf.mxu0
      %7608 = vmatprep.mubr.f32.mxu0 0.0
      %7609 = vmatmul.mubr.f32.gmra.mxu0 %v7425
      %v7610 = vpop.f32.mrf.mxu0
      %v7611 = vadd.f32 0.0, %v7610
      %v7612 = vpop.f32.mrf.mxu0
      %7613 = vmatprep.mubr.f32.mxu0 0.0
      %7614 = vmatmul.mubr.f32.gmra.mxu0 %v7428
      %v7615 = vpop.f32.mrf.mxu0
      %v7616 = vadd.f32 0.0, %v7615
      %v7617 = vpop.f32.mrf.mxu0
      %7618 = vmatprep.mubr.f32.mxu0 0.0
      %7619 = vmatmul.mubr.f32.gmra.mxu0 %v7431
      %v7620 = vpop.f32.mrf.mxu0
      %v7621 = vadd.f32 0.0, %v7620
      %v7622 = vpop.f32.mrf.mxu0
      %7623 = vmatprep.mubr.f32.mxu0 0.0
      %7624 = vmatmul.mubr.f32.gmra.mxu0 %v7434
      %v7625 = vpop.f32.mrf.mxu0
      %v7626 = vadd.f32 0.0, %v7625
      %v7627 = vpop.f32.mrf.mxu0
      %7628 = vmatprep.mubr.f32.mxu0 0.0
      %7629 = vmatmul.mubr.f32.gmra.mxu0 %v7437
      %v7630 = vpop.f32.mrf.mxu0
      %v7631 = vadd.f32 0.0, %v7630
      %v7632 = vpop.f32.mrf.mxu0
      %7633 = vmatprep.mubr.f32.mxu0 0.0
      %7634 = vmatmul.mubr.f32.gmra.mxu0 %v7440
      %v7635 = vpop.f32.mrf.mxu0
      %v7636 = vadd.f32 0.0, %v7635
      %v7637 = vpop.f32.mrf.mxu0
      %7638 = vmatprep.mubr.f32.mxu0 0.0
      %7639 = vmatmul.mubr.f32.gmra.mxu0 %v7443
      %v7640 = vpop.f32.mrf.mxu0
      %v7641 = vadd.f32 0.0, %v7640
      %v7642 = vpop.f32.mrf.mxu0
      %7643 = vmatprep.mubr.f32.mxu0 0.0
      %7644 = vmatmul.mubr.f32.gmra.mxu0 %v7446
      %v7645 = vpop.f32.mrf.mxu0
      %v7646 = vadd.f32 0.0, %v7645
      %v7647 = vpop.f32.mrf.mxu0
      %7648 = vmatprep.mubr.f32.mxu0 0.0
      %7649 = vmatmul.mubr.f32.gmra.mxu0 %v7449
      %v7650 = vpop.f32.mrf.mxu0
      %v7651 = vadd.f32 0.0, %v7650
      %v7652 = vpop.f32.mrf.mxu0
      %7653 = vmatprep.mubr.f32.mxu0 0.0
      %7654 = vmatmul.mubr.f32.gmra.mxu0 %v7452
      %v7655 = vpop.f32.mrf.mxu0
      %v7656 = vadd.f32 0.0, %v7655
      %v7657 = vpop.f32.mrf.mxu0
      %7658 = vmatprep.mubr.f32.mxu0 0.0
      %7659 = vmatmul.mubr.f32.gmra.mxu0 %v7455
      %v7660 = vpop.f32.mrf.mxu0
      %v7661 = vadd.f32 0.0, %v7660
      %v7662 = vpop.f32.mrf.mxu0
      %7663 = vmatprep.mubr.f32.mxu0 0.0
      %7664 = vmatmul.mubr.f32.gmra.mxu0 %v7458
      %v7665 = vpop.f32.mrf.mxu0
      %v7666 = vadd.f32 0.0, %v7665
      %v7667 = vpop.f32.mrf.mxu0
      %7668 = vmatprep.mubr.f32.mxu0 0.0
      %7669 = vmatmul.mubr.f32.gmra.mxu0 %v7461
      %v7670 = vpop.f32.mrf.mxu0
      %v7671 = vadd.f32 0.0, %v7670
      %v7672 = vpop.f32.mrf.mxu0
      %7673 = vmatprep.mubr.f32.mxu0 0.0
      %7674 = vmatmul.mubr.f32.gmra.mxu0 %v7464
      %v7675 = vpop.f32.mrf.mxu0
      %v7676 = vadd.f32 0.0, %v7675
      %v7677 = vpop.f32.mrf.mxu0
      %7678 = vmatprep.mubr.f32.mxu0 0.0
      %7679 = vmatmul.mubr.f32.gmra.mxu0 %v7467
      %v7680 = vpop.f32.mrf.mxu0
      %v7681 = vadd.f32 0.0, %v7680
      %v7682 = vpop.f32.mrf.mxu0
      %7683 = vmatprep.mubr.f32.mxu0 0.0
      %7684 = vmatmul.mubr.f32.gmra.mxu0 %v7470
      %v7685 = vpop.f32.mrf.mxu0
      %v7686 = vadd.f32 0.0, %v7685
      %v7687 = vpop.f32.mrf.mxu0
      %7688 = vmatprep.mubr.f32.mxu0 0.0
      %7689 = vmatmul.mubr.f32.gmra.mxu0 %v7473
      %v7690 = vpop.f32.mrf.mxu0
      %v7691 = vadd.f32 0.0, %v7690
      %v7692 = vpop.f32.mrf.mxu0
      %7693 = vmatprep.mubr.f32.mxu0 0.0
      %7694 = vmatmul.mubr.f32.gmra.mxu0 %v7476
      %v7695 = vpop.f32.mrf.mxu0
      %v7696 = vadd.f32 0.0, %v7695
      %v7697 = vpop.f32.mrf.mxu0
      %7698 = vmatprep.mubr.f32.mxu0 0.0
      %7699 = vmatmul.mubr.f32.gmra.mxu0 %v7479
      %v7700 = vpop.f32.mrf.mxu0
      %v7701 = vadd.f32 0.0, %v7700
      %v7702 = vpop.f32.mrf.mxu0
      %7703 = vmatprep.mubr.f32.mxu0 0.0
      %7704 = vmatmul.mubr.f32.gmra.mxu0 %v7482
      %v7705 = vpop.f32.mrf.mxu0
      %v7706 = vadd.f32 0.0, %v7705
      %v7707 = vpop.f32.mrf.mxu0
      %7708 = vdwg.mxu0
      %v7709 = vadd.f32 %v6489, %v7551
      %v7710 = vadd.f32 %v6490, %v7556
      %v7711 = vadd.f32 %v6491, %v7561
      %v7712 = vadd.f32 %v6492, %v7566
      %v7713 = vadd.f32 %v6493, %v7571
      %v7714 = vadd.f32 %v6494, %v7576
      %v7715 = vadd.f32 %v6495, %v7581
      %v7716 = vadd.f32 %v6496, %v7586
      %v7717 = vadd.f32 %v6497, %v7591
      %v7718 = vadd.f32 %v6498, %v7596
      %v7719 = vadd.f32 %v6499, %v7601
      %v7720 = vadd.f32 %v6500, %v7606
      %v7721 = vadd.f32 %v6501, %v7611
      %v7722 = vadd.f32 %v6502, %v7616
      %v7723 = vadd.f32 %v6503, %v7621
      %v7724 = vadd.f32 %v6504, %v7626
      %v7725 = vadd.f32 %v6505, %v7631
      %v7726 = vadd.f32 %v6506, %v7636
      %v7727 = vadd.f32 %v6507, %v7641
      %v7728 = vadd.f32 %v6508, %v7646
      %v7729 = vadd.f32 %v6509, %v7651
      %v7730 = vadd.f32 %v6510, %v7656
      %v7731 = vadd.f32 %v6511, %v7661
      %v7732 = vadd.f32 %v6512, %v7666
      %v7733 = vadd.f32 %v6513, %v7671
      %v7734 = vadd.f32 %v6514, %v7676
      %v7735 = vadd.f32 %v6515, %v7681
      %v7736 = vadd.f32 %v6516, %v7686
      %v7737 = vadd.f32 %v6517, %v7691
      %v7738 = vadd.f32 %v6518, %v7696
      %v7739 = vadd.f32 %v6519, %v7701
      %v7740 = vadd.f32 %v6520, %v7706
      %s7741 = scalar_lea.vmem %s5, 224
      %v7742 = vld [vmem:[%s7741] sm:$0xff]
      %v7743 = vld [vmem:[%s7741 + $0x8] sm:$0xff]
      %v7744 = vld [vmem:[%s7741 + $0x10] sm:$0xff]
      %v7745 = vld [vmem:[%s7741 + $0x18] sm:$0xff]
      %v7746 = vld [vmem:[%s7741 + $0x20] sm:$0xff]
      %v7747 = vld [vmem:[%s7741 + $0x28] sm:$0xff]
      %v7748 = vld [vmem:[%s7741 + $0x30] sm:$0xff]
      %v7749 = vld [vmem:[%s7741 + $0x38] sm:$0xff]
      %v7750 = vld [vmem:[%s7741 + $0x40] sm:$0xff]
      %v7751 = vld [vmem:[%s7741 + $0x48] sm:$0xff]
      %v7752 = vld [vmem:[%s7741 + $0x50] sm:$0xff]
      %v7753 = vld [vmem:[%s7741 + $0x58] sm:$0xff]
      %v7754 = vld [vmem:[%s7741 + $0x60] sm:$0xff]
      %v7755 = vld [vmem:[%s7741 + $0x68] sm:$0x1]
      %s7756 = scalar_lea.vmem %s1, 96
      %v7757 = vld [vmem:[%s7756] sm:$0xff]
      %v7758 = vld [vmem:[%s7756 + $0x8] sm:$0x7f]
      %s7759 = scalar_lea.vmem %s2, 6
      %v7760 = vld [vmem:[%s7759] sm:$0x1]
      %v7762 = vlaneseq
      %v7763 = vshrl.u32 %v7762, 7
      %v7764 = vsub.s32 0, %v7763
      %v7765 = vrot.slane %v7760, %v7764
      %v7768 = vsel %vm255, %v7709, 0
      %v7771 = vsel %vm255, %v7710, 0
      %v7774 = vsel %vm255, %v7711, 0
      %v7777 = vsel %vm255, %v7712, 0
      %v7780 = vsel %vm255, %v7713, 0
      %v7783 = vsel %vm255, %v7714, 0
      %v7786 = vsel %vm255, %v7715, 0
      %v7789 = vsel %vm255, %v7716, 0
      %v7792 = vsel %vm255, %v7717, 0
      %v7795 = vsel %vm255, %v7718, 0
      %v7798 = vsel %vm255, %v7719, 0
      %v7801 = vsel %vm255, %v7720, 0
      %v7804 = vsel %vm255, %v7721, 0
      %v7807 = vsel %vm255, %v7722, 0
      %v7810 = vsel %vm255, %v7723, 0
      %v7813 = vsel %vm255, %v7724, 0
      %v7816 = vsel %vm255, %v7725, 0
      %v7819 = vsel %vm255, %v7726, 0
      %v7822 = vsel %vm255, %v7727, 0
      %v7825 = vsel %vm255, %v7728, 0
      %v7828 = vsel %vm255, %v7729, 0
      %v7831 = vsel %vm255, %v7730, 0
      %v7834 = vsel %vm255, %v7731, 0
      %v7837 = vsel %vm255, %v7732, 0
      %v7840 = vsel %vm255, %v7733, 0
      %v7843 = vsel %vm255, %v7734, 0
      %v7846 = vsel %vm255, %v7735, 0
      %v7849 = vsel %vm255, %v7736, 0
      %v7852 = vsel %vm255, %v7737, 0
      %v7855 = vsel %vm255, %v7738, 0
      %v7858 = vsel %vm255, %v7739, 0
      %v7861 = vsel %vm255, %v7740, 0
      %v7864 = vsel %vm504, %v7758, 0
      %7866 = vmatprep.subr.mxu0 0.0
      %7867 = vmatpush1.msra.mxu0 0.0
      %7868 = vmatprep.subr.mxu0 0.0
      %7869 = vmatpush1.msra.mxu0 0.0
      %7870 = vmatprep.subr.mxu0 0.0
      %7871 = vmatpush1.msra.mxu0 0.0
      %7872 = vmatprep.subr.mxu0 0.0
      %7873 = vmatpush1.msra.mxu0 0.0
      %7874 = vmatprep.subr.mxu0 0.0
      %7875 = vmatpush1.msra.mxu0 0.0
      %7876 = vmatprep.subr.mxu0 0.0
      %7877 = vmatpush1.msra.mxu0 0.0
      %7878 = vmatprep.subr.mxu0 0.0
      %7879 = vmatpush1.msra.mxu0 0.0
      %7880 = vmatprep.subr.mxu0 0.0
      %7881 = vmatpush1.msra.mxu0 0.0
      %7882 = vmatprep.subr.mxu0 0.0
      %7883 = vmatpush1.msra.mxu0 0.0
      %7884 = vmatprep.subr.mxu0 0.0
      %7885 = vmatpush1.msra.mxu0 0.0
      %7886 = vmatprep.subr.mxu0 0.0
      %7887 = vmatpush1.msra.mxu0 0.0
      %7888 = vmatprep.subr.mxu0 0.0
      %7889 = vmatpush1.msra.mxu0 0.0
      %7890 = vmatprep.subr.mxu0 0.0
      %7891 = vmatpush1.msra.mxu0 0.0
      %7892 = vmatprep.subr.mxu0 0.0
      %7893 = vmatpush1.msra.mxu0 0.0
      %7894 = vmatprep.subr.mxu0 0.0
      %7895 = vmatpush1.msra.mxu0 %v7864
      %7896 = vmatprep.subr.mxu0 0.0
      %7897 = vmatpush1.msra.mxu0 %v7757
      %7898 = vmatprep.subr.mxu0 0.0
      %7899 = vmatpush2.msra.mxu0 0.0
      %7900 = vmatprep.subr.mxu0 0.0
      %7901 = vmatpush2.msra.mxu0 0.0
      %7902 = vmatprep.subr.mxu0 0.0
      %7903 = vmatpush2.msra.mxu0 0.0
      %7904 = vmatprep.subr.mxu0 0.0
      %7905 = vmatpush2.msra.mxu0 0.0
      %7906 = vmatprep.subr.mxu0 0.0
      %7907 = vmatpush2.msra.mxu0 0.0
      %7908 = vmatprep.subr.mxu0 0.0
      %7909 = vmatpush2.msra.mxu0 0.0
      %7910 = vmatprep.subr.mxu0 0.0
      %7911 = vmatpush2.msra.mxu0 0.0
      %7912 = vmatprep.subr.mxu0 0.0
      %7913 = vmatpush2.msra.mxu0 0.0
      %7914 = vmatprep.subr.mxu0 0.0
      %7915 = vmatpush2.msra.mxu0 0.0
      %7916 = vmatprep.subr.mxu0 0.0
      %7917 = vmatpush2.msra.mxu0 0.0
      %7918 = vmatprep.subr.mxu0 0.0
      %7919 = vmatpush2.msra.mxu0 0.0
      %7920 = vmatprep.subr.mxu0 0.0
      %7921 = vmatpush2.msra.mxu0 0.0
      %7922 = vmatprep.subr.mxu0 0.0
      %7923 = vmatpush2.msra.mxu0 0.0
      %7924 = vmatprep.subr.mxu0 0.0
      %7925 = vmatpush2.msra.mxu0 0.0
      %7926 = vmatprep.subr.mxu0 0.0
      %7927 = vmatpush2.msra.mxu0 0.0
      %7928 = vmatprep.subr.mxu0 0.0
      %7929 = vmatpush2.msra.mxu0 0.0
      %7930 = vmatprep.mubr.f32.mxu0 0.0
      %7931 = vmatmul.mubr.f32.gmra.mxu0 %v7768
      %v7932 = vpop.f32.mrf.mxu0
      %v7933 = vadd.f32 %v7765, %v7932
      %v7934 = vpop.f32.mrf.mxu0
      %7935 = vmatprep.mubr.f32.mxu0 0.0
      %7936 = vmatmul.mubr.f32.gmra.mxu0 %v7771
      %v7937 = vpop.f32.mrf.mxu0
      %v7938 = vadd.f32 %v7765, %v7937
      %v7939 = vpop.f32.mrf.mxu0
      %7940 = vmatprep.mubr.f32.mxu0 0.0
      %7941 = vmatmul.mubr.f32.gmra.mxu0 %v7774
      %v7942 = vpop.f32.mrf.mxu0
      %v7943 = vadd.f32 %v7765, %v7942
      %v7944 = vpop.f32.mrf.mxu0
      %7945 = vmatprep.mubr.f32.mxu0 0.0
      %7946 = vmatmul.mubr.f32.gmra.mxu0 %v7777
      %v7947 = vpop.f32.mrf.mxu0
      %v7948 = vadd.f32 %v7765, %v7947
      %v7949 = vpop.f32.mrf.mxu0
      %7950 = vmatprep.mubr.f32.mxu0 0.0
      %7951 = vmatmul.mubr.f32.gmra.mxu0 %v7780
      %v7952 = vpop.f32.mrf.mxu0
      %v7953 = vadd.f32 %v7765, %v7952
      %v7954 = vpop.f32.mrf.mxu0
      %7955 = vmatprep.mubr.f32.mxu0 0.0
      %7956 = vmatmul.mubr.f32.gmra.mxu0 %v7783
      %v7957 = vpop.f32.mrf.mxu0
      %v7958 = vadd.f32 %v7765, %v7957
      %v7959 = vpop.f32.mrf.mxu0
      %7960 = vmatprep.mubr.f32.mxu0 0.0
      %7961 = vmatmul.mubr.f32.gmra.mxu0 %v7786
      %v7962 = vpop.f32.mrf.mxu0
      %v7963 = vadd.f32 %v7765, %v7962
      %v7964 = vpop.f32.mrf.mxu0
      %7965 = vmatprep.mubr.f32.mxu0 0.0
      %7966 = vmatmul.mubr.f32.gmra.mxu0 %v7789
      %v7967 = vpop.f32.mrf.mxu0
      %v7968 = vadd.f32 %v7765, %v7967
      %v7969 = vpop.f32.mrf.mxu0
      %7970 = vmatprep.mubr.f32.mxu0 0.0
      %7971 = vmatmul.mubr.f32.gmra.mxu0 %v7792
      %v7972 = vpop.f32.mrf.mxu0
      %v7973 = vadd.f32 %v7765, %v7972
      %v7974 = vpop.f32.mrf.mxu0
      %7975 = vmatprep.mubr.f32.mxu0 0.0
      %7976 = vmatmul.mubr.f32.gmra.mxu0 %v7795
      %v7977 = vpop.f32.mrf.mxu0
      %v7978 = vadd.f32 %v7765, %v7977
      %v7979 = vpop.f32.mrf.mxu0
      %7980 = vmatprep.mubr.f32.mxu0 0.0
      %7981 = vmatmul.mubr.f32.gmra.mxu0 %v7798
      %v7982 = vpop.f32.mrf.mxu0
      %v7983 = vadd.f32 %v7765, %v7982
      %v7984 = vpop.f32.mrf.mxu0
      %7985 = vmatprep.mubr.f32.mxu0 0.0
      %7986 = vmatmul.mubr.f32.gmra.mxu0 %v7801
      %v7987 = vpop.f32.mrf.mxu0
      %v7988 = vadd.f32 %v7765, %v7987
      %v7989 = vpop.f32.mrf.mxu0
      %7990 = vmatprep.mubr.f32.mxu0 0.0
      %7991 = vmatmul.mubr.f32.gmra.mxu0 %v7804
      %v7992 = vpop.f32.mrf.mxu0
      %v7993 = vadd.f32 %v7765, %v7992
      %v7994 = vpop.f32.mrf.mxu0
      %7995 = vmatprep.mubr.f32.mxu0 0.0
      %7996 = vmatmul.mubr.f32.gmra.mxu0 %v7807
      %v7997 = vpop.f32.mrf.mxu0
      %v7998 = vadd.f32 %v7765, %v7997
      %v7999 = vpop.f32.mrf.mxu0
      %8000 = vmatprep.mubr.f32.mxu0 0.0
      %8001 = vmatmul.mubr.f32.gmra.mxu0 %v7810
      %v8002 = vpop.f32.mrf.mxu0
      %v8003 = vadd.f32 %v7765, %v8002
      %v8004 = vpop.f32.mrf.mxu0
      %8005 = vmatprep.mubr.f32.mxu0 0.0
      %8006 = vmatmul.mubr.f32.gmra.mxu0 %v7813
      %v8007 = vpop.f32.mrf.mxu0
      %v8008 = vadd.f32 %v7765, %v8007
      %v8009 = vpop.f32.mrf.mxu0
      %8010 = vmatprep.mubr.f32.mxu0 0.0
      %8011 = vmatmul.mubr.f32.gmra.mxu0 %v7816
      %v8012 = vpop.f32.mrf.mxu0
      %v8013 = vadd.f32 %v7765, %v8012
      %v8014 = vpop.f32.mrf.mxu0
      %8015 = vmatprep.mubr.f32.mxu0 0.0
      %8016 = vmatmul.mubr.f32.gmra.mxu0 %v7819
      %v8017 = vpop.f32.mrf.mxu0
      %v8018 = vadd.f32 %v7765, %v8017
      %v8019 = vpop.f32.mrf.mxu0
      %8020 = vmatprep.mubr.f32.mxu0 0.0
      %8021 = vmatmul.mubr.f32.gmra.mxu0 %v7822
      %v8022 = vpop.f32.mrf.mxu0
      %v8023 = vadd.f32 %v7765, %v8022
      %v8024 = vpop.f32.mrf.mxu0
      %8025 = vmatprep.mubr.f32.mxu0 0.0
      %8026 = vmatmul.mubr.f32.gmra.mxu0 %v7825
      %v8027 = vpop.f32.mrf.mxu0
      %v8028 = vadd.f32 %v7765, %v8027
      %v8029 = vpop.f32.mrf.mxu0
      %8030 = vmatprep.mubr.f32.mxu0 0.0
      %8031 = vmatmul.mubr.f32.gmra.mxu0 %v7828
      %v8032 = vpop.f32.mrf.mxu0
      %v8033 = vadd.f32 %v7765, %v8032
      %v8034 = vpop.f32.mrf.mxu0
      %8035 = vmatprep.mubr.f32.mxu0 0.0
      %8036 = vmatmul.mubr.f32.gmra.mxu0 %v7831
      %v8037 = vpop.f32.mrf.mxu0
      %v8038 = vadd.f32 %v7765, %v8037
      %v8039 = vpop.f32.mrf.mxu0
      %8040 = vmatprep.mubr.f32.mxu0 0.0
      %8041 = vmatmul.mubr.f32.gmra.mxu0 %v7834
      %v8042 = vpop.f32.mrf.mxu0
      %v8043 = vadd.f32 %v7765, %v8042
      %v8044 = vpop.f32.mrf.mxu0
      %8045 = vmatprep.mubr.f32.mxu0 0.0
      %8046 = vmatmul.mubr.f32.gmra.mxu0 %v7837
      %v8047 = vpop.f32.mrf.mxu0
      %v8048 = vadd.f32 %v7765, %v8047
      %v8049 = vpop.f32.mrf.mxu0
      %8050 = vmatprep.mubr.f32.mxu0 0.0
      %8051 = vmatmul.mubr.f32.gmra.mxu0 %v7840
      %v8052 = vpop.f32.mrf.mxu0
      %v8053 = vadd.f32 %v7765, %v8052
      %v8054 = vpop.f32.mrf.mxu0
      %8055 = vmatprep.mubr.f32.mxu0 0.0
      %8056 = vmatmul.mubr.f32.gmra.mxu0 %v7843
      %v8057 = vpop.f32.mrf.mxu0
      %v8058 = vadd.f32 %v7765, %v8057
      %v8059 = vpop.f32.mrf.mxu0
      %8060 = vmatprep.mubr.f32.mxu0 0.0
      %8061 = vmatmul.mubr.f32.gmra.mxu0 %v7846
      %v8062 = vpop.f32.mrf.mxu0
      %v8063 = vadd.f32 %v7765, %v8062
      %v8064 = vpop.f32.mrf.mxu0
      %8065 = vmatprep.mubr.f32.mxu0 0.0
      %8066 = vmatmul.mubr.f32.gmra.mxu0 %v7849
      %v8067 = vpop.f32.mrf.mxu0
      %v8068 = vadd.f32 %v7765, %v8067
      %v8069 = vpop.f32.mrf.mxu0
      %8070 = vmatprep.mubr.f32.mxu0 0.0
      %8071 = vmatmul.mubr.f32.gmra.mxu0 %v7852
      %v8072 = vpop.f32.mrf.mxu0
      %v8073 = vadd.f32 %v7765, %v8072
      %v8074 = vpop.f32.mrf.mxu0
      %8075 = vmatprep.mubr.f32.mxu0 0.0
      %8076 = vmatmul.mubr.f32.gmra.mxu0 %v7855
      %v8077 = vpop.f32.mrf.mxu0
      %v8078 = vadd.f32 %v7765, %v8077
      %v8079 = vpop.f32.mrf.mxu0
      %8080 = vmatprep.mubr.f32.mxu0 0.0
      %8081 = vmatmul.mubr.f32.gmra.mxu0 %v7858
      %v8082 = vpop.f32.mrf.mxu0
      %v8083 = vadd.f32 %v7765, %v8082
      %v8084 = vpop.f32.mrf.mxu0
      %8085 = vmatprep.mubr.f32.mxu0 0.0
      %8086 = vmatmul.mubr.f32.gmra.mxu0 %v7861
      %v8087 = vpop.f32.mrf.mxu0
      %v8088 = vadd.f32 %v7765, %v8087
      %v8089 = vpop.f32.mrf.mxu0
      %8090 = vdwg.mxu0
      %vm8091 = vcmp.ge.f32.partialorder %v7933, 0.0
      %vm8092 = vcmp.ge.f32.partialorder %v7938, 0.0
      %vm8093 = vcmp.ge.f32.partialorder %v7943, 0.0
      %vm8094 = vcmp.ge.f32.partialorder %v7948, 0.0
      %vm8095 = vcmp.ge.f32.partialorder %v7953, 0.0
      %vm8096 = vcmp.ge.f32.partialorder %v7958, 0.0
      %vm8097 = vcmp.ge.f32.partialorder %v7963, 0.0
      %vm8098 = vcmp.ge.f32.partialorder %v7968, 0.0
      %vm8099 = vcmp.ge.f32.partialorder %v7973, 0.0
      %vm8100 = vcmp.ge.f32.partialorder %v7978, 0.0
      %vm8101 = vcmp.ge.f32.partialorder %v7983, 0.0
      %vm8102 = vcmp.ge.f32.partialorder %v7988, 0.0
      %vm8103 = vcmp.ge.f32.partialorder %v7993, 0.0
      %vm8104 = vcmp.ge.f32.partialorder %v7998, 0.0
      %vm8105 = vcmp.ge.f32.partialorder %v8003, 0.0
      %vm8106 = vcmp.ge.f32.partialorder %v8008, 0.0
      %vm8107 = vcmp.ge.f32.partialorder %v8013, 0.0
      %vm8108 = vcmp.ge.f32.partialorder %v8018, 0.0
      %vm8109 = vcmp.ge.f32.partialorder %v8023, 0.0
      %vm8110 = vcmp.ge.f32.partialorder %v8028, 0.0
      %vm8111 = vcmp.ge.f32.partialorder %v8033, 0.0
      %vm8112 = vcmp.ge.f32.partialorder %v8038, 0.0
      %vm8113 = vcmp.ge.f32.partialorder %v8043, 0.0
      %vm8114 = vcmp.ge.f32.partialorder %v8048, 0.0
      %vm8115 = vcmp.ge.f32.partialorder %v8053, 0.0
      %vm8116 = vcmp.ge.f32.partialorder %v8058, 0.0
      %vm8117 = vcmp.ge.f32.partialorder %v8063, 0.0
      %vm8118 = vcmp.ge.f32.partialorder %v8068, 0.0
      %vm8119 = vcmp.ge.f32.partialorder %v8073, 0.0
      %vm8120 = vcmp.ge.f32.partialorder %v8078, 0.0
      %vm8121 = vcmp.ge.f32.partialorder %v8083, 0.0
      %vm8122 = vcmp.ge.f32.partialorder %v8088, 0.0
      %v8123 = vmul.f32 %v7933, 0.01
      %v8124 = vmul.f32 %v7938, 0.01
      %v8125 = vmul.f32 %v7943, 0.01
      %v8126 = vmul.f32 %v7948, 0.01
      %v8127 = vmul.f32 %v7953, 0.01
      %v8128 = vmul.f32 %v7958, 0.01
      %v8129 = vmul.f32 %v7963, 0.01
      %v8130 = vmul.f32 %v7968, 0.01
      %v8131 = vmul.f32 %v7973, 0.01
      %v8132 = vmul.f32 %v7978, 0.01
      %v8133 = vmul.f32 %v7983, 0.01
      %v8134 = vmul.f32 %v7988, 0.01
      %v8135 = vmul.f32 %v7993, 0.01
      %v8136 = vmul.f32 %v7998, 0.01
      %v8137 = vmul.f32 %v8003, 0.01
      %v8138 = vmul.f32 %v8008, 0.01
      %v8139 = vmul.f32 %v8013, 0.01
      %v8140 = vmul.f32 %v8018, 0.01
      %v8141 = vmul.f32 %v8023, 0.01
      %v8142 = vmul.f32 %v8028, 0.01
      %v8143 = vmul.f32 %v8033, 0.01
      %v8144 = vmul.f32 %v8038, 0.01
      %v8145 = vmul.f32 %v8043, 0.01
      %v8146 = vmul.f32 %v8048, 0.01
      %v8147 = vmul.f32 %v8053, 0.01
      %v8148 = vmul.f32 %v8058, 0.01
      %v8149 = vmul.f32 %v8063, 0.01
      %v8150 = vmul.f32 %v8068, 0.01
      %v8151 = vmul.f32 %v8073, 0.01
      %v8152 = vmul.f32 %v8078, 0.01
      %v8153 = vmul.f32 %v8083, 0.01
      %v8154 = vmul.f32 %v8088, 0.01
      %v8155 = vsel %vm8091, %v7933, %v8123
      %v8156 = vsel %vm8092, %v7938, %v8124
      %v8157 = vsel %vm8093, %v7943, %v8125
      %v8158 = vsel %vm8094, %v7948, %v8126
      %v8159 = vsel %vm8095, %v7953, %v8127
      %v8160 = vsel %vm8096, %v7958, %v8128
      %v8161 = vsel %vm8097, %v7963, %v8129
      %v8162 = vsel %vm8098, %v7968, %v8130
      %v8163 = vsel %vm8099, %v7973, %v8131
      %v8164 = vsel %vm8100, %v7978, %v8132
      %v8165 = vsel %vm8101, %v7983, %v8133
      %v8166 = vsel %vm8102, %v7988, %v8134
      %v8167 = vsel %vm8103, %v7993, %v8135
      %v8168 = vsel %vm8104, %v7998, %v8136
      %v8169 = vsel %vm8105, %v8003, %v8137
      %v8170 = vsel %vm8106, %v8008, %v8138
      %v8171 = vsel %vm8107, %v8013, %v8139
      %v8172 = vsel %vm8108, %v8018, %v8140
      %v8173 = vsel %vm8109, %v8023, %v8141
      %v8174 = vsel %vm8110, %v8028, %v8142
      %v8175 = vsel %vm8111, %v8033, %v8143
      %v8176 = vsel %vm8112, %v8038, %v8144
      %v8177 = vsel %vm8113, %v8043, %v8145
      %v8178 = vsel %vm8114, %v8048, %v8146
      %v8179 = vsel %vm8115, %v8053, %v8147
      %v8180 = vsel %vm8116, %v8058, %v8148
      %v8181 = vsel %vm8117, %v8063, %v8149
      %v8182 = vsel %vm8118, %v8068, %v8150
      %v8183 = vsel %vm8119, %v8073, %v8151
      %v8184 = vsel %vm8120, %v8078, %v8152
      %v8185 = vsel %vm8121, %v8083, %v8153
      %v8186 = vsel %vm8122, %v8088, %v8154
      %s8187 = scalar_lea.vmem %s3, 336
      %v8188 = vld [vmem:[%s8187] sm:$0xff]
      %v8189 = vld [vmem:[%s8187 + $0x8] sm:$0xff]
      %v8190 = vld [vmem:[%s8187 + $0x10] sm:$0xff]
      %v8191 = vld [vmem:[%s8187 + $0x18] sm:$0xff]
      %v8192 = vld [vmem:[%s8187 + $0x20] sm:$0xff]
      %v8193 = vld [vmem:[%s8187 + $0x28] sm:$0xff]
      %v8194 = vld [vmem:[%s8187 + $0x30] sm:$0x3]
      %s8195 = scalar_lea.vmem %s4, 6
      %v8196 = vld [vmem:[%s8195] sm:$0x1]
      %v8198 = vlaneseq
      %v8199 = vshrl.u32 %v8198, 7
      %v8200 = vsub.s32 0, %v8199
      %v8201 = vrot.slane %v8196, %v8200
      %v8204 = vsel %vm843, %v8155, 0
      %v8207 = vsel %vm843, %v8156, 0
      %v8210 = vsel %vm843, %v8157, 0
      %v8213 = vsel %vm843, %v8158, 0
      %v8216 = vsel %vm843, %v8159, 0
      %v8219 = vsel %vm843, %v8160, 0
      %v8222 = vsel %vm843, %v8161, 0
      %v8225 = vsel %vm843, %v8162, 0
      %v8228 = vsel %vm843, %v8163, 0
      %v8231 = vsel %vm843, %v8164, 0
      %v8234 = vsel %vm843, %v8165, 0
      %v8237 = vsel %vm843, %v8166, 0
      %v8240 = vsel %vm843, %v8167, 0
      %v8243 = vsel %vm843, %v8168, 0
      %v8246 = vsel %vm843, %v8169, 0
      %v8249 = vsel %vm843, %v8170, 0
      %v8252 = vsel %vm843, %v8171, 0
      %v8255 = vsel %vm843, %v8172, 0
      %v8258 = vsel %vm843, %v8173, 0
      %v8261 = vsel %vm843, %v8174, 0
      %v8264 = vsel %vm843, %v8175, 0
      %v8267 = vsel %vm843, %v8176, 0
      %v8270 = vsel %vm843, %v8177, 0
      %v8273 = vsel %vm843, %v8178, 0
      %v8276 = vsel %vm843, %v8179, 0
      %v8279 = vsel %vm843, %v8180, 0
      %v8282 = vsel %vm843, %v8181, 0
      %v8285 = vsel %vm843, %v8182, 0
      %v8288 = vsel %vm843, %v8183, 0
      %v8291 = vsel %vm843, %v8184, 0
      %v8294 = vsel %vm843, %v8185, 0
      %v8297 = vsel %vm843, %v8186, 0
      %v8300 = vsel %vm940, %v8194, 0
      %8302 = vmatprep.subr.mxu0 0.0
      %8303 = vmatpush1.msra.mxu0 0.0
      %8304 = vmatprep.subr.mxu0 0.0
      %8305 = vmatpush1.msra.mxu0 0.0
      %8306 = vmatprep.subr.mxu0 0.0
      %8307 = vmatpush1.msra.mxu0 0.0
      %8308 = vmatprep.subr.mxu0 0.0
      %8309 = vmatpush1.msra.mxu0 0.0
      %8310 = vmatprep.subr.mxu0 0.0
      %8311 = vmatpush1.msra.mxu0 0.0
      %8312 = vmatprep.subr.mxu0 0.0
      %8313 = vmatpush1.msra.mxu0 0.0
      %8314 = vmatprep.subr.mxu0 0.0
      %8315 = vmatpush1.msra.mxu0 0.0
      %8316 = vmatprep.subr.mxu0 0.0
      %8317 = vmatpush1.msra.mxu0 0.0
      %8318 = vmatprep.subr.mxu0 0.0
      %8319 = vmatpush1.msra.mxu0 0.0
      %8320 = vmatprep.subr.mxu0 0.0
      %8321 = vmatpush1.msra.mxu0 %v8300
      %8322 = vmatprep.subr.mxu0 0.0
      %8323 = vmatpush1.msra.mxu0 %v8193
      %8324 = vmatprep.subr.mxu0 0.0
      %8325 = vmatpush1.msra.mxu0 %v8192
      %8326 = vmatprep.subr.mxu0 0.0
      %8327 = vmatpush1.msra.mxu0 %v8191
      %8328 = vmatprep.subr.mxu0 0.0
      %8329 = vmatpush1.msra.mxu0 %v8190
      %8330 = vmatprep.subr.mxu0 0.0
      %8331 = vmatpush1.msra.mxu0 %v8189
      %8332 = vmatprep.subr.mxu0 0.0
      %8333 = vmatpush1.msra.mxu0 %v8188
      %8334 = vmatprep.subr.mxu0 0.0
      %8335 = vmatpush2.msra.mxu0 0.0
      %8336 = vmatprep.subr.mxu0 0.0
      %8337 = vmatpush2.msra.mxu0 0.0
      %8338 = vmatprep.subr.mxu0 0.0
      %8339 = vmatpush2.msra.mxu0 0.0
      %8340 = vmatprep.subr.mxu0 0.0
      %8341 = vmatpush2.msra.mxu0 0.0
      %8342 = vmatprep.subr.mxu0 0.0
      %8343 = vmatpush2.msra.mxu0 0.0
      %8344 = vmatprep.subr.mxu0 0.0
      %8345 = vmatpush2.msra.mxu0 0.0
      %8346 = vmatprep.subr.mxu0 0.0
      %8347 = vmatpush2.msra.mxu0 0.0
      %8348 = vmatprep.subr.mxu0 0.0
      %8349 = vmatpush2.msra.mxu0 0.0
      %8350 = vmatprep.subr.mxu0 0.0
      %8351 = vmatpush2.msra.mxu0 0.0
      %8352 = vmatprep.subr.mxu0 0.0
      %8353 = vmatpush2.msra.mxu0 0.0
      %8354 = vmatprep.subr.mxu0 0.0
      %8355 = vmatpush2.msra.mxu0 0.0
      %8356 = vmatprep.subr.mxu0 0.0
      %8357 = vmatpush2.msra.mxu0 0.0
      %8358 = vmatprep.subr.mxu0 0.0
      %8359 = vmatpush2.msra.mxu0 0.0
      %8360 = vmatprep.subr.mxu0 0.0
      %8361 = vmatpush2.msra.mxu0 0.0
      %8362 = vmatprep.subr.mxu0 0.0
      %8363 = vmatpush2.msra.mxu0 0.0
      %8364 = vmatprep.subr.mxu0 0.0
      %8365 = vmatpush2.msra.mxu0 0.0
      %8366 = vmatprep.mubr.f32.mxu0 0.0
      %8367 = vmatmul.mubr.f32.gmra.mxu0 %v8204
      %v8368 = vpop.f32.mrf.mxu0
      %v8369 = vadd.f32 %v8201, %v8368
      %v8370 = vpop.f32.mrf.mxu0
      %8371 = vmatprep.mubr.f32.mxu0 0.0
      %8372 = vmatmul.mubr.f32.gmra.mxu0 %v8207
      %v8373 = vpop.f32.mrf.mxu0
      %v8374 = vadd.f32 %v8201, %v8373
      %v8375 = vpop.f32.mrf.mxu0
      %8376 = vmatprep.mubr.f32.mxu0 0.0
      %8377 = vmatmul.mubr.f32.gmra.mxu0 %v8210
      %v8378 = vpop.f32.mrf.mxu0
      %v8379 = vadd.f32 %v8201, %v8378
      %v8380 = vpop.f32.mrf.mxu0
      %8381 = vmatprep.mubr.f32.mxu0 0.0
      %8382 = vmatmul.mubr.f32.gmra.mxu0 %v8213
      %v8383 = vpop.f32.mrf.mxu0
      %v8384 = vadd.f32 %v8201, %v8383
      %v8385 = vpop.f32.mrf.mxu0
      %8386 = vmatprep.mubr.f32.mxu0 0.0
      %8387 = vmatmul.mubr.f32.gmra.mxu0 %v8216
      %v8388 = vpop.f32.mrf.mxu0
      %v8389 = vadd.f32 %v8201, %v8388
      %v8390 = vpop.f32.mrf.mxu0
      %8391 = vmatprep.mubr.f32.mxu0 0.0
      %8392 = vmatmul.mubr.f32.gmra.mxu0 %v8219
      %v8393 = vpop.f32.mrf.mxu0
      %v8394 = vadd.f32 %v8201, %v8393
      %v8395 = vpop.f32.mrf.mxu0
      %8396 = vmatprep.mubr.f32.mxu0 0.0
      %8397 = vmatmul.mubr.f32.gmra.mxu0 %v8222
      %v8398 = vpop.f32.mrf.mxu0
      %v8399 = vadd.f32 %v8201, %v8398
      %v8400 = vpop.f32.mrf.mxu0
      %8401 = vmatprep.mubr.f32.mxu0 0.0
      %8402 = vmatmul.mubr.f32.gmra.mxu0 %v8225
      %v8403 = vpop.f32.mrf.mxu0
      %v8404 = vadd.f32 %v8201, %v8403
      %v8405 = vpop.f32.mrf.mxu0
      %8406 = vmatprep.mubr.f32.mxu0 0.0
      %8407 = vmatmul.mubr.f32.gmra.mxu0 %v8228
      %v8408 = vpop.f32.mrf.mxu0
      %v8409 = vadd.f32 %v8201, %v8408
      %v8410 = vpop.f32.mrf.mxu0
      %8411 = vmatprep.mubr.f32.mxu0 0.0
      %8412 = vmatmul.mubr.f32.gmra.mxu0 %v8231
      %v8413 = vpop.f32.mrf.mxu0
      %v8414 = vadd.f32 %v8201, %v8413
      %v8415 = vpop.f32.mrf.mxu0
      %8416 = vmatprep.mubr.f32.mxu0 0.0
      %8417 = vmatmul.mubr.f32.gmra.mxu0 %v8234
      %v8418 = vpop.f32.mrf.mxu0
      %v8419 = vadd.f32 %v8201, %v8418
      %v8420 = vpop.f32.mrf.mxu0
      %8421 = vmatprep.mubr.f32.mxu0 0.0
      %8422 = vmatmul.mubr.f32.gmra.mxu0 %v8237
      %v8423 = vpop.f32.mrf.mxu0
      %v8424 = vadd.f32 %v8201, %v8423
      %v8425 = vpop.f32.mrf.mxu0
      %8426 = vmatprep.mubr.f32.mxu0 0.0
      %8427 = vmatmul.mubr.f32.gmra.mxu0 %v8240
      %v8428 = vpop.f32.mrf.mxu0
      %v8429 = vadd.f32 %v8201, %v8428
      %v8430 = vpop.f32.mrf.mxu0
      %8431 = vmatprep.mubr.f32.mxu0 0.0
      %8432 = vmatmul.mubr.f32.gmra.mxu0 %v8243
      %v8433 = vpop.f32.mrf.mxu0
      %v8434 = vadd.f32 %v8201, %v8433
      %v8435 = vpop.f32.mrf.mxu0
      %8436 = vmatprep.mubr.f32.mxu0 0.0
      %8437 = vmatmul.mubr.f32.gmra.mxu0 %v8246
      %v8438 = vpop.f32.mrf.mxu0
      %v8439 = vadd.f32 %v8201, %v8438
      %v8440 = vpop.f32.mrf.mxu0
      %8441 = vmatprep.mubr.f32.mxu0 0.0
      %8442 = vmatmul.mubr.f32.gmra.mxu0 %v8249
      %v8443 = vpop.f32.mrf.mxu0
      %v8444 = vadd.f32 %v8201, %v8443
      %v8445 = vpop.f32.mrf.mxu0
      %8446 = vmatprep.mubr.f32.mxu0 0.0
      %8447 = vmatmul.mubr.f32.gmra.mxu0 %v8252
      %v8448 = vpop.f32.mrf.mxu0
      %v8449 = vadd.f32 %v8201, %v8448
      %v8450 = vpop.f32.mrf.mxu0
      %8451 = vmatprep.mubr.f32.mxu0 0.0
      %8452 = vmatmul.mubr.f32.gmra.mxu0 %v8255
      %v8453 = vpop.f32.mrf.mxu0
      %v8454 = vadd.f32 %v8201, %v8453
      %v8455 = vpop.f32.mrf.mxu0
      %8456 = vmatprep.mubr.f32.mxu0 0.0
      %8457 = vmatmul.mubr.f32.gmra.mxu0 %v8258
      %v8458 = vpop.f32.mrf.mxu0
      %v8459 = vadd.f32 %v8201, %v8458
      %v8460 = vpop.f32.mrf.mxu0
      %8461 = vmatprep.mubr.f32.mxu0 0.0
      %8462 = vmatmul.mubr.f32.gmra.mxu0 %v8261
      %v8463 = vpop.f32.mrf.mxu0
      %v8464 = vadd.f32 %v8201, %v8463
      %v8465 = vpop.f32.mrf.mxu0
      %8466 = vmatprep.mubr.f32.mxu0 0.0
      %8467 = vmatmul.mubr.f32.gmra.mxu0 %v8264
      %v8468 = vpop.f32.mrf.mxu0
      %v8469 = vadd.f32 %v8201, %v8468
      %v8470 = vpop.f32.mrf.mxu0
      %8471 = vmatprep.mubr.f32.mxu0 0.0
      %8472 = vmatmul.mubr.f32.gmra.mxu0 %v8267
      %v8473 = vpop.f32.mrf.mxu0
      %v8474 = vadd.f32 %v8201, %v8473
      %v8475 = vpop.f32.mrf.mxu0
      %8476 = vmatprep.mubr.f32.mxu0 0.0
      %8477 = vmatmul.mubr.f32.gmra.mxu0 %v8270
      %v8478 = vpop.f32.mrf.mxu0
      %v8479 = vadd.f32 %v8201, %v8478
      %v8480 = vpop.f32.mrf.mxu0
      %8481 = vmatprep.mubr.f32.mxu0 0.0
      %8482 = vmatmul.mubr.f32.gmra.mxu0 %v8273
      %v8483 = vpop.f32.mrf.mxu0
      %v8484 = vadd.f32 %v8201, %v8483
      %v8485 = vpop.f32.mrf.mxu0
      %8486 = vmatprep.mubr.f32.mxu0 0.0
      %8487 = vmatmul.mubr.f32.gmra.mxu0 %v8276
      %v8488 = vpop.f32.mrf.mxu0
      %v8489 = vadd.f32 %v8201, %v8488
      %v8490 = vpop.f32.mrf.mxu0
      %8491 = vmatprep.mubr.f32.mxu0 0.0
      %8492 = vmatmul.mubr.f32.gmra.mxu0 %v8279
      %v8493 = vpop.f32.mrf.mxu0
      %v8494 = vadd.f32 %v8201, %v8493
      %v8495 = vpop.f32.mrf.mxu0
      %8496 = vmatprep.mubr.f32.mxu0 0.0
      %8497 = vmatmul.mubr.f32.gmra.mxu0 %v8282
      %v8498 = vpop.f32.mrf.mxu0
      %v8499 = vadd.f32 %v8201, %v8498
      %v8500 = vpop.f32.mrf.mxu0
      %8501 = vmatprep.mubr.f32.mxu0 0.0
      %8502 = vmatmul.mubr.f32.gmra.mxu0 %v8285
      %v8503 = vpop.f32.mrf.mxu0
      %v8504 = vadd.f32 %v8201, %v8503
      %v8505 = vpop.f32.mrf.mxu0
      %8506 = vmatprep.mubr.f32.mxu0 0.0
      %8507 = vmatmul.mubr.f32.gmra.mxu0 %v8288
      %v8508 = vpop.f32.mrf.mxu0
      %v8509 = vadd.f32 %v8201, %v8508
      %v8510 = vpop.f32.mrf.mxu0
      %8511 = vmatprep.mubr.f32.mxu0 0.0
      %8512 = vmatmul.mubr.f32.gmra.mxu0 %v8291
      %v8513 = vpop.f32.mrf.mxu0
      %v8514 = vadd.f32 %v8201, %v8513
      %v8515 = vpop.f32.mrf.mxu0
      %8516 = vmatprep.mubr.f32.mxu0 0.0
      %8517 = vmatmul.mubr.f32.gmra.mxu0 %v8294
      %v8518 = vpop.f32.mrf.mxu0
      %v8519 = vadd.f32 %v8201, %v8518
      %v8520 = vpop.f32.mrf.mxu0
      %8521 = vmatprep.mubr.f32.mxu0 0.0
      %8522 = vmatmul.mubr.f32.gmra.mxu0 %v8297
      %v8523 = vpop.f32.mrf.mxu0
      %v8524 = vadd.f32 %v8201, %v8523
      %v8525 = vpop.f32.mrf.mxu0
      %8526 = vdwg.mxu0
      %vm8527 = vcmp.ge.f32.partialorder %v8369, 0.0
      %vm8528 = vcmp.ge.f32.partialorder %v8374, 0.0
      %vm8529 = vcmp.ge.f32.partialorder %v8379, 0.0
      %vm8530 = vcmp.ge.f32.partialorder %v8384, 0.0
      %vm8531 = vcmp.ge.f32.partialorder %v8389, 0.0
      %vm8532 = vcmp.ge.f32.partialorder %v8394, 0.0
      %vm8533 = vcmp.ge.f32.partialorder %v8399, 0.0
      %vm8534 = vcmp.ge.f32.partialorder %v8404, 0.0
      %vm8535 = vcmp.ge.f32.partialorder %v8409, 0.0
      %vm8536 = vcmp.ge.f32.partialorder %v8414, 0.0
      %vm8537 = vcmp.ge.f32.partialorder %v8419, 0.0
      %vm8538 = vcmp.ge.f32.partialorder %v8424, 0.0
      %vm8539 = vcmp.ge.f32.partialorder %v8429, 0.0
      %vm8540 = vcmp.ge.f32.partialorder %v8434, 0.0
      %vm8541 = vcmp.ge.f32.partialorder %v8439, 0.0
      %vm8542 = vcmp.ge.f32.partialorder %v8444, 0.0
      %vm8543 = vcmp.ge.f32.partialorder %v8449, 0.0
      %vm8544 = vcmp.ge.f32.partialorder %v8454, 0.0
      %vm8545 = vcmp.ge.f32.partialorder %v8459, 0.0
      %vm8546 = vcmp.ge.f32.partialorder %v8464, 0.0
      %vm8547 = vcmp.ge.f32.partialorder %v8469, 0.0
      %vm8548 = vcmp.ge.f32.partialorder %v8474, 0.0
      %vm8549 = vcmp.ge.f32.partialorder %v8479, 0.0
      %vm8550 = vcmp.ge.f32.partialorder %v8484, 0.0
      %vm8551 = vcmp.ge.f32.partialorder %v8489, 0.0
      %vm8552 = vcmp.ge.f32.partialorder %v8494, 0.0
      %vm8553 = vcmp.ge.f32.partialorder %v8499, 0.0
      %vm8554 = vcmp.ge.f32.partialorder %v8504, 0.0
      %vm8555 = vcmp.ge.f32.partialorder %v8509, 0.0
      %vm8556 = vcmp.ge.f32.partialorder %v8514, 0.0
      %vm8557 = vcmp.ge.f32.partialorder %v8519, 0.0
      %vm8558 = vcmp.ge.f32.partialorder %v8524, 0.0
      %v8559 = vmul.f32 %v8369, 0.01
      %v8560 = vmul.f32 %v8374, 0.01
      %v8561 = vmul.f32 %v8379, 0.01
      %v8562 = vmul.f32 %v8384, 0.01
      %v8563 = vmul.f32 %v8389, 0.01
      %v8564 = vmul.f32 %v8394, 0.01
      %v8565 = vmul.f32 %v8399, 0.01
      %v8566 = vmul.f32 %v8404, 0.01
      %v8567 = vmul.f32 %v8409, 0.01
      %v8568 = vmul.f32 %v8414, 0.01
      %v8569 = vmul.f32 %v8419, 0.01
      %v8570 = vmul.f32 %v8424, 0.01
      %v8571 = vmul.f32 %v8429, 0.01
      %v8572 = vmul.f32 %v8434, 0.01
      %v8573 = vmul.f32 %v8439, 0.01
      %v8574 = vmul.f32 %v8444, 0.01
      %v8575 = vmul.f32 %v8449, 0.01
      %v8576 = vmul.f32 %v8454, 0.01
      %v8577 = vmul.f32 %v8459, 0.01
      %v8578 = vmul.f32 %v8464, 0.01
      %v8579 = vmul.f32 %v8469, 0.01
      %v8580 = vmul.f32 %v8474, 0.01
      %v8581 = vmul.f32 %v8479, 0.01
      %v8582 = vmul.f32 %v8484, 0.01
      %v8583 = vmul.f32 %v8489, 0.01
      %v8584 = vmul.f32 %v8494, 0.01
      %v8585 = vmul.f32 %v8499, 0.01
      %v8586 = vmul.f32 %v8504, 0.01
      %v8587 = vmul.f32 %v8509, 0.01
      %v8588 = vmul.f32 %v8514, 0.01
      %v8589 = vmul.f32 %v8519, 0.01
      %v8590 = vmul.f32 %v8524, 0.01
      %v8591 = vsel %vm8527, %v8369, %v8559
      %v8592 = vsel %vm8528, %v8374, %v8560
      %v8593 = vsel %vm8529, %v8379, %v8561
      %v8594 = vsel %vm8530, %v8384, %v8562
      %v8595 = vsel %vm8531, %v8389, %v8563
      %v8596 = vsel %vm8532, %v8394, %v8564
      %v8597 = vsel %vm8533, %v8399, %v8565
      %v8598 = vsel %vm8534, %v8404, %v8566
      %v8599 = vsel %vm8535, %v8409, %v8567
      %v8600 = vsel %vm8536, %v8414, %v8568
      %v8601 = vsel %vm8537, %v8419, %v8569
      %v8602 = vsel %vm8538, %v8424, %v8570
      %v8603 = vsel %vm8539, %v8429, %v8571
      %v8604 = vsel %vm8540, %v8434, %v8572
      %v8605 = vsel %vm8541, %v8439, %v8573
      %v8606 = vsel %vm8542, %v8444, %v8574
      %v8607 = vsel %vm8543, %v8449, %v8575
      %v8608 = vsel %vm8544, %v8454, %v8576
      %v8609 = vsel %vm8545, %v8459, %v8577
      %v8610 = vsel %vm8546, %v8464, %v8578
      %v8611 = vsel %vm8547, %v8469, %v8579
      %v8612 = vsel %vm8548, %v8474, %v8580
      %v8613 = vsel %vm8549, %v8479, %v8581
      %v8614 = vsel %vm8550, %v8484, %v8582
      %v8615 = vsel %vm8551, %v8489, %v8583
      %v8616 = vsel %vm8552, %v8494, %v8584
      %v8617 = vsel %vm8553, %v8499, %v8585
      %v8618 = vsel %vm8554, %v8504, %v8586
      %v8619 = vsel %vm8555, %v8509, %v8587
      %v8620 = vsel %vm8556, %v8514, %v8588
      %v8621 = vsel %vm8557, %v8519, %v8589
      %v8622 = vsel %vm8558, %v8524, %v8590
      %v8624 = vsel %vm1265, %v8591, 0
      %v8627 = vsel %vm1265, %v8592, 0
      %v8630 = vsel %vm1265, %v8593, 0
      %v8633 = vsel %vm1265, %v8594, 0
      %v8636 = vsel %vm1265, %v8595, 0
      %v8639 = vsel %vm1265, %v8596, 0
      %v8642 = vsel %vm1265, %v8597, 0
      %v8645 = vsel %vm1265, %v8598, 0
      %v8648 = vsel %vm1265, %v8599, 0
      %v8651 = vsel %vm1265, %v8600, 0
      %v8654 = vsel %vm1265, %v8601, 0
      %v8657 = vsel %vm1265, %v8602, 0
      %v8660 = vsel %vm1265, %v8603, 0
      %v8663 = vsel %vm1265, %v8604, 0
      %v8666 = vsel %vm1265, %v8605, 0
      %v8669 = vsel %vm1265, %v8606, 0
      %v8672 = vsel %vm1265, %v8607, 0
      %v8675 = vsel %vm1265, %v8608, 0
      %v8678 = vsel %vm1265, %v8609, 0
      %v8681 = vsel %vm1265, %v8610, 0
      %v8684 = vsel %vm1265, %v8611, 0
      %v8687 = vsel %vm1265, %v8612, 0
      %v8690 = vsel %vm1265, %v8613, 0
      %v8693 = vsel %vm1265, %v8614, 0
      %v8696 = vsel %vm1265, %v8615, 0
      %v8699 = vsel %vm1265, %v8616, 0
      %v8702 = vsel %vm1265, %v8617, 0
      %v8705 = vsel %vm1265, %v8618, 0
      %v8708 = vsel %vm1265, %v8619, 0
      %v8711 = vsel %vm1265, %v8620, 0
      %v8714 = vsel %vm1265, %v8621, 0
      %v8717 = vsel %vm1265, %v8622, 0
      %v8720 = vsel %vm1362, %v7755, 0
      %8722 = vmatprep.subr.mxu0 0.0
      %8723 = vmatpush1.msra.mxu0 0.0
      %8724 = vmatprep.subr.mxu0 0.0
      %8725 = vmatpush1.msra.mxu0 0.0
      %8726 = vmatprep.subr.mxu0 0.0
      %8727 = vmatpush1.msra.mxu0 %v8720
      %8728 = vmatprep.subr.mxu0 0.0
      %8729 = vmatpush1.msra.mxu0 %v7754
      %8730 = vmatprep.subr.mxu0 0.0
      %8731 = vmatpush1.msra.mxu0 %v7753
      %8732 = vmatprep.subr.mxu0 0.0
      %8733 = vmatpush1.msra.mxu0 %v7752
      %8734 = vmatprep.subr.mxu0 0.0
      %8735 = vmatpush1.msra.mxu0 %v7751
      %8736 = vmatprep.subr.mxu0 0.0
      %8737 = vmatpush1.msra.mxu0 %v7750
      %8738 = vmatprep.subr.mxu0 0.0
      %8739 = vmatpush1.msra.mxu0 %v7749
      %8740 = vmatprep.subr.mxu0 0.0
      %8741 = vmatpush1.msra.mxu0 %v7748
      %8742 = vmatprep.subr.mxu0 0.0
      %8743 = vmatpush1.msra.mxu0 %v7747
      %8744 = vmatprep.subr.mxu0 0.0
      %8745 = vmatpush1.msra.mxu0 %v7746
      %8746 = vmatprep.subr.mxu0 0.0
      %8747 = vmatpush1.msra.mxu0 %v7745
      %8748 = vmatprep.subr.mxu0 0.0
      %8749 = vmatpush1.msra.mxu0 %v7744
      %8750 = vmatprep.subr.mxu0 0.0
      %8751 = vmatpush1.msra.mxu0 %v7743
      %8752 = vmatprep.subr.mxu0 0.0
      %8753 = vmatpush1.msra.mxu0 %v7742
      %8754 = vmatprep.subr.mxu0 0.0
      %8755 = vmatpush2.msra.mxu0 0.0
      %8756 = vmatprep.subr.mxu0 0.0
      %8757 = vmatpush2.msra.mxu0 0.0
      %8758 = vmatprep.subr.mxu0 0.0
      %8759 = vmatpush2.msra.mxu0 0.0
      %8760 = vmatprep.subr.mxu0 0.0
      %8761 = vmatpush2.msra.mxu0 0.0
      %8762 = vmatprep.subr.mxu0 0.0
      %8763 = vmatpush2.msra.mxu0 0.0
      %8764 = vmatprep.subr.mxu0 0.0
      %8765 = vmatpush2.msra.mxu0 0.0
      %8766 = vmatprep.subr.mxu0 0.0
      %8767 = vmatpush2.msra.mxu0 0.0
      %8768 = vmatprep.subr.mxu0 0.0
      %8769 = vmatpush2.msra.mxu0 0.0
      %8770 = vmatprep.subr.mxu0 0.0
      %8771 = vmatpush2.msra.mxu0 0.0
      %8772 = vmatprep.subr.mxu0 0.0
      %8773 = vmatpush2.msra.mxu0 0.0
      %8774 = vmatprep.subr.mxu0 0.0
      %8775 = vmatpush2.msra.mxu0 0.0
      %8776 = vmatprep.subr.mxu0 0.0
      %8777 = vmatpush2.msra.mxu0 0.0
      %8778 = vmatprep.subr.mxu0 0.0
      %8779 = vmatpush2.msra.mxu0 0.0
      %8780 = vmatprep.subr.mxu0 0.0
      %8781 = vmatpush2.msra.mxu0 0.0
      %8782 = vmatprep.subr.mxu0 0.0
      %8783 = vmatpush2.msra.mxu0 0.0
      %8784 = vmatprep.subr.mxu0 0.0
      %8785 = vmatpush2.msra.mxu0 0.0
      %8786 = vmatprep.mubr.f32.mxu0 0.0
      %8787 = vmatmul.mubr.f32.gmra.mxu0 %v8624
      %v8788 = vpop.f32.mrf.mxu0
      %v8789 = vadd.f32 0.0, %v8788
      %v8790 = vpop.f32.mrf.mxu0
      %8791 = vmatprep.mubr.f32.mxu0 0.0
      %8792 = vmatmul.mubr.f32.gmra.mxu0 %v8627
      %v8793 = vpop.f32.mrf.mxu0
      %v8794 = vadd.f32 0.0, %v8793
      %v8795 = vpop.f32.mrf.mxu0
      %8796 = vmatprep.mubr.f32.mxu0 0.0
      %8797 = vmatmul.mubr.f32.gmra.mxu0 %v8630
      %v8798 = vpop.f32.mrf.mxu0
      %v8799 = vadd.f32 0.0, %v8798
      %v8800 = vpop.f32.mrf.mxu0
      %8801 = vmatprep.mubr.f32.mxu0 0.0
      %8802 = vmatmul.mubr.f32.gmra.mxu0 %v8633
      %v8803 = vpop.f32.mrf.mxu0
      %v8804 = vadd.f32 0.0, %v8803
      %v8805 = vpop.f32.mrf.mxu0
      %8806 = vmatprep.mubr.f32.mxu0 0.0
      %8807 = vmatmul.mubr.f32.gmra.mxu0 %v8636
      %v8808 = vpop.f32.mrf.mxu0
      %v8809 = vadd.f32 0.0, %v8808
      %v8810 = vpop.f32.mrf.mxu0
      %8811 = vmatprep.mubr.f32.mxu0 0.0
      %8812 = vmatmul.mubr.f32.gmra.mxu0 %v8639
      %v8813 = vpop.f32.mrf.mxu0
      %v8814 = vadd.f32 0.0, %v8813
      %v8815 = vpop.f32.mrf.mxu0
      %8816 = vmatprep.mubr.f32.mxu0 0.0
      %8817 = vmatmul.mubr.f32.gmra.mxu0 %v8642
      %v8818 = vpop.f32.mrf.mxu0
      %v8819 = vadd.f32 0.0, %v8818
      %v8820 = vpop.f32.mrf.mxu0
      %8821 = vmatprep.mubr.f32.mxu0 0.0
      %8822 = vmatmul.mubr.f32.gmra.mxu0 %v8645
      %v8823 = vpop.f32.mrf.mxu0
      %v8824 = vadd.f32 0.0, %v8823
      %v8825 = vpop.f32.mrf.mxu0
      %8826 = vmatprep.mubr.f32.mxu0 0.0
      %8827 = vmatmul.mubr.f32.gmra.mxu0 %v8648
      %v8828 = vpop.f32.mrf.mxu0
      %v8829 = vadd.f32 0.0, %v8828
      %v8830 = vpop.f32.mrf.mxu0
      %8831 = vmatprep.mubr.f32.mxu0 0.0
      %8832 = vmatmul.mubr.f32.gmra.mxu0 %v8651
      %v8833 = vpop.f32.mrf.mxu0
      %v8834 = vadd.f32 0.0, %v8833
      %v8835 = vpop.f32.mrf.mxu0
      %8836 = vmatprep.mubr.f32.mxu0 0.0
      %8837 = vmatmul.mubr.f32.gmra.mxu0 %v8654
      %v8838 = vpop.f32.mrf.mxu0
      %v8839 = vadd.f32 0.0, %v8838
      %v8840 = vpop.f32.mrf.mxu0
      %8841 = vmatprep.mubr.f32.mxu0 0.0
      %8842 = vmatmul.mubr.f32.gmra.mxu0 %v8657
      %v8843 = vpop.f32.mrf.mxu0
      %v8844 = vadd.f32 0.0, %v8843
      %v8845 = vpop.f32.mrf.mxu0
      %8846 = vmatprep.mubr.f32.mxu0 0.0
      %8847 = vmatmul.mubr.f32.gmra.mxu0 %v8660
      %v8848 = vpop.f32.mrf.mxu0
      %v8849 = vadd.f32 0.0, %v8848
      %v8850 = vpop.f32.mrf.mxu0
      %8851 = vmatprep.mubr.f32.mxu0 0.0
      %8852 = vmatmul.mubr.f32.gmra.mxu0 %v8663
      %v8853 = vpop.f32.mrf.mxu0
      %v8854 = vadd.f32 0.0, %v8853
      %v8855 = vpop.f32.mrf.mxu0
      %8856 = vmatprep.mubr.f32.mxu0 0.0
      %8857 = vmatmul.mubr.f32.gmra.mxu0 %v8666
      %v8858 = vpop.f32.mrf.mxu0
      %v8859 = vadd.f32 0.0, %v8858
      %v8860 = vpop.f32.mrf.mxu0
      %8861 = vmatprep.mubr.f32.mxu0 0.0
      %8862 = vmatmul.mubr.f32.gmra.mxu0 %v8669
      %v8863 = vpop.f32.mrf.mxu0
      %v8864 = vadd.f32 0.0, %v8863
      %v8865 = vpop.f32.mrf.mxu0
      %8866 = vmatprep.mubr.f32.mxu0 0.0
      %8867 = vmatmul.mubr.f32.gmra.mxu0 %v8672
      %v8868 = vpop.f32.mrf.mxu0
      %v8869 = vadd.f32 0.0, %v8868
      %v8870 = vpop.f32.mrf.mxu0
      %8871 = vmatprep.mubr.f32.mxu0 0.0
      %8872 = vmatmul.mubr.f32.gmra.mxu0 %v8675
      %v8873 = vpop.f32.mrf.mxu0
      %v8874 = vadd.f32 0.0, %v8873
      %v8875 = vpop.f32.mrf.mxu0
      %8876 = vmatprep.mubr.f32.mxu0 0.0
      %8877 = vmatmul.mubr.f32.gmra.mxu0 %v8678
      %v8878 = vpop.f32.mrf.mxu0
      %v8879 = vadd.f32 0.0, %v8878
      %v8880 = vpop.f32.mrf.mxu0
      %8881 = vmatprep.mubr.f32.mxu0 0.0
      %8882 = vmatmul.mubr.f32.gmra.mxu0 %v8681
      %v8883 = vpop.f32.mrf.mxu0
      %v8884 = vadd.f32 0.0, %v8883
      %v8885 = vpop.f32.mrf.mxu0
      %8886 = vmatprep.mubr.f32.mxu0 0.0
      %8887 = vmatmul.mubr.f32.gmra.mxu0 %v8684
      %v8888 = vpop.f32.mrf.mxu0
      %v8889 = vadd.f32 0.0, %v8888
      %v8890 = vpop.f32.mrf.mxu0
      %8891 = vmatprep.mubr.f32.mxu0 0.0
      %8892 = vmatmul.mubr.f32.gmra.mxu0 %v8687
      %v8893 = vpop.f32.mrf.mxu0
      %v8894 = vadd.f32 0.0, %v8893
      %v8895 = vpop.f32.mrf.mxu0
      %8896 = vmatprep.mubr.f32.mxu0 0.0
      %8897 = vmatmul.mubr.f32.gmra.mxu0 %v8690
      %v8898 = vpop.f32.mrf.mxu0
      %v8899 = vadd.f32 0.0, %v8898
      %v8900 = vpop.f32.mrf.mxu0
      %8901 = vmatprep.mubr.f32.mxu0 0.0
      %8902 = vmatmul.mubr.f32.gmra.mxu0 %v8693
      %v8903 = vpop.f32.mrf.mxu0
      %v8904 = vadd.f32 0.0, %v8903
      %v8905 = vpop.f32.mrf.mxu0
      %8906 = vmatprep.mubr.f32.mxu0 0.0
      %8907 = vmatmul.mubr.f32.gmra.mxu0 %v8696
      %v8908 = vpop.f32.mrf.mxu0
      %v8909 = vadd.f32 0.0, %v8908
      %v8910 = vpop.f32.mrf.mxu0
      %8911 = vmatprep.mubr.f32.mxu0 0.0
      %8912 = vmatmul.mubr.f32.gmra.mxu0 %v8699
      %v8913 = vpop.f32.mrf.mxu0
      %v8914 = vadd.f32 0.0, %v8913
      %v8915 = vpop.f32.mrf.mxu0
      %8916 = vmatprep.mubr.f32.mxu0 0.0
      %8917 = vmatmul.mubr.f32.gmra.mxu0 %v8702
      %v8918 = vpop.f32.mrf.mxu0
      %v8919 = vadd.f32 0.0, %v8918
      %v8920 = vpop.f32.mrf.mxu0
      %8921 = vmatprep.mubr.f32.mxu0 0.0
      %8922 = vmatmul.mubr.f32.gmra.mxu0 %v8705
      %v8923 = vpop.f32.mrf.mxu0
      %v8924 = vadd.f32 0.0, %v8923
      %v8925 = vpop.f32.mrf.mxu0
      %8926 = vmatprep.mubr.f32.mxu0 0.0
      %8927 = vmatmul.mubr.f32.gmra.mxu0 %v8708
      %v8928 = vpop.f32.mrf.mxu0
      %v8929 = vadd.f32 0.0, %v8928
      %v8930 = vpop.f32.mrf.mxu0
      %8931 = vmatprep.mubr.f32.mxu0 0.0
      %8932 = vmatmul.mubr.f32.gmra.mxu0 %v8711
      %v8933 = vpop.f32.mrf.mxu0
      %v8934 = vadd.f32 0.0, %v8933
      %v8935 = vpop.f32.mrf.mxu0
      %8936 = vmatprep.mubr.f32.mxu0 0.0
      %8937 = vmatmul.mubr.f32.gmra.mxu0 %v8714
      %v8938 = vpop.f32.mrf.mxu0
      %v8939 = vadd.f32 0.0, %v8938
      %v8940 = vpop.f32.mrf.mxu0
      %8941 = vmatprep.mubr.f32.mxu0 0.0
      %8942 = vmatmul.mubr.f32.gmra.mxu0 %v8717
      %v8943 = vpop.f32.mrf.mxu0
      %v8944 = vadd.f32 0.0, %v8943
      %v8945 = vpop.f32.mrf.mxu0
      %8946 = vdwg.mxu0
      %v8947 = vadd.f32 %v7709, %v8789
      %v8948 = vadd.f32 %v7710, %v8794
      %v8949 = vadd.f32 %v7711, %v8799
      %v8950 = vadd.f32 %v7712, %v8804
      %v8951 = vadd.f32 %v7713, %v8809
      %v8952 = vadd.f32 %v7714, %v8814
      %v8953 = vadd.f32 %v7715, %v8819
      %v8954 = vadd.f32 %v7716, %v8824
      %v8955 = vadd.f32 %v7717, %v8829
      %v8956 = vadd.f32 %v7718, %v8834
      %v8957 = vadd.f32 %v7719, %v8839
      %v8958 = vadd.f32 %v7720, %v8844
      %v8959 = vadd.f32 %v7721, %v8849
      %v8960 = vadd.f32 %v7722, %v8854
      %v8961 = vadd.f32 %v7723, %v8859
      %v8962 = vadd.f32 %v7724, %v8864
      %v8963 = vadd.f32 %v7725, %v8869
      %v8964 = vadd.f32 %v7726, %v8874
      %v8965 = vadd.f32 %v7727, %v8879
      %v8966 = vadd.f32 %v7728, %v8884
      %v8967 = vadd.f32 %v7729, %v8889
      %v8968 = vadd.f32 %v7730, %v8894
      %v8969 = vadd.f32 %v7731, %v8899
      %v8970 = vadd.f32 %v7732, %v8904
      %v8971 = vadd.f32 %v7733, %v8909
      %v8972 = vadd.f32 %v7734, %v8914
      %v8973 = vadd.f32 %v7735, %v8919
      %v8974 = vadd.f32 %v7736, %v8924
      %v8975 = vadd.f32 %v7737, %v8929
      %v8976 = vadd.f32 %v7738, %v8934
      %v8977 = vadd.f32 %v7739, %v8939
      %v8978 = vadd.f32 %v7740, %v8944
      %s8979 = scalar_lea.vmem %s1, 112
      %v8980 = vld [vmem:[%s8979] sm:$0xff]
      %v8981 = vld [vmem:[%s8979 + $0x8] sm:$0x7f]
      %s8982 = scalar_lea.vmem %s2, 7
      %v8983 = vld [vmem:[%s8982] sm:$0x1]
      %v8985 = vlaneseq
      %v8986 = vshrl.u32 %v8985, 7
      %v8987 = vsub.s32 0, %v8986
      %v8988 = vrot.slane %v8983, %v8987
      %v8991 = vsel %vm255, %v8947, 0
      %v8994 = vsel %vm255, %v8948, 0
      %v8997 = vsel %vm255, %v8949, 0
      %v9000 = vsel %vm255, %v8950, 0
      %v9003 = vsel %vm255, %v8951, 0
      %v9006 = vsel %vm255, %v8952, 0
      %v9009 = vsel %vm255, %v8953, 0
      %v9012 = vsel %vm255, %v8954, 0
      %v9015 = vsel %vm255, %v8955, 0
      %v9018 = vsel %vm255, %v8956, 0
      %v9021 = vsel %vm255, %v8957, 0
      %v9024 = vsel %vm255, %v8958, 0
      %v9027 = vsel %vm255, %v8959, 0
      %v9030 = vsel %vm255, %v8960, 0
      %v9033 = vsel %vm255, %v8961, 0
      %v9036 = vsel %vm255, %v8962, 0
      %v9039 = vsel %vm255, %v8963, 0
      %v9042 = vsel %vm255, %v8964, 0
      %v9045 = vsel %vm255, %v8965, 0
      %v9048 = vsel %vm255, %v8966, 0
      %v9051 = vsel %vm255, %v8967, 0
      %v9054 = vsel %vm255, %v8968, 0
      %v9057 = vsel %vm255, %v8969, 0
      %v9060 = vsel %vm255, %v8970, 0
      %v9063 = vsel %vm255, %v8971, 0
      %v9066 = vsel %vm255, %v8972, 0
      %v9069 = vsel %vm255, %v8973, 0
      %v9072 = vsel %vm255, %v8974, 0
      %v9075 = vsel %vm255, %v8975, 0
      %v9078 = vsel %vm255, %v8976, 0
      %v9081 = vsel %vm255, %v8977, 0
      %v9084 = vsel %vm255, %v8978, 0
      %v9087 = vsel %vm504, %v8981, 0
      %9089 = vmatprep.subr.mxu0 0.0
      %9090 = vmatpush1.msra.mxu0 0.0
      %9091 = vmatprep.subr.mxu0 0.0
      %9092 = vmatpush1.msra.mxu0 0.0
      %9093 = vmatprep.subr.mxu0 0.0
      %9094 = vmatpush1.msra.mxu0 0.0
      %9095 = vmatprep.subr.mxu0 0.0
      %9096 = vmatpush1.msra.mxu0 0.0
      %9097 = vmatprep.subr.mxu0 0.0
      %9098 = vmatpush1.msra.mxu0 0.0
      %9099 = vmatprep.subr.mxu0 0.0
      %9100 = vmatpush1.msra.mxu0 0.0
      %9101 = vmatprep.subr.mxu0 0.0
      %9102 = vmatpush1.msra.mxu0 0.0
      %9103 = vmatprep.subr.mxu0 0.0
      %9104 = vmatpush1.msra.mxu0 0.0
      %9105 = vmatprep.subr.mxu0 0.0
      %9106 = vmatpush1.msra.mxu0 0.0
      %9107 = vmatprep.subr.mxu0 0.0
      %9108 = vmatpush1.msra.mxu0 0.0
      %9109 = vmatprep.subr.mxu0 0.0
      %9110 = vmatpush1.msra.mxu0 0.0
      %9111 = vmatprep.subr.mxu0 0.0
      %9112 = vmatpush1.msra.mxu0 0.0
      %9113 = vmatprep.subr.mxu0 0.0
      %9114 = vmatpush1.msra.mxu0 0.0
      %9115 = vmatprep.subr.mxu0 0.0
      %9116 = vmatpush1.msra.mxu0 0.0
      %9117 = vmatprep.subr.mxu0 0.0
      %9118 = vmatpush1.msra.mxu0 %v9087
      %9119 = vmatprep.subr.mxu0 0.0
      %9120 = vmatpush1.msra.mxu0 %v8980
      %9121 = vmatprep.subr.mxu0 0.0
      %9122 = vmatpush2.msra.mxu0 0.0
      %9123 = vmatprep.subr.mxu0 0.0
      %9124 = vmatpush2.msra.mxu0 0.0
      %9125 = vmatprep.subr.mxu0 0.0
      %9126 = vmatpush2.msra.mxu0 0.0
      %9127 = vmatprep.subr.mxu0 0.0
      %9128 = vmatpush2.msra.mxu0 0.0
      %9129 = vmatprep.subr.mxu0 0.0
      %9130 = vmatpush2.msra.mxu0 0.0
      %9131 = vmatprep.subr.mxu0 0.0
      %9132 = vmatpush2.msra.mxu0 0.0
      %9133 = vmatprep.subr.mxu0 0.0
      %9134 = vmatpush2.msra.mxu0 0.0
      %9135 = vmatprep.subr.mxu0 0.0
      %9136 = vmatpush2.msra.mxu0 0.0
      %9137 = vmatprep.subr.mxu0 0.0
      %9138 = vmatpush2.msra.mxu0 0.0
      %9139 = vmatprep.subr.mxu0 0.0
      %9140 = vmatpush2.msra.mxu0 0.0
      %9141 = vmatprep.subr.mxu0 0.0
      %9142 = vmatpush2.msra.mxu0 0.0
      %9143 = vmatprep.subr.mxu0 0.0
      %9144 = vmatpush2.msra.mxu0 0.0
      %9145 = vmatprep.subr.mxu0 0.0
      %9146 = vmatpush2.msra.mxu0 0.0
      %9147 = vmatprep.subr.mxu0 0.0
      %9148 = vmatpush2.msra.mxu0 0.0
      %9149 = vmatprep.subr.mxu0 0.0
      %9150 = vmatpush2.msra.mxu0 0.0
      %9151 = vmatprep.subr.mxu0 0.0
      %9152 = vmatpush2.msra.mxu0 0.0
      %9153 = vmatprep.mubr.f32.mxu0 0.0
      %9154 = vmatmul.mubr.f32.gmra.mxu0 %v8991
      %v9155 = vpop.f32.mrf.mxu0
      %v9156 = vadd.f32 %v8988, %v9155
      %v9157 = vpop.f32.mrf.mxu0
      %9158 = vmatprep.mubr.f32.mxu0 0.0
      %9159 = vmatmul.mubr.f32.gmra.mxu0 %v8994
      %v9160 = vpop.f32.mrf.mxu0
      %v9161 = vadd.f32 %v8988, %v9160
      %v9162 = vpop.f32.mrf.mxu0
      %9163 = vmatprep.mubr.f32.mxu0 0.0
      %9164 = vmatmul.mubr.f32.gmra.mxu0 %v8997
      %v9165 = vpop.f32.mrf.mxu0
      %v9166 = vadd.f32 %v8988, %v9165
      %v9167 = vpop.f32.mrf.mxu0
      %9168 = vmatprep.mubr.f32.mxu0 0.0
      %9169 = vmatmul.mubr.f32.gmra.mxu0 %v9000
      %v9170 = vpop.f32.mrf.mxu0
      %v9171 = vadd.f32 %v8988, %v9170
      %v9172 = vpop.f32.mrf.mxu0
      %9173 = vmatprep.mubr.f32.mxu0 0.0
      %9174 = vmatmul.mubr.f32.gmra.mxu0 %v9003
      %v9175 = vpop.f32.mrf.mxu0
      %v9176 = vadd.f32 %v8988, %v9175
      %v9177 = vpop.f32.mrf.mxu0
      %9178 = vmatprep.mubr.f32.mxu0 0.0
      %9179 = vmatmul.mubr.f32.gmra.mxu0 %v9006
      %v9180 = vpop.f32.mrf.mxu0
      %v9181 = vadd.f32 %v8988, %v9180
      %v9182 = vpop.f32.mrf.mxu0
      %9183 = vmatprep.mubr.f32.mxu0 0.0
      %9184 = vmatmul.mubr.f32.gmra.mxu0 %v9009
      %v9185 = vpop.f32.mrf.mxu0
      %v9186 = vadd.f32 %v8988, %v9185
      %v9187 = vpop.f32.mrf.mxu0
      %9188 = vmatprep.mubr.f32.mxu0 0.0
      %9189 = vmatmul.mubr.f32.gmra.mxu0 %v9012
      %v9190 = vpop.f32.mrf.mxu0
      %v9191 = vadd.f32 %v8988, %v9190
      %v9192 = vpop.f32.mrf.mxu0
      %9193 = vmatprep.mubr.f32.mxu0 0.0
      %9194 = vmatmul.mubr.f32.gmra.mxu0 %v9015
      %v9195 = vpop.f32.mrf.mxu0
      %v9196 = vadd.f32 %v8988, %v9195
      %v9197 = vpop.f32.mrf.mxu0
      %9198 = vmatprep.mubr.f32.mxu0 0.0
      %9199 = vmatmul.mubr.f32.gmra.mxu0 %v9018
      %v9200 = vpop.f32.mrf.mxu0
      %v9201 = vadd.f32 %v8988, %v9200
      %v9202 = vpop.f32.mrf.mxu0
      %9203 = vmatprep.mubr.f32.mxu0 0.0
      %9204 = vmatmul.mubr.f32.gmra.mxu0 %v9021
      %v9205 = vpop.f32.mrf.mxu0
      %v9206 = vadd.f32 %v8988, %v9205
      %v9207 = vpop.f32.mrf.mxu0
      %9208 = vmatprep.mubr.f32.mxu0 0.0
      %9209 = vmatmul.mubr.f32.gmra.mxu0 %v9024
      %v9210 = vpop.f32.mrf.mxu0
      %v9211 = vadd.f32 %v8988, %v9210
      %v9212 = vpop.f32.mrf.mxu0
      %9213 = vmatprep.mubr.f32.mxu0 0.0
      %9214 = vmatmul.mubr.f32.gmra.mxu0 %v9027
      %v9215 = vpop.f32.mrf.mxu0
      %v9216 = vadd.f32 %v8988, %v9215
      %v9217 = vpop.f32.mrf.mxu0
      %9218 = vmatprep.mubr.f32.mxu0 0.0
      %9219 = vmatmul.mubr.f32.gmra.mxu0 %v9030
      %v9220 = vpop.f32.mrf.mxu0
      %v9221 = vadd.f32 %v8988, %v9220
      %v9222 = vpop.f32.mrf.mxu0
      %9223 = vmatprep.mubr.f32.mxu0 0.0
      %9224 = vmatmul.mubr.f32.gmra.mxu0 %v9033
      %v9225 = vpop.f32.mrf.mxu0
      %v9226 = vadd.f32 %v8988, %v9225
      %v9227 = vpop.f32.mrf.mxu0
      %9228 = vmatprep.mubr.f32.mxu0 0.0
      %9229 = vmatmul.mubr.f32.gmra.mxu0 %v9036
      %v9230 = vpop.f32.mrf.mxu0
      %v9231 = vadd.f32 %v8988, %v9230
      %v9232 = vpop.f32.mrf.mxu0
      %9233 = vmatprep.mubr.f32.mxu0 0.0
      %9234 = vmatmul.mubr.f32.gmra.mxu0 %v9039
      %v9235 = vpop.f32.mrf.mxu0
      %v9236 = vadd.f32 %v8988, %v9235
      %v9237 = vpop.f32.mrf.mxu0
      %9238 = vmatprep.mubr.f32.mxu0 0.0
      %9239 = vmatmul.mubr.f32.gmra.mxu0 %v9042
      %v9240 = vpop.f32.mrf.mxu0
      %v9241 = vadd.f32 %v8988, %v9240
      %v9242 = vpop.f32.mrf.mxu0
      %9243 = vmatprep.mubr.f32.mxu0 0.0
      %9244 = vmatmul.mubr.f32.gmra.mxu0 %v9045
      %v9245 = vpop.f32.mrf.mxu0
      %v9246 = vadd.f32 %v8988, %v9245
      %v9247 = vpop.f32.mrf.mxu0
      %9248 = vmatprep.mubr.f32.mxu0 0.0
      %9249 = vmatmul.mubr.f32.gmra.mxu0 %v9048
      %v9250 = vpop.f32.mrf.mxu0
      %v9251 = vadd.f32 %v8988, %v9250
      %v9252 = vpop.f32.mrf.mxu0
      %9253 = vmatprep.mubr.f32.mxu0 0.0
      %9254 = vmatmul.mubr.f32.gmra.mxu0 %v9051
      %v9255 = vpop.f32.mrf.mxu0
      %v9256 = vadd.f32 %v8988, %v9255
      %v9257 = vpop.f32.mrf.mxu0
      %9258 = vmatprep.mubr.f32.mxu0 0.0
      %9259 = vmatmul.mubr.f32.gmra.mxu0 %v9054
      %v9260 = vpop.f32.mrf.mxu0
      %v9261 = vadd.f32 %v8988, %v9260
      %v9262 = vpop.f32.mrf.mxu0
      %9263 = vmatprep.mubr.f32.mxu0 0.0
      %9264 = vmatmul.mubr.f32.gmra.mxu0 %v9057
      %v9265 = vpop.f32.mrf.mxu0
      %v9266 = vadd.f32 %v8988, %v9265
      %v9267 = vpop.f32.mrf.mxu0
      %9268 = vmatprep.mubr.f32.mxu0 0.0
      %9269 = vmatmul.mubr.f32.gmra.mxu0 %v9060
      %v9270 = vpop.f32.mrf.mxu0
      %v9271 = vadd.f32 %v8988, %v9270
      %v9272 = vpop.f32.mrf.mxu0
      %9273 = vmatprep.mubr.f32.mxu0 0.0
      %9274 = vmatmul.mubr.f32.gmra.mxu0 %v9063
      %v9275 = vpop.f32.mrf.mxu0
      %v9276 = vadd.f32 %v8988, %v9275
      %v9277 = vpop.f32.mrf.mxu0
      %9278 = vmatprep.mubr.f32.mxu0 0.0
      %9279 = vmatmul.mubr.f32.gmra.mxu0 %v9066
      %v9280 = vpop.f32.mrf.mxu0
      %v9281 = vadd.f32 %v8988, %v9280
      %v9282 = vpop.f32.mrf.mxu0
      %9283 = vmatprep.mubr.f32.mxu0 0.0
      %9284 = vmatmul.mubr.f32.gmra.mxu0 %v9069
      %v9285 = vpop.f32.mrf.mxu0
      %v9286 = vadd.f32 %v8988, %v9285
      %v9287 = vpop.f32.mrf.mxu0
      %9288 = vmatprep.mubr.f32.mxu0 0.0
      %9289 = vmatmul.mubr.f32.gmra.mxu0 %v9072
      %v9290 = vpop.f32.mrf.mxu0
      %v9291 = vadd.f32 %v8988, %v9290
      %v9292 = vpop.f32.mrf.mxu0
      %9293 = vmatprep.mubr.f32.mxu0 0.0
      %9294 = vmatmul.mubr.f32.gmra.mxu0 %v9075
      %v9295 = vpop.f32.mrf.mxu0
      %v9296 = vadd.f32 %v8988, %v9295
      %v9297 = vpop.f32.mrf.mxu0
      %9298 = vmatprep.mubr.f32.mxu0 0.0
      %9299 = vmatmul.mubr.f32.gmra.mxu0 %v9078
      %v9300 = vpop.f32.mrf.mxu0
      %v9301 = vadd.f32 %v8988, %v9300
      %v9302 = vpop.f32.mrf.mxu0
      %9303 = vmatprep.mubr.f32.mxu0 0.0
      %9304 = vmatmul.mubr.f32.gmra.mxu0 %v9081
      %v9305 = vpop.f32.mrf.mxu0
      %v9306 = vadd.f32 %v8988, %v9305
      %v9307 = vpop.f32.mrf.mxu0
      %9308 = vmatprep.mubr.f32.mxu0 0.0
      %9309 = vmatmul.mubr.f32.gmra.mxu0 %v9084
      %v9310 = vpop.f32.mrf.mxu0
      %v9311 = vadd.f32 %v8988, %v9310
      %v9312 = vpop.f32.mrf.mxu0
      %9313 = vdwg.mxu0
      %vm9314 = vcmp.ge.f32.partialorder %v9156, 0.0
      %vm9315 = vcmp.ge.f32.partialorder %v9161, 0.0
      %vm9316 = vcmp.ge.f32.partialorder %v9166, 0.0
      %vm9317 = vcmp.ge.f32.partialorder %v9171, 0.0
      %vm9318 = vcmp.ge.f32.partialorder %v9176, 0.0
      %vm9319 = vcmp.ge.f32.partialorder %v9181, 0.0
      %vm9320 = vcmp.ge.f32.partialorder %v9186, 0.0
      %vm9321 = vcmp.ge.f32.partialorder %v9191, 0.0
      %vm9322 = vcmp.ge.f32.partialorder %v9196, 0.0
      %vm9323 = vcmp.ge.f32.partialorder %v9201, 0.0
      %vm9324 = vcmp.ge.f32.partialorder %v9206, 0.0
      %vm9325 = vcmp.ge.f32.partialorder %v9211, 0.0
      %vm9326 = vcmp.ge.f32.partialorder %v9216, 0.0
      %vm9327 = vcmp.ge.f32.partialorder %v9221, 0.0
      %vm9328 = vcmp.ge.f32.partialorder %v9226, 0.0
      %vm9329 = vcmp.ge.f32.partialorder %v9231, 0.0
      %vm9330 = vcmp.ge.f32.partialorder %v9236, 0.0
      %vm9331 = vcmp.ge.f32.partialorder %v9241, 0.0
      %vm9332 = vcmp.ge.f32.partialorder %v9246, 0.0
      %vm9333 = vcmp.ge.f32.partialorder %v9251, 0.0
      %vm9334 = vcmp.ge.f32.partialorder %v9256, 0.0
      %vm9335 = vcmp.ge.f32.partialorder %v9261, 0.0
      %vm9336 = vcmp.ge.f32.partialorder %v9266, 0.0
      %vm9337 = vcmp.ge.f32.partialorder %v9271, 0.0
      %vm9338 = vcmp.ge.f32.partialorder %v9276, 0.0
      %vm9339 = vcmp.ge.f32.partialorder %v9281, 0.0
      %vm9340 = vcmp.ge.f32.partialorder %v9286, 0.0
      %vm9341 = vcmp.ge.f32.partialorder %v9291, 0.0
      %vm9342 = vcmp.ge.f32.partialorder %v9296, 0.0
      %vm9343 = vcmp.ge.f32.partialorder %v9301, 0.0
      %vm9344 = vcmp.ge.f32.partialorder %v9306, 0.0
      %vm9345 = vcmp.ge.f32.partialorder %v9311, 0.0
      %v9346 = vmul.f32 %v9156, 0.01
      %v9347 = vmul.f32 %v9161, 0.01
      %v9348 = vmul.f32 %v9166, 0.01
      %v9349 = vmul.f32 %v9171, 0.01
      %v9350 = vmul.f32 %v9176, 0.01
      %v9351 = vmul.f32 %v9181, 0.01
      %v9352 = vmul.f32 %v9186, 0.01
      %v9353 = vmul.f32 %v9191, 0.01
      %v9354 = vmul.f32 %v9196, 0.01
      %v9355 = vmul.f32 %v9201, 0.01
      %v9356 = vmul.f32 %v9206, 0.01
      %v9357 = vmul.f32 %v9211, 0.01
      %v9358 = vmul.f32 %v9216, 0.01
      %v9359 = vmul.f32 %v9221, 0.01
      %v9360 = vmul.f32 %v9226, 0.01
      %v9361 = vmul.f32 %v9231, 0.01
      %v9362 = vmul.f32 %v9236, 0.01
      %v9363 = vmul.f32 %v9241, 0.01
      %v9364 = vmul.f32 %v9246, 0.01
      %v9365 = vmul.f32 %v9251, 0.01
      %v9366 = vmul.f32 %v9256, 0.01
      %v9367 = vmul.f32 %v9261, 0.01
      %v9368 = vmul.f32 %v9266, 0.01
      %v9369 = vmul.f32 %v9271, 0.01
      %v9370 = vmul.f32 %v9276, 0.01
      %v9371 = vmul.f32 %v9281, 0.01
      %v9372 = vmul.f32 %v9286, 0.01
      %v9373 = vmul.f32 %v9291, 0.01
      %v9374 = vmul.f32 %v9296, 0.01
      %v9375 = vmul.f32 %v9301, 0.01
      %v9376 = vmul.f32 %v9306, 0.01
      %v9377 = vmul.f32 %v9311, 0.01
      %v9378 = vsel %vm9314, %v9156, %v9346
      %v9379 = vsel %vm9315, %v9161, %v9347
      %v9380 = vsel %vm9316, %v9166, %v9348
      %v9381 = vsel %vm9317, %v9171, %v9349
      %v9382 = vsel %vm9318, %v9176, %v9350
      %v9383 = vsel %vm9319, %v9181, %v9351
      %v9384 = vsel %vm9320, %v9186, %v9352
      %v9385 = vsel %vm9321, %v9191, %v9353
      %v9386 = vsel %vm9322, %v9196, %v9354
      %v9387 = vsel %vm9323, %v9201, %v9355
      %v9388 = vsel %vm9324, %v9206, %v9356
      %v9389 = vsel %vm9325, %v9211, %v9357
      %v9390 = vsel %vm9326, %v9216, %v9358
      %v9391 = vsel %vm9327, %v9221, %v9359
      %v9392 = vsel %vm9328, %v9226, %v9360
      %v9393 = vsel %vm9329, %v9231, %v9361
      %v9394 = vsel %vm9330, %v9236, %v9362
      %v9395 = vsel %vm9331, %v9241, %v9363
      %v9396 = vsel %vm9332, %v9246, %v9364
      %v9397 = vsel %vm9333, %v9251, %v9365
      %v9398 = vsel %vm9334, %v9256, %v9366
      %v9399 = vsel %vm9335, %v9261, %v9367
      %v9400 = vsel %vm9336, %v9266, %v9368
      %v9401 = vsel %vm9337, %v9271, %v9369
      %v9402 = vsel %vm9338, %v9276, %v9370
      %v9403 = vsel %vm9339, %v9281, %v9371
      %v9404 = vsel %vm9340, %v9286, %v9372
      %v9405 = vsel %vm9341, %v9291, %v9373
      %v9406 = vsel %vm9342, %v9296, %v9374
      %v9407 = vsel %vm9343, %v9301, %v9375
      %v9408 = vsel %vm9344, %v9306, %v9376
      %v9409 = vsel %vm9345, %v9311, %v9377
      %s9410 = scalar_lea.vmem %s3, 392
      %v9411 = vld [vmem:[%s9410] sm:$0xff]
      %v9412 = vld [vmem:[%s9410 + $0x8] sm:$0xff]
      %v9413 = vld [vmem:[%s9410 + $0x10] sm:$0xff]
      %v9414 = vld [vmem:[%s9410 + $0x18] sm:$0xff]
      %v9415 = vld [vmem:[%s9410 + $0x20] sm:$0xff]
      %v9416 = vld [vmem:[%s9410 + $0x28] sm:$0xff]
      %v9417 = vld [vmem:[%s9410 + $0x30] sm:$0x3]
      %s9418 = scalar_lea.vmem %s4, 7
      %v9419 = vld [vmem:[%s9418] sm:$0x1]
      %v9421 = vlaneseq
      %v9422 = vshrl.u32 %v9421, 7
      %v9423 = vsub.s32 0, %v9422
      %v9424 = vrot.slane %v9419, %v9423
      %v9427 = vsel %vm843, %v9378, 0
      %v9430 = vsel %vm843, %v9379, 0
      %v9433 = vsel %vm843, %v9380, 0
      %v9436 = vsel %vm843, %v9381, 0
      %v9439 = vsel %vm843, %v9382, 0
      %v9442 = vsel %vm843, %v9383, 0
      %v9445 = vsel %vm843, %v9384, 0
      %v9448 = vsel %vm843, %v9385, 0
      %v9451 = vsel %vm843, %v9386, 0
      %v9454 = vsel %vm843, %v9387, 0
      %v9457 = vsel %vm843, %v9388, 0
      %v9460 = vsel %vm843, %v9389, 0
      %v9463 = vsel %vm843, %v9390, 0
      %v9466 = vsel %vm843, %v9391, 0
      %v9469 = vsel %vm843, %v9392, 0
      %v9472 = vsel %vm843, %v9393, 0
      %v9475 = vsel %vm843, %v9394, 0
      %v9478 = vsel %vm843, %v9395, 0
      %v9481 = vsel %vm843, %v9396, 0
      %v9484 = vsel %vm843, %v9397, 0
      %v9487 = vsel %vm843, %v9398, 0
      %v9490 = vsel %vm843, %v9399, 0
      %v9493 = vsel %vm843, %v9400, 0
      %v9496 = vsel %vm843, %v9401, 0
      %v9499 = vsel %vm843, %v9402, 0
      %v9502 = vsel %vm843, %v9403, 0
      %v9505 = vsel %vm843, %v9404, 0
      %v9508 = vsel %vm843, %v9405, 0
      %v9511 = vsel %vm843, %v9406, 0
      %v9514 = vsel %vm843, %v9407, 0
      %v9517 = vsel %vm843, %v9408, 0
      %v9520 = vsel %vm843, %v9409, 0
      %v9523 = vsel %vm940, %v9417, 0
      %9525 = vmatprep.subr.mxu0 0.0
      %9526 = vmatpush1.msra.mxu0 0.0
      %9527 = vmatprep.subr.mxu0 0.0
      %9528 = vmatpush1.msra.mxu0 0.0
      %9529 = vmatprep.subr.mxu0 0.0
      %9530 = vmatpush1.msra.mxu0 0.0
      %9531 = vmatprep.subr.mxu0 0.0
      %9532 = vmatpush1.msra.mxu0 0.0
      %9533 = vmatprep.subr.mxu0 0.0
      %9534 = vmatpush1.msra.mxu0 0.0
      %9535 = vmatprep.subr.mxu0 0.0
      %9536 = vmatpush1.msra.mxu0 0.0
      %9537 = vmatprep.subr.mxu0 0.0
      %9538 = vmatpush1.msra.mxu0 0.0
      %9539 = vmatprep.subr.mxu0 0.0
      %9540 = vmatpush1.msra.mxu0 0.0
      %9541 = vmatprep.subr.mxu0 0.0
      %9542 = vmatpush1.msra.mxu0 0.0
      %9543 = vmatprep.subr.mxu0 0.0
      %9544 = vmatpush1.msra.mxu0 %v9523
      %9545 = vmatprep.subr.mxu0 0.0
      %9546 = vmatpush1.msra.mxu0 %v9416
      %9547 = vmatprep.subr.mxu0 0.0
      %9548 = vmatpush1.msra.mxu0 %v9415
      %9549 = vmatprep.subr.mxu0 0.0
      %9550 = vmatpush1.msra.mxu0 %v9414
      %9551 = vmatprep.subr.mxu0 0.0
      %9552 = vmatpush1.msra.mxu0 %v9413
      %9553 = vmatprep.subr.mxu0 0.0
      %9554 = vmatpush1.msra.mxu0 %v9412
      %9555 = vmatprep.subr.mxu0 0.0
      %9556 = vmatpush1.msra.mxu0 %v9411
      %9557 = vmatprep.subr.mxu0 0.0
      %9558 = vmatpush2.msra.mxu0 0.0
      %9559 = vmatprep.subr.mxu0 0.0
      %9560 = vmatpush2.msra.mxu0 0.0
      %9561 = vmatprep.subr.mxu0 0.0
      %9562 = vmatpush2.msra.mxu0 0.0
      %9563 = vmatprep.subr.mxu0 0.0
      %9564 = vmatpush2.msra.mxu0 0.0
      %9565 = vmatprep.subr.mxu0 0.0
      %9566 = vmatpush2.msra.mxu0 0.0
      %9567 = vmatprep.subr.mxu0 0.0
      %9568 = vmatpush2.msra.mxu0 0.0
      %9569 = vmatprep.subr.mxu0 0.0
      %9570 = vmatpush2.msra.mxu0 0.0
      %9571 = vmatprep.subr.mxu0 0.0
      %9572 = vmatpush2.msra.mxu0 0.0
      %9573 = vmatprep.subr.mxu0 0.0
      %9574 = vmatpush2.msra.mxu0 0.0
      %9575 = vmatprep.subr.mxu0 0.0
      %9576 = vmatpush2.msra.mxu0 0.0
      %9577 = vmatprep.subr.mxu0 0.0
      %9578 = vmatpush2.msra.mxu0 0.0
      %9579 = vmatprep.subr.mxu0 0.0
      %9580 = vmatpush2.msra.mxu0 0.0
      %9581 = vmatprep.subr.mxu0 0.0
      %9582 = vmatpush2.msra.mxu0 0.0
      %9583 = vmatprep.subr.mxu0 0.0
      %9584 = vmatpush2.msra.mxu0 0.0
      %9585 = vmatprep.subr.mxu0 0.0
      %9586 = vmatpush2.msra.mxu0 0.0
      %9587 = vmatprep.subr.mxu0 0.0
      %9588 = vmatpush2.msra.mxu0 0.0
      %9589 = vmatprep.mubr.f32.mxu0 0.0
      %9590 = vmatmul.mubr.f32.gmra.mxu0 %v9427
      %v9591 = vpop.f32.mrf.mxu0
      %v9592 = vadd.f32 %v9424, %v9591
      %v9593 = vpop.f32.mrf.mxu0
      %9594 = vmatprep.mubr.f32.mxu0 0.0
      %9595 = vmatmul.mubr.f32.gmra.mxu0 %v9430
      %v9596 = vpop.f32.mrf.mxu0
      %v9597 = vadd.f32 %v9424, %v9596
      %v9598 = vpop.f32.mrf.mxu0
      %9599 = vmatprep.mubr.f32.mxu0 0.0
      %9600 = vmatmul.mubr.f32.gmra.mxu0 %v9433
      %v9601 = vpop.f32.mrf.mxu0
      %v9602 = vadd.f32 %v9424, %v9601
      %v9603 = vpop.f32.mrf.mxu0
      %9604 = vmatprep.mubr.f32.mxu0 0.0
      %9605 = vmatmul.mubr.f32.gmra.mxu0 %v9436
      %v9606 = vpop.f32.mrf.mxu0
      %v9607 = vadd.f32 %v9424, %v9606
      %v9608 = vpop.f32.mrf.mxu0
      %9609 = vmatprep.mubr.f32.mxu0 0.0
      %9610 = vmatmul.mubr.f32.gmra.mxu0 %v9439
      %v9611 = vpop.f32.mrf.mxu0
      %v9612 = vadd.f32 %v9424, %v9611
      %v9613 = vpop.f32.mrf.mxu0
      %9614 = vmatprep.mubr.f32.mxu0 0.0
      %9615 = vmatmul.mubr.f32.gmra.mxu0 %v9442
      %v9616 = vpop.f32.mrf.mxu0
      %v9617 = vadd.f32 %v9424, %v9616
      %v9618 = vpop.f32.mrf.mxu0
      %9619 = vmatprep.mubr.f32.mxu0 0.0
      %9620 = vmatmul.mubr.f32.gmra.mxu0 %v9445
      %v9621 = vpop.f32.mrf.mxu0
      %v9622 = vadd.f32 %v9424, %v9621
      %v9623 = vpop.f32.mrf.mxu0
      %9624 = vmatprep.mubr.f32.mxu0 0.0
      %9625 = vmatmul.mubr.f32.gmra.mxu0 %v9448
      %v9626 = vpop.f32.mrf.mxu0
      %v9627 = vadd.f32 %v9424, %v9626
      %v9628 = vpop.f32.mrf.mxu0
      %9629 = vmatprep.mubr.f32.mxu0 0.0
      %9630 = vmatmul.mubr.f32.gmra.mxu0 %v9451
      %v9631 = vpop.f32.mrf.mxu0
      %v9632 = vadd.f32 %v9424, %v9631
      %v9633 = vpop.f32.mrf.mxu0
      %9634 = vmatprep.mubr.f32.mxu0 0.0
      %9635 = vmatmul.mubr.f32.gmra.mxu0 %v9454
      %v9636 = vpop.f32.mrf.mxu0
      %v9637 = vadd.f32 %v9424, %v9636
      %v9638 = vpop.f32.mrf.mxu0
      %9639 = vmatprep.mubr.f32.mxu0 0.0
      %9640 = vmatmul.mubr.f32.gmra.mxu0 %v9457
      %v9641 = vpop.f32.mrf.mxu0
      %v9642 = vadd.f32 %v9424, %v9641
      %v9643 = vpop.f32.mrf.mxu0
      %9644 = vmatprep.mubr.f32.mxu0 0.0
      %9645 = vmatmul.mubr.f32.gmra.mxu0 %v9460
      %v9646 = vpop.f32.mrf.mxu0
      %v9647 = vadd.f32 %v9424, %v9646
      %v9648 = vpop.f32.mrf.mxu0
      %9649 = vmatprep.mubr.f32.mxu0 0.0
      %9650 = vmatmul.mubr.f32.gmra.mxu0 %v9463
      %v9651 = vpop.f32.mrf.mxu0
      %v9652 = vadd.f32 %v9424, %v9651
      %v9653 = vpop.f32.mrf.mxu0
      %9654 = vmatprep.mubr.f32.mxu0 0.0
      %9655 = vmatmul.mubr.f32.gmra.mxu0 %v9466
      %v9656 = vpop.f32.mrf.mxu0
      %v9657 = vadd.f32 %v9424, %v9656
      %v9658 = vpop.f32.mrf.mxu0
      %9659 = vmatprep.mubr.f32.mxu0 0.0
      %9660 = vmatmul.mubr.f32.gmra.mxu0 %v9469
      %v9661 = vpop.f32.mrf.mxu0
      %v9662 = vadd.f32 %v9424, %v9661
      %v9663 = vpop.f32.mrf.mxu0
      %9664 = vmatprep.mubr.f32.mxu0 0.0
      %9665 = vmatmul.mubr.f32.gmra.mxu0 %v9472
      %v9666 = vpop.f32.mrf.mxu0
      %v9667 = vadd.f32 %v9424, %v9666
      %v9668 = vpop.f32.mrf.mxu0
      %9669 = vmatprep.mubr.f32.mxu0 0.0
      %9670 = vmatmul.mubr.f32.gmra.mxu0 %v9475
      %v9671 = vpop.f32.mrf.mxu0
      %v9672 = vadd.f32 %v9424, %v9671
      %v9673 = vpop.f32.mrf.mxu0
      %9674 = vmatprep.mubr.f32.mxu0 0.0
      %9675 = vmatmul.mubr.f32.gmra.mxu0 %v9478
      %v9676 = vpop.f32.mrf.mxu0
      %v9677 = vadd.f32 %v9424, %v9676
      %v9678 = vpop.f32.mrf.mxu0
      %9679 = vmatprep.mubr.f32.mxu0 0.0
      %9680 = vmatmul.mubr.f32.gmra.mxu0 %v9481
      %v9681 = vpop.f32.mrf.mxu0
      %v9682 = vadd.f32 %v9424, %v9681
      %v9683 = vpop.f32.mrf.mxu0
      %9684 = vmatprep.mubr.f32.mxu0 0.0
      %9685 = vmatmul.mubr.f32.gmra.mxu0 %v9484
      %v9686 = vpop.f32.mrf.mxu0
      %v9687 = vadd.f32 %v9424, %v9686
      %v9688 = vpop.f32.mrf.mxu0
      %9689 = vmatprep.mubr.f32.mxu0 0.0
      %9690 = vmatmul.mubr.f32.gmra.mxu0 %v9487
      %v9691 = vpop.f32.mrf.mxu0
      %v9692 = vadd.f32 %v9424, %v9691
      %v9693 = vpop.f32.mrf.mxu0
      %9694 = vmatprep.mubr.f32.mxu0 0.0
      %9695 = vmatmul.mubr.f32.gmra.mxu0 %v9490
      %v9696 = vpop.f32.mrf.mxu0
      %v9697 = vadd.f32 %v9424, %v9696
      %v9698 = vpop.f32.mrf.mxu0
      %9699 = vmatprep.mubr.f32.mxu0 0.0
      %9700 = vmatmul.mubr.f32.gmra.mxu0 %v9493
      %v9701 = vpop.f32.mrf.mxu0
      %v9702 = vadd.f32 %v9424, %v9701
      %v9703 = vpop.f32.mrf.mxu0
      %9704 = vmatprep.mubr.f32.mxu0 0.0
      %9705 = vmatmul.mubr.f32.gmra.mxu0 %v9496
      %v9706 = vpop.f32.mrf.mxu0
      %v9707 = vadd.f32 %v9424, %v9706
      %v9708 = vpop.f32.mrf.mxu0
      %9709 = vmatprep.mubr.f32.mxu0 0.0
      %9710 = vmatmul.mubr.f32.gmra.mxu0 %v9499
      %v9711 = vpop.f32.mrf.mxu0
      %v9712 = vadd.f32 %v9424, %v9711
      %v9713 = vpop.f32.mrf.mxu0
      %9714 = vmatprep.mubr.f32.mxu0 0.0
      %9715 = vmatmul.mubr.f32.gmra.mxu0 %v9502
      %v9716 = vpop.f32.mrf.mxu0
      %v9717 = vadd.f32 %v9424, %v9716
      %v9718 = vpop.f32.mrf.mxu0
      %9719 = vmatprep.mubr.f32.mxu0 0.0
      %9720 = vmatmul.mubr.f32.gmra.mxu0 %v9505
      %v9721 = vpop.f32.mrf.mxu0
      %v9722 = vadd.f32 %v9424, %v9721
      %v9723 = vpop.f32.mrf.mxu0
      %9724 = vmatprep.mubr.f32.mxu0 0.0
      %9725 = vmatmul.mubr.f32.gmra.mxu0 %v9508
      %v9726 = vpop.f32.mrf.mxu0
      %v9727 = vadd.f32 %v9424, %v9726
      %v9728 = vpop.f32.mrf.mxu0
      %9729 = vmatprep.mubr.f32.mxu0 0.0
      %9730 = vmatmul.mubr.f32.gmra.mxu0 %v9511
      %v9731 = vpop.f32.mrf.mxu0
      %v9732 = vadd.f32 %v9424, %v9731
      %v9733 = vpop.f32.mrf.mxu0
      %9734 = vmatprep.mubr.f32.mxu0 0.0
      %9735 = vmatmul.mubr.f32.gmra.mxu0 %v9514
      %v9736 = vpop.f32.mrf.mxu0
      %v9737 = vadd.f32 %v9424, %v9736
      %v9738 = vpop.f32.mrf.mxu0
      %9739 = vmatprep.mubr.f32.mxu0 0.0
      %9740 = vmatmul.mubr.f32.gmra.mxu0 %v9517
      %v9741 = vpop.f32.mrf.mxu0
      %v9742 = vadd.f32 %v9424, %v9741
      %v9743 = vpop.f32.mrf.mxu0
      %9744 = vmatprep.mubr.f32.mxu0 0.0
      %9745 = vmatmul.mubr.f32.gmra.mxu0 %v9520
      %v9746 = vpop.f32.mrf.mxu0
      %v9747 = vadd.f32 %v9424, %v9746
      %v9748 = vpop.f32.mrf.mxu0
      %9749 = vdwg.mxu0
      %vm9750 = vcmp.ge.f32.partialorder %v9592, 0.0
      %vm9751 = vcmp.ge.f32.partialorder %v9597, 0.0
      %vm9752 = vcmp.ge.f32.partialorder %v9602, 0.0
      %vm9753 = vcmp.ge.f32.partialorder %v9607, 0.0
      %vm9754 = vcmp.ge.f32.partialorder %v9612, 0.0
      %vm9755 = vcmp.ge.f32.partialorder %v9617, 0.0
      %vm9756 = vcmp.ge.f32.partialorder %v9622, 0.0
      %vm9757 = vcmp.ge.f32.partialorder %v9627, 0.0
      %vm9758 = vcmp.ge.f32.partialorder %v9632, 0.0
      %vm9759 = vcmp.ge.f32.partialorder %v9637, 0.0
      %vm9760 = vcmp.ge.f32.partialorder %v9642, 0.0
      %vm9761 = vcmp.ge.f32.partialorder %v9647, 0.0
      %vm9762 = vcmp.ge.f32.partialorder %v9652, 0.0
      %vm9763 = vcmp.ge.f32.partialorder %v9657, 0.0
      %vm9764 = vcmp.ge.f32.partialorder %v9662, 0.0
      %vm9765 = vcmp.ge.f32.partialorder %v9667, 0.0
      %vm9766 = vcmp.ge.f32.partialorder %v9672, 0.0
      %vm9767 = vcmp.ge.f32.partialorder %v9677, 0.0
      %vm9768 = vcmp.ge.f32.partialorder %v9682, 0.0
      %vm9769 = vcmp.ge.f32.partialorder %v9687, 0.0
      %vm9770 = vcmp.ge.f32.partialorder %v9692, 0.0
      %vm9771 = vcmp.ge.f32.partialorder %v9697, 0.0
      %vm9772 = vcmp.ge.f32.partialorder %v9702, 0.0
      %vm9773 = vcmp.ge.f32.partialorder %v9707, 0.0
      %vm9774 = vcmp.ge.f32.partialorder %v9712, 0.0
      %vm9775 = vcmp.ge.f32.partialorder %v9717, 0.0
      %vm9776 = vcmp.ge.f32.partialorder %v9722, 0.0
      %vm9777 = vcmp.ge.f32.partialorder %v9727, 0.0
      %vm9778 = vcmp.ge.f32.partialorder %v9732, 0.0
      %vm9779 = vcmp.ge.f32.partialorder %v9737, 0.0
      %vm9780 = vcmp.ge.f32.partialorder %v9742, 0.0
      %vm9781 = vcmp.ge.f32.partialorder %v9747, 0.0
      %v9782 = vmul.f32 %v9592, 0.01
      %v9783 = vmul.f32 %v9597, 0.01
      %v9784 = vmul.f32 %v9602, 0.01
      %v9785 = vmul.f32 %v9607, 0.01
      %v9786 = vmul.f32 %v9612, 0.01
      %v9787 = vmul.f32 %v9617, 0.01
      %v9788 = vmul.f32 %v9622, 0.01
      %v9789 = vmul.f32 %v9627, 0.01
      %v9790 = vmul.f32 %v9632, 0.01
      %v9791 = vmul.f32 %v9637, 0.01
      %v9792 = vmul.f32 %v9642, 0.01
      %v9793 = vmul.f32 %v9647, 0.01
      %v9794 = vmul.f32 %v9652, 0.01
      %v9795 = vmul.f32 %v9657, 0.01
      %v9796 = vmul.f32 %v9662, 0.01
      %v9797 = vmul.f32 %v9667, 0.01
      %v9798 = vmul.f32 %v9672, 0.01
      %v9799 = vmul.f32 %v9677, 0.01
      %v9800 = vmul.f32 %v9682, 0.01
      %v9801 = vmul.f32 %v9687, 0.01
      %v9802 = vmul.f32 %v9692, 0.01
      %v9803 = vmul.f32 %v9697, 0.01
      %v9804 = vmul.f32 %v9702, 0.01
      %v9805 = vmul.f32 %v9707, 0.01
      %v9806 = vmul.f32 %v9712, 0.01
      %v9807 = vmul.f32 %v9717, 0.01
      %v9808 = vmul.f32 %v9722, 0.01
      %v9809 = vmul.f32 %v9727, 0.01
      %v9810 = vmul.f32 %v9732, 0.01
      %v9811 = vmul.f32 %v9737, 0.01
      %v9812 = vmul.f32 %v9742, 0.01
      %v9813 = vmul.f32 %v9747, 0.01
      %v9814 = vsel %vm9750, %v9592, %v9782
      %v9815 = vsel %vm9751, %v9597, %v9783
      %v9816 = vsel %vm9752, %v9602, %v9784
      %v9817 = vsel %vm9753, %v9607, %v9785
      %v9818 = vsel %vm9754, %v9612, %v9786
      %v9819 = vsel %vm9755, %v9617, %v9787
      %v9820 = vsel %vm9756, %v9622, %v9788
      %v9821 = vsel %vm9757, %v9627, %v9789
      %v9822 = vsel %vm9758, %v9632, %v9790
      %v9823 = vsel %vm9759, %v9637, %v9791
      %v9824 = vsel %vm9760, %v9642, %v9792
      %v9825 = vsel %vm9761, %v9647, %v9793
      %v9826 = vsel %vm9762, %v9652, %v9794
      %v9827 = vsel %vm9763, %v9657, %v9795
      %v9828 = vsel %vm9764, %v9662, %v9796
      %v9829 = vsel %vm9765, %v9667, %v9797
      %v9830 = vsel %vm9766, %v9672, %v9798
      %v9831 = vsel %vm9767, %v9677, %v9799
      %v9832 = vsel %vm9768, %v9682, %v9800
      %v9833 = vsel %vm9769, %v9687, %v9801
      %v9834 = vsel %vm9770, %v9692, %v9802
      %v9835 = vsel %vm9771, %v9697, %v9803
      %v9836 = vsel %vm9772, %v9702, %v9804
      %v9837 = vsel %vm9773, %v9707, %v9805
      %v9838 = vsel %vm9774, %v9712, %v9806
      %v9839 = vsel %vm9775, %v9717, %v9807
      %v9840 = vsel %vm9776, %v9722, %v9808
      %v9841 = vsel %vm9777, %v9727, %v9809
      %v9842 = vsel %vm9778, %v9732, %v9810
      %v9843 = vsel %vm9779, %v9737, %v9811
      %v9844 = vsel %vm9780, %v9742, %v9812
      %v9845 = vsel %vm9781, %v9747, %v9813
      %v9847 = vsel %vm1265, %v9814, 0
      %v9850 = vsel %vm1265, %v9815, 0
      %v9853 = vsel %vm1265, %v9816, 0
      %v9856 = vsel %vm1265, %v9817, 0
      %v9859 = vsel %vm1265, %v9818, 0
      %v9862 = vsel %vm1265, %v9819, 0
      %v9865 = vsel %vm1265, %v9820, 0
      %v9868 = vsel %vm1265, %v9821, 0
      %v9871 = vsel %vm1265, %v9822, 0
      %v9874 = vsel %vm1265, %v9823, 0
      %v9877 = vsel %vm1265, %v9824, 0
      %v9880 = vsel %vm1265, %v9825, 0
      %v9883 = vsel %vm1265, %v9826, 0
      %v9886 = vsel %vm1265, %v9827, 0
      %v9889 = vsel %vm1265, %v9828, 0
      %v9892 = vsel %vm1265, %v9829, 0
      %v9895 = vsel %vm1265, %v9830, 0
      %v9898 = vsel %vm1265, %v9831, 0
      %v9901 = vsel %vm1265, %v9832, 0
      %v9904 = vsel %vm1265, %v9833, 0
      %v9907 = vsel %vm1265, %v9834, 0
      %v9910 = vsel %vm1265, %v9835, 0
      %v9913 = vsel %vm1265, %v9836, 0
      %v9916 = vsel %vm1265, %v9837, 0
      %v9919 = vsel %vm1265, %v9838, 0
      %v9922 = vsel %vm1265, %v9839, 0
      %v9925 = vsel %vm1265, %v9840, 0
      %v9928 = vsel %vm1265, %v9841, 0
      %v9931 = vsel %vm1265, %v9842, 0
      %v9934 = vsel %vm1265, %v9843, 0
      %v9937 = vsel %vm1265, %v9844, 0
      %v9940 = vsel %vm1265, %v9845, 0
      %9942 = vmatprep.subr.mxu0 0.0
      %9943 = vmatpush1.msra.mxu0 0.0
      %9944 = vmatprep.subr.mxu0 0.0
      %9945 = vmatpush1.msra.mxu0 0.0
      %9946 = vmatprep.subr.mxu0 0.0
      %9947 = vmatpush1.msra.mxu0 %v8720
      %9948 = vmatprep.subr.mxu0 0.0
      %9949 = vmatpush1.msra.mxu0 %v7754
      %9950 = vmatprep.subr.mxu0 0.0
      %9951 = vmatpush1.msra.mxu0 %v7753
      %9952 = vmatprep.subr.mxu0 0.0
      %9953 = vmatpush1.msra.mxu0 %v7752
      %9954 = vmatprep.subr.mxu0 0.0
      %9955 = vmatpush1.msra.mxu0 %v7751
      %9956 = vmatprep.subr.mxu0 0.0
      %9957 = vmatpush1.msra.mxu0 %v7750
      %9958 = vmatprep.subr.mxu0 0.0
      %9959 = vmatpush1.msra.mxu0 %v7749
      %9960 = vmatprep.subr.mxu0 0.0
      %9961 = vmatpush1.msra.mxu0 %v7748
      %9962 = vmatprep.subr.mxu0 0.0
      %9963 = vmatpush1.msra.mxu0 %v7747
      %9964 = vmatprep.subr.mxu0 0.0
      %9965 = vmatpush1.msra.mxu0 %v7746
      %9966 = vmatprep.subr.mxu0 0.0
      %9967 = vmatpush1.msra.mxu0 %v7745
      %9968 = vmatprep.subr.mxu0 0.0
      %9969 = vmatpush1.msra.mxu0 %v7744
      %9970 = vmatprep.subr.mxu0 0.0
      %9971 = vmatpush1.msra.mxu0 %v7743
      %9972 = vmatprep.subr.mxu0 0.0
      %9973 = vmatpush1.msra.mxu0 %v7742
      %9974 = vmatprep.subr.mxu0 0.0
      %9975 = vmatpush2.msra.mxu0 0.0
      %9976 = vmatprep.subr.mxu0 0.0
      %9977 = vmatpush2.msra.mxu0 0.0
      %9978 = vmatprep.subr.mxu0 0.0
      %9979 = vmatpush2.msra.mxu0 0.0
      %9980 = vmatprep.subr.mxu0 0.0
      %9981 = vmatpush2.msra.mxu0 0.0
      %9982 = vmatprep.subr.mxu0 0.0
      %9983 = vmatpush2.msra.mxu0 0.0
      %9984 = vmatprep.subr.mxu0 0.0
      %9985 = vmatpush2.msra.mxu0 0.0
      %9986 = vmatprep.subr.mxu0 0.0
      %9987 = vmatpush2.msra.mxu0 0.0
      %9988 = vmatprep.subr.mxu0 0.0
      %9989 = vmatpush2.msra.mxu0 0.0
      %9990 = vmatprep.subr.mxu0 0.0
      %9991 = vmatpush2.msra.mxu0 0.0
      %9992 = vmatprep.subr.mxu0 0.0
      %9993 = vmatpush2.msra.mxu0 0.0
      %9994 = vmatprep.subr.mxu0 0.0
      %9995 = vmatpush2.msra.mxu0 0.0
      %9996 = vmatprep.subr.mxu0 0.0
      %9997 = vmatpush2.msra.mxu0 0.0
      %9998 = vmatprep.subr.mxu0 0.0
      %9999 = vmatpush2.msra.mxu0 0.0
      %10000 = vmatprep.subr.mxu0 0.0
      %10001 = vmatpush2.msra.mxu0 0.0
      %10002 = vmatprep.subr.mxu0 0.0
      %10003 = vmatpush2.msra.mxu0 0.0
      %10004 = vmatprep.subr.mxu0 0.0
      %10005 = vmatpush2.msra.mxu0 0.0
      %10006 = vmatprep.mubr.f32.mxu0 0.0
      %10007 = vmatmul.mubr.f32.gmra.mxu0 %v9847
      %v10008 = vpop.f32.mrf.mxu0
      %v10009 = vadd.f32 0.0, %v10008
      %v10010 = vpop.f32.mrf.mxu0
      %10011 = vmatprep.mubr.f32.mxu0 0.0
      %10012 = vmatmul.mubr.f32.gmra.mxu0 %v9850
      %v10013 = vpop.f32.mrf.mxu0
      %v10014 = vadd.f32 0.0, %v10013
      %v10015 = vpop.f32.mrf.mxu0
      %10016 = vmatprep.mubr.f32.mxu0 0.0
      %10017 = vmatmul.mubr.f32.gmra.mxu0 %v9853
      %v10018 = vpop.f32.mrf.mxu0
      %v10019 = vadd.f32 0.0, %v10018
      %v10020 = vpop.f32.mrf.mxu0
      %10021 = vmatprep.mubr.f32.mxu0 0.0
      %10022 = vmatmul.mubr.f32.gmra.mxu0 %v9856
      %v10023 = vpop.f32.mrf.mxu0
      %v10024 = vadd.f32 0.0, %v10023
      %v10025 = vpop.f32.mrf.mxu0
      %10026 = vmatprep.mubr.f32.mxu0 0.0
      %10027 = vmatmul.mubr.f32.gmra.mxu0 %v9859
      %v10028 = vpop.f32.mrf.mxu0
      %v10029 = vadd.f32 0.0, %v10028
      %v10030 = vpop.f32.mrf.mxu0
      %10031 = vmatprep.mubr.f32.mxu0 0.0
      %10032 = vmatmul.mubr.f32.gmra.mxu0 %v9862
      %v10033 = vpop.f32.mrf.mxu0
      %v10034 = vadd.f32 0.0, %v10033
      %v10035 = vpop.f32.mrf.mxu0
      %10036 = vmatprep.mubr.f32.mxu0 0.0
      %10037 = vmatmul.mubr.f32.gmra.mxu0 %v9865
      %v10038 = vpop.f32.mrf.mxu0
      %v10039 = vadd.f32 0.0, %v10038
      %v10040 = vpop.f32.mrf.mxu0
      %10041 = vmatprep.mubr.f32.mxu0 0.0
      %10042 = vmatmul.mubr.f32.gmra.mxu0 %v9868
      %v10043 = vpop.f32.mrf.mxu0
      %v10044 = vadd.f32 0.0, %v10043
      %v10045 = vpop.f32.mrf.mxu0
      %10046 = vmatprep.mubr.f32.mxu0 0.0
      %10047 = vmatmul.mubr.f32.gmra.mxu0 %v9871
      %v10048 = vpop.f32.mrf.mxu0
      %v10049 = vadd.f32 0.0, %v10048
      %v10050 = vpop.f32.mrf.mxu0
      %10051 = vmatprep.mubr.f32.mxu0 0.0
      %10052 = vmatmul.mubr.f32.gmra.mxu0 %v9874
      %v10053 = vpop.f32.mrf.mxu0
      %v10054 = vadd.f32 0.0, %v10053
      %v10055 = vpop.f32.mrf.mxu0
      %10056 = vmatprep.mubr.f32.mxu0 0.0
      %10057 = vmatmul.mubr.f32.gmra.mxu0 %v9877
      %v10058 = vpop.f32.mrf.mxu0
      %v10059 = vadd.f32 0.0, %v10058
      %v10060 = vpop.f32.mrf.mxu0
      %10061 = vmatprep.mubr.f32.mxu0 0.0
      %10062 = vmatmul.mubr.f32.gmra.mxu0 %v9880
      %v10063 = vpop.f32.mrf.mxu0
      %v10064 = vadd.f32 0.0, %v10063
      %v10065 = vpop.f32.mrf.mxu0
      %10066 = vmatprep.mubr.f32.mxu0 0.0
      %10067 = vmatmul.mubr.f32.gmra.mxu0 %v9883
      %v10068 = vpop.f32.mrf.mxu0
      %v10069 = vadd.f32 0.0, %v10068
      %v10070 = vpop.f32.mrf.mxu0
      %10071 = vmatprep.mubr.f32.mxu0 0.0
      %10072 = vmatmul.mubr.f32.gmra.mxu0 %v9886
      %v10073 = vpop.f32.mrf.mxu0
      %v10074 = vadd.f32 0.0, %v10073
      %v10075 = vpop.f32.mrf.mxu0
      %10076 = vmatprep.mubr.f32.mxu0 0.0
      %10077 = vmatmul.mubr.f32.gmra.mxu0 %v9889
      %v10078 = vpop.f32.mrf.mxu0
      %v10079 = vadd.f32 0.0, %v10078
      %v10080 = vpop.f32.mrf.mxu0
      %10081 = vmatprep.mubr.f32.mxu0 0.0
      %10082 = vmatmul.mubr.f32.gmra.mxu0 %v9892
      %v10083 = vpop.f32.mrf.mxu0
      %v10084 = vadd.f32 0.0, %v10083
      %v10085 = vpop.f32.mrf.mxu0
      %10086 = vmatprep.mubr.f32.mxu0 0.0
      %10087 = vmatmul.mubr.f32.gmra.mxu0 %v9895
      %v10088 = vpop.f32.mrf.mxu0
      %v10089 = vadd.f32 0.0, %v10088
      %v10090 = vpop.f32.mrf.mxu0
      %10091 = vmatprep.mubr.f32.mxu0 0.0
      %10092 = vmatmul.mubr.f32.gmra.mxu0 %v9898
      %v10093 = vpop.f32.mrf.mxu0
      %v10094 = vadd.f32 0.0, %v10093
      %v10095 = vpop.f32.mrf.mxu0
      %10096 = vmatprep.mubr.f32.mxu0 0.0
      %10097 = vmatmul.mubr.f32.gmra.mxu0 %v9901
      %v10098 = vpop.f32.mrf.mxu0
      %v10099 = vadd.f32 0.0, %v10098
      %v10100 = vpop.f32.mrf.mxu0
      %10101 = vmatprep.mubr.f32.mxu0 0.0
      %10102 = vmatmul.mubr.f32.gmra.mxu0 %v9904
      %v10103 = vpop.f32.mrf.mxu0
      %v10104 = vadd.f32 0.0, %v10103
      %v10105 = vpop.f32.mrf.mxu0
      %10106 = vmatprep.mubr.f32.mxu0 0.0
      %10107 = vmatmul.mubr.f32.gmra.mxu0 %v9907
      %v10108 = vpop.f32.mrf.mxu0
      %v10109 = vadd.f32 0.0, %v10108
      %v10110 = vpop.f32.mrf.mxu0
      %10111 = vmatprep.mubr.f32.mxu0 0.0
      %10112 = vmatmul.mubr.f32.gmra.mxu0 %v9910
      %v10113 = vpop.f32.mrf.mxu0
      %v10114 = vadd.f32 0.0, %v10113
      %v10115 = vpop.f32.mrf.mxu0
      %10116 = vmatprep.mubr.f32.mxu0 0.0
      %10117 = vmatmul.mubr.f32.gmra.mxu0 %v9913
      %v10118 = vpop.f32.mrf.mxu0
      %v10119 = vadd.f32 0.0, %v10118
      %v10120 = vpop.f32.mrf.mxu0
      %10121 = vmatprep.mubr.f32.mxu0 0.0
      %10122 = vmatmul.mubr.f32.gmra.mxu0 %v9916
      %v10123 = vpop.f32.mrf.mxu0
      %v10124 = vadd.f32 0.0, %v10123
      %v10125 = vpop.f32.mrf.mxu0
      %10126 = vmatprep.mubr.f32.mxu0 0.0
      %10127 = vmatmul.mubr.f32.gmra.mxu0 %v9919
      %v10128 = vpop.f32.mrf.mxu0
      %v10129 = vadd.f32 0.0, %v10128
      %v10130 = vpop.f32.mrf.mxu0
      %10131 = vmatprep.mubr.f32.mxu0 0.0
      %10132 = vmatmul.mubr.f32.gmra.mxu0 %v9922
      %v10133 = vpop.f32.mrf.mxu0
      %v10134 = vadd.f32 0.0, %v10133
      %v10135 = vpop.f32.mrf.mxu0
      %10136 = vmatprep.mubr.f32.mxu0 0.0
      %10137 = vmatmul.mubr.f32.gmra.mxu0 %v9925
      %v10138 = vpop.f32.mrf.mxu0
      %v10139 = vadd.f32 0.0, %v10138
      %v10140 = vpop.f32.mrf.mxu0
      %10141 = vmatprep.mubr.f32.mxu0 0.0
      %10142 = vmatmul.mubr.f32.gmra.mxu0 %v9928
      %v10143 = vpop.f32.mrf.mxu0
      %v10144 = vadd.f32 0.0, %v10143
      %v10145 = vpop.f32.mrf.mxu0
      %10146 = vmatprep.mubr.f32.mxu0 0.0
      %10147 = vmatmul.mubr.f32.gmra.mxu0 %v9931
      %v10148 = vpop.f32.mrf.mxu0
      %v10149 = vadd.f32 0.0, %v10148
      %v10150 = vpop.f32.mrf.mxu0
      %10151 = vmatprep.mubr.f32.mxu0 0.0
      %10152 = vmatmul.mubr.f32.gmra.mxu0 %v9934
      %v10153 = vpop.f32.mrf.mxu0
      %v10154 = vadd.f32 0.0, %v10153
      %v10155 = vpop.f32.mrf.mxu0
      %10156 = vmatprep.mubr.f32.mxu0 0.0
      %10157 = vmatmul.mubr.f32.gmra.mxu0 %v9937
      %v10158 = vpop.f32.mrf.mxu0
      %v10159 = vadd.f32 0.0, %v10158
      %v10160 = vpop.f32.mrf.mxu0
      %10161 = vmatprep.mubr.f32.mxu0 0.0
      %10162 = vmatmul.mubr.f32.gmra.mxu0 %v9940
      %v10163 = vpop.f32.mrf.mxu0
      %v10164 = vadd.f32 0.0, %v10163
      %v10165 = vpop.f32.mrf.mxu0
      %10166 = vdwg.mxu0
      %v10167 = vadd.f32 %v8947, %v10009
      %v10168 = vadd.f32 %v8948, %v10014
      %v10169 = vadd.f32 %v8949, %v10019
      %v10170 = vadd.f32 %v8950, %v10024
      %v10171 = vadd.f32 %v8951, %v10029
      %v10172 = vadd.f32 %v8952, %v10034
      %v10173 = vadd.f32 %v8953, %v10039
      %v10174 = vadd.f32 %v8954, %v10044
      %v10175 = vadd.f32 %v8955, %v10049
      %v10176 = vadd.f32 %v8956, %v10054
      %v10177 = vadd.f32 %v8957, %v10059
      %v10178 = vadd.f32 %v8958, %v10064
      %v10179 = vadd.f32 %v8959, %v10069
      %v10180 = vadd.f32 %v8960, %v10074
      %v10181 = vadd.f32 %v8961, %v10079
      %v10182 = vadd.f32 %v8962, %v10084
      %v10183 = vadd.f32 %v8963, %v10089
      %v10184 = vadd.f32 %v8964, %v10094
      %v10185 = vadd.f32 %v8965, %v10099
      %v10186 = vadd.f32 %v8966, %v10104
      %v10187 = vadd.f32 %v8967, %v10109
      %v10188 = vadd.f32 %v8968, %v10114
      %v10189 = vadd.f32 %v8969, %v10119
      %v10190 = vadd.f32 %v8970, %v10124
      %v10191 = vadd.f32 %v8971, %v10129
      %v10192 = vadd.f32 %v8972, %v10134
      %v10193 = vadd.f32 %v8973, %v10139
      %v10194 = vadd.f32 %v8974, %v10144
      %v10195 = vadd.f32 %v8975, %v10149
      %v10196 = vadd.f32 %v8976, %v10154
      %v10197 = vadd.f32 %v8977, %v10159
      %v10198 = vadd.f32 %v8978, %v10164
      %s10199 = scalar_lea.vmem %s1, 128
      %v10200 = vld [vmem:[%s10199] sm:$0xff]
      %v10201 = vld [vmem:[%s10199 + $0x8] sm:$0x7f]
      %s10202 = scalar_lea.vmem %s2, 8
      %v10203 = vld [vmem:[%s10202] sm:$0x1]
      %v10205 = vlaneseq
      %v10206 = vshrl.u32 %v10205, 7
      %v10207 = vsub.s32 0, %v10206
      %v10208 = vrot.slane %v10203, %v10207
      %v10211 = vsel %vm255, %v10167, 0
      %v10214 = vsel %vm255, %v10168, 0
      %v10217 = vsel %vm255, %v10169, 0
      %v10220 = vsel %vm255, %v10170, 0
      %v10223 = vsel %vm255, %v10171, 0
      %v10226 = vsel %vm255, %v10172, 0
      %v10229 = vsel %vm255, %v10173, 0
      %v10232 = vsel %vm255, %v10174, 0
      %v10235 = vsel %vm255, %v10175, 0
      %v10238 = vsel %vm255, %v10176, 0
      %v10241 = vsel %vm255, %v10177, 0
      %v10244 = vsel %vm255, %v10178, 0
      %v10247 = vsel %vm255, %v10179, 0
      %v10250 = vsel %vm255, %v10180, 0
      %v10253 = vsel %vm255, %v10181, 0
      %v10256 = vsel %vm255, %v10182, 0
      %v10259 = vsel %vm255, %v10183, 0
      %v10262 = vsel %vm255, %v10184, 0
      %v10265 = vsel %vm255, %v10185, 0
      %v10268 = vsel %vm255, %v10186, 0
      %v10271 = vsel %vm255, %v10187, 0
      %v10274 = vsel %vm255, %v10188, 0
      %v10277 = vsel %vm255, %v10189, 0
      %v10280 = vsel %vm255, %v10190, 0
      %v10283 = vsel %vm255, %v10191, 0
      %v10286 = vsel %vm255, %v10192, 0
      %v10289 = vsel %vm255, %v10193, 0
      %v10292 = vsel %vm255, %v10194, 0
      %v10295 = vsel %vm255, %v10195, 0
      %v10298 = vsel %vm255, %v10196, 0
      %v10301 = vsel %vm255, %v10197, 0
      %v10304 = vsel %vm255, %v10198, 0
      %v10307 = vsel %vm504, %v10201, 0
      %10309 = vmatprep.subr.mxu0 0.0
      %10310 = vmatpush1.msra.mxu0 0.0
      %10311 = vmatprep.subr.mxu0 0.0
      %10312 = vmatpush1.msra.mxu0 0.0
      %10313 = vmatprep.subr.mxu0 0.0
      %10314 = vmatpush1.msra.mxu0 0.0
      %10315 = vmatprep.subr.mxu0 0.0
      %10316 = vmatpush1.msra.mxu0 0.0
      %10317 = vmatprep.subr.mxu0 0.0
      %10318 = vmatpush1.msra.mxu0 0.0
      %10319 = vmatprep.subr.mxu0 0.0
      %10320 = vmatpush1.msra.mxu0 0.0
      %10321 = vmatprep.subr.mxu0 0.0
      %10322 = vmatpush1.msra.mxu0 0.0
      %10323 = vmatprep.subr.mxu0 0.0
      %10324 = vmatpush1.msra.mxu0 0.0
      %10325 = vmatprep.subr.mxu0 0.0
      %10326 = vmatpush1.msra.mxu0 0.0
      %10327 = vmatprep.subr.mxu0 0.0
      %10328 = vmatpush1.msra.mxu0 0.0
      %10329 = vmatprep.subr.mxu0 0.0
      %10330 = vmatpush1.msra.mxu0 0.0
      %10331 = vmatprep.subr.mxu0 0.0
      %10332 = vmatpush1.msra.mxu0 0.0
      %10333 = vmatprep.subr.mxu0 0.0
      %10334 = vmatpush1.msra.mxu0 0.0
      %10335 = vmatprep.subr.mxu0 0.0
      %10336 = vmatpush1.msra.mxu0 0.0
      %10337 = vmatprep.subr.mxu0 0.0
      %10338 = vmatpush1.msra.mxu0 %v10307
      %10339 = vmatprep.subr.mxu0 0.0
      %10340 = vmatpush1.msra.mxu0 %v10200
      %10341 = vmatprep.subr.mxu0 0.0
      %10342 = vmatpush2.msra.mxu0 0.0
      %10343 = vmatprep.subr.mxu0 0.0
      %10344 = vmatpush2.msra.mxu0 0.0
      %10345 = vmatprep.subr.mxu0 0.0
      %10346 = vmatpush2.msra.mxu0 0.0
      %10347 = vmatprep.subr.mxu0 0.0
      %10348 = vmatpush2.msra.mxu0 0.0
      %10349 = vmatprep.subr.mxu0 0.0
      %10350 = vmatpush2.msra.mxu0 0.0
      %10351 = vmatprep.subr.mxu0 0.0
      %10352 = vmatpush2.msra.mxu0 0.0
      %10353 = vmatprep.subr.mxu0 0.0
      %10354 = vmatpush2.msra.mxu0 0.0
      %10355 = vmatprep.subr.mxu0 0.0
      %10356 = vmatpush2.msra.mxu0 0.0
      %10357 = vmatprep.subr.mxu0 0.0
      %10358 = vmatpush2.msra.mxu0 0.0
      %10359 = vmatprep.subr.mxu0 0.0
      %10360 = vmatpush2.msra.mxu0 0.0
      %10361 = vmatprep.subr.mxu0 0.0
      %10362 = vmatpush2.msra.mxu0 0.0
      %10363 = vmatprep.subr.mxu0 0.0
      %10364 = vmatpush2.msra.mxu0 0.0
      %10365 = vmatprep.subr.mxu0 0.0
      %10366 = vmatpush2.msra.mxu0 0.0
      %10367 = vmatprep.subr.mxu0 0.0
      %10368 = vmatpush2.msra.mxu0 0.0
      %10369 = vmatprep.subr.mxu0 0.0
      %10370 = vmatpush2.msra.mxu0 0.0
      %10371 = vmatprep.subr.mxu0 0.0
      %10372 = vmatpush2.msra.mxu0 0.0
      %10373 = vmatprep.mubr.f32.mxu0 0.0
      %10374 = vmatmul.mubr.f32.gmra.mxu0 %v10211
      %v10375 = vpop.f32.mrf.mxu0
      %v10376 = vadd.f32 %v10208, %v10375
      %v10377 = vpop.f32.mrf.mxu0
      %10378 = vmatprep.mubr.f32.mxu0 0.0
      %10379 = vmatmul.mubr.f32.gmra.mxu0 %v10214
      %v10380 = vpop.f32.mrf.mxu0
      %v10381 = vadd.f32 %v10208, %v10380
      %v10382 = vpop.f32.mrf.mxu0
      %10383 = vmatprep.mubr.f32.mxu0 0.0
      %10384 = vmatmul.mubr.f32.gmra.mxu0 %v10217
      %v10385 = vpop.f32.mrf.mxu0
      %v10386 = vadd.f32 %v10208, %v10385
      %v10387 = vpop.f32.mrf.mxu0
      %10388 = vmatprep.mubr.f32.mxu0 0.0
      %10389 = vmatmul.mubr.f32.gmra.mxu0 %v10220
      %v10390 = vpop.f32.mrf.mxu0
      %v10391 = vadd.f32 %v10208, %v10390
      %v10392 = vpop.f32.mrf.mxu0
      %10393 = vmatprep.mubr.f32.mxu0 0.0
      %10394 = vmatmul.mubr.f32.gmra.mxu0 %v10223
      %v10395 = vpop.f32.mrf.mxu0
      %v10396 = vadd.f32 %v10208, %v10395
      %v10397 = vpop.f32.mrf.mxu0
      %10398 = vmatprep.mubr.f32.mxu0 0.0
      %10399 = vmatmul.mubr.f32.gmra.mxu0 %v10226
      %v10400 = vpop.f32.mrf.mxu0
      %v10401 = vadd.f32 %v10208, %v10400
      %v10402 = vpop.f32.mrf.mxu0
      %10403 = vmatprep.mubr.f32.mxu0 0.0
      %10404 = vmatmul.mubr.f32.gmra.mxu0 %v10229
      %v10405 = vpop.f32.mrf.mxu0
      %v10406 = vadd.f32 %v10208, %v10405
      %v10407 = vpop.f32.mrf.mxu0
      %10408 = vmatprep.mubr.f32.mxu0 0.0
      %10409 = vmatmul.mubr.f32.gmra.mxu0 %v10232
      %v10410 = vpop.f32.mrf.mxu0
      %v10411 = vadd.f32 %v10208, %v10410
      %v10412 = vpop.f32.mrf.mxu0
      %10413 = vmatprep.mubr.f32.mxu0 0.0
      %10414 = vmatmul.mubr.f32.gmra.mxu0 %v10235
      %v10415 = vpop.f32.mrf.mxu0
      %v10416 = vadd.f32 %v10208, %v10415
      %v10417 = vpop.f32.mrf.mxu0
      %10418 = vmatprep.mubr.f32.mxu0 0.0
      %10419 = vmatmul.mubr.f32.gmra.mxu0 %v10238
      %v10420 = vpop.f32.mrf.mxu0
      %v10421 = vadd.f32 %v10208, %v10420
      %v10422 = vpop.f32.mrf.mxu0
      %10423 = vmatprep.mubr.f32.mxu0 0.0
      %10424 = vmatmul.mubr.f32.gmra.mxu0 %v10241
      %v10425 = vpop.f32.mrf.mxu0
      %v10426 = vadd.f32 %v10208, %v10425
      %v10427 = vpop.f32.mrf.mxu0
      %10428 = vmatprep.mubr.f32.mxu0 0.0
      %10429 = vmatmul.mubr.f32.gmra.mxu0 %v10244
      %v10430 = vpop.f32.mrf.mxu0
      %v10431 = vadd.f32 %v10208, %v10430
      %v10432 = vpop.f32.mrf.mxu0
      %10433 = vmatprep.mubr.f32.mxu0 0.0
      %10434 = vmatmul.mubr.f32.gmra.mxu0 %v10247
      %v10435 = vpop.f32.mrf.mxu0
      %v10436 = vadd.f32 %v10208, %v10435
      %v10437 = vpop.f32.mrf.mxu0
      %10438 = vmatprep.mubr.f32.mxu0 0.0
      %10439 = vmatmul.mubr.f32.gmra.mxu0 %v10250
      %v10440 = vpop.f32.mrf.mxu0
      %v10441 = vadd.f32 %v10208, %v10440
      %v10442 = vpop.f32.mrf.mxu0
      %10443 = vmatprep.mubr.f32.mxu0 0.0
      %10444 = vmatmul.mubr.f32.gmra.mxu0 %v10253
      %v10445 = vpop.f32.mrf.mxu0
      %v10446 = vadd.f32 %v10208, %v10445
      %v10447 = vpop.f32.mrf.mxu0
      %10448 = vmatprep.mubr.f32.mxu0 0.0
      %10449 = vmatmul.mubr.f32.gmra.mxu0 %v10256
      %v10450 = vpop.f32.mrf.mxu0
      %v10451 = vadd.f32 %v10208, %v10450
      %v10452 = vpop.f32.mrf.mxu0
      %10453 = vmatprep.mubr.f32.mxu0 0.0
      %10454 = vmatmul.mubr.f32.gmra.mxu0 %v10259
      %v10455 = vpop.f32.mrf.mxu0
      %v10456 = vadd.f32 %v10208, %v10455
      %v10457 = vpop.f32.mrf.mxu0
      %10458 = vmatprep.mubr.f32.mxu0 0.0
      %10459 = vmatmul.mubr.f32.gmra.mxu0 %v10262
      %v10460 = vpop.f32.mrf.mxu0
      %v10461 = vadd.f32 %v10208, %v10460
      %v10462 = vpop.f32.mrf.mxu0
      %10463 = vmatprep.mubr.f32.mxu0 0.0
      %10464 = vmatmul.mubr.f32.gmra.mxu0 %v10265
      %v10465 = vpop.f32.mrf.mxu0
      %v10466 = vadd.f32 %v10208, %v10465
      %v10467 = vpop.f32.mrf.mxu0
      %10468 = vmatprep.mubr.f32.mxu0 0.0
      %10469 = vmatmul.mubr.f32.gmra.mxu0 %v10268
      %v10470 = vpop.f32.mrf.mxu0
      %v10471 = vadd.f32 %v10208, %v10470
      %v10472 = vpop.f32.mrf.mxu0
      %10473 = vmatprep.mubr.f32.mxu0 0.0
      %10474 = vmatmul.mubr.f32.gmra.mxu0 %v10271
      %v10475 = vpop.f32.mrf.mxu0
      %v10476 = vadd.f32 %v10208, %v10475
      %v10477 = vpop.f32.mrf.mxu0
      %10478 = vmatprep.mubr.f32.mxu0 0.0
      %10479 = vmatmul.mubr.f32.gmra.mxu0 %v10274
      %v10480 = vpop.f32.mrf.mxu0
      %v10481 = vadd.f32 %v10208, %v10480
      %v10482 = vpop.f32.mrf.mxu0
      %10483 = vmatprep.mubr.f32.mxu0 0.0
      %10484 = vmatmul.mubr.f32.gmra.mxu0 %v10277
      %v10485 = vpop.f32.mrf.mxu0
      %v10486 = vadd.f32 %v10208, %v10485
      %v10487 = vpop.f32.mrf.mxu0
      %10488 = vmatprep.mubr.f32.mxu0 0.0
      %10489 = vmatmul.mubr.f32.gmra.mxu0 %v10280
      %v10490 = vpop.f32.mrf.mxu0
      %v10491 = vadd.f32 %v10208, %v10490
      %v10492 = vpop.f32.mrf.mxu0
      %10493 = vmatprep.mubr.f32.mxu0 0.0
      %10494 = vmatmul.mubr.f32.gmra.mxu0 %v10283
      %v10495 = vpop.f32.mrf.mxu0
      %v10496 = vadd.f32 %v10208, %v10495
      %v10497 = vpop.f32.mrf.mxu0
      %10498 = vmatprep.mubr.f32.mxu0 0.0
      %10499 = vmatmul.mubr.f32.gmra.mxu0 %v10286
      %v10500 = vpop.f32.mrf.mxu0
      %v10501 = vadd.f32 %v10208, %v10500
      %v10502 = vpop.f32.mrf.mxu0
      %10503 = vmatprep.mubr.f32.mxu0 0.0
      %10504 = vmatmul.mubr.f32.gmra.mxu0 %v10289
      %v10505 = vpop.f32.mrf.mxu0
      %v10506 = vadd.f32 %v10208, %v10505
      %v10507 = vpop.f32.mrf.mxu0
      %10508 = vmatprep.mubr.f32.mxu0 0.0
      %10509 = vmatmul.mubr.f32.gmra.mxu0 %v10292
      %v10510 = vpop.f32.mrf.mxu0
      %v10511 = vadd.f32 %v10208, %v10510
      %v10512 = vpop.f32.mrf.mxu0
      %10513 = vmatprep.mubr.f32.mxu0 0.0
      %10514 = vmatmul.mubr.f32.gmra.mxu0 %v10295
      %v10515 = vpop.f32.mrf.mxu0
      %v10516 = vadd.f32 %v10208, %v10515
      %v10517 = vpop.f32.mrf.mxu0
      %10518 = vmatprep.mubr.f32.mxu0 0.0
      %10519 = vmatmul.mubr.f32.gmra.mxu0 %v10298
      %v10520 = vpop.f32.mrf.mxu0
      %v10521 = vadd.f32 %v10208, %v10520
      %v10522 = vpop.f32.mrf.mxu0
      %10523 = vmatprep.mubr.f32.mxu0 0.0
      %10524 = vmatmul.mubr.f32.gmra.mxu0 %v10301
      %v10525 = vpop.f32.mrf.mxu0
      %v10526 = vadd.f32 %v10208, %v10525
      %v10527 = vpop.f32.mrf.mxu0
      %10528 = vmatprep.mubr.f32.mxu0 0.0
      %10529 = vmatmul.mubr.f32.gmra.mxu0 %v10304
      %v10530 = vpop.f32.mrf.mxu0
      %v10531 = vadd.f32 %v10208, %v10530
      %v10532 = vpop.f32.mrf.mxu0
      %10533 = vdwg.mxu0
      %vm10534 = vcmp.ge.f32.partialorder %v10376, 0.0
      %vm10535 = vcmp.ge.f32.partialorder %v10381, 0.0
      %vm10536 = vcmp.ge.f32.partialorder %v10386, 0.0
      %vm10537 = vcmp.ge.f32.partialorder %v10391, 0.0
      %vm10538 = vcmp.ge.f32.partialorder %v10396, 0.0
      %vm10539 = vcmp.ge.f32.partialorder %v10401, 0.0
      %vm10540 = vcmp.ge.f32.partialorder %v10406, 0.0
      %vm10541 = vcmp.ge.f32.partialorder %v10411, 0.0
      %vm10542 = vcmp.ge.f32.partialorder %v10416, 0.0
      %vm10543 = vcmp.ge.f32.partialorder %v10421, 0.0
      %vm10544 = vcmp.ge.f32.partialorder %v10426, 0.0
      %vm10545 = vcmp.ge.f32.partialorder %v10431, 0.0
      %vm10546 = vcmp.ge.f32.partialorder %v10436, 0.0
      %vm10547 = vcmp.ge.f32.partialorder %v10441, 0.0
      %vm10548 = vcmp.ge.f32.partialorder %v10446, 0.0
      %vm10549 = vcmp.ge.f32.partialorder %v10451, 0.0
      %vm10550 = vcmp.ge.f32.partialorder %v10456, 0.0
      %vm10551 = vcmp.ge.f32.partialorder %v10461, 0.0
      %vm10552 = vcmp.ge.f32.partialorder %v10466, 0.0
      %vm10553 = vcmp.ge.f32.partialorder %v10471, 0.0
      %vm10554 = vcmp.ge.f32.partialorder %v10476, 0.0
      %vm10555 = vcmp.ge.f32.partialorder %v10481, 0.0
      %vm10556 = vcmp.ge.f32.partialorder %v10486, 0.0
      %vm10557 = vcmp.ge.f32.partialorder %v10491, 0.0
      %vm10558 = vcmp.ge.f32.partialorder %v10496, 0.0
      %vm10559 = vcmp.ge.f32.partialorder %v10501, 0.0
      %vm10560 = vcmp.ge.f32.partialorder %v10506, 0.0
      %vm10561 = vcmp.ge.f32.partialorder %v10511, 0.0
      %vm10562 = vcmp.ge.f32.partialorder %v10516, 0.0
      %vm10563 = vcmp.ge.f32.partialorder %v10521, 0.0
      %vm10564 = vcmp.ge.f32.partialorder %v10526, 0.0
      %vm10565 = vcmp.ge.f32.partialorder %v10531, 0.0
      %v10566 = vmul.f32 %v10376, 0.01
      %v10567 = vmul.f32 %v10381, 0.01
      %v10568 = vmul.f32 %v10386, 0.01
      %v10569 = vmul.f32 %v10391, 0.01
      %v10570 = vmul.f32 %v10396, 0.01
      %v10571 = vmul.f32 %v10401, 0.01
      %v10572 = vmul.f32 %v10406, 0.01
      %v10573 = vmul.f32 %v10411, 0.01
      %v10574 = vmul.f32 %v10416, 0.01
      %v10575 = vmul.f32 %v10421, 0.01
      %v10576 = vmul.f32 %v10426, 0.01
      %v10577 = vmul.f32 %v10431, 0.01
      %v10578 = vmul.f32 %v10436, 0.01
      %v10579 = vmul.f32 %v10441, 0.01
      %v10580 = vmul.f32 %v10446, 0.01
      %v10581 = vmul.f32 %v10451, 0.01
      %v10582 = vmul.f32 %v10456, 0.01
      %v10583 = vmul.f32 %v10461, 0.01
      %v10584 = vmul.f32 %v10466, 0.01
      %v10585 = vmul.f32 %v10471, 0.01
      %v10586 = vmul.f32 %v10476, 0.01
      %v10587 = vmul.f32 %v10481, 0.01
      %v10588 = vmul.f32 %v10486, 0.01
      %v10589 = vmul.f32 %v10491, 0.01
      %v10590 = vmul.f32 %v10496, 0.01
      %v10591 = vmul.f32 %v10501, 0.01
      %v10592 = vmul.f32 %v10506, 0.01
      %v10593 = vmul.f32 %v10511, 0.01
      %v10594 = vmul.f32 %v10516, 0.01
      %v10595 = vmul.f32 %v10521, 0.01
      %v10596 = vmul.f32 %v10526, 0.01
      %v10597 = vmul.f32 %v10531, 0.01
      %v10598 = vsel %vm10534, %v10376, %v10566
      %v10599 = vsel %vm10535, %v10381, %v10567
      %v10600 = vsel %vm10536, %v10386, %v10568
      %v10601 = vsel %vm10537, %v10391, %v10569
      %v10602 = vsel %vm10538, %v10396, %v10570
      %v10603 = vsel %vm10539, %v10401, %v10571
      %v10604 = vsel %vm10540, %v10406, %v10572
      %v10605 = vsel %vm10541, %v10411, %v10573
      %v10606 = vsel %vm10542, %v10416, %v10574
      %v10607 = vsel %vm10543, %v10421, %v10575
      %v10608 = vsel %vm10544, %v10426, %v10576
      %v10609 = vsel %vm10545, %v10431, %v10577
      %v10610 = vsel %vm10546, %v10436, %v10578
      %v10611 = vsel %vm10547, %v10441, %v10579
      %v10612 = vsel %vm10548, %v10446, %v10580
      %v10613 = vsel %vm10549, %v10451, %v10581
      %v10614 = vsel %vm10550, %v10456, %v10582
      %v10615 = vsel %vm10551, %v10461, %v10583
      %v10616 = vsel %vm10552, %v10466, %v10584
      %v10617 = vsel %vm10553, %v10471, %v10585
      %v10618 = vsel %vm10554, %v10476, %v10586
      %v10619 = vsel %vm10555, %v10481, %v10587
      %v10620 = vsel %vm10556, %v10486, %v10588
      %v10621 = vsel %vm10557, %v10491, %v10589
      %v10622 = vsel %vm10558, %v10496, %v10590
      %v10623 = vsel %vm10559, %v10501, %v10591
      %v10624 = vsel %vm10560, %v10506, %v10592
      %v10625 = vsel %vm10561, %v10511, %v10593
      %v10626 = vsel %vm10562, %v10516, %v10594
      %v10627 = vsel %vm10563, %v10521, %v10595
      %v10628 = vsel %vm10564, %v10526, %v10596
      %v10629 = vsel %vm10565, %v10531, %v10597
      %s10630 = scalar_lea.vmem %s3, 448
      %v10631 = vld [vmem:[%s10630] sm:$0xff]
      %v10632 = vld [vmem:[%s10630 + $0x8] sm:$0xff]
      %v10633 = vld [vmem:[%s10630 + $0x10] sm:$0xff]
      %v10634 = vld [vmem:[%s10630 + $0x18] sm:$0xff]
      %v10635 = vld [vmem:[%s10630 + $0x20] sm:$0xff]
      %v10636 = vld [vmem:[%s10630 + $0x28] sm:$0xff]
      %v10637 = vld [vmem:[%s10630 + $0x30] sm:$0x3]
      %s10638 = scalar_lea.vmem %s4, 8
      %v10639 = vld [vmem:[%s10638] sm:$0x1]
      %v10641 = vlaneseq
      %v10642 = vshrl.u32 %v10641, 7
      %v10643 = vsub.s32 0, %v10642
      %v10644 = vrot.slane %v10639, %v10643
      %v10647 = vsel %vm843, %v10598, 0
      %v10650 = vsel %vm843, %v10599, 0
      %v10653 = vsel %vm843, %v10600, 0
      %v10656 = vsel %vm843, %v10601, 0
      %v10659 = vsel %vm843, %v10602, 0
      %v10662 = vsel %vm843, %v10603, 0
      %v10665 = vsel %vm843, %v10604, 0
      %v10668 = vsel %vm843, %v10605, 0
      %v10671 = vsel %vm843, %v10606, 0
      %v10674 = vsel %vm843, %v10607, 0
      %v10677 = vsel %vm843, %v10608, 0
      %v10680 = vsel %vm843, %v10609, 0
      %v10683 = vsel %vm843, %v10610, 0
      %v10686 = vsel %vm843, %v10611, 0
      %v10689 = vsel %vm843, %v10612, 0
      %v10692 = vsel %vm843, %v10613, 0
      %v10695 = vsel %vm843, %v10614, 0
      %v10698 = vsel %vm843, %v10615, 0
      %v10701 = vsel %vm843, %v10616, 0
      %v10704 = vsel %vm843, %v10617, 0
      %v10707 = vsel %vm843, %v10618, 0
      %v10710 = vsel %vm843, %v10619, 0
      %v10713 = vsel %vm843, %v10620, 0
      %v10716 = vsel %vm843, %v10621, 0
      %v10719 = vsel %vm843, %v10622, 0
      %v10722 = vsel %vm843, %v10623, 0
      %v10725 = vsel %vm843, %v10624, 0
      %v10728 = vsel %vm843, %v10625, 0
      %v10731 = vsel %vm843, %v10626, 0
      %v10734 = vsel %vm843, %v10627, 0
      %v10737 = vsel %vm843, %v10628, 0
      %v10740 = vsel %vm843, %v10629, 0
      %v10743 = vsel %vm940, %v10637, 0
      %10745 = vmatprep.subr.mxu0 0.0
      %10746 = vmatpush1.msra.mxu0 0.0
      %10747 = vmatprep.subr.mxu0 0.0
      %10748 = vmatpush1.msra.mxu0 0.0
      %10749 = vmatprep.subr.mxu0 0.0
      %10750 = vmatpush1.msra.mxu0 0.0
      %10751 = vmatprep.subr.mxu0 0.0
      %10752 = vmatpush1.msra.mxu0 0.0
      %10753 = vmatprep.subr.mxu0 0.0
      %10754 = vmatpush1.msra.mxu0 0.0
      %10755 = vmatprep.subr.mxu0 0.0
      %10756 = vmatpush1.msra.mxu0 0.0
      %10757 = vmatprep.subr.mxu0 0.0
      %10758 = vmatpush1.msra.mxu0 0.0
      %10759 = vmatprep.subr.mxu0 0.0
      %10760 = vmatpush1.msra.mxu0 0.0
      %10761 = vmatprep.subr.mxu0 0.0
      %10762 = vmatpush1.msra.mxu0 0.0
      %10763 = vmatprep.subr.mxu0 0.0
      %10764 = vmatpush1.msra.mxu0 %v10743
      %10765 = vmatprep.subr.mxu0 0.0
      %10766 = vmatpush1.msra.mxu0 %v10636
      %10767 = vmatprep.subr.mxu0 0.0
      %10768 = vmatpush1.msra.mxu0 %v10635
      %10769 = vmatprep.subr.mxu0 0.0
      %10770 = vmatpush1.msra.mxu0 %v10634
      %10771 = vmatprep.subr.mxu0 0.0
      %10772 = vmatpush1.msra.mxu0 %v10633
      %10773 = vmatprep.subr.mxu0 0.0
      %10774 = vmatpush1.msra.mxu0 %v10632
      %10775 = vmatprep.subr.mxu0 0.0
      %10776 = vmatpush1.msra.mxu0 %v10631
      %10777 = vmatprep.subr.mxu0 0.0
      %10778 = vmatpush2.msra.mxu0 0.0
      %10779 = vmatprep.subr.mxu0 0.0
      %10780 = vmatpush2.msra.mxu0 0.0
      %10781 = vmatprep.subr.mxu0 0.0
      %10782 = vmatpush2.msra.mxu0 0.0
      %10783 = vmatprep.subr.mxu0 0.0
      %10784 = vmatpush2.msra.mxu0 0.0
      %10785 = vmatprep.subr.mxu0 0.0
      %10786 = vmatpush2.msra.mxu0 0.0
      %10787 = vmatprep.subr.mxu0 0.0
      %10788 = vmatpush2.msra.mxu0 0.0
      %10789 = vmatprep.subr.mxu0 0.0
      %10790 = vmatpush2.msra.mxu0 0.0
      %10791 = vmatprep.subr.mxu0 0.0
      %10792 = vmatpush2.msra.mxu0 0.0
      %10793 = vmatprep.subr.mxu0 0.0
      %10794 = vmatpush2.msra.mxu0 0.0
      %10795 = vmatprep.subr.mxu0 0.0
      %10796 = vmatpush2.msra.mxu0 0.0
      %10797 = vmatprep.subr.mxu0 0.0
      %10798 = vmatpush2.msra.mxu0 0.0
      %10799 = vmatprep.subr.mxu0 0.0
      %10800 = vmatpush2.msra.mxu0 0.0
      %10801 = vmatprep.subr.mxu0 0.0
      %10802 = vmatpush2.msra.mxu0 0.0
      %10803 = vmatprep.subr.mxu0 0.0
      %10804 = vmatpush2.msra.mxu0 0.0
      %10805 = vmatprep.subr.mxu0 0.0
      %10806 = vmatpush2.msra.mxu0 0.0
      %10807 = vmatprep.subr.mxu0 0.0
      %10808 = vmatpush2.msra.mxu0 0.0
      %10809 = vmatprep.mubr.f32.mxu0 0.0
      %10810 = vmatmul.mubr.f32.gmra.mxu0 %v10647
      %v10811 = vpop.f32.mrf.mxu0
      %v10812 = vadd.f32 %v10644, %v10811
      %v10813 = vpop.f32.mrf.mxu0
      %10814 = vmatprep.mubr.f32.mxu0 0.0
      %10815 = vmatmul.mubr.f32.gmra.mxu0 %v10650
      %v10816 = vpop.f32.mrf.mxu0
      %v10817 = vadd.f32 %v10644, %v10816
      %v10818 = vpop.f32.mrf.mxu0
      %10819 = vmatprep.mubr.f32.mxu0 0.0
      %10820 = vmatmul.mubr.f32.gmra.mxu0 %v10653
      %v10821 = vpop.f32.mrf.mxu0
      %v10822 = vadd.f32 %v10644, %v10821
      %v10823 = vpop.f32.mrf.mxu0
      %10824 = vmatprep.mubr.f32.mxu0 0.0
      %10825 = vmatmul.mubr.f32.gmra.mxu0 %v10656
      %v10826 = vpop.f32.mrf.mxu0
      %v10827 = vadd.f32 %v10644, %v10826
      %v10828 = vpop.f32.mrf.mxu0
      %10829 = vmatprep.mubr.f32.mxu0 0.0
      %10830 = vmatmul.mubr.f32.gmra.mxu0 %v10659
      %v10831 = vpop.f32.mrf.mxu0
      %v10832 = vadd.f32 %v10644, %v10831
      %v10833 = vpop.f32.mrf.mxu0
      %10834 = vmatprep.mubr.f32.mxu0 0.0
      %10835 = vmatmul.mubr.f32.gmra.mxu0 %v10662
      %v10836 = vpop.f32.mrf.mxu0
      %v10837 = vadd.f32 %v10644, %v10836
      %v10838 = vpop.f32.mrf.mxu0
      %10839 = vmatprep.mubr.f32.mxu0 0.0
      %10840 = vmatmul.mubr.f32.gmra.mxu0 %v10665
      %v10841 = vpop.f32.mrf.mxu0
      %v10842 = vadd.f32 %v10644, %v10841
      %v10843 = vpop.f32.mrf.mxu0
      %10844 = vmatprep.mubr.f32.mxu0 0.0
      %10845 = vmatmul.mubr.f32.gmra.mxu0 %v10668
      %v10846 = vpop.f32.mrf.mxu0
      %v10847 = vadd.f32 %v10644, %v10846
      %v10848 = vpop.f32.mrf.mxu0
      %10849 = vmatprep.mubr.f32.mxu0 0.0
      %10850 = vmatmul.mubr.f32.gmra.mxu0 %v10671
      %v10851 = vpop.f32.mrf.mxu0
      %v10852 = vadd.f32 %v10644, %v10851
      %v10853 = vpop.f32.mrf.mxu0
      %10854 = vmatprep.mubr.f32.mxu0 0.0
      %10855 = vmatmul.mubr.f32.gmra.mxu0 %v10674
      %v10856 = vpop.f32.mrf.mxu0
      %v10857 = vadd.f32 %v10644, %v10856
      %v10858 = vpop.f32.mrf.mxu0
      %10859 = vmatprep.mubr.f32.mxu0 0.0
      %10860 = vmatmul.mubr.f32.gmra.mxu0 %v10677
      %v10861 = vpop.f32.mrf.mxu0
      %v10862 = vadd.f32 %v10644, %v10861
      %v10863 = vpop.f32.mrf.mxu0
      %10864 = vmatprep.mubr.f32.mxu0 0.0
      %10865 = vmatmul.mubr.f32.gmra.mxu0 %v10680
      %v10866 = vpop.f32.mrf.mxu0
      %v10867 = vadd.f32 %v10644, %v10866
      %v10868 = vpop.f32.mrf.mxu0
      %10869 = vmatprep.mubr.f32.mxu0 0.0
      %10870 = vmatmul.mubr.f32.gmra.mxu0 %v10683
      %v10871 = vpop.f32.mrf.mxu0
      %v10872 = vadd.f32 %v10644, %v10871
      %v10873 = vpop.f32.mrf.mxu0
      %10874 = vmatprep.mubr.f32.mxu0 0.0
      %10875 = vmatmul.mubr.f32.gmra.mxu0 %v10686
      %v10876 = vpop.f32.mrf.mxu0
      %v10877 = vadd.f32 %v10644, %v10876
      %v10878 = vpop.f32.mrf.mxu0
      %10879 = vmatprep.mubr.f32.mxu0 0.0
      %10880 = vmatmul.mubr.f32.gmra.mxu0 %v10689
      %v10881 = vpop.f32.mrf.mxu0
      %v10882 = vadd.f32 %v10644, %v10881
      %v10883 = vpop.f32.mrf.mxu0
      %10884 = vmatprep.mubr.f32.mxu0 0.0
      %10885 = vmatmul.mubr.f32.gmra.mxu0 %v10692
      %v10886 = vpop.f32.mrf.mxu0
      %v10887 = vadd.f32 %v10644, %v10886
      %v10888 = vpop.f32.mrf.mxu0
      %10889 = vmatprep.mubr.f32.mxu0 0.0
      %10890 = vmatmul.mubr.f32.gmra.mxu0 %v10695
      %v10891 = vpop.f32.mrf.mxu0
      %v10892 = vadd.f32 %v10644, %v10891
      %v10893 = vpop.f32.mrf.mxu0
      %10894 = vmatprep.mubr.f32.mxu0 0.0
      %10895 = vmatmul.mubr.f32.gmra.mxu0 %v10698
      %v10896 = vpop.f32.mrf.mxu0
      %v10897 = vadd.f32 %v10644, %v10896
      %v10898 = vpop.f32.mrf.mxu0
      %10899 = vmatprep.mubr.f32.mxu0 0.0
      %10900 = vmatmul.mubr.f32.gmra.mxu0 %v10701
      %v10901 = vpop.f32.mrf.mxu0
      %v10902 = vadd.f32 %v10644, %v10901
      %v10903 = vpop.f32.mrf.mxu0
      %10904 = vmatprep.mubr.f32.mxu0 0.0
      %10905 = vmatmul.mubr.f32.gmra.mxu0 %v10704
      %v10906 = vpop.f32.mrf.mxu0
      %v10907 = vadd.f32 %v10644, %v10906
      %v10908 = vpop.f32.mrf.mxu0
      %10909 = vmatprep.mubr.f32.mxu0 0.0
      %10910 = vmatmul.mubr.f32.gmra.mxu0 %v10707
      %v10911 = vpop.f32.mrf.mxu0
      %v10912 = vadd.f32 %v10644, %v10911
      %v10913 = vpop.f32.mrf.mxu0
      %10914 = vmatprep.mubr.f32.mxu0 0.0
      %10915 = vmatmul.mubr.f32.gmra.mxu0 %v10710
      %v10916 = vpop.f32.mrf.mxu0
      %v10917 = vadd.f32 %v10644, %v10916
      %v10918 = vpop.f32.mrf.mxu0
      %10919 = vmatprep.mubr.f32.mxu0 0.0
      %10920 = vmatmul.mubr.f32.gmra.mxu0 %v10713
      %v10921 = vpop.f32.mrf.mxu0
      %v10922 = vadd.f32 %v10644, %v10921
      %v10923 = vpop.f32.mrf.mxu0
      %10924 = vmatprep.mubr.f32.mxu0 0.0
      %10925 = vmatmul.mubr.f32.gmra.mxu0 %v10716
      %v10926 = vpop.f32.mrf.mxu0
      %v10927 = vadd.f32 %v10644, %v10926
      %v10928 = vpop.f32.mrf.mxu0
      %10929 = vmatprep.mubr.f32.mxu0 0.0
      %10930 = vmatmul.mubr.f32.gmra.mxu0 %v10719
      %v10931 = vpop.f32.mrf.mxu0
      %v10932 = vadd.f32 %v10644, %v10931
      %v10933 = vpop.f32.mrf.mxu0
      %10934 = vmatprep.mubr.f32.mxu0 0.0
      %10935 = vmatmul.mubr.f32.gmra.mxu0 %v10722
      %v10936 = vpop.f32.mrf.mxu0
      %v10937 = vadd.f32 %v10644, %v10936
      %v10938 = vpop.f32.mrf.mxu0
      %10939 = vmatprep.mubr.f32.mxu0 0.0
      %10940 = vmatmul.mubr.f32.gmra.mxu0 %v10725
      %v10941 = vpop.f32.mrf.mxu0
      %v10942 = vadd.f32 %v10644, %v10941
      %v10943 = vpop.f32.mrf.mxu0
      %10944 = vmatprep.mubr.f32.mxu0 0.0
      %10945 = vmatmul.mubr.f32.gmra.mxu0 %v10728
      %v10946 = vpop.f32.mrf.mxu0
      %v10947 = vadd.f32 %v10644, %v10946
      %v10948 = vpop.f32.mrf.mxu0
      %10949 = vmatprep.mubr.f32.mxu0 0.0
      %10950 = vmatmul.mubr.f32.gmra.mxu0 %v10731
      %v10951 = vpop.f32.mrf.mxu0
      %v10952 = vadd.f32 %v10644, %v10951
      %v10953 = vpop.f32.mrf.mxu0
      %10954 = vmatprep.mubr.f32.mxu0 0.0
      %10955 = vmatmul.mubr.f32.gmra.mxu0 %v10734
      %v10956 = vpop.f32.mrf.mxu0
      %v10957 = vadd.f32 %v10644, %v10956
      %v10958 = vpop.f32.mrf.mxu0
      %10959 = vmatprep.mubr.f32.mxu0 0.0
      %10960 = vmatmul.mubr.f32.gmra.mxu0 %v10737
      %v10961 = vpop.f32.mrf.mxu0
      %v10962 = vadd.f32 %v10644, %v10961
      %v10963 = vpop.f32.mrf.mxu0
      %10964 = vmatprep.mubr.f32.mxu0 0.0
      %10965 = vmatmul.mubr.f32.gmra.mxu0 %v10740
      %v10966 = vpop.f32.mrf.mxu0
      %v10967 = vadd.f32 %v10644, %v10966
      %v10968 = vpop.f32.mrf.mxu0
      %10969 = vdwg.mxu0
      %vm10970 = vcmp.ge.f32.partialorder %v10812, 0.0
      %vm10971 = vcmp.ge.f32.partialorder %v10817, 0.0
      %vm10972 = vcmp.ge.f32.partialorder %v10822, 0.0
      %vm10973 = vcmp.ge.f32.partialorder %v10827, 0.0
      %vm10974 = vcmp.ge.f32.partialorder %v10832, 0.0
      %vm10975 = vcmp.ge.f32.partialorder %v10837, 0.0
      %vm10976 = vcmp.ge.f32.partialorder %v10842, 0.0
      %vm10977 = vcmp.ge.f32.partialorder %v10847, 0.0
      %vm10978 = vcmp.ge.f32.partialorder %v10852, 0.0
      %vm10979 = vcmp.ge.f32.partialorder %v10857, 0.0
      %vm10980 = vcmp.ge.f32.partialorder %v10862, 0.0
      %vm10981 = vcmp.ge.f32.partialorder %v10867, 0.0
      %vm10982 = vcmp.ge.f32.partialorder %v10872, 0.0
      %vm10983 = vcmp.ge.f32.partialorder %v10877, 0.0
      %vm10984 = vcmp.ge.f32.partialorder %v10882, 0.0
      %vm10985 = vcmp.ge.f32.partialorder %v10887, 0.0
      %vm10986 = vcmp.ge.f32.partialorder %v10892, 0.0
      %vm10987 = vcmp.ge.f32.partialorder %v10897, 0.0
      %vm10988 = vcmp.ge.f32.partialorder %v10902, 0.0
      %vm10989 = vcmp.ge.f32.partialorder %v10907, 0.0
      %vm10990 = vcmp.ge.f32.partialorder %v10912, 0.0
      %vm10991 = vcmp.ge.f32.partialorder %v10917, 0.0
      %vm10992 = vcmp.ge.f32.partialorder %v10922, 0.0
      %vm10993 = vcmp.ge.f32.partialorder %v10927, 0.0
      %vm10994 = vcmp.ge.f32.partialorder %v10932, 0.0
      %vm10995 = vcmp.ge.f32.partialorder %v10937, 0.0
      %vm10996 = vcmp.ge.f32.partialorder %v10942, 0.0
      %vm10997 = vcmp.ge.f32.partialorder %v10947, 0.0
      %vm10998 = vcmp.ge.f32.partialorder %v10952, 0.0
      %vm10999 = vcmp.ge.f32.partialorder %v10957, 0.0
      %vm11000 = vcmp.ge.f32.partialorder %v10962, 0.0
      %vm11001 = vcmp.ge.f32.partialorder %v10967, 0.0
      %v11002 = vmul.f32 %v10812, 0.01
      %v11003 = vmul.f32 %v10817, 0.01
      %v11004 = vmul.f32 %v10822, 0.01
      %v11005 = vmul.f32 %v10827, 0.01
      %v11006 = vmul.f32 %v10832, 0.01
      %v11007 = vmul.f32 %v10837, 0.01
      %v11008 = vmul.f32 %v10842, 0.01
      %v11009 = vmul.f32 %v10847, 0.01
      %v11010 = vmul.f32 %v10852, 0.01
      %v11011 = vmul.f32 %v10857, 0.01
      %v11012 = vmul.f32 %v10862, 0.01
      %v11013 = vmul.f32 %v10867, 0.01
      %v11014 = vmul.f32 %v10872, 0.01
      %v11015 = vmul.f32 %v10877, 0.01
      %v11016 = vmul.f32 %v10882, 0.01
      %v11017 = vmul.f32 %v10887, 0.01
      %v11018 = vmul.f32 %v10892, 0.01
      %v11019 = vmul.f32 %v10897, 0.01
      %v11020 = vmul.f32 %v10902, 0.01
      %v11021 = vmul.f32 %v10907, 0.01
      %v11022 = vmul.f32 %v10912, 0.01
      %v11023 = vmul.f32 %v10917, 0.01
      %v11024 = vmul.f32 %v10922, 0.01
      %v11025 = vmul.f32 %v10927, 0.01
      %v11026 = vmul.f32 %v10932, 0.01
      %v11027 = vmul.f32 %v10937, 0.01
      %v11028 = vmul.f32 %v10942, 0.01
      %v11029 = vmul.f32 %v10947, 0.01
      %v11030 = vmul.f32 %v10952, 0.01
      %v11031 = vmul.f32 %v10957, 0.01
      %v11032 = vmul.f32 %v10962, 0.01
      %v11033 = vmul.f32 %v10967, 0.01
      %v11034 = vsel %vm10970, %v10812, %v11002
      %v11035 = vsel %vm10971, %v10817, %v11003
      %v11036 = vsel %vm10972, %v10822, %v11004
      %v11037 = vsel %vm10973, %v10827, %v11005
      %v11038 = vsel %vm10974, %v10832, %v11006
      %v11039 = vsel %vm10975, %v10837, %v11007
      %v11040 = vsel %vm10976, %v10842, %v11008
      %v11041 = vsel %vm10977, %v10847, %v11009
      %v11042 = vsel %vm10978, %v10852, %v11010
      %v11043 = vsel %vm10979, %v10857, %v11011
      %v11044 = vsel %vm10980, %v10862, %v11012
      %v11045 = vsel %vm10981, %v10867, %v11013
      %v11046 = vsel %vm10982, %v10872, %v11014
      %v11047 = vsel %vm10983, %v10877, %v11015
      %v11048 = vsel %vm10984, %v10882, %v11016
      %v11049 = vsel %vm10985, %v10887, %v11017
      %v11050 = vsel %vm10986, %v10892, %v11018
      %v11051 = vsel %vm10987, %v10897, %v11019
      %v11052 = vsel %vm10988, %v10902, %v11020
      %v11053 = vsel %vm10989, %v10907, %v11021
      %v11054 = vsel %vm10990, %v10912, %v11022
      %v11055 = vsel %vm10991, %v10917, %v11023
      %v11056 = vsel %vm10992, %v10922, %v11024
      %v11057 = vsel %vm10993, %v10927, %v11025
      %v11058 = vsel %vm10994, %v10932, %v11026
      %v11059 = vsel %vm10995, %v10937, %v11027
      %v11060 = vsel %vm10996, %v10942, %v11028
      %v11061 = vsel %vm10997, %v10947, %v11029
      %v11062 = vsel %vm10998, %v10952, %v11030
      %v11063 = vsel %vm10999, %v10957, %v11031
      %v11064 = vsel %vm11000, %v10962, %v11032
      %v11065 = vsel %vm11001, %v10967, %v11033
      %v11067 = vsel %vm1265, %v11034, 0
      %v11070 = vsel %vm1265, %v11035, 0
      %v11073 = vsel %vm1265, %v11036, 0
      %v11076 = vsel %vm1265, %v11037, 0
      %v11079 = vsel %vm1265, %v11038, 0
      %v11082 = vsel %vm1265, %v11039, 0
      %v11085 = vsel %vm1265, %v11040, 0
      %v11088 = vsel %vm1265, %v11041, 0
      %v11091 = vsel %vm1265, %v11042, 0
      %v11094 = vsel %vm1265, %v11043, 0
      %v11097 = vsel %vm1265, %v11044, 0
      %v11100 = vsel %vm1265, %v11045, 0
      %v11103 = vsel %vm1265, %v11046, 0
      %v11106 = vsel %vm1265, %v11047, 0
      %v11109 = vsel %vm1265, %v11048, 0
      %v11112 = vsel %vm1265, %v11049, 0
      %v11115 = vsel %vm1265, %v11050, 0
      %v11118 = vsel %vm1265, %v11051, 0
      %v11121 = vsel %vm1265, %v11052, 0
      %v11124 = vsel %vm1265, %v11053, 0
      %v11127 = vsel %vm1265, %v11054, 0
      %v11130 = vsel %vm1265, %v11055, 0
      %v11133 = vsel %vm1265, %v11056, 0
      %v11136 = vsel %vm1265, %v11057, 0
      %v11139 = vsel %vm1265, %v11058, 0
      %v11142 = vsel %vm1265, %v11059, 0
      %v11145 = vsel %vm1265, %v11060, 0
      %v11148 = vsel %vm1265, %v11061, 0
      %v11151 = vsel %vm1265, %v11062, 0
      %v11154 = vsel %vm1265, %v11063, 0
      %v11157 = vsel %vm1265, %v11064, 0
      %v11160 = vsel %vm1265, %v11065, 0
      %11162 = vmatprep.subr.mxu0 0.0
      %11163 = vmatpush1.msra.mxu0 0.0
      %11164 = vmatprep.subr.mxu0 0.0
      %11165 = vmatpush1.msra.mxu0 0.0
      %11166 = vmatprep.subr.mxu0 0.0
      %11167 = vmatpush1.msra.mxu0 %v8720
      %11168 = vmatprep.subr.mxu0 0.0
      %11169 = vmatpush1.msra.mxu0 %v7754
      %11170 = vmatprep.subr.mxu0 0.0
      %11171 = vmatpush1.msra.mxu0 %v7753
      %11172 = vmatprep.subr.mxu0 0.0
      %11173 = vmatpush1.msra.mxu0 %v7752
      %11174 = vmatprep.subr.mxu0 0.0
      %11175 = vmatpush1.msra.mxu0 %v7751
      %11176 = vmatprep.subr.mxu0 0.0
      %11177 = vmatpush1.msra.mxu0 %v7750
      %11178 = vmatprep.subr.mxu0 0.0
      %11179 = vmatpush1.msra.mxu0 %v7749
      %11180 = vmatprep.subr.mxu0 0.0
      %11181 = vmatpush1.msra.mxu0 %v7748
      %11182 = vmatprep.subr.mxu0 0.0
      %11183 = vmatpush1.msra.mxu0 %v7747
      %11184 = vmatprep.subr.mxu0 0.0
      %11185 = vmatpush1.msra.mxu0 %v7746
      %11186 = vmatprep.subr.mxu0 0.0
      %11187 = vmatpush1.msra.mxu0 %v7745
      %11188 = vmatprep.subr.mxu0 0.0
      %11189 = vmatpush1.msra.mxu0 %v7744
      %11190 = vmatprep.subr.mxu0 0.0
      %11191 = vmatpush1.msra.mxu0 %v7743
      %11192 = vmatprep.subr.mxu0 0.0
      %11193 = vmatpush1.msra.mxu0 %v7742
      %11194 = vmatprep.subr.mxu0 0.0
      %11195 = vmatpush2.msra.mxu0 0.0
      %11196 = vmatprep.subr.mxu0 0.0
      %11197 = vmatpush2.msra.mxu0 0.0
      %11198 = vmatprep.subr.mxu0 0.0
      %11199 = vmatpush2.msra.mxu0 0.0
      %11200 = vmatprep.subr.mxu0 0.0
      %11201 = vmatpush2.msra.mxu0 0.0
      %11202 = vmatprep.subr.mxu0 0.0
      %11203 = vmatpush2.msra.mxu0 0.0
      %11204 = vmatprep.subr.mxu0 0.0
      %11205 = vmatpush2.msra.mxu0 0.0
      %11206 = vmatprep.subr.mxu0 0.0
      %11207 = vmatpush2.msra.mxu0 0.0
      %11208 = vmatprep.subr.mxu0 0.0
      %11209 = vmatpush2.msra.mxu0 0.0
      %11210 = vmatprep.subr.mxu0 0.0
      %11211 = vmatpush2.msra.mxu0 0.0
      %11212 = vmatprep.subr.mxu0 0.0
      %11213 = vmatpush2.msra.mxu0 0.0
      %11214 = vmatprep.subr.mxu0 0.0
      %11215 = vmatpush2.msra.mxu0 0.0
      %11216 = vmatprep.subr.mxu0 0.0
      %11217 = vmatpush2.msra.mxu0 0.0
      %11218 = vmatprep.subr.mxu0 0.0
      %11219 = vmatpush2.msra.mxu0 0.0
      %11220 = vmatprep.subr.mxu0 0.0
      %11221 = vmatpush2.msra.mxu0 0.0
      %11222 = vmatprep.subr.mxu0 0.0
      %11223 = vmatpush2.msra.mxu0 0.0
      %11224 = vmatprep.subr.mxu0 0.0
      %11225 = vmatpush2.msra.mxu0 0.0
      %11226 = vmatprep.mubr.f32.mxu0 0.0
      %11227 = vmatmul.mubr.f32.gmra.mxu0 %v11067
      %v11228 = vpop.f32.mrf.mxu0
      %v11229 = vadd.f32 0.0, %v11228
      %v11230 = vpop.f32.mrf.mxu0
      %11231 = vmatprep.mubr.f32.mxu0 0.0
      %11232 = vmatmul.mubr.f32.gmra.mxu0 %v11070
      %v11233 = vpop.f32.mrf.mxu0
      %v11234 = vadd.f32 0.0, %v11233
      %v11235 = vpop.f32.mrf.mxu0
      %11236 = vmatprep.mubr.f32.mxu0 0.0
      %11237 = vmatmul.mubr.f32.gmra.mxu0 %v11073
      %v11238 = vpop.f32.mrf.mxu0
      %v11239 = vadd.f32 0.0, %v11238
      %v11240 = vpop.f32.mrf.mxu0
      %11241 = vmatprep.mubr.f32.mxu0 0.0
      %11242 = vmatmul.mubr.f32.gmra.mxu0 %v11076
      %v11243 = vpop.f32.mrf.mxu0
      %v11244 = vadd.f32 0.0, %v11243
      %v11245 = vpop.f32.mrf.mxu0
      %11246 = vmatprep.mubr.f32.mxu0 0.0
      %11247 = vmatmul.mubr.f32.gmra.mxu0 %v11079
      %v11248 = vpop.f32.mrf.mxu0
      %v11249 = vadd.f32 0.0, %v11248
      %v11250 = vpop.f32.mrf.mxu0
      %11251 = vmatprep.mubr.f32.mxu0 0.0
      %11252 = vmatmul.mubr.f32.gmra.mxu0 %v11082
      %v11253 = vpop.f32.mrf.mxu0
      %v11254 = vadd.f32 0.0, %v11253
      %v11255 = vpop.f32.mrf.mxu0
      %11256 = vmatprep.mubr.f32.mxu0 0.0
      %11257 = vmatmul.mubr.f32.gmra.mxu0 %v11085
      %v11258 = vpop.f32.mrf.mxu0
      %v11259 = vadd.f32 0.0, %v11258
      %v11260 = vpop.f32.mrf.mxu0
      %11261 = vmatprep.mubr.f32.mxu0 0.0
      %11262 = vmatmul.mubr.f32.gmra.mxu0 %v11088
      %v11263 = vpop.f32.mrf.mxu0
      %v11264 = vadd.f32 0.0, %v11263
      %v11265 = vpop.f32.mrf.mxu0
      %11266 = vmatprep.mubr.f32.mxu0 0.0
      %11267 = vmatmul.mubr.f32.gmra.mxu0 %v11091
      %v11268 = vpop.f32.mrf.mxu0
      %v11269 = vadd.f32 0.0, %v11268
      %v11270 = vpop.f32.mrf.mxu0
      %11271 = vmatprep.mubr.f32.mxu0 0.0
      %11272 = vmatmul.mubr.f32.gmra.mxu0 %v11094
      %v11273 = vpop.f32.mrf.mxu0
      %v11274 = vadd.f32 0.0, %v11273
      %v11275 = vpop.f32.mrf.mxu0
      %11276 = vmatprep.mubr.f32.mxu0 0.0
      %11277 = vmatmul.mubr.f32.gmra.mxu0 %v11097
      %v11278 = vpop.f32.mrf.mxu0
      %v11279 = vadd.f32 0.0, %v11278
      %v11280 = vpop.f32.mrf.mxu0
      %11281 = vmatprep.mubr.f32.mxu0 0.0
      %11282 = vmatmul.mubr.f32.gmra.mxu0 %v11100
      %v11283 = vpop.f32.mrf.mxu0
      %v11284 = vadd.f32 0.0, %v11283
      %v11285 = vpop.f32.mrf.mxu0
      %11286 = vmatprep.mubr.f32.mxu0 0.0
      %11287 = vmatmul.mubr.f32.gmra.mxu0 %v11103
      %v11288 = vpop.f32.mrf.mxu0
      %v11289 = vadd.f32 0.0, %v11288
      %v11290 = vpop.f32.mrf.mxu0
      %11291 = vmatprep.mubr.f32.mxu0 0.0
      %11292 = vmatmul.mubr.f32.gmra.mxu0 %v11106
      %v11293 = vpop.f32.mrf.mxu0
      %v11294 = vadd.f32 0.0, %v11293
      %v11295 = vpop.f32.mrf.mxu0
      %11296 = vmatprep.mubr.f32.mxu0 0.0
      %11297 = vmatmul.mubr.f32.gmra.mxu0 %v11109
      %v11298 = vpop.f32.mrf.mxu0
      %v11299 = vadd.f32 0.0, %v11298
      %v11300 = vpop.f32.mrf.mxu0
      %11301 = vmatprep.mubr.f32.mxu0 0.0
      %11302 = vmatmul.mubr.f32.gmra.mxu0 %v11112
      %v11303 = vpop.f32.mrf.mxu0
      %v11304 = vadd.f32 0.0, %v11303
      %v11305 = vpop.f32.mrf.mxu0
      %11306 = vmatprep.mubr.f32.mxu0 0.0
      %11307 = vmatmul.mubr.f32.gmra.mxu0 %v11115
      %v11308 = vpop.f32.mrf.mxu0
      %v11309 = vadd.f32 0.0, %v11308
      %v11310 = vpop.f32.mrf.mxu0
      %11311 = vmatprep.mubr.f32.mxu0 0.0
      %11312 = vmatmul.mubr.f32.gmra.mxu0 %v11118
      %v11313 = vpop.f32.mrf.mxu0
      %v11314 = vadd.f32 0.0, %v11313
      %v11315 = vpop.f32.mrf.mxu0
      %11316 = vmatprep.mubr.f32.mxu0 0.0
      %11317 = vmatmul.mubr.f32.gmra.mxu0 %v11121
      %v11318 = vpop.f32.mrf.mxu0
      %v11319 = vadd.f32 0.0, %v11318
      %v11320 = vpop.f32.mrf.mxu0
      %11321 = vmatprep.mubr.f32.mxu0 0.0
      %11322 = vmatmul.mubr.f32.gmra.mxu0 %v11124
      %v11323 = vpop.f32.mrf.mxu0
      %v11324 = vadd.f32 0.0, %v11323
      %v11325 = vpop.f32.mrf.mxu0
      %11326 = vmatprep.mubr.f32.mxu0 0.0
      %11327 = vmatmul.mubr.f32.gmra.mxu0 %v11127
      %v11328 = vpop.f32.mrf.mxu0
      %v11329 = vadd.f32 0.0, %v11328
      %v11330 = vpop.f32.mrf.mxu0
      %11331 = vmatprep.mubr.f32.mxu0 0.0
      %11332 = vmatmul.mubr.f32.gmra.mxu0 %v11130
      %v11333 = vpop.f32.mrf.mxu0
      %v11334 = vadd.f32 0.0, %v11333
      %v11335 = vpop.f32.mrf.mxu0
      %11336 = vmatprep.mubr.f32.mxu0 0.0
      %11337 = vmatmul.mubr.f32.gmra.mxu0 %v11133
      %v11338 = vpop.f32.mrf.mxu0
      %v11339 = vadd.f32 0.0, %v11338
      %v11340 = vpop.f32.mrf.mxu0
      %11341 = vmatprep.mubr.f32.mxu0 0.0
      %11342 = vmatmul.mubr.f32.gmra.mxu0 %v11136
      %v11343 = vpop.f32.mrf.mxu0
      %v11344 = vadd.f32 0.0, %v11343
      %v11345 = vpop.f32.mrf.mxu0
      %11346 = vmatprep.mubr.f32.mxu0 0.0
      %11347 = vmatmul.mubr.f32.gmra.mxu0 %v11139
      %v11348 = vpop.f32.mrf.mxu0
      %v11349 = vadd.f32 0.0, %v11348
      %v11350 = vpop.f32.mrf.mxu0
      %11351 = vmatprep.mubr.f32.mxu0 0.0
      %11352 = vmatmul.mubr.f32.gmra.mxu0 %v11142
      %v11353 = vpop.f32.mrf.mxu0
      %v11354 = vadd.f32 0.0, %v11353
      %v11355 = vpop.f32.mrf.mxu0
      %11356 = vmatprep.mubr.f32.mxu0 0.0
      %11357 = vmatmul.mubr.f32.gmra.mxu0 %v11145
      %v11358 = vpop.f32.mrf.mxu0
      %v11359 = vadd.f32 0.0, %v11358
      %v11360 = vpop.f32.mrf.mxu0
      %11361 = vmatprep.mubr.f32.mxu0 0.0
      %11362 = vmatmul.mubr.f32.gmra.mxu0 %v11148
      %v11363 = vpop.f32.mrf.mxu0
      %v11364 = vadd.f32 0.0, %v11363
      %v11365 = vpop.f32.mrf.mxu0
      %11366 = vmatprep.mubr.f32.mxu0 0.0
      %11367 = vmatmul.mubr.f32.gmra.mxu0 %v11151
      %v11368 = vpop.f32.mrf.mxu0
      %v11369 = vadd.f32 0.0, %v11368
      %v11370 = vpop.f32.mrf.mxu0
      %11371 = vmatprep.mubr.f32.mxu0 0.0
      %11372 = vmatmul.mubr.f32.gmra.mxu0 %v11154
      %v11373 = vpop.f32.mrf.mxu0
      %v11374 = vadd.f32 0.0, %v11373
      %v11375 = vpop.f32.mrf.mxu0
      %11376 = vmatprep.mubr.f32.mxu0 0.0
      %11377 = vmatmul.mubr.f32.gmra.mxu0 %v11157
      %v11378 = vpop.f32.mrf.mxu0
      %v11379 = vadd.f32 0.0, %v11378
      %v11380 = vpop.f32.mrf.mxu0
      %11381 = vmatprep.mubr.f32.mxu0 0.0
      %11382 = vmatmul.mubr.f32.gmra.mxu0 %v11160
      %v11383 = vpop.f32.mrf.mxu0
      %v11384 = vadd.f32 0.0, %v11383
      %v11385 = vpop.f32.mrf.mxu0
      %11386 = vdwg.mxu0
      %v11387 = vadd.f32 %v10167, %v11229
      %v11388 = vadd.f32 %v10168, %v11234
      %v11389 = vadd.f32 %v10169, %v11239
      %v11390 = vadd.f32 %v10170, %v11244
      %v11391 = vadd.f32 %v10171, %v11249
      %v11392 = vadd.f32 %v10172, %v11254
      %v11393 = vadd.f32 %v10173, %v11259
      %v11394 = vadd.f32 %v10174, %v11264
      %v11395 = vadd.f32 %v10175, %v11269
      %v11396 = vadd.f32 %v10176, %v11274
      %v11397 = vadd.f32 %v10177, %v11279
      %v11398 = vadd.f32 %v10178, %v11284
      %v11399 = vadd.f32 %v10179, %v11289
      %v11400 = vadd.f32 %v10180, %v11294
      %v11401 = vadd.f32 %v10181, %v11299
      %v11402 = vadd.f32 %v10182, %v11304
      %v11403 = vadd.f32 %v10183, %v11309
      %v11404 = vadd.f32 %v10184, %v11314
      %v11405 = vadd.f32 %v10185, %v11319
      %v11406 = vadd.f32 %v10186, %v11324
      %v11407 = vadd.f32 %v10187, %v11329
      %v11408 = vadd.f32 %v10188, %v11334
      %v11409 = vadd.f32 %v10189, %v11339
      %v11410 = vadd.f32 %v10190, %v11344
      %v11411 = vadd.f32 %v10191, %v11349
      %v11412 = vadd.f32 %v10192, %v11354
      %v11413 = vadd.f32 %v10193, %v11359
      %v11414 = vadd.f32 %v10194, %v11364
      %v11415 = vadd.f32 %v10195, %v11369
      %v11416 = vadd.f32 %v10196, %v11374
      %v11417 = vadd.f32 %v10197, %v11379
      %v11418 = vadd.f32 %v10198, %v11384
      %11451 = vrot.lane.b32.xlu0 %v11387, 125
      %v11452 = vpop.permute.xlu0 %11451
      %11453 = vrot.lane.b32.xlu0 %v11388, 125
      %v11454 = vpop.permute.xlu0 %11453
      %11455 = vrot.lane.b32.xlu0 %v11389, 125
      %v11456 = vpop.permute.xlu0 %11455
      %11457 = vrot.lane.b32.xlu0 %v11390, 125
      %v11458 = vpop.permute.xlu0 %11457
      %11459 = vrot.lane.b32.xlu0 %v11391, 125
      %v11460 = vpop.permute.xlu0 %11459
      %11461 = vrot.lane.b32.xlu0 %v11392, 125
      %v11462 = vpop.permute.xlu0 %11461
      %11463 = vrot.lane.b32.xlu0 %v11393, 125
      %v11464 = vpop.permute.xlu0 %11463
      %11465 = vrot.lane.b32.xlu0 %v11394, 125
      %v11466 = vpop.permute.xlu0 %11465
      %11467 = vrot.lane.b32.xlu0 %v11395, 125
      %v11468 = vpop.permute.xlu0 %11467
      %11469 = vrot.lane.b32.xlu0 %v11396, 125
      %v11470 = vpop.permute.xlu0 %11469
      %11471 = vrot.lane.b32.xlu0 %v11397, 125
      %v11472 = vpop.permute.xlu0 %11471
      %11473 = vrot.lane.b32.xlu0 %v11398, 125
      %v11474 = vpop.permute.xlu0 %11473
      %11475 = vrot.lane.b32.xlu0 %v11399, 125
      %v11476 = vpop.permute.xlu0 %11475
      %11477 = vrot.lane.b32.xlu0 %v11400, 125
      %v11478 = vpop.permute.xlu0 %11477
      %11479 = vrot.lane.b32.xlu0 %v11401, 125
      %v11480 = vpop.permute.xlu0 %11479
      %11481 = vrot.lane.b32.xlu0 %v11402, 125
      %v11482 = vpop.permute.xlu0 %11481
      %11483 = vrot.lane.b32.xlu0 %v11403, 125
      %v11484 = vpop.permute.xlu0 %11483
      %11485 = vrot.lane.b32.xlu0 %v11404, 125
      %v11486 = vpop.permute.xlu0 %11485
      %11487 = vrot.lane.b32.xlu0 %v11405, 125
      %v11488 = vpop.permute.xlu0 %11487
      %11489 = vrot.lane.b32.xlu0 %v11406, 125
      %v11490 = vpop.permute.xlu0 %11489
      %11491 = vrot.lane.b32.xlu0 %v11407, 125
      %v11492 = vpop.permute.xlu0 %11491
      %11493 = vrot.lane.b32.xlu0 %v11408, 125
      %v11494 = vpop.permute.xlu0 %11493
      %11495 = vrot.lane.b32.xlu0 %v11409, 125
      %v11496 = vpop.permute.xlu0 %11495
      %11497 = vrot.lane.b32.xlu0 %v11410, 125
      %v11498 = vpop.permute.xlu0 %11497
      %11499 = vrot.lane.b32.xlu0 %v11411, 125
      %v11500 = vpop.permute.xlu0 %11499
      %11501 = vrot.lane.b32.xlu0 %v11412, 125
      %v11502 = vpop.permute.xlu0 %11501
      %11503 = vrot.lane.b32.xlu0 %v11413, 125
      %v11504 = vpop.permute.xlu0 %11503
      %11505 = vrot.lane.b32.xlu0 %v11414, 125
      %v11506 = vpop.permute.xlu0 %11505
      %11507 = vrot.lane.b32.xlu0 %v11415, 125
      %v11508 = vpop.permute.xlu0 %11507
      %11509 = vrot.lane.b32.xlu0 %v11416, 125
      %v11510 = vpop.permute.xlu0 %11509
      %11511 = vrot.lane.b32.xlu0 %v11417, 125
      %v11512 = vpop.permute.xlu0 %11511
      %11513 = vrot.lane.b32.xlu0 %v11418, 125
      %v11514 = vpop.permute.xlu0 %11513
      %vm11547 = vcmask 97280
      %v11548 = vsel %vm11547, %v11452, 0.0
      %11549 = vadd.xlane.f32.xlu0 %v11548
      %v11550 = vpop.xlane.xlu0 %11549
      %v11551 = vsel %vm11547, %v11454, 0.0
      %11552 = vadd.xlane.f32.xlu0 %v11551
      %v11553 = vpop.xlane.xlu0 %11552
      %v11554 = vsel %vm11547, %v11456, 0.0
      %11555 = vadd.xlane.f32.xlu0 %v11554
      %v11556 = vpop.xlane.xlu0 %11555
      %v11557 = vsel %vm11547, %v11458, 0.0
      %11558 = vadd.xlane.f32.xlu0 %v11557
      %v11559 = vpop.xlane.xlu0 %11558
      %v11560 = vsel %vm11547, %v11460, 0.0
      %11561 = vadd.xlane.f32.xlu0 %v11560
      %v11562 = vpop.xlane.xlu0 %11561
      %v11563 = vsel %vm11547, %v11462, 0.0
      %11564 = vadd.xlane.f32.xlu0 %v11563
      %v11565 = vpop.xlane.xlu0 %11564
      %v11566 = vsel %vm11547, %v11464, 0.0
      %11567 = vadd.xlane.f32.xlu0 %v11566
      %v11568 = vpop.xlane.xlu0 %11567
      %v11569 = vsel %vm11547, %v11466, 0.0
      %11570 = vadd.xlane.f32.xlu0 %v11569
      %v11571 = vpop.xlane.xlu0 %11570
      %v11572 = vsel %vm11547, %v11468, 0.0
      %11573 = vadd.xlane.f32.xlu0 %v11572
      %v11574 = vpop.xlane.xlu0 %11573
      %v11575 = vsel %vm11547, %v11470, 0.0
      %11576 = vadd.xlane.f32.xlu0 %v11575
      %v11577 = vpop.xlane.xlu0 %11576
      %v11578 = vsel %vm11547, %v11472, 0.0
      %11579 = vadd.xlane.f32.xlu0 %v11578
      %v11580 = vpop.xlane.xlu0 %11579
      %v11581 = vsel %vm11547, %v11474, 0.0
      %11582 = vadd.xlane.f32.xlu0 %v11581
      %v11583 = vpop.xlane.xlu0 %11582
      %v11584 = vsel %vm11547, %v11476, 0.0
      %11585 = vadd.xlane.f32.xlu0 %v11584
      %v11586 = vpop.xlane.xlu0 %11585
      %v11587 = vsel %vm11547, %v11478, 0.0
      %11588 = vadd.xlane.f32.xlu0 %v11587
      %v11589 = vpop.xlane.xlu0 %11588
      %v11590 = vsel %vm11547, %v11480, 0.0
      %11591 = vadd.xlane.f32.xlu0 %v11590
      %v11592 = vpop.xlane.xlu0 %11591
      %v11593 = vsel %vm11547, %v11482, 0.0
      %11594 = vadd.xlane.f32.xlu0 %v11593
      %v11595 = vpop.xlane.xlu0 %11594
      %v11596 = vsel %vm11547, %v11484, 0.0
      %11597 = vadd.xlane.f32.xlu0 %v11596
      %v11598 = vpop.xlane.xlu0 %11597
      %v11599 = vsel %vm11547, %v11486, 0.0
      %11600 = vadd.xlane.f32.xlu0 %v11599
      %v11601 = vpop.xlane.xlu0 %11600
      %v11602 = vsel %vm11547, %v11488, 0.0
      %11603 = vadd.xlane.f32.xlu0 %v11602
      %v11604 = vpop.xlane.xlu0 %11603
      %v11605 = vsel %vm11547, %v11490, 0.0
      %11606 = vadd.xlane.f32.xlu0 %v11605
      %v11607 = vpop.xlane.xlu0 %11606
      %v11608 = vsel %vm11547, %v11492, 0.0
      %11609 = vadd.xlane.f32.xlu0 %v11608
      %v11610 = vpop.xlane.xlu0 %11609
      %v11611 = vsel %vm11547, %v11494, 0.0
      %11612 = vadd.xlane.f32.xlu0 %v11611
      %v11613 = vpop.xlane.xlu0 %11612
      %v11614 = vsel %vm11547, %v11496, 0.0
      %11615 = vadd.xlane.f32.xlu0 %v11614
      %v11616 = vpop.xlane.xlu0 %11615
      %v11617 = vsel %vm11547, %v11498, 0.0
      %11618 = vadd.xlane.f32.xlu0 %v11617
      %v11619 = vpop.xlane.xlu0 %11618
      %v11620 = vsel %vm11547, %v11500, 0.0
      %11621 = vadd.xlane.f32.xlu0 %v11620
      %v11622 = vpop.xlane.xlu0 %11621
      %v11623 = vsel %vm11547, %v11502, 0.0
      %11624 = vadd.xlane.f32.xlu0 %v11623
      %v11625 = vpop.xlane.xlu0 %11624
      %v11626 = vsel %vm11547, %v11504, 0.0
      %11627 = vadd.xlane.f32.xlu0 %v11626
      %v11628 = vpop.xlane.xlu0 %11627
      %v11629 = vsel %vm11547, %v11506, 0.0
      %11630 = vadd.xlane.f32.xlu0 %v11629
      %v11631 = vpop.xlane.xlu0 %11630
      %v11632 = vsel %vm11547, %v11508, 0.0
      %11633 = vadd.xlane.f32.xlu0 %v11632
      %v11634 = vpop.xlane.xlu0 %11633
      %v11635 = vsel %vm11547, %v11510, 0.0
      %11636 = vadd.xlane.f32.xlu0 %v11635
      %v11637 = vpop.xlane.xlu0 %11636
      %v11638 = vsel %vm11547, %v11512, 0.0
      %11639 = vadd.xlane.f32.xlu0 %v11638
      %v11640 = vpop.xlane.xlu0 %11639
      %v11641 = vsel %vm11547, %v11514, 0.0
      %11642 = vadd.xlane.f32.xlu0 %v11641
      %v11643 = vpop.xlane.xlu0 %11642
      %v11644 = vmul.f32 %v11550, 0.33333334
      %v11645 = vmul.f32 %v11553, 0.33333334
      %v11646 = vmul.f32 %v11556, 0.33333334
      %v11647 = vmul.f32 %v11559, 0.33333334
      %v11648 = vmul.f32 %v11562, 0.33333334
      %v11649 = vmul.f32 %v11565, 0.33333334
      %v11650 = vmul.f32 %v11568, 0.33333334
      %v11651 = vmul.f32 %v11571, 0.33333334
      %v11652 = vmul.f32 %v11574, 0.33333334
      %v11653 = vmul.f32 %v11577, 0.33333334
      %v11654 = vmul.f32 %v11580, 0.33333334
      %v11655 = vmul.f32 %v11583, 0.33333334
      %v11656 = vmul.f32 %v11586, 0.33333334
      %v11657 = vmul.f32 %v11589, 0.33333334
      %v11658 = vmul.f32 %v11592, 0.33333334
      %v11659 = vmul.f32 %v11595, 0.33333334
      %v11660 = vmul.f32 %v11598, 0.33333334
      %v11661 = vmul.f32 %v11601, 0.33333334
      %v11662 = vmul.f32 %v11604, 0.33333334
      %v11663 = vmul.f32 %v11607, 0.33333334
      %v11664 = vmul.f32 %v11610, 0.33333334
      %v11665 = vmul.f32 %v11613, 0.33333334
      %v11666 = vmul.f32 %v11616, 0.33333334
      %v11667 = vmul.f32 %v11619, 0.33333334
      %v11668 = vmul.f32 %v11622, 0.33333334
      %v11669 = vmul.f32 %v11625, 0.33333334
      %v11670 = vmul.f32 %v11628, 0.33333334
      %v11671 = vmul.f32 %v11631, 0.33333334
      %v11672 = vmul.f32 %v11634, 0.33333334
      %v11673 = vmul.f32 %v11637, 0.33333334
      %v11674 = vmul.f32 %v11640, 0.33333334
      %v11675 = vmul.f32 %v11643, 0.33333334
      %v11676 = vadd.f32 %v11387, %v11644
      %v11677 = vadd.f32 %v11388, %v11645
      %v11678 = vadd.f32 %v11389, %v11646
      %v11679 = vadd.f32 %v11390, %v11647
      %v11680 = vadd.f32 %v11391, %v11648
      %v11681 = vadd.f32 %v11392, %v11649
      %v11682 = vadd.f32 %v11393, %v11650
      %v11683 = vadd.f32 %v11394, %v11651
      %v11684 = vadd.f32 %v11395, %v11652
      %v11685 = vadd.f32 %v11396, %v11653
      %v11686 = vadd.f32 %v11397, %v11654
      %v11687 = vadd.f32 %v11398, %v11655
      %v11688 = vadd.f32 %v11399, %v11656
      %v11689 = vadd.f32 %v11400, %v11657
      %v11690 = vadd.f32 %v11401, %v11658
      %v11691 = vadd.f32 %v11402, %v11659
      %v11692 = vadd.f32 %v11403, %v11660
      %v11693 = vadd.f32 %v11404, %v11661
      %v11694 = vadd.f32 %v11405, %v11662
      %v11695 = vadd.f32 %v11406, %v11663
      %v11696 = vadd.f32 %v11407, %v11664
      %v11697 = vadd.f32 %v11408, %v11665
      %v11698 = vadd.f32 %v11409, %v11666
      %v11699 = vadd.f32 %v11410, %v11667
      %v11700 = vadd.f32 %v11411, %v11668
      %v11701 = vadd.f32 %v11412, %v11669
      %v11702 = vadd.f32 %v11413, %v11670
      %v11703 = vadd.f32 %v11414, %v11671
      %v11704 = vadd.f32 %v11415, %v11672
      %v11705 = vadd.f32 %v11416, %v11673
      %v11706 = vadd.f32 %v11417, %v11674
      %v11707 = vadd.f32 %v11418, %v11675
      %11708 = vst.msk [vmem:[%s253] sm:$0xff] %vm320, %v11676
      %11709 = vst.msk [vmem:[%s253 + $0x8] sm:$0xff] %vm320, %v11677
      %11710 = vst.msk [vmem:[%s253 + $0x10] sm:$0xff] %vm320, %v11678
      %11711 = vst.msk [vmem:[%s253 + $0x18] sm:$0xff] %vm320, %v11679
      %11712 = vst.msk [vmem:[%s253 + $0x20] sm:$0xff] %vm320, %v11680
      %11713 = vst.msk [vmem:[%s253 + $0x28] sm:$0xff] %vm320, %v11681
      %11714 = vst.msk [vmem:[%s253 + $0x30] sm:$0xff] %vm320, %v11682
      %11715 = vst.msk [vmem:[%s253 + $0x38] sm:$0xff] %vm320, %v11683
      %11716 = vst.msk [vmem:[%s253 + $0x40] sm:$0xff] %vm320, %v11684
      %11717 = vst.msk [vmem:[%s253 + $0x48] sm:$0xff] %vm320, %v11685
      %11718 = vst.msk [vmem:[%s253 + $0x50] sm:$0xff] %vm320, %v11686
      %11719 = vst.msk [vmem:[%s253 + $0x58] sm:$0xff] %vm320, %v11687
      %11720 = vst.msk [vmem:[%s253 + $0x60] sm:$0xff] %vm320, %v11688
      %11721 = vst.msk [vmem:[%s253 + $0x68] sm:$0xff] %vm320, %v11689
      %11722 = vst.msk [vmem:[%s253 + $0x70] sm:$0xff] %vm320, %v11690
      %11723 = vst.msk [vmem:[%s253 + $0x78] sm:$0xff] %vm320, %v11691
      %11724 = vst.msk [vmem:[%s253 + $0x80] sm:$0xff] %vm320, %v11692
      %11725 = vst.msk [vmem:[%s253 + $0x88] sm:$0xff] %vm320, %v11693
      %11726 = vst.msk [vmem:[%s253 + $0x90] sm:$0xff] %vm320, %v11694
      %11727 = vst.msk [vmem:[%s253 + $0x98] sm:$0xff] %vm320, %v11695
      %11728 = vst.msk [vmem:[%s253 + $0xa0] sm:$0xff] %vm320, %v11696
      %11729 = vst.msk [vmem:[%s253 + $0xa8] sm:$0xff] %vm320, %v11697
      %11730 = vst.msk [vmem:[%s253 + $0xb0] sm:$0xff] %vm320, %v11698
      %11731 = vst.msk [vmem:[%s253 + $0xb8] sm:$0xff] %vm320, %v11699
      %11732 = vst.msk [vmem:[%s253 + $0xc0] sm:$0xff] %vm320, %v11700
      %11733 = vst.msk [vmem:[%s253 + $0xc8] sm:$0xff] %vm320, %v11701
      %11734 = vst.msk [vmem:[%s253 + $0xd0] sm:$0xff] %vm320, %v11702
      %11735 = vst.msk [vmem:[%s253 + $0xd8] sm:$0xff] %vm320, %v11703
      %11736 = vst.msk [vmem:[%s253 + $0xe0] sm:$0xff] %vm320, %v11704
      %11737 = vst.msk [vmem:[%s253 + $0xe8] sm:$0xff] %vm320, %v11705
      %11738 = vst.msk [vmem:[%s253 + $0xf0] sm:$0xff] %vm320, %v11706
      %11739 = vst.msk [vmem:[%s253 + $0xf8] sm:$0xff] %vm320, %v11707
      %s11740 = smul.u32 32, %s17
      %p11741 = scmp.lt.s32.totalorder %s11740, 63
      %s11742 = scalar_select %p11741, %s11740, 63
      %s11743 = smul.addr %s11742, 8
      %s11744 = scalar_lea.vmem %s6, %s11743
      // Predicated region
      $region45: #{tpu_custom_call.1} parent=43 // pred_check
        %p11745 = pneg %p166
      $region46: #{tpu_custom_call.1} parent=43 // pred_check_branch
        %11747 = sbr.rel (%p11745) target = $region48
      $region47: #{tpu_custom_call.1} parent=43 // pred_region
        %s11748 = smul.u32 32, %s17
      $region48: #{tpu_custom_call.1} parent=43 // pred_fallthru
        _
    $region44: #{tpu_custom_call.1} parent=5 // pred_fallthru
      _
    %p11749 = scmp.le.s32.totalorder 2, %s12
    // Predicated region
    $region49: #{tpu_custom_call.1} parent=5 // pred_check
      %p11750 = pneg %p11749
    $region50: #{tpu_custom_call.1} parent=5 // pred_check_branch
      %11752 = sbr.rel (%p11750) target = $region52
    $region51: #{tpu_custom_call.1} parent=5 // pred_region
      %s11753 = ssub.s32 %s12, 2
      // Predicated region
      $region53: #{tpu_custom_call.1} parent=51 // pred_check
        %p11754 = pneg %p172
      $region54: #{tpu_custom_call.1} parent=51 // pred_check_branch
        %11756 = sbr.rel (%p11754) target = $region56
      $region55: #{tpu_custom_call.1} parent=51 // pred_region
        %s11757 = smul.u32 32, %s18
        %p11758 = scmp.lt.s32.totalorder %s11757, 63
        %s11759 = scalar_select %p11758, %s11757, 63
        %s11760 = smul.addr %s11759, 8
        %s11761 = scalar_lea.vmem %s6, %s11760
      $region56: #{tpu_custom_call.1} parent=51 // pred_fallthru
        _
    $region52: #{tpu_custom_call.1} parent=5 // pred_fallthru
      _
  $region6: #{tpu_custom_call.1} parent=0 // loop_footer
    %s16 = sadd.s32 1, %s12
  $region7: #{tpu_custom_call.1} parent=0 // loop_footer_branch
    %11 = sbr.rel target = $region3
  $region8: #{tpu_custom_call.1} parent=0 // loop_exit
    _

</llo_original>
